<compile_context>
chip_gen: v7x
topology: tpu7x:2x2x1
jax: 0.10.0
libtpu: 0.0.40
codegen_flags: <defaults>
</compile_context>

<pallas_src>
import functools

import numpy as np
import jax
import jax.numpy as jnp
from jax import lax
from jax.experimental import pallas as pl
from jax.experimental.pallas import tpu as pltpu

_LANE_BLK = 128   # per-kh lane block in the banded conv weights
_K = 5            # conv kernel size


def _vmem_specs(n):
    return [pl.BlockSpec(memory_space=pltpu.MemorySpace.VMEM) for _ in range(n)]


# ---------------------------------------------------------------------------
# The single fused kernel.
# Row layout of x / all conv intermediates: r = h * n_pad + n  (n_pad % 8 == 0,
# so every row shift below is sublane-aligned).  Lane layout: conv outputs use
# lanes c*OW + ow inside a 128-lane block; one block per kh in the weights.
# ---------------------------------------------------------------------------
def _fused_kernel(x_ref, wb1_ref, sh1_ref, wb2_ref, sh2_ref, we_ref, be_ref,
                  wc_ref, bc_ref, oh_ref, sw_ref, out_ref,
                  *, n_pad, n_sup_blk, num_steps, lr):

    def shift_up(v, s):
        # out[r] = v[r + s]; rows past the end become zero (they are junk rows).
        if s == 0:
            return v
        pad = jnp.zeros((s, v.shape[1]), v.dtype)
        return jnp.concatenate([v[s:, :], pad], axis=0)

    # ---------------- conv1 (banded matmul) + folded BN + ReLU ---------------
    x = x_ref[...]                                         # [32*n_pad, 96]
    a1 = None
    for kh in range(_K):
        t = jnp.dot(x, wb1_ref[:, kh * _LANE_BLK:(kh + 1) * _LANE_BLK],
                    preferred_element_type=jnp.float32)    # [rows, 128]
        t = shift_up(t, n_pad * kh)
        a1 = t if a1 is None else a1 + t
    a1 = jnp.maximum(a1 + sh1_ref[...], 0.0)               # lanes co*28+ow (112 valid)

    # ---------------- MaxPool2d(2) #1: row-shift max + lane-roll max ---------
    r1 = jnp.maximum(a1, shift_up(a1, n_pad))              # pool over oh pairs
    p1 = jnp.maximum(r1, jnp.roll(r1, -1, axis=1))         # pool over ow pairs (even lanes valid)

    # ---------------- conv2 (banded matmul) + folded BN + ReLU ---------------
    y2 = None
    for kh in range(_K):
        t = jnp.dot(p1, wb2_ref[:, kh * _LANE_BLK:(kh + 1) * _LANE_BLK],
                    preferred_element_type=jnp.float32)    # [rows, 128]
        t = shift_up(t, 2 * n_pad * kh)
        y2 = t if y2 is None else y2 + t
    y2 = jnp.maximum(y2 + sh2_ref[...], 0.0)               # lanes c2*10+ow2 (80 valid)

    # ---------------- MaxPool2d(2) #2 ----------------------------------------
    r2 = jnp.maximum(y2, shift_up(y2, 2 * n_pad))
    f = jnp.maximum(r2, jnp.roll(r2, -1, axis=1))          # valid @ rows 4*n_pad*a2 + n

    # ---------------- flatten + Linear(200, 64) + ReLU (single dot) ----------
    fcat = jnp.concatenate(
        [f[4 * n_pad * a2:4 * n_pad * a2 + n_pad, :] for a2 in range(5)],
        axis=1)                                            # [n_pad, 640]
    emb = jnp.dot(fcat, we_ref[...], preferred_element_type=jnp.float32) + be_ref[...]
    emb = jnp.maximum(emb, 0.0)                            # [n_pad, 64]
    # TODO(synk): Dropout(0.5) is identity (eval mode); training-mode mask not modeled.

    # ---------------- MAML inner loop on the classifier ----------------------
    sf = emb[0:n_sup_blk, :]                               # [8, 64] (pad rows masked by sw)
    qf = emb[n_sup_blk:, :]                                # [8, 64]
    onehot = oh_ref[...]                                   # [8, C], zero rows for padding
    sw = sw_ref[...]                                       # [8, 1], 1/n_support or 0
    w = wc_ref[...]                                        # [C, 64]
    b = bc_ref[...]                                        # [1, C]
    dn_feat = (((1,), (1,)), ((), ()))                     # [N,D] x [C,D] -> [N,C]
    dn_batch = (((0,), (0,)), ((), ()))                    # [N,C] x [N,D] -> [C,D]
    for _ in range(num_steps):
        logits = lax.dot_general(sf, w, dn_feat, preferred_element_type=jnp.float32) + b
        m = jnp.max(logits, axis=-1, keepdims=True)
        e = jnp.exp(logits - m)
        p = e / jnp.sum(e, axis=-1, keepdims=True)         # exact divide (torch parity)
        g = (p - onehot) * sw                              # dCE/dlogits, mean over real support
        gw = lax.dot_general(g, sf, dn_batch, preferred_element_type=jnp.float32)
        gb = jnp.sum(g, axis=0, keepdims=True)
        w = w - lr * gw
        b = b - lr * gb

    out_ref[...] = lax.dot_general(qf, w, dn_feat, preferred_element_type=jnp.float32) + b


# ---------------------------------------------------------------------------
# Host-side weight preparation (tiny, fused under the surrounding jit).
# ---------------------------------------------------------------------------
def _band_matrix_1(w1f):
    """[96, 5*128]: row ci*32 + (ow+kw), col kh*128 + co*28 + ow  <- w1f[co,ci,kh,kw]."""
    b = np.zeros((5, 32, 28), np.float32)
    for kw in range(5):
        for ow in range(28):
            b[kw, ow + kw, ow] = 1.0
    m = jnp.einsum('oihk,kwz->iwhoz', w1f, jnp.asarray(b))        # [3,32,5,4,28]
    m = m.reshape(96, 5, 112)
    return jnp.pad(m, ((0, 0), (0, 0), (0, 16))).reshape(96, 5 * 128)


def _band_matrix_2(w2f):
    """[128, 5*128]: row co1*28 + 2*(ow2+kw), col kh*128 + c2*10 + ow2 <- w2f[c2,co1,kh,kw]."""
    b = np.zeros((5, 28, 10), np.float32)
    for kw in range(5):
        for ow in range(10):
            b[kw, 2 * (ow + kw), ow] = 1.0
    m = jnp.einsum('oihk,kwz->iwhoz', w2f, jnp.asarray(b))        # [4,28,5,8,10]
    m = m.reshape(112, 5, 80)
    return jnp.pad(m, ((0, 16), (0, 0), (0, 48))).reshape(128, 5 * 128)


def _embedding_matrix(we):
    """[5*128, 64]: row a2*128 + c2*10 + 2*b2  <-  we[:, c2*25 + a2*5 + b2]."""
    w4 = we.reshape(64, 8, 5, 5).transpose(2, 1, 3, 0)            # [a2, c2, b2, d]
    w4 = jnp.stack([w4, jnp.zeros_like(w4)], axis=3)              # values at even lanes
    w4 = w4.reshape(5, 8, 10, 64).reshape(5, 80, 64)
    return jnp.pad(w4, ((0, 0), (0, 48), (0, 0))).reshape(5 * 128, 64)


def meta_lenet_forward(params, support_x, support_y, query_x, num_steps=5):
    eps = 1e-5
    lr = 0.01
    ns, nq = support_x.shape[0], query_x.shape[0]
    assert support_x.shape[1:] == (3, 32, 32) and query_x.shape[1:] == (3, 32, 32)
    sup_blk = ((ns + 7) // 8) * 8
    qry_blk = ((nq + 7) // 8) * 8
    n_pad = sup_blk + qry_blk                       # batch rows per h; multiple of 8
    n_classes = params['wc'].shape[0]

    # -- pack + zero-pad the batch (support block, then query block) ----------
    x = jnp.concatenate([
        support_x.astype(jnp.float32),
        jnp.zeros((sup_blk - ns, 3, 32, 32), jnp.float32),
        query_x.astype(jnp.float32),
        jnp.zeros((qry_blk - nq, 3, 32, 32), jnp.float32)], axis=0)
    # rows = h*n_pad + n ; lanes = ci*32 + w
    xm = x.transpose(2, 0, 1, 3).reshape(32 * n_pad, 3 * 32)

    # -- fold eval-mode BatchNorm into the conv weights, build banded weights --
    scale1 = params['g1'] / jnp.sqrt(params['v1'] + eps)
    wb1 = _band_matrix_1(params['w1'] * scale1[:, None, None, None])
    sh1 = jnp.pad(jnp.repeat(params['be1'] + (params['b1'] - params['m1']) * scale1, 28),
                  (0, 16)).reshape(1, 128)
    scale2 = params['g2'] / jnp.sqrt(params['v2'] + eps)
    wb2 = _band_matrix_2(params['w2'] * scale2[:, None, None, None])
    sh2 = jnp.pad(jnp.repeat(params['be2'] + (params['b2'] - params['m2']) * scale2, 10),
                  (0, 48)).reshape(1, 128)

    we_cat = _embedding_matrix(params['we'])
    be = params['be'].reshape(1, 64)
    wc = params['wc']
    bc = params['bc'].reshape(1, n_classes)
    onehot = jnp.pad(jax.nn.one_hot(support_y, n_classes, dtype=jnp.float32),
                     ((0, sup_blk - ns), (0, 0)))
    sw = jnp.pad(jnp.full((ns, 1), 1.0 / ns, jnp.float32), ((0, sup_blk - ns), (0, 0)))

    kern = functools.partial(_fused_kernel, n_pad=n_pad, n_sup_blk=sup_blk,
                             num_steps=num_steps, lr=lr)
    qlog = pl.pallas_call(
        kern,
        out_shape=jax.ShapeDtypeStruct((qry_blk, n_classes), jnp.float32),
        in_specs=_vmem_specs(11),
        out_specs=pl.BlockSpec(memory_space=pltpu.MemorySpace.VMEM),
    )(xm, wb1, sh1, wb2, sh2, we_cat, be, wc, bc, onehot, sw)
    return qlog[:nq]


# ---------------------------------------------------------------------------
# Pure-JAX reference (eval-mode semantics) for a correctness sanity check.
# ---------------------------------------------------------------------------
def _reference_forward(params, support_x, support_y, query_x, num_steps=5):
    eps = 1e-5

    def bn(y, g, be, m, v):
        s = g / jnp.sqrt(v + eps)
        return (y - m[None, :, None, None]) * s[None, :, None, None] + be[None, :, None, None]

    def features(x):
        y = lax.conv_general_dilated(x, params['w1'], (1, 1), 'VALID',
                                     dimension_numbers=('NCHW', 'OIHW', 'NCHW'))
        y = y + params['b1'][None, :, None, None]
        y = jnp.maximum(bn(y, params['g1'], params['be1'], params['m1'], params['v1']), 0.0)
        y = lax.reduce_window(y, -jnp.inf, lax.max, (1, 1, 2, 2), (1, 1, 2, 2), 'VALID')
        y = lax.conv_general_dilated(y, params['w2'], (1, 1), 'VALID',
                                     dimension_numbers=('NCHW', 'OIHW', 'NCHW'))
        y = y + params['b2'][None, :, None, None]
        y = jnp.maximum(bn(y, params['g2'], params['be2'], params['m2'], params['v2']), 0.0)
        y = lax.reduce_window(y, -jnp.inf, lax.max, (1, 1, 2, 2), (1, 1, 2, 2), 'VALID')
        y = y.reshape(y.shape[0], -1)
        return jnp.maximum(y @ params['we'].T + params['be'], 0.0)

    sf, qf = features(support_x), features(query_x)
    n_classes = params['wc'].shape[0]
    onehot = jax.nn.one_hot(support_y, n_classes, dtype=jnp.float32)
    w, b = params['wc'], params['bc']
    for _ in range(num_steps):
        logits = sf @ w.T + b
        p = jax.nn.softmax(logits, axis=-1)
        g = (p - onehot) / sf.shape[0]
        w = w - 0.01 * (g.T @ sf)
        b = b - 0.01 * jnp.sum(g, axis=0)
    return qf @ w.T + b


def init_params(key, num_classes=5):
    ks = jax.random.split(key, 8)

    def u(k, shape, fan_in):
        bound = 1.0 / (fan_in ** 0.5)
        return jax.random.uniform(k, shape, jnp.float32, -bound, bound)

    p = dict(
        w1=u(ks[0], (4, 3, 5, 5), 3 * 25), b1=u(ks[1], (4,), 3 * 25),
        g1=jnp.ones((4,)), be1=jnp.zeros((4,)),
        m1=jnp.zeros((4,)), v1=jnp.ones((4,)),
        w2=u(ks[2], (8, 4, 5, 5), 4 * 25), b2=u(ks[3], (8,), 4 * 25),
        g2=jnp.ones((8,)), be2=jnp.zeros((8,)),
        m2=jnp.zeros((8,)), v2=jnp.ones((8,)),
        we=u(ks[4], (64, 200), 200), be=u(ks[5], (64,), 200),
        wc=u(ks[6], (num_classes, 64), 64), bc=u(ks[7], (num_classes,), 64),
    )
    return {k: v.astype(jnp.float32) for k, v in p.items()}


if __name__ == "__main__":
    key = jax.random.PRNGKey(0)
    pkey, sxk, qxk = jax.random.split(key, 3)

    n_way, k_shot, n_query = 5, 1, 6     # num_classes = n_way = 5
    params = init_params(pkey, num_classes=n_way)

    # Input spatial size must be 32x32 so the flattened feature is 8*5*5 = 200.
    support_x = jax.random.normal(sxk, (n_way * k_shot, 3, 32, 32), jnp.float32)
    support_y = (jnp.arange(n_way * k_shot) % n_way).astype(jnp.int32)
    query_x = jax.random.normal(qxk, (n_query, 3, 32, 32), jnp.float32)

    fwd = jax.jit(functools.partial(meta_lenet_forward, num_steps=5))
    query_logits = fwd(params, support_x, support_y, query_x)
    jax.block_until_ready(query_logits)
    assert query_logits.shape == (n_query, n_way)

    ref = jax.jit(functools.partial(_reference_forward, num_steps=5))(
        params, support_x, support_y, query_x)
    np.testing.assert_allclose(np.asarray(query_logits), np.asarray(ref),
                               rtol=5e-2, atol=2e-2)
    print("KERNEL_OK")
</pallas_src>

<mosaic_0001>
module attributes {stable_mosaic.version = 11 : i64} {
  func.func @_fused_kernel(%arg0: memref<512x96xf32, #tpu.memory_space<vmem>>, %arg1: memref<96x640xf32, #tpu.memory_space<vmem>>, %arg2: memref<1x128xf32, #tpu.memory_space<vmem>>, %arg3: memref<128x640xf32, #tpu.memory_space<vmem>>, %arg4: memref<1x128xf32, #tpu.memory_space<vmem>>, %arg5: memref<640x64xf32, #tpu.memory_space<vmem>>, %arg6: memref<1x64xf32, #tpu.memory_space<vmem>>, %arg7: memref<5x64xf32, #tpu.memory_space<vmem>>, %arg8: memref<1x5xf32, #tpu.memory_space<vmem>>, %arg9: memref<8x5xf32, #tpu.memory_space<vmem>>, %arg10: memref<8x1xf32, #tpu.memory_space<vmem>>, %arg11: memref<8x5xf32, #tpu.memory_space<vmem>>) attributes {dimension_semantics = [], scalar_prefetch = 0 : i64, scratch_operands = 0 : i64, tpu.core_type = #tpu.core_type<tc>} {
    %c0 = arith.constant 0 : index
    %c0_0 = arith.constant 0 : index
    %0 = vector.load %arg0[%c0, %c0_0] : memref<512x96xf32, #tpu.memory_space<vmem>>, vector<512x96xf32>
    %c0_1 = arith.constant 0 : index
    %c0_2 = arith.constant 0 : index
    %1 = vector.load %arg1[%c0_1, %c0_2] : memref<96x640xf32, #tpu.memory_space<vmem>>, vector<96x128xf32>
    %cst = arith.constant dense<0.000000e+00> : vector<512x128xf32>
    %2 = tpu.matmul %0, %1, %cst {dimension_numbers = #tpu.dot_dimension_numbers<[1], [0], [0], [1], [0, 0, 1, 1], [], []>} : vector<512x96xf32>, vector<96x128xf32>, vector<512x128xf32> -> vector<512x128xf32>
    %c0_3 = arith.constant 0 : index
    %c128 = arith.constant 128 : index
    %3 = vector.load %arg1[%c0_3, %c128] : memref<96x640xf32, #tpu.memory_space<vmem>>, vector<96x128xf32>
    %cst_4 = arith.constant dense<0.000000e+00> : vector<512x128xf32>
    %4 = tpu.matmul %0, %3, %cst_4 {dimension_numbers = #tpu.dot_dimension_numbers<[1], [0], [0], [1], [0, 0, 1, 1], [], []>} : vector<512x96xf32>, vector<96x128xf32>, vector<512x128xf32> -> vector<512x128xf32>
    %cst_5 = arith.constant 0.000000e+00 : f32
    %5 = vector.broadcast %cst_5 : f32 to vector<16x128xf32>
    %6 = vector.extract_strided_slice %4 {offsets = [16, 0], sizes = [496, 128], strides = [1, 1]} : vector<512x128xf32> to vector<496x128xf32>
    %7 = tpu.concatenate %6, %5 in 0 : vector<496x128xf32>, vector<16x128xf32> -> vector<512x128xf32>
    %8 = arith.addf %2, %7 : vector<512x128xf32>
    %c0_6 = arith.constant 0 : index
    %c256 = arith.constant 256 : index
    %9 = vector.load %arg1[%c0_6, %c256] : memref<96x640xf32, #tpu.memory_space<vmem>>, vector<96x128xf32>
    %cst_7 = arith.constant dense<0.000000e+00> : vector<512x128xf32>
    %10 = tpu.matmul %0, %9, %cst_7 {dimension_numbers = #tpu.dot_dimension_numbers<[1], [0], [0], [1], [0, 0, 1, 1], [], []>} : vector<512x96xf32>, vector<96x128xf32>, vector<512x128xf32> -> vector<512x128xf32>
    %cst_8 = arith.constant 0.000000e+00 : f32
    %11 = vector.broadcast %cst_8 : f32 to vector<32x128xf32>
    %12 = vector.extract_strided_slice %10 {offsets = [32, 0], sizes = [480, 128], strides = [1, 1]} : vector<512x128xf32> to vector<480x128xf32>
    %13 = tpu.concatenate %12, %11 in 0 : vector<480x128xf32>, vector<32x128xf32> -> vector<512x128xf32>
    %14 = arith.addf %8, %13 : vector<512x128xf32>
    %c0_9 = arith.constant 0 : index
    %c384 = arith.constant 384 : index
    %15 = vector.load %arg1[%c0_9, %c384] : memref<96x640xf32, #tpu.memory_space<vmem>>, vector<96x128xf32>
    %cst_10 = arith.constant dense<0.000000e+00> : vector<512x128xf32>
    %16 = tpu.matmul %0, %15, %cst_10 {dimension_numbers = #tpu.dot_dimension_numbers<[1], [0], [0], [1], [0, 0, 1, 1], [], []>} : vector<512x96xf32>, vector<96x128xf32>, vector<512x128xf32> -> vector<512x128xf32>
    %cst_11 = arith.constant 0.000000e+00 : f32
    %17 = vector.broadcast %cst_11 : f32 to vector<48x128xf32>
    %18 = vector.extract_strided_slice %16 {offsets = [48, 0], sizes = [464, 128], strides = [1, 1]} : vector<512x128xf32> to vector<464x128xf32>
    %19 = tpu.concatenate %18, %17 in 0 : vector<464x128xf32>, vector<48x128xf32> -> vector<512x128xf32>
    %20 = arith.addf %14, %19 : vector<512x128xf32>
    %c0_12 = arith.constant 0 : index
    %c512 = arith.constant 512 : index
    %21 = vector.load %arg1[%c0_12, %c512] : memref<96x640xf32, #tpu.memory_space<vmem>>, vector<96x128xf32>
    %cst_13 = arith.constant dense<0.000000e+00> : vector<512x128xf32>
    %22 = tpu.matmul %0, %21, %cst_13 {dimension_numbers = #tpu.dot_dimension_numbers<[1], [0], [0], [1], [0, 0, 1, 1], [], []>} : vector<512x96xf32>, vector<96x128xf32>, vector<512x128xf32> -> vector<512x128xf32>
    %cst_14 = arith.constant 0.000000e+00 : f32
    %23 = vector.broadcast %cst_14 : f32 to vector<64x128xf32>
    %24 = vector.extract_strided_slice %22 {offsets = [64, 0], sizes = [448, 128], strides = [1, 1]} : vector<512x128xf32> to vector<448x128xf32>
    %25 = tpu.concatenate %24, %23 in 0 : vector<448x128xf32>, vector<64x128xf32> -> vector<512x128xf32>
    %26 = arith.addf %20, %25 : vector<512x128xf32>
    %c0_15 = arith.constant 0 : index
    %c0_16 = arith.constant 0 : index
    %27 = vector.load %arg2[%c0_15, %c0_16] : memref<1x128xf32, #tpu.memory_space<vmem>>, vector<1x128xf32>
    %28 = vector.broadcast %27 : vector<1x128xf32> to vector<512x128xf32>
    %29 = arith.addf %26, %28 : vector<512x128xf32>
    %cst_17 = arith.constant 0.000000e+00 : f32
    %30 = vector.broadcast %cst_17 : f32 to vector<512x128xf32>
    %31 = arith.maximumf %29, %30 : vector<512x128xf32>
    %cst_18 = arith.constant 0.000000e+00 : f32
    %32 = vector.broadcast %cst_18 : f32 to vector<16x128xf32>
    %33 = vector.extract_strided_slice %31 {offsets = [16, 0], sizes = [496, 128], strides = [1, 1]} : vector<512x128xf32> to vector<496x128xf32>
    %34 = tpu.concatenate %33, %32 in 0 : vector<496x128xf32>, vector<16x128xf32> -> vector<512x128xf32>
    %35 = arith.maximumf %31, %34 : vector<512x128xf32>
    %36 = vector.extract_strided_slice %35 {offsets = [0, 1], sizes = [512, 127], strides = [1, 1]} : vector<512x128xf32> to vector<512x127xf32>
    %37 = vector.extract_strided_slice %35 {offsets = [0, 0], sizes = [512, 1], strides = [1, 1]} : vector<512x128xf32> to vector<512x1xf32>
    %38 = tpu.concatenate %36, %37 in 1 : vector<512x127xf32>, vector<512x1xf32> -> vector<512x128xf32>
    %39 = arith.maximumf %35, %38 : vector<512x128xf32>
    %c0_19 = arith.constant 0 : index
    %c0_20 = arith.constant 0 : index
    %40 = vector.load %arg3[%c0_19, %c0_20] : memref<128x640xf32, #tpu.memory_space<vmem>>, vector<128x128xf32>
    %cst_21 = arith.constant dense<0.000000e+00> : vector<512x128xf32>
    %41 = tpu.matmul %39, %40, %cst_21 {dimension_numbers = #tpu.dot_dimension_numbers<[1], [0], [0], [1], [0, 0, 1, 1], [], []>} : vector<512x128xf32>, vector<128x128xf32>, vector<512x128xf32> -> vector<512x128xf32>
    %c0_22 = arith.constant 0 : index
    %c128_23 = arith.constant 128 : index
    %42 = vector.load %arg3[%c0_22, %c128_23] : memref<128x640xf32, #tpu.memory_space<vmem>>, vector<128x128xf32>
    %cst_24 = arith.constant dense<0.000000e+00> : vector<512x128xf32>
    %43 = tpu.matmul %39, %42, %cst_24 {dimension_numbers = #tpu.dot_dimension_numbers<[1], [0], [0], [1], [0, 0, 1, 1], [], []>} : vector<512x128xf32>, vector<128x128xf32>, vector<512x128xf32> -> vector<512x128xf32>
    %cst_25 = arith.constant 0.000000e+00 : f32
    %44 = vector.broadcast %cst_25 : f32 to vector<32x128xf32>
    %45 = vector.extract_strided_slice %43 {offsets = [32, 0], sizes = [480, 128], strides = [1, 1]} : vector<512x128xf32> to vector<480x128xf32>
    %46 = tpu.concatenate %45, %44 in 0 : vector<480x128xf32>, vector<32x128xf32> -> vector<512x128xf32>
    %47 = arith.addf %41, %46 : vector<512x128xf32>
    %c0_26 = arith.constant 0 : index
    %c256_27 = arith.constant 256 : index
    %48 = vector.load %arg3[%c0_26, %c256_27] : memref<128x640xf32, #tpu.memory_space<vmem>>, vector<128x128xf32>
    %cst_28 = arith.constant dense<0.000000e+00> : vector<512x128xf32>
    %49 = tpu.matmul %39, %48, %cst_28 {dimension_numbers = #tpu.dot_dimension_numbers<[1], [0], [0], [1], [0, 0, 1, 1], [], []>} : vector<512x128xf32>, vector<128x128xf32>, vector<512x128xf32> -> vector<512x128xf32>
    %cst_29 = arith.constant 0.000000e+00 : f32
    %50 = vector.broadcast %cst_29 : f32 to vector<64x128xf32>
    %51 = vector.extract_strided_slice %49 {offsets = [64, 0], sizes = [448, 128], strides = [1, 1]} : vector<512x128xf32> to vector<448x128xf32>
    %52 = tpu.concatenate %51, %50 in 0 : vector<448x128xf32>, vector<64x128xf32> -> vector<512x128xf32>
    %53 = arith.addf %47, %52 : vector<512x128xf32>
    %c0_30 = arith.constant 0 : index
    %c384_31 = arith.constant 384 : index
    %54 = vector.load %arg3[%c0_30, %c384_31] : memref<128x640xf32, #tpu.memory_space<vmem>>, vector<128x128xf32>
    %cst_32 = arith.constant dense<0.000000e+00> : vector<512x128xf32>
    %55 = tpu.matmul %39, %54, %cst_32 {dimension_numbers = #tpu.dot_dimension_numbers<[1], [0], [0], [1], [0, 0, 1, 1], [], []>} : vector<512x128xf32>, vector<128x128xf32>, vector<512x128xf32> -> vector<512x128xf32>
    %cst_33 = arith.constant 0.000000e+00 : f32
    %56 = vector.broadcast %cst_33 : f32 to vector<96x128xf32>
    %57 = vector.extract_strided_slice %55 {offsets = [96, 0], sizes = [416, 128], strides = [1, 1]} : vector<512x128xf32> to vector<416x128xf32>
    %58 = tpu.concatenate %57, %56 in 0 : vector<416x128xf32>, vector<96x128xf32> -> vector<512x128xf32>
    %59 = arith.addf %53, %58 : vector<512x128xf32>
    %c0_34 = arith.constant 0 : index
    %c512_35 = arith.constant 512 : index
    %60 = vector.load %arg3[%c0_34, %c512_35] : memref<128x640xf32, #tpu.memory_space<vmem>>, vector<128x128xf32>
    %cst_36 = arith.constant dense<0.000000e+00> : vector<512x128xf32>
    %61 = tpu.matmul %39, %60, %cst_36 {dimension_numbers = #tpu.dot_dimension_numbers<[1], [0], [0], [1], [0, 0, 1, 1], [], []>} : vector<512x128xf32>, vector<128x128xf32>, vector<512x128xf32> -> vector<512x128xf32>
    %cst_37 = arith.constant 0.000000e+00 : f32
    %62 = vector.broadcast %cst_37 : f32 to vector<128x128xf32>
    %63 = vector.extract_strided_slice %61 {offsets = [128, 0], sizes = [384, 128], strides = [1, 1]} : vector<512x128xf32> to vector<384x128xf32>
    %64 = tpu.concatenate %63, %62 in 0 : vector<384x128xf32>, vector<128x128xf32> -> vector<512x128xf32>
    %65 = arith.addf %59, %64 : vector<512x128xf32>
    %c0_38 = arith.constant 0 : index
    %c0_39 = arith.constant 0 : index
    %66 = vector.load %arg4[%c0_38, %c0_39] : memref<1x128xf32, #tpu.memory_space<vmem>>, vector<1x128xf32>
    %67 = vector.broadcast %66 : vector<1x128xf32> to vector<512x128xf32>
    %68 = arith.addf %65, %67 : vector<512x128xf32>
    %cst_40 = arith.constant 0.000000e+00 : f32
    %69 = vector.broadcast %cst_40 : f32 to vector<512x128xf32>
    %70 = arith.maximumf %68, %69 : vector<512x128xf32>
    %cst_41 = arith.constant 0.000000e+00 : f32
    %71 = vector.broadcast %cst_41 : f32 to vector<32x128xf32>
    %72 = vector.extract_strided_slice %70 {offsets = [32, 0], sizes = [480, 128], strides = [1, 1]} : vector<512x128xf32> to vector<480x128xf32>
    %73 = tpu.concatenate %72, %71 in 0 : vector<480x128xf32>, vector<32x128xf32> -> vector<512x128xf32>
    %74 = arith.maximumf %70, %73 : vector<512x128xf32>
    %75 = vector.extract_strided_slice %74 {offsets = [0, 1], sizes = [512, 127], strides = [1, 1]} : vector<512x128xf32> to vector<512x127xf32>
    %76 = vector.extract_strided_slice %74 {offsets = [0, 0], sizes = [512, 1], strides = [1, 1]} : vector<512x128xf32> to vector<512x1xf32>
    %77 = tpu.concatenate %75, %76 in 1 : vector<512x127xf32>, vector<512x1xf32> -> vector<512x128xf32>
    %78 = arith.maximumf %74, %77 : vector<512x128xf32>
    %79 = vector.extract_strided_slice %78 {offsets = [0, 0], sizes = [16, 128], strides = [1, 1]} : vector<512x128xf32> to vector<16x128xf32>
    %80 = vector.extract_strided_slice %78 {offsets = [64, 0], sizes = [16, 128], strides = [1, 1]} : vector<512x128xf32> to vector<16x128xf32>
    %81 = vector.extract_strided_slice %78 {offsets = [128, 0], sizes = [16, 128], strides = [1, 1]} : vector<512x128xf32> to vector<16x128xf32>
    %82 = vector.extract_strided_slice %78 {offsets = [192, 0], sizes = [16, 128], strides = [1, 1]} : vector<512x128xf32> to vector<16x128xf32>
    %83 = vector.extract_strided_slice %78 {offsets = [256, 0], sizes = [16, 128], strides = [1, 1]} : vector<512x128xf32> to vector<16x128xf32>
    %84 = tpu.concatenate %79, %80, %81, %82, %83 in 1 : vector<16x128xf32>, vector<16x128xf32>, vector<16x128xf32>, vector<16x128xf32>, vector<16x128xf32> -> vector<16x640xf32>
    %c0_42 = arith.constant 0 : index
    %c0_43 = arith.constant 0 : index
    %85 = vector.load %arg5[%c0_42, %c0_43] : memref<640x64xf32, #tpu.memory_space<vmem>>, vector<640x64xf32>
    %cst_44 = arith.constant dense<0.000000e+00> : vector<16x64xf32>
    %86 = tpu.matmul %84, %85, %cst_44 {dimension_numbers = #tpu.dot_dimension_numbers<[1], [0], [0], [1], [0, 0, 1, 1], [], []>} : vector<16x640xf32>, vector<640x64xf32>, vector<16x64xf32> -> vector<16x64xf32>
    %c0_45 = arith.constant 0 : index
    %c0_46 = arith.constant 0 : index
    %87 = vector.load %arg6[%c0_45, %c0_46] : memref<1x64xf32, #tpu.memory_space<vmem>>, vector<1x64xf32>
    %88 = vector.broadcast %87 : vector<1x64xf32> to vector<16x64xf32>
    %89 = arith.addf %86, %88 : vector<16x64xf32>
    %cst_47 = arith.constant 0.000000e+00 : f32
    %90 = vector.broadcast %cst_47 : f32 to vector<16x64xf32>
    %91 = arith.maximumf %89, %90 : vector<16x64xf32>
    %92 = vector.extract_strided_slice %91 {offsets = [0, 0], sizes = [8, 64], strides = [1, 1]} : vector<16x64xf32> to vector<8x64xf32>
    %93 = vector.extract_strided_slice %91 {offsets = [8, 0], sizes = [8, 64], strides = [1, 1]} : vector<16x64xf32> to vector<8x64xf32>
    %c0_48 = arith.constant 0 : index
    %c0_49 = arith.constant 0 : index
    %94 = vector.load %arg9[%c0_48, %c0_49] : memref<8x5xf32, #tpu.memory_space<vmem>>, vector<8x5xf32>
    %c0_50 = arith.constant 0 : index
    %c0_51 = arith.constant 0 : index
    %95 = vector.load %arg10[%c0_50, %c0_51] : memref<8x1xf32, #tpu.memory_space<vmem>>, vector<8x1xf32>
    %c0_52 = arith.constant 0 : index
    %c0_53 = arith.constant 0 : index
    %96 = vector.load %arg7[%c0_52, %c0_53] : memref<5x64xf32, #tpu.memory_space<vmem>>, vector<5x64xf32>
    %c0_54 = arith.constant 0 : index
    %c0_55 = arith.constant 0 : index
    %97 = vector.load %arg8[%c0_54, %c0_55] : memref<1x5xf32, #tpu.memory_space<vmem>>, vector<1x5xf32>
    %cst_56 = arith.constant dense<0.000000e+00> : vector<8x5xf32>
    %98 = tpu.matmul %92, %96, %cst_56 {dimension_numbers = #tpu.dot_dimension_numbers<[1], [1], [0], [0], [0, 0, 1, 0], [], []>} : vector<8x64xf32>, vector<5x64xf32>, vector<8x5xf32> -> vector<8x5xf32>
    %99 = vector.broadcast %97 : vector<1x5xf32> to vector<8x5xf32>
    %100 = arith.addf %98, %99 : vector<8x5xf32>
    %cst_57 = arith.constant dense<0xFF800000> : vector<8xf32>
    %101 = vector.multi_reduction <maximumf>, %100, %cst_57 [1] : vector<8x5xf32> to vector<8xf32>
    %102 = vector.shape_cast %101 : vector<8xf32> to vector<8x1xf32>
    %103 = vector.broadcast %102 : vector<8x1xf32> to vector<8x5xf32>
    %104 = arith.subf %100, %103 : vector<8x5xf32>
    %105 = math.exp %104 : vector<8x5xf32>
    %cst_58 = arith.constant dense<0.000000e+00> : vector<8xf32>
    %106 = vector.multi_reduction <add>, %105, %cst_58 [1] : vector<8x5xf32> to vector<8xf32>
    %107 = vector.shape_cast %106 : vector<8xf32> to vector<8x1xf32>
    %108 = vector.broadcast %107 : vector<8x1xf32> to vector<8x5xf32>
    %109 = arith.divf %105, %108 : vector<8x5xf32>
    %110 = arith.subf %109, %94 : vector<8x5xf32>
    %111 = vector.broadcast %95 : vector<8x1xf32> to vector<8x5xf32>
    %112 = arith.mulf %110, %111 : vector<8x5xf32>
    %cst_59 = arith.constant dense<0.000000e+00> : vector<5x64xf32>
    %113 = tpu.matmul %112, %92, %cst_59 {dimension_numbers = #tpu.dot_dimension_numbers<[0], [0], [1], [1], [0, 1, 1, 1], [], []>} : vector<8x5xf32>, vector<8x64xf32>, vector<5x64xf32> -> vector<5x64xf32>
    %cst_60 = arith.constant dense<0.000000e+00> : vector<5xf32>
    %114 = vector.multi_reduction <add>, %112, %cst_60 [0] : vector<8x5xf32> to vector<5xf32>
    %115 = vector.shape_cast %114 : vector<5xf32> to vector<1x5xf32>
    %cst_61 = arith.constant 0.00999999977 : f32
    %116 = vector.broadcast %cst_61 : f32 to vector<5x64xf32>
    %117 = arith.mulf %116, %113 : vector<5x64xf32>
    %118 = arith.subf %96, %117 : vector<5x64xf32>
    %cst_62 = arith.constant 0.00999999977 : f32
    %119 = vector.broadcast %cst_62 : f32 to vector<1x5xf32>
    %120 = arith.mulf %119, %115 : vector<1x5xf32>
    %121 = arith.subf %97, %120 : vector<1x5xf32>
    %cst_63 = arith.constant dense<0.000000e+00> : vector<8x5xf32>
    %122 = tpu.matmul %92, %118, %cst_63 {dimension_numbers = #tpu.dot_dimension_numbers<[1], [1], [0], [0], [0, 0, 1, 0], [], []>} : vector<8x64xf32>, vector<5x64xf32>, vector<8x5xf32> -> vector<8x5xf32>
    %123 = vector.broadcast %121 : vector<1x5xf32> to vector<8x5xf32>
    %124 = arith.addf %122, %123 : vector<8x5xf32>
    %cst_64 = arith.constant dense<0xFF800000> : vector<8xf32>
    %125 = vector.multi_reduction <maximumf>, %124, %cst_64 [1] : vector<8x5xf32> to vector<8xf32>
    %126 = vector.shape_cast %125 : vector<8xf32> to vector<8x1xf32>
    %127 = vector.broadcast %126 : vector<8x1xf32> to vector<8x5xf32>
    %128 = arith.subf %124, %127 : vector<8x5xf32>
    %129 = math.exp %128 : vector<8x5xf32>
    %cst_65 = arith.constant dense<0.000000e+00> : vector<8xf32>
    %130 = vector.multi_reduction <add>, %129, %cst_65 [1] : vector<8x5xf32> to vector<8xf32>
    %131 = vector.shape_cast %130 : vector<8xf32> to vector<8x1xf32>
    %132 = vector.broadcast %131 : vector<8x1xf32> to vector<8x5xf32>
    %133 = arith.divf %129, %132 : vector<8x5xf32>
    %134 = arith.subf %133, %94 : vector<8x5xf32>
    %135 = vector.broadcast %95 : vector<8x1xf32> to vector<8x5xf32>
    %136 = arith.mulf %134, %135 : vector<8x5xf32>
    %cst_66 = arith.constant dense<0.000000e+00> : vector<5x64xf32>
    %137 = tpu.matmul %136, %92, %cst_66 {dimension_numbers = #tpu.dot_dimension_numbers<[0], [0], [1], [1], [0, 1, 1, 1], [], []>} : vector<8x5xf32>, vector<8x64xf32>, vector<5x64xf32> -> vector<5x64xf32>
    %cst_67 = arith.constant dense<0.000000e+00> : vector<5xf32>
    %138 = vector.multi_reduction <add>, %136, %cst_67 [0] : vector<8x5xf32> to vector<5xf32>
    %139 = vector.shape_cast %138 : vector<5xf32> to vector<1x5xf32>
    %cst_68 = arith.constant 0.00999999977 : f32
    %140 = vector.broadcast %cst_68 : f32 to vector<5x64xf32>
    %141 = arith.mulf %140, %137 : vector<5x64xf32>
    %142 = arith.subf %118, %141 : vector<5x64xf32>
    %cst_69 = arith.constant 0.00999999977 : f32
    %143 = vector.broadcast %cst_69 : f32 to vector<1x5xf32>
    %144 = arith.mulf %143, %139 : vector<1x5xf32>
    %145 = arith.subf %121, %144 : vector<1x5xf32>
    %cst_70 = arith.constant dense<0.000000e+00> : vector<8x5xf32>
    %146 = tpu.matmul %92, %142, %cst_70 {dimension_numbers = #tpu.dot_dimension_numbers<[1], [1], [0], [0], [0, 0, 1, 0], [], []>} : vector<8x64xf32>, vector<5x64xf32>, vector<8x5xf32> -> vector<8x5xf32>
    %147 = vector.broadcast %145 : vector<1x5xf32> to vector<8x5xf32>
    %148 = arith.addf %146, %147 : vector<8x5xf32>
    %cst_71 = arith.constant dense<0xFF800000> : vector<8xf32>
    %149 = vector.multi_reduction <maximumf>, %148, %cst_71 [1] : vector<8x5xf32> to vector<8xf32>
    %150 = vector.shape_cast %149 : vector<8xf32> to vector<8x1xf32>
    %151 = vector.broadcast %150 : vector<8x1xf32> to vector<8x5xf32>
    %152 = arith.subf %148, %151 : vector<8x5xf32>
    %153 = math.exp %152 : vector<8x5xf32>
    %cst_72 = arith.constant dense<0.000000e+00> : vector<8xf32>
    %154 = vector.multi_reduction <add>, %153, %cst_72 [1] : vector<8x5xf32> to vector<8xf32>
    %155 = vector.shape_cast %154 : vector<8xf32> to vector<8x1xf32>
    %156 = vector.broadcast %155 : vector<8x1xf32> to vector<8x5xf32>
    %157 = arith.divf %153, %156 : vector<8x5xf32>
    %158 = arith.subf %157, %94 : vector<8x5xf32>
    %159 = vector.broadcast %95 : vector<8x1xf32> to vector<8x5xf32>
    %160 = arith.mulf %158, %159 : vector<8x5xf32>
    %cst_73 = arith.constant dense<0.000000e+00> : vector<5x64xf32>
    %161 = tpu.matmul %160, %92, %cst_73 {dimension_numbers = #tpu.dot_dimension_numbers<[0], [0], [1], [1], [0, 1, 1, 1], [], []>} : vector<8x5xf32>, vector<8x64xf32>, vector<5x64xf32> -> vector<5x64xf32>
    %cst_74 = arith.constant dense<0.000000e+00> : vector<5xf32>
    %162 = vector.multi_reduction <add>, %160, %cst_74 [0] : vector<8x5xf32> to vector<5xf32>
    %163 = vector.shape_cast %162 : vector<5xf32> to vector<1x5xf32>
    %cst_75 = arith.constant 0.00999999977 : f32
    %164 = vector.broadcast %cst_75 : f32 to vector<5x64xf32>
    %165 = arith.mulf %164, %161 : vector<5x64xf32>
    %166 = arith.subf %142, %165 : vector<5x64xf32>
    %cst_76 = arith.constant 0.00999999977 : f32
    %167 = vector.broadcast %cst_76 : f32 to vector<1x5xf32>
    %168 = arith.mulf %167, %163 : vector<1x5xf32>
    %169 = arith.subf %145, %168 : vector<1x5xf32>
    %cst_77 = arith.constant dense<0.000000e+00> : vector<8x5xf32>
    %170 = tpu.matmul %92, %166, %cst_77 {dimension_numbers = #tpu.dot_dimension_numbers<[1], [1], [0], [0], [0, 0, 1, 0], [], []>} : vector<8x64xf32>, vector<5x64xf32>, vector<8x5xf32> -> vector<8x5xf32>
    %171 = vector.broadcast %169 : vector<1x5xf32> to vector<8x5xf32>
    %172 = arith.addf %170, %171 : vector<8x5xf32>
    %cst_78 = arith.constant dense<0xFF800000> : vector<8xf32>
    %173 = vector.multi_reduction <maximumf>, %172, %cst_78 [1] : vector<8x5xf32> to vector<8xf32>
    %174 = vector.shape_cast %173 : vector<8xf32> to vector<8x1xf32>
    %175 = vector.broadcast %174 : vector<8x1xf32> to vector<8x5xf32>
    %176 = arith.subf %172, %175 : vector<8x5xf32>
    %177 = math.exp %176 : vector<8x5xf32>
    %cst_79 = arith.constant dense<0.000000e+00> : vector<8xf32>
    %178 = vector.multi_reduction <add>, %177, %cst_79 [1] : vector<8x5xf32> to vector<8xf32>
    %179 = vector.shape_cast %178 : vector<8xf32> to vector<8x1xf32>
    %180 = vector.broadcast %179 : vector<8x1xf32> to vector<8x5xf32>
    %181 = arith.divf %177, %180 : vector<8x5xf32>
    %182 = arith.subf %181, %94 : vector<8x5xf32>
    %183 = vector.broadcast %95 : vector<8x1xf32> to vector<8x5xf32>
    %184 = arith.mulf %182, %183 : vector<8x5xf32>
    %cst_80 = arith.constant dense<0.000000e+00> : vector<5x64xf32>
    %185 = tpu.matmul %184, %92, %cst_80 {dimension_numbers = #tpu.dot_dimension_numbers<[0], [0], [1], [1], [0, 1, 1, 1], [], []>} : vector<8x5xf32>, vector<8x64xf32>, vector<5x64xf32> -> vector<5x64xf32>
    %cst_81 = arith.constant dense<0.000000e+00> : vector<5xf32>
    %186 = vector.multi_reduction <add>, %184, %cst_81 [0] : vector<8x5xf32> to vector<5xf32>
    %187 = vector.shape_cast %186 : vector<5xf32> to vector<1x5xf32>
    %cst_82 = arith.constant 0.00999999977 : f32
    %188 = vector.broadcast %cst_82 : f32 to vector<5x64xf32>
    %189 = arith.mulf %188, %185 : vector<5x64xf32>
    %190 = arith.subf %166, %189 : vector<5x64xf32>
    %cst_83 = arith.constant 0.00999999977 : f32
    %191 = vector.broadcast %cst_83 : f32 to vector<1x5xf32>
    %192 = arith.mulf %191, %187 : vector<1x5xf32>
    %193 = arith.subf %169, %192 : vector<1x5xf32>
    %cst_84 = arith.constant dense<0.000000e+00> : vector<8x5xf32>
    %194 = tpu.matmul %92, %190, %cst_84 {dimension_numbers = #tpu.dot_dimension_numbers<[1], [1], [0], [0], [0, 0, 1, 0], [], []>} : vector<8x64xf32>, vector<5x64xf32>, vector<8x5xf32> -> vector<8x5xf32>
    %195 = vector.broadcast %193 : vector<1x5xf32> to vector<8x5xf32>
    %196 = arith.addf %194, %195 : vector<8x5xf32>
    %cst_85 = arith.constant dense<0xFF800000> : vector<8xf32>
    %197 = vector.multi_reduction <maximumf>, %196, %cst_85 [1] : vector<8x5xf32> to vector<8xf32>
    %198 = vector.shape_cast %197 : vector<8xf32> to vector<8x1xf32>
    %199 = vector.broadcast %198 : vector<8x1xf32> to vector<8x5xf32>
    %200 = arith.subf %196, %199 : vector<8x5xf32>
    %201 = math.exp %200 : vector<8x5xf32>
    %cst_86 = arith.constant dense<0.000000e+00> : vector<8xf32>
    %202 = vector.multi_reduction <add>, %201, %cst_86 [1] : vector<8x5xf32> to vector<8xf32>
    %203 = vector.shape_cast %202 : vector<8xf32> to vector<8x1xf32>
    %204 = vector.broadcast %203 : vector<8x1xf32> to vector<8x5xf32>
    %205 = arith.divf %201, %204 : vector<8x5xf32>
    %206 = arith.subf %205, %94 : vector<8x5xf32>
    %207 = vector.broadcast %95 : vector<8x1xf32> to vector<8x5xf32>
    %208 = arith.mulf %206, %207 : vector<8x5xf32>
    %cst_87 = arith.constant dense<0.000000e+00> : vector<5x64xf32>
    %209 = tpu.matmul %208, %92, %cst_87 {dimension_numbers = #tpu.dot_dimension_numbers<[0], [0], [1], [1], [0, 1, 1, 1], [], []>} : vector<8x5xf32>, vector<8x64xf32>, vector<5x64xf32> -> vector<5x64xf32>
    %cst_88 = arith.constant dense<0.000000e+00> : vector<5xf32>
    %210 = vector.multi_reduction <add>, %208, %cst_88 [0] : vector<8x5xf32> to vector<5xf32>
    %211 = vector.shape_cast %210 : vector<5xf32> to vector<1x5xf32>
    %cst_89 = arith.constant 0.00999999977 : f32
    %212 = vector.broadcast %cst_89 : f32 to vector<5x64xf32>
    %213 = arith.mulf %212, %209 : vector<5x64xf32>
    %214 = arith.subf %190, %213 : vector<5x64xf32>
    %cst_90 = arith.constant 0.00999999977 : f32
    %215 = vector.broadcast %cst_90 : f32 to vector<1x5xf32>
    %216 = arith.mulf %215, %211 : vector<1x5xf32>
    %217 = arith.subf %193, %216 : vector<1x5xf32>
    %cst_91 = arith.constant dense<0.000000e+00> : vector<8x5xf32>
    %218 = tpu.matmul %93, %214, %cst_91 {dimension_numbers = #tpu.dot_dimension_numbers<[1], [1], [0], [0], [0, 0, 1, 0], [], []>} : vector<8x64xf32>, vector<5x64xf32>, vector<8x5xf32> -> vector<8x5xf32>
    %219 = vector.broadcast %217 : vector<1x5xf32> to vector<8x5xf32>
    %220 = arith.addf %218, %219 : vector<8x5xf32>
    %c0_92 = arith.constant 0 : index
    %c0_93 = arith.constant 0 : index
    %221 = vector.load %arg11[%c0_92, %c0_93] : memref<8x5xf32, #tpu.memory_space<vmem>>, vector<8x5xf32>
    tpu.vector_store %arg11[%c0_92, %c0_93], %220 {strides = array<i32>} : memref<8x5xf32, #tpu.memory_space<vmem>>, vector<8x5xf32>,
    return
  }
}

</mosaic_0001>

<llo_original>
// kernel: meta_lenet_forward.1
$region0: #{meta_lenet_forward.1}
  #allocation0 [shape = 'u32[]', space=smem, size = 0x4, offset = 0x4, fixed_abs, tag = 'smem constant byte address 0x4 - core index']
  #allocation1 [shape = 'u32[144,128]{1,0:T(1,128)}', space=vmem, size = 0x12000, scoped, tag = 'internal scratch']
  %s0 = inlined_call_operand.vmem [shape: f32[512,96], index: 0, kind: input, shape index: {}]
  %s1 = inlined_call_operand.vmem [shape: f32[96,640], index: 1, kind: input, shape index: {}]
  %s2 = inlined_call_operand.vmem [shape: f32[1,128], index: 2, kind: input, shape index: {}]
  %s3 = inlined_call_operand.vmem [shape: f32[128,640], index: 3, kind: input, shape index: {}]
  %s4 = inlined_call_operand.vmem [shape: f32[1,128], index: 4, kind: input, shape index: {}]
  %s5 = inlined_call_operand.vmem [shape: f32[640,64], index: 5, kind: input, shape index: {}]
  %s6 = inlined_call_operand.vmem [shape: f32[1,64], index: 6, kind: input, shape index: {}]
  %s7 = inlined_call_operand.vmem [shape: f32[5,64], index: 7, kind: input, shape index: {}]
  %s8 = inlined_call_operand.vmem [shape: f32[1,5], index: 8, kind: input, shape index: {}]
  %s9 = inlined_call_operand.vmem [shape: f32[8,5], index: 9, kind: input, shape index: {}]
  %s10 = inlined_call_operand.vmem [shape: f32[8,1], index: 10, kind: input, shape index: {}]
  %s11 = inlined_call_operand.hbm [shape: f32[8,5], index: 11, kind: output, shape index: {}]
  %s12 = sld [smem:[#allocation0]]
  $region54: #{meta_lenet_forward.1} parent=0
    _
  %s14 = ssub.s32 1, %s12
  %s15 = scalar_select 0, %s14, %s12
  $region1: #{meta_lenet_forward.1} parent=0
    #allocation2 [shape = 'u8[4096]{0}', space=vmem, size = 0x1000, scoped, tag = 'output window, operand 0, single buffered']
    #allocation3 [shape = 's32[1]{0}', space=sflag, size = 0x4, scoped, tag = 'scoped memory for meta_lenet_forward.1']
    %16 = vsyncpa [#allocation3], 0
    // Predicated region
    $region2: #{meta_lenet_forward.1} parent=1 // pred_check
      _
    $region3: #{meta_lenet_forward.1} parent=1 // pred_check_branch
      %18 = sbr.rel (0) target = $region5
    $region4: #{meta_lenet_forward.1} parent=1 // pred_region
      _
    $region5: #{meta_lenet_forward.1} parent=1 // pred_fallthru
      _
    // Predicated region
    $region6: #{meta_lenet_forward.1} parent=1 // pred_check
      _
    $region7: #{meta_lenet_forward.1} parent=1 // pred_check_branch
      %20 = sbr.rel (0) target = $region9
    $region8: #{meta_lenet_forward.1} parent=1 // pred_region
      _
    $region9: #{meta_lenet_forward.1} parent=1 // pred_fallthru
      _
    // Predicated region
    $region10: #{meta_lenet_forward.1} parent=1 // pred_check
      _
    $region11: #{meta_lenet_forward.1} parent=1 // pred_check_branch
      %22 = sbr.rel (0) target = $region13
    $region12: #{meta_lenet_forward.1} parent=1 // pred_region
      _
    $region13: #{meta_lenet_forward.1} parent=1 // pred_fallthru
      _
    // Predicated region
    $region14: #{meta_lenet_forward.1} parent=1 // pred_check
      _
    $region15: #{meta_lenet_forward.1} parent=1 // pred_check_branch
      %24 = sbr.rel (0) target = $region17
    $region16: #{meta_lenet_forward.1} parent=1 // pred_region
      _
    $region17: #{meta_lenet_forward.1} parent=1 // pred_fallthru
      _
    // Predicated region
    $region18: #{meta_lenet_forward.1} parent=1 // pred_check
      _
    $region19: #{meta_lenet_forward.1} parent=1 // pred_check_branch
      %26 = sbr.rel (0) target = $region21
    $region20: #{meta_lenet_forward.1} parent=1 // pred_region
      _
    $region21: #{meta_lenet_forward.1} parent=1 // pred_fallthru
      _
    // Predicated region
    $region22: #{meta_lenet_forward.1} parent=1 // pred_check
      _
    $region23: #{meta_lenet_forward.1} parent=1 // pred_check_branch
      %28 = sbr.rel (0) target = $region25
    $region24: #{meta_lenet_forward.1} parent=1 // pred_region
      _
    $region25: #{meta_lenet_forward.1} parent=1 // pred_fallthru
      _
    // Predicated region
    $region26: #{meta_lenet_forward.1} parent=1 // pred_check
      _
    $region27: #{meta_lenet_forward.1} parent=1 // pred_check_branch
      %30 = sbr.rel (0) target = $region29
    $region28: #{meta_lenet_forward.1} parent=1 // pred_region
      _
    $region29: #{meta_lenet_forward.1} parent=1 // pred_fallthru
      _
    // Predicated region
    $region30: #{meta_lenet_forward.1} parent=1 // pred_check
      _
    $region31: #{meta_lenet_forward.1} parent=1 // pred_check_branch
      %32 = sbr.rel (0) target = $region33
    $region32: #{meta_lenet_forward.1} parent=1 // pred_region
      _
    $region33: #{meta_lenet_forward.1} parent=1 // pred_fallthru
      _
    // Predicated region
    $region34: #{meta_lenet_forward.1} parent=1 // pred_check
      _
    $region35: #{meta_lenet_forward.1} parent=1 // pred_check_branch
      %34 = sbr.rel (0) target = $region37
    $region36: #{meta_lenet_forward.1} parent=1 // pred_region
      _
    $region37: #{meta_lenet_forward.1} parent=1 // pred_fallthru
      _
    // Predicated region
    $region38: #{meta_lenet_forward.1} parent=1 // pred_check
      _
    $region39: #{meta_lenet_forward.1} parent=1 // pred_check_branch
      %36 = sbr.rel (0) target = $region41
    $region40: #{meta_lenet_forward.1} parent=1 // pred_region
      _
    $region41: #{meta_lenet_forward.1} parent=1 // pred_fallthru
      _
    // Predicated region
    $region42: #{meta_lenet_forward.1} parent=1 // pred_check
      _
    $region43: #{meta_lenet_forward.1} parent=1 // pred_check_branch
      %38 = sbr.rel (0) target = $region45
    $region44: #{meta_lenet_forward.1} parent=1 // pred_region
      _
    $region45: #{meta_lenet_forward.1} parent=1 // pred_fallthru
      _
    %v39 = vld [vmem:[%s0] sm:$0xff]
    %v40 = vld [vmem:[%s0 + $0x8] sm:$0xff]
    %v41 = vld [vmem:[%s0 + $0x10] sm:$0xff]
    %v42 = vld [vmem:[%s0 + $0x18] sm:$0xff]
    %v43 = vld [vmem:[%s0 + $0x20] sm:$0xff]
    %v44 = vld [vmem:[%s0 + $0x28] sm:$0xff]
    %v45 = vld [vmem:[%s0 + $0x30] sm:$0xff]
    %v46 = vld [vmem:[%s0 + $0x38] sm:$0xff]
    %v47 = vld [vmem:[%s0 + $0x40] sm:$0xff]
    %v48 = vld [vmem:[%s0 + $0x48] sm:$0xff]
    %v49 = vld [vmem:[%s0 + $0x50] sm:$0xff]
    %v50 = vld [vmem:[%s0 + $0x58] sm:$0xff]
    %v51 = vld [vmem:[%s0 + $0x60] sm:$0xff]
    %v52 = vld [vmem:[%s0 + $0x68] sm:$0xff]
    %v53 = vld [vmem:[%s0 + $0x70] sm:$0xff]
    %v54 = vld [vmem:[%s0 + $0x78] sm:$0xff]
    %v55 = vld [vmem:[%s0 + $0x80] sm:$0xff]
    %v56 = vld [vmem:[%s0 + $0x88] sm:$0xff]
    %v57 = vld [vmem:[%s0 + $0x90] sm:$0xff]
    %v58 = vld [vmem:[%s0 + $0x98] sm:$0xff]
    %v59 = vld [vmem:[%s0 + $0xa0] sm:$0xff]
    %v60 = vld [vmem:[%s0 + $0xa8] sm:$0xff]
    %v61 = vld [vmem:[%s0 + $0xb0] sm:$0xff]
    %v62 = vld [vmem:[%s0 + $0xb8] sm:$0xff]
    %v63 = vld [vmem:[%s0 + $0xc0] sm:$0xff]
    %v64 = vld [vmem:[%s0 + $0xc8] sm:$0xff]
    %v65 = vld [vmem:[%s0 + $0xd0] sm:$0xff]
    %v66 = vld [vmem:[%s0 + $0xd8] sm:$0xff]
    %v67 = vld [vmem:[%s0 + $0xe0] sm:$0xff]
    %v68 = vld [vmem:[%s0 + $0xe8] sm:$0xff]
    %v69 = vld [vmem:[%s0 + $0xf0] sm:$0xff]
    %v70 = vld [vmem:[%s0 + $0xf8] sm:$0xff]
    %v71 = vld [vmem:[%s0 + $0x100] sm:$0xff]
    %v72 = vld [vmem:[%s0 + $0x108] sm:$0xff]
    %v73 = vld [vmem:[%s0 + $0x110] sm:$0xff]
    %v74 = vld [vmem:[%s0 + $0x118] sm:$0xff]
    %v75 = vld [vmem:[%s0 + $0x120] sm:$0xff]
    %v76 = vld [vmem:[%s0 + $0x128] sm:$0xff]
    %v77 = vld [vmem:[%s0 + $0x130] sm:$0xff]
    %v78 = vld [vmem:[%s0 + $0x138] sm:$0xff]
    %v79 = vld [vmem:[%s0 + $0x140] sm:$0xff]
    %v80 = vld [vmem:[%s0 + $0x148] sm:$0xff]
    %v81 = vld [vmem:[%s0 + $0x150] sm:$0xff]
    %v82 = vld [vmem:[%s0 + $0x158] sm:$0xff]
    %v83 = vld [vmem:[%s0 + $0x160] sm:$0xff]
    %v84 = vld [vmem:[%s0 + $0x168] sm:$0xff]
    %v85 = vld [vmem:[%s0 + $0x170] sm:$0xff]
    %v86 = vld [vmem:[%s0 + $0x178] sm:$0xff]
    %v87 = vld [vmem:[%s0 + $0x180] sm:$0xff]
    %v88 = vld [vmem:[%s0 + $0x188] sm:$0xff]
    %v89 = vld [vmem:[%s0 + $0x190] sm:$0xff]
    %v90 = vld [vmem:[%s0 + $0x198] sm:$0xff]
    %v91 = vld [vmem:[%s0 + $0x1a0] sm:$0xff]
    %v92 = vld [vmem:[%s0 + $0x1a8] sm:$0xff]
    %v93 = vld [vmem:[%s0 + $0x1b0] sm:$0xff]
    %v94 = vld [vmem:[%s0 + $0x1b8] sm:$0xff]
    %v95 = vld [vmem:[%s0 + $0x1c0] sm:$0xff]
    %v96 = vld [vmem:[%s0 + $0x1c8] sm:$0xff]
    %v97 = vld [vmem:[%s0 + $0x1d0] sm:$0xff]
    %v98 = vld [vmem:[%s0 + $0x1d8] sm:$0xff]
    %v99 = vld [vmem:[%s0 + $0x1e0] sm:$0xff]
    %v100 = vld [vmem:[%s0 + $0x1e8] sm:$0xff]
    %v101 = vld [vmem:[%s0 + $0x1f0] sm:$0xff]
    %v102 = vld [vmem:[%s0 + $0x1f8] sm:$0xff]
    %v103 = vld [vmem:[%s1] sm:$0xff]
    %v104 = vld [vmem:[%s1 + $0x28] sm:$0xff]
    %v105 = vld [vmem:[%s1 + $0x50] sm:$0xff]
    %v106 = vld [vmem:[%s1 + $0x78] sm:$0xff]
    %v107 = vld [vmem:[%s1 + $0xa0] sm:$0xff]
    %v108 = vld [vmem:[%s1 + $0xc8] sm:$0xff]
    %v109 = vld [vmem:[%s1 + $0xf0] sm:$0xff]
    %v110 = vld [vmem:[%s1 + $0x118] sm:$0xff]
    %v111 = vld [vmem:[%s1 + $0x140] sm:$0xff]
    %v112 = vld [vmem:[%s1 + $0x168] sm:$0xff]
    %v113 = vld [vmem:[%s1 + $0x190] sm:$0xff]
    %v114 = vld [vmem:[%s1 + $0x1b8] sm:$0xff]
    %v115 = vld [vmem:[%s1 + $0x8] sm:$0xff]
    %v116 = vld [vmem:[%s1 + $0x30] sm:$0xff]
    %v117 = vld [vmem:[%s1 + $0x58] sm:$0xff]
    %v118 = vld [vmem:[%s1 + $0x80] sm:$0xff]
    %v119 = vld [vmem:[%s1 + $0xa8] sm:$0xff]
    %v120 = vld [vmem:[%s1 + $0xd0] sm:$0xff]
    %v121 = vld [vmem:[%s1 + $0xf8] sm:$0xff]
    %v122 = vld [vmem:[%s1 + $0x120] sm:$0xff]
    %v123 = vld [vmem:[%s1 + $0x148] sm:$0xff]
    %v124 = vld [vmem:[%s1 + $0x170] sm:$0xff]
    %v125 = vld [vmem:[%s1 + $0x198] sm:$0xff]
    %v126 = vld [vmem:[%s1 + $0x1c0] sm:$0xff]
    %vm127 = vcmask 785408
    %v129 = vsel %vm127, %v39, 0
    %v132 = vsel %vm127, %v40, 0
    %v135 = vsel %vm127, %v41, 0
    %v138 = vsel %vm127, %v42, 0
    %v141 = vsel %vm127, %v43, 0
    %v144 = vsel %vm127, %v44, 0
    %v147 = vsel %vm127, %v45, 0
    %v150 = vsel %vm127, %v46, 0
    %v153 = vsel %vm127, %v47, 0
    %v156 = vsel %vm127, %v48, 0
    %v159 = vsel %vm127, %v49, 0
    %v162 = vsel %vm127, %v50, 0
    %v165 = vsel %vm127, %v51, 0
    %v168 = vsel %vm127, %v52, 0
    %v171 = vsel %vm127, %v53, 0
    %v174 = vsel %vm127, %v54, 0
    %v177 = vsel %vm127, %v55, 0
    %v180 = vsel %vm127, %v56, 0
    %v183 = vsel %vm127, %v57, 0
    %v186 = vsel %vm127, %v58, 0
    %v189 = vsel %vm127, %v59, 0
    %v192 = vsel %vm127, %v60, 0
    %v195 = vsel %vm127, %v61, 0
    %v198 = vsel %vm127, %v62, 0
    %v201 = vsel %vm127, %v63, 0
    %v204 = vsel %vm127, %v64, 0
    %v207 = vsel %vm127, %v65, 0
    %v210 = vsel %vm127, %v66, 0
    %v213 = vsel %vm127, %v67, 0
    %v216 = vsel %vm127, %v68, 0
    %v219 = vsel %vm127, %v69, 0
    %v222 = vsel %vm127, %v70, 0
    %v225 = vsel %vm127, %v71, 0
    %v228 = vsel %vm127, %v72, 0
    %v231 = vsel %vm127, %v73, 0
    %v234 = vsel %vm127, %v74, 0
    %v237 = vsel %vm127, %v75, 0
    %v240 = vsel %vm127, %v76, 0
    %v243 = vsel %vm127, %v77, 0
    %v246 = vsel %vm127, %v78, 0
    %v249 = vsel %vm127, %v79, 0
    %v252 = vsel %vm127, %v80, 0
    %v255 = vsel %vm127, %v81, 0
    %v258 = vsel %vm127, %v82, 0
    %v261 = vsel %vm127, %v83, 0
    %v264 = vsel %vm127, %v84, 0
    %v267 = vsel %vm127, %v85, 0
    %v270 = vsel %vm127, %v86, 0
    %v273 = vsel %vm127, %v87, 0
    %v276 = vsel %vm127, %v88, 0
    %v279 = vsel %vm127, %v89, 0
    %v282 = vsel %vm127, %v90, 0
    %v285 = vsel %vm127, %v91, 0
    %v288 = vsel %vm127, %v92, 0
    %v291 = vsel %vm127, %v93, 0
    %v294 = vsel %vm127, %v94, 0
    %v297 = vsel %vm127, %v95, 0
    %v300 = vsel %vm127, %v96, 0
    %v303 = vsel %vm127, %v97, 0
    %v306 = vsel %vm127, %v98, 0
    %v309 = vsel %vm127, %v99, 0
    %v312 = vsel %vm127, %v100, 0
    %v315 = vsel %vm127, %v101, 0
    %v318 = vsel %vm127, %v102, 0
    %320 = vmatprep.subr.mxu0 0.0
    %321 = vmatpush1.msra.mxu0 %v115
    %322 = vmatprep.subr.mxu0 0.0
    %323 = vmatpush1.msra.mxu0 %v116
    %324 = vmatprep.subr.mxu0 0.0
    %325 = vmatpush1.msra.mxu0 %v117
    %326 = vmatprep.subr.mxu0 0.0
    %327 = vmatpush1.msra.mxu0 %v118
    %328 = vmatprep.subr.mxu0 0.0
    %329 = vmatpush1.msra.mxu0 %v119
    %330 = vmatprep.subr.mxu0 0.0
    %331 = vmatpush1.msra.mxu0 %v120
    %332 = vmatprep.subr.mxu0 0.0
    %333 = vmatpush1.msra.mxu0 %v121
    %334 = vmatprep.subr.mxu0 0.0
    %335 = vmatpush1.msra.mxu0 %v122
    %336 = vmatprep.subr.mxu0 0.0
    %337 = vmatpush1.msra.mxu0 %v123
    %338 = vmatprep.subr.mxu0 0.0
    %339 = vmatpush1.msra.mxu0 %v124
    %340 = vmatprep.subr.mxu0 0.0
    %341 = vmatpush1.msra.mxu0 %v125
    %342 = vmatprep.subr.mxu0 0.0
    %343 = vmatpush1.msra.mxu0 %v126
    %344 = vmatprep.subr.mxu0 0.0
    %345 = vmatpush1.msra.mxu0 0.0
    %346 = vmatprep.subr.mxu0 0.0
    %347 = vmatpush1.msra.mxu0 0.0
    %348 = vmatprep.subr.mxu0 0.0
    %349 = vmatpush1.msra.mxu0 0.0
    %350 = vmatprep.subr.mxu0 0.0
    %351 = vmatpush1.msra.mxu0 0.0
    %352 = vmatprep.subr.mxu0 0.0
    %353 = vmatpush1.msra.mxu0 0.0
    %354 = vmatprep.subr.mxu0 0.0
    %355 = vmatpush1.msra.mxu0 0.0
    %356 = vmatprep.subr.mxu0 0.0
    %357 = vmatpush1.msra.mxu0 0.0
    %358 = vmatprep.subr.mxu0 0.0
    %359 = vmatpush1.msra.mxu0 0.0
    %360 = vmatprep.subr.mxu0 0.0
    %361 = vmatpush1.msra.mxu0 0.0
    %362 = vmatprep.subr.mxu0 0.0
    %363 = vmatpush1.msra.mxu0 0.0
    %364 = vmatprep.subr.mxu0 0.0
    %365 = vmatpush1.msra.mxu0 0.0
    %366 = vmatprep.subr.mxu0 0.0
    %367 = vmatpush1.msra.mxu0 0.0
    %368 = vmatprep.subr.mxu0 0.0
    %369 = vmatpush1.msra.mxu0 0.0
    %370 = vmatprep.subr.mxu0 0.0
    %371 = vmatpush1.msra.mxu0 0.0
    %372 = vmatprep.subr.mxu0 0.0
    %373 = vmatpush1.msra.mxu0 0.0
    %374 = vmatprep.subr.mxu0 0.0
    %375 = vmatpush1.msra.mxu0 0.0
    %376 = vmatprep.subr.mxu0 0.0
    %377 = vmatpush1.msra.mxu0 0.0
    %378 = vmatprep.subr.mxu0 0.0
    %379 = vmatpush1.msra.mxu0 0.0
    %380 = vmatprep.subr.mxu0 0.0
    %381 = vmatpush1.msra.mxu0 0.0
    %382 = vmatprep.subr.mxu0 0.0
    %383 = vmatpush1.msra.mxu0 0.0
    %384 = vmatprep.mubr.f32.mxu0 0.0
    %385 = vmatmul.mubr.f32.gmra.mrb[0].mxu0 %v129
    %v386 = vpop.f32.mrb[0].mxu0
    %v387 = vpop.f32.mrb[0].mxu0
    %388 = vmatprep.mubr.f32.mxu0 0.0
    %389 = vmatmul.mubr.f32.gmra.mrb[0].mxu0 %v132
    %v390 = vpop.f32.mrb[0].mxu0
    %v391 = vpop.f32.mrb[0].mxu0
    %392 = vmatprep.mubr.f32.mxu0 0.0
    %393 = vmatmul.mubr.f32.gmra.mrb[0].mxu0 %v135
    %v394 = vpop.f32.mrb[0].mxu0
    %v395 = vadd.f32 0.0, %v394
    %v396 = vpop.f32.mrb[0].mxu0
    %397 = vmatprep.mubr.f32.mxu0 0.0
    %398 = vmatmul.mubr.f32.gmra.mrb[0].mxu0 %v138
    %v399 = vpop.f32.mrb[0].mxu0
    %v400 = vadd.f32 0.0, %v399
    %v401 = vpop.f32.mrb[0].mxu0
    %402 = vmatprep.mubr.f32.mxu0 0.0
    %403 = vmatmul.mubr.f32.gmra.mrb[0].mxu0 %v141
    %v404 = vpop.f32.mrb[0].mxu0
    %v405 = vadd.f32 0.0, %v404
    %v406 = vpop.f32.mrb[0].mxu0
    %407 = vmatprep.mubr.f32.mxu0 0.0
    %408 = vmatmul.mubr.f32.gmra.mrb[0].mxu0 %v144
    %v409 = vpop.f32.mrb[0].mxu0
    %v410 = vadd.f32 0.0, %v409
    %v411 = vpop.f32.mrb[0].mxu0
    %412 = vmatprep.mubr.f32.mxu0 0.0
    %413 = vmatmul.mubr.f32.gmra.mrb[0].mxu0 %v147
    %v414 = vpop.f32.mrb[0].mxu0
    %v415 = vadd.f32 0.0, %v414
    %v416 = vpop.f32.mrb[0].mxu0
    %417 = vmatprep.mubr.f32.mxu0 0.0
    %418 = vmatmul.mubr.f32.gmra.mrb[0].mxu0 %v150
    %v419 = vpop.f32.mrb[0].mxu0
    %v420 = vadd.f32 0.0, %v419
    %v421 = vpop.f32.mrb[0].mxu0
    %422 = vmatprep.mubr.f32.mxu0 0.0
    %423 = vmatmul.mubr.f32.gmra.mrb[0].mxu0 %v153
    %v424 = vpop.f32.mrb[0].mxu0
    %v425 = vadd.f32 0.0, %v424
    %v426 = vpop.f32.mrb[0].mxu0
    %427 = vmatprep.mubr.f32.mxu0 0.0
    %428 = vmatmul.mubr.f32.gmra.mrb[0].mxu0 %v156
    %v429 = vpop.f32.mrb[0].mxu0
    %v430 = vadd.f32 0.0, %v429
    %v431 = vpop.f32.mrb[0].mxu0
    %432 = vmatprep.mubr.f32.mxu0 0.0
    %433 = vmatmul.mubr.f32.gmra.mrb[0].mxu0 %v159
    %v434 = vpop.f32.mrb[0].mxu0
    %v435 = vadd.f32 0.0, %v434
    %v436 = vpop.f32.mrb[0].mxu0
    %437 = vmatprep.mubr.f32.mxu0 0.0
    %438 = vmatmul.mubr.f32.gmra.mrb[0].mxu0 %v162
    %v439 = vpop.f32.mrb[0].mxu0
    %v440 = vadd.f32 0.0, %v439
    %v441 = vpop.f32.mrb[0].mxu0
    %442 = vmatprep.mubr.f32.mxu0 0.0
    %443 = vmatmul.mubr.f32.gmra.mrb[0].mxu0 %v165
    %v444 = vpop.f32.mrb[0].mxu0
    %v445 = vadd.f32 0.0, %v444
    %v446 = vpop.f32.mrb[0].mxu0
    %447 = vmatprep.mubr.f32.mxu0 0.0
    %448 = vmatmul.mubr.f32.gmra.mrb[0].mxu0 %v168
    %v449 = vpop.f32.mrb[0].mxu0
    %v450 = vadd.f32 0.0, %v449
    %v451 = vpop.f32.mrb[0].mxu0
    %452 = vmatprep.mubr.f32.mxu0 0.0
    %453 = vmatmul.mubr.f32.gmra.mrb[0].mxu0 %v171
    %v454 = vpop.f32.mrb[0].mxu0
    %v455 = vadd.f32 0.0, %v454
    %v456 = vpop.f32.mrb[0].mxu0
    %457 = vmatprep.mubr.f32.mxu0 0.0
    %458 = vmatmul.mubr.f32.gmra.mrb[0].mxu0 %v174
    %v459 = vpop.f32.mrb[0].mxu0
    %v460 = vadd.f32 0.0, %v459
    %v461 = vpop.f32.mrb[0].mxu0
    %462 = vmatprep.mubr.f32.mxu0 0.0
    %463 = vmatmul.mubr.f32.gmra.mrb[0].mxu0 %v177
    %v464 = vpop.f32.mrb[0].mxu0
    %v465 = vadd.f32 0.0, %v464
    %v466 = vpop.f32.mrb[0].mxu0
    %467 = vmatprep.mubr.f32.mxu0 0.0
    %468 = vmatmul.mubr.f32.gmra.mrb[0].mxu0 %v180
    %v469 = vpop.f32.mrb[0].mxu0
    %v470 = vadd.f32 0.0, %v469
    %v471 = vpop.f32.mrb[0].mxu0
    %472 = vmatprep.mubr.f32.mxu0 0.0
    %473 = vmatmul.mubr.f32.gmra.mrb[0].mxu0 %v183
    %v474 = vpop.f32.mrb[0].mxu0
    %v475 = vadd.f32 0.0, %v474
    %v476 = vpop.f32.mrb[0].mxu0
    %477 = vmatprep.mubr.f32.mxu0 0.0
    %478 = vmatmul.mubr.f32.gmra.mrb[0].mxu0 %v186
    %v479 = vpop.f32.mrb[0].mxu0
    %v480 = vadd.f32 0.0, %v479
    %v481 = vpop.f32.mrb[0].mxu0
    %482 = vmatprep.mubr.f32.mxu0 0.0
    %483 = vmatmul.mubr.f32.gmra.mrb[0].mxu0 %v189
    %v484 = vpop.f32.mrb[0].mxu0
    %v485 = vadd.f32 0.0, %v484
    %v486 = vpop.f32.mrb[0].mxu0
    %487 = vmatprep.mubr.f32.mxu0 0.0
    %488 = vmatmul.mubr.f32.gmra.mrb[0].mxu0 %v192
    %v489 = vpop.f32.mrb[0].mxu0
    %v490 = vadd.f32 0.0, %v489
    %v491 = vpop.f32.mrb[0].mxu0
    %492 = vmatprep.mubr.f32.mxu0 0.0
    %493 = vmatmul.mubr.f32.gmra.mrb[0].mxu0 %v195
    %v494 = vpop.f32.mrb[0].mxu0
    %v495 = vadd.f32 0.0, %v494
    %v496 = vpop.f32.mrb[0].mxu0
    %497 = vmatprep.mubr.f32.mxu0 0.0
    %498 = vmatmul.mubr.f32.gmra.mrb[0].mxu0 %v198
    %v499 = vpop.f32.mrb[0].mxu0
    %v500 = vadd.f32 0.0, %v499
    %v501 = vpop.f32.mrb[0].mxu0
    %502 = vmatprep.mubr.f32.mxu0 0.0
    %503 = vmatmul.mubr.f32.gmra.mrb[0].mxu0 %v201
    %v504 = vpop.f32.mrb[0].mxu0
    %v505 = vadd.f32 0.0, %v504
    %v506 = vpop.f32.mrb[0].mxu0
    %507 = vmatprep.mubr.f32.mxu0 0.0
    %508 = vmatmul.mubr.f32.gmra.mrb[0].mxu0 %v204
    %v509 = vpop.f32.mrb[0].mxu0
    %v510 = vadd.f32 0.0, %v509
    %v511 = vpop.f32.mrb[0].mxu0
    %512 = vmatprep.mubr.f32.mxu0 0.0
    %513 = vmatmul.mubr.f32.gmra.mrb[0].mxu0 %v207
    %v514 = vpop.f32.mrb[0].mxu0
    %v515 = vadd.f32 0.0, %v514
    %v516 = vpop.f32.mrb[0].mxu0
    %517 = vmatprep.mubr.f32.mxu0 0.0
    %518 = vmatmul.mubr.f32.gmra.mrb[0].mxu0 %v210
    %v519 = vpop.f32.mrb[0].mxu0
    %v520 = vadd.f32 0.0, %v519
    %v521 = vpop.f32.mrb[0].mxu0
    %522 = vmatprep.mubr.f32.mxu0 0.0
    %523 = vmatmul.mubr.f32.gmra.mrb[0].mxu0 %v213
    %v524 = vpop.f32.mrb[0].mxu0
    %v525 = vadd.f32 0.0, %v524
    %v526 = vpop.f32.mrb[0].mxu0
    %527 = vmatprep.mubr.f32.mxu0 0.0
    %528 = vmatmul.mubr.f32.gmra.mrb[0].mxu0 %v216
    %v529 = vpop.f32.mrb[0].mxu0
    %v530 = vadd.f32 0.0, %v529
    %v531 = vpop.f32.mrb[0].mxu0
    %532 = vmatprep.mubr.f32.mxu0 0.0
    %533 = vmatmul.mubr.f32.gmra.mrb[0].mxu0 %v219
    %v534 = vpop.f32.mrb[0].mxu0
    %v535 = vadd.f32 0.0, %v534
    %v536 = vpop.f32.mrb[0].mxu0
    %537 = vmatprep.mubr.f32.mxu0 0.0
    %538 = vmatmul.mubr.f32.gmra.mrb[0].mxu0 %v222
    %v539 = vpop.f32.mrb[0].mxu0
    %v540 = vadd.f32 0.0, %v539
    %v541 = vpop.f32.mrb[0].mxu0
    %542 = vmatprep.mubr.f32.mxu0 0.0
    %543 = vmatmul.mubr.f32.gmra.mrb[0].mxu0 %v225
    %v544 = vpop.f32.mrb[0].mxu0
    %v545 = vadd.f32 0.0, %v544
    %v546 = vpop.f32.mrb[0].mxu0
    %547 = vmatprep.mubr.f32.mxu0 0.0
    %548 = vmatmul.mubr.f32.gmra.mrb[0].mxu0 %v228
    %v549 = vpop.f32.mrb[0].mxu0
    %v550 = vadd.f32 0.0, %v549
    %v551 = vpop.f32.mrb[0].mxu0
    %552 = vmatprep.mubr.f32.mxu0 0.0
    %553 = vmatmul.mubr.f32.gmra.mrb[0].mxu0 %v231
    %v554 = vpop.f32.mrb[0].mxu0
    %v555 = vadd.f32 0.0, %v554
    %v556 = vpop.f32.mrb[0].mxu0
    %557 = vmatprep.mubr.f32.mxu0 0.0
    %558 = vmatmul.mubr.f32.gmra.mrb[0].mxu0 %v234
    %v559 = vpop.f32.mrb[0].mxu0
    %v560 = vadd.f32 0.0, %v559
    %v561 = vpop.f32.mrb[0].mxu0
    %562 = vmatprep.mubr.f32.mxu0 0.0
    %563 = vmatmul.mubr.f32.gmra.mrb[0].mxu0 %v237
    %v564 = vpop.f32.mrb[0].mxu0
    %v565 = vadd.f32 0.0, %v564
    %v566 = vpop.f32.mrb[0].mxu0
    %567 = vmatprep.mubr.f32.mxu0 0.0
    %568 = vmatmul.mubr.f32.gmra.mrb[0].mxu0 %v240
    %v569 = vpop.f32.mrb[0].mxu0
    %v570 = vadd.f32 0.0, %v569
    %v571 = vpop.f32.mrb[0].mxu0
    %572 = vmatprep.mubr.f32.mxu0 0.0
    %573 = vmatmul.mubr.f32.gmra.mrb[0].mxu0 %v243
    %v574 = vpop.f32.mrb[0].mxu0
    %v575 = vadd.f32 0.0, %v574
    %v576 = vpop.f32.mrb[0].mxu0
    %577 = vmatprep.mubr.f32.mxu0 0.0
    %578 = vmatmul.mubr.f32.gmra.mrb[0].mxu0 %v246
    %v579 = vpop.f32.mrb[0].mxu0
    %v580 = vadd.f32 0.0, %v579
    %v581 = vpop.f32.mrb[0].mxu0
    %582 = vmatprep.mubr.f32.mxu0 0.0
    %583 = vmatmul.mubr.f32.gmra.mrb[0].mxu0 %v249
    %v584 = vpop.f32.mrb[0].mxu0
    %v585 = vadd.f32 0.0, %v584
    %v586 = vpop.f32.mrb[0].mxu0
    %587 = vmatprep.mubr.f32.mxu0 0.0
    %588 = vmatmul.mubr.f32.gmra.mrb[0].mxu0 %v252
    %v589 = vpop.f32.mrb[0].mxu0
    %v590 = vadd.f32 0.0, %v589
    %v591 = vpop.f32.mrb[0].mxu0
    %592 = vmatprep.mubr.f32.mxu0 0.0
    %593 = vmatmul.mubr.f32.gmra.mrb[0].mxu0 %v255
    %v594 = vpop.f32.mrb[0].mxu0
    %v595 = vadd.f32 0.0, %v594
    %v596 = vpop.f32.mrb[0].mxu0
    %597 = vmatprep.mubr.f32.mxu0 0.0
    %598 = vmatmul.mubr.f32.gmra.mrb[0].mxu0 %v258
    %v599 = vpop.f32.mrb[0].mxu0
    %v600 = vadd.f32 0.0, %v599
    %v601 = vpop.f32.mrb[0].mxu0
    %602 = vmatprep.mubr.f32.mxu0 0.0
    %603 = vmatmul.mubr.f32.gmra.mrb[0].mxu0 %v261
    %v604 = vpop.f32.mrb[0].mxu0
    %v605 = vadd.f32 0.0, %v604
    %v606 = vpop.f32.mrb[0].mxu0
    %607 = vmatprep.mubr.f32.mxu0 0.0
    %608 = vmatmul.mubr.f32.gmra.mrb[0].mxu0 %v264
    %v609 = vpop.f32.mrb[0].mxu0
    %v610 = vadd.f32 0.0, %v609
    %v611 = vpop.f32.mrb[0].mxu0
    %612 = vmatprep.mubr.f32.mxu0 0.0
    %613 = vmatmul.mubr.f32.gmra.mrb[0].mxu0 %v267
    %v614 = vpop.f32.mrb[0].mxu0
    %v615 = vadd.f32 0.0, %v614
    %v616 = vpop.f32.mrb[0].mxu0
    %617 = vmatprep.mubr.f32.mxu0 0.0
    %618 = vmatmul.mubr.f32.gmra.mrb[0].mxu0 %v270
    %v619 = vpop.f32.mrb[0].mxu0
    %v620 = vadd.f32 0.0, %v619
    %v621 = vpop.f32.mrb[0].mxu0
    %622 = vmatprep.mubr.f32.mxu0 0.0
    %623 = vmatmul.mubr.f32.gmra.mrb[0].mxu0 %v273
    %v624 = vpop.f32.mrb[0].mxu0
    %v625 = vadd.f32 0.0, %v624
    %v626 = vpop.f32.mrb[0].mxu0
    %627 = vmatprep.mubr.f32.mxu0 0.0
    %628 = vmatmul.mubr.f32.gmra.mrb[0].mxu0 %v276
    %v629 = vpop.f32.mrb[0].mxu0
    %v630 = vadd.f32 0.0, %v629
    %v631 = vpop.f32.mrb[0].mxu0
    %632 = vmatprep.mubr.f32.mxu0 0.0
    %633 = vmatmul.mubr.f32.gmra.mrb[0].mxu0 %v279
    %v634 = vpop.f32.mrb[0].mxu0
    %v635 = vadd.f32 0.0, %v634
    %v636 = vpop.f32.mrb[0].mxu0
    %637 = vmatprep.mubr.f32.mxu0 0.0
    %638 = vmatmul.mubr.f32.gmra.mrb[0].mxu0 %v282
    %v639 = vpop.f32.mrb[0].mxu0
    %v640 = vadd.f32 0.0, %v639
    %v641 = vpop.f32.mrb[0].mxu0
    %642 = vmatprep.mubr.f32.mxu0 0.0
    %643 = vmatmul.mubr.f32.gmra.mrb[0].mxu0 %v285
    %v644 = vpop.f32.mrb[0].mxu0
    %v645 = vadd.f32 0.0, %v644
    %v646 = vpop.f32.mrb[0].mxu0
    %647 = vmatprep.mubr.f32.mxu0 0.0
    %648 = vmatmul.mubr.f32.gmra.mrb[0].mxu0 %v288
    %v649 = vpop.f32.mrb[0].mxu0
    %v650 = vadd.f32 0.0, %v649
    %v651 = vpop.f32.mrb[0].mxu0
    %652 = vmatprep.mubr.f32.mxu0 0.0
    %653 = vmatmul.mubr.f32.gmra.mrb[0].mxu0 %v291
    %v654 = vpop.f32.mrb[0].mxu0
    %v655 = vadd.f32 0.0, %v654
    %v656 = vpop.f32.mrb[0].mxu0
    %657 = vmatprep.mubr.f32.mxu0 0.0
    %658 = vmatmul.mubr.f32.gmra.mrb[0].mxu0 %v294
    %v659 = vpop.f32.mrb[0].mxu0
    %v660 = vadd.f32 0.0, %v659
    %v661 = vpop.f32.mrb[0].mxu0
    %662 = vmatprep.mubr.f32.mxu0 0.0
    %663 = vmatmul.mubr.f32.gmra.mrb[0].mxu0 %v297
    %v664 = vpop.f32.mrb[0].mxu0
    %v665 = vadd.f32 0.0, %v664
    %v666 = vpop.f32.mrb[0].mxu0
    %667 = vmatprep.mubr.f32.mxu0 0.0
    %668 = vmatmul.mubr.f32.gmra.mrb[0].mxu0 %v300
    %v669 = vpop.f32.mrb[0].mxu0
    %v670 = vadd.f32 0.0, %v669
    %v671 = vpop.f32.mrb[0].mxu0
    %672 = vmatprep.mubr.f32.mxu0 0.0
    %673 = vmatmul.mubr.f32.gmra.mrb[0].mxu0 %v303
    %v674 = vpop.f32.mrb[0].mxu0
    %v675 = vadd.f32 0.0, %v674
    %v676 = vpop.f32.mrb[0].mxu0
    %677 = vmatprep.mubr.f32.mxu0 0.0
    %678 = vmatmul.mubr.f32.gmra.mrb[0].mxu0 %v306
    %v679 = vpop.f32.mrb[0].mxu0
    %v680 = vadd.f32 0.0, %v679
    %v681 = vpop.f32.mrb[0].mxu0
    %682 = vmatprep.mubr.f32.mxu0 0.0
    %683 = vmatmul.mubr.f32.gmra.mrb[0].mxu0 %v309
    %v684 = vpop.f32.mrb[0].mxu0
    %v685 = vadd.f32 0.0, %v684
    %v686 = vpop.f32.mrb[0].mxu0
    %687 = vmatprep.mubr.f32.mxu0 0.0
    %688 = vmatmul.mubr.f32.gmra.mrb[0].mxu0 %v312
    %v689 = vpop.f32.mrb[0].mxu0
    %v690 = vadd.f32 0.0, %v689
    %v691 = vpop.f32.mrb[0].mxu0
    %692 = vmatprep.mubr.f32.mxu0 0.0
    %693 = vmatmul.mubr.f32.gmra.mrb[0].mxu0 %v315
    %v694 = vpop.f32.mrb[0].mxu0
    %v695 = vadd.f32 0.0, %v694
    %v696 = vpop.f32.mrb[0].mxu0
    %697 = vmatprep.mubr.f32.mxu0 0.0
    %698 = vmatmul.mubr.f32.gmra.mrb[0].mxu0 %v318
    %v699 = vpop.f32.mrb[0].mxu0
    %v700 = vadd.f32 0.0, %v699
    %v701 = vpop.f32.mrb[0].mxu0
    %702 = vdwg.mxu0
    %703 = vmatprep.subr.mxu0 0.0
    %704 = vmatpush1.msra.mxu0 %v103
    %705 = vmatprep.subr.mxu0 0.0
    %706 = vmatpush1.msra.mxu0 %v104
    %707 = vmatprep.subr.mxu0 0.0
    %708 = vmatpush1.msra.mxu0 %v105
    %709 = vmatprep.subr.mxu0 0.0
    %710 = vmatpush1.msra.mxu0 %v106
    %711 = vmatprep.subr.mxu0 0.0
    %712 = vmatpush1.msra.mxu0 %v107
    %713 = vmatprep.subr.mxu0 0.0
    %714 = vmatpush1.msra.mxu0 %v108
    %715 = vmatprep.subr.mxu0 0.0
    %716 = vmatpush1.msra.mxu0 %v109
    %717 = vmatprep.subr.mxu0 0.0
    %718 = vmatpush1.msra.mxu0 %v110
    %719 = vmatprep.subr.mxu0 0.0
    %720 = vmatpush1.msra.mxu0 %v111
    %721 = vmatprep.subr.mxu0 0.0
    %722 = vmatpush1.msra.mxu0 %v112
    %723 = vmatprep.subr.mxu0 0.0
    %724 = vmatpush1.msra.mxu0 %v113
    %725 = vmatprep.subr.mxu0 0.0
    %726 = vmatpush1.msra.mxu0 %v114
    %727 = vmatprep.subr.mxu0 0.0
    %728 = vmatpush1.msra.mxu0 0.0
    %729 = vmatprep.subr.mxu0 0.0
    %730 = vmatpush1.msra.mxu0 0.0
    %731 = vmatprep.subr.mxu0 0.0
    %732 = vmatpush1.msra.mxu0 0.0
    %733 = vmatprep.subr.mxu0 0.0
    %734 = vmatpush1.msra.mxu0 0.0
    %735 = vmatprep.subr.mxu0 0.0
    %736 = vmatpush1.msra.mxu0 0.0
    %737 = vmatprep.subr.mxu0 0.0
    %738 = vmatpush1.msra.mxu0 0.0
    %739 = vmatprep.subr.mxu0 0.0
    %740 = vmatpush1.msra.mxu0 0.0
    %741 = vmatprep.subr.mxu0 0.0
    %742 = vmatpush1.msra.mxu0 0.0
    %743 = vmatprep.subr.mxu0 0.0
    %744 = vmatpush1.msra.mxu0 0.0
    %745 = vmatprep.subr.mxu0 0.0
    %746 = vmatpush1.msra.mxu0 0.0
    %747 = vmatprep.subr.mxu0 0.0
    %748 = vmatpush1.msra.mxu0 0.0
    %749 = vmatprep.subr.mxu0 0.0
    %750 = vmatpush1.msra.mxu0 0.0
    %751 = vmatprep.subr.mxu0 0.0
    %752 = vmatpush1.msra.mxu0 0.0
    %753 = vmatprep.subr.mxu0 0.0
    %754 = vmatpush1.msra.mxu0 0.0
    %755 = vmatprep.subr.mxu0 0.0
    %756 = vmatpush1.msra.mxu0 0.0
    %757 = vmatprep.subr.mxu0 0.0
    %758 = vmatpush1.msra.mxu0 0.0
    %759 = vmatprep.subr.mxu0 0.0
    %760 = vmatpush1.msra.mxu0 0.0
    %761 = vmatprep.subr.mxu0 0.0
    %762 = vmatpush1.msra.mxu0 0.0
    %763 = vmatprep.subr.mxu0 0.0
    %764 = vmatpush1.msra.mxu0 0.0
    %765 = vmatprep.subr.mxu0 0.0
    %766 = vmatpush1.msra.mxu0 0.0
    %767 = vmatprep.mubr.f32.mxu0 0.0
    %768 = vmatmul.mubr.f32.gmra.mrb[0].mxu0 %v129
    %v769 = vpop.f32.mrb[0].mxu0
    %v770 = vadd.f32 %v395, %v769
    %v771 = vpop.f32.mrb[0].mxu0
    %772 = vmatprep.mubr.f32.mxu0 0.0
    %773 = vmatmul.mubr.f32.gmra.mrb[0].mxu0 %v132
    %v774 = vpop.f32.mrb[0].mxu0
    %v775 = vadd.f32 %v400, %v774
    %v776 = vpop.f32.mrb[0].mxu0
    %777 = vmatprep.mubr.f32.mxu0 0.0
    %778 = vmatmul.mubr.f32.gmra.mrb[0].mxu0 %v135
    %v779 = vpop.f32.mrb[0].mxu0
    %v780 = vadd.f32 %v405, %v779
    %v781 = vpop.f32.mrb[0].mxu0
    %782 = vmatprep.mubr.f32.mxu0 0.0
    %783 = vmatmul.mubr.f32.gmra.mrb[0].mxu0 %v138
    %v784 = vpop.f32.mrb[0].mxu0
    %v785 = vadd.f32 %v410, %v784
    %v786 = vpop.f32.mrb[0].mxu0
    %787 = vmatprep.mubr.f32.mxu0 0.0
    %788 = vmatmul.mubr.f32.gmra.mrb[0].mxu0 %v141
    %v789 = vpop.f32.mrb[0].mxu0
    %v790 = vadd.f32 %v415, %v789
    %v791 = vpop.f32.mrb[0].mxu0
    %792 = vmatprep.mubr.f32.mxu0 0.0
    %793 = vmatmul.mubr.f32.gmra.mrb[0].mxu0 %v144
    %v794 = vpop.f32.mrb[0].mxu0
    %v795 = vadd.f32 %v420, %v794
    %v796 = vpop.f32.mrb[0].mxu0
    %797 = vmatprep.mubr.f32.mxu0 0.0
    %798 = vmatmul.mubr.f32.gmra.mrb[0].mxu0 %v147
    %v799 = vpop.f32.mrb[0].mxu0
    %v800 = vadd.f32 %v425, %v799
    %v801 = vpop.f32.mrb[0].mxu0
    %802 = vmatprep.mubr.f32.mxu0 0.0
    %803 = vmatmul.mubr.f32.gmra.mrb[0].mxu0 %v150
    %v804 = vpop.f32.mrb[0].mxu0
    %v805 = vadd.f32 %v430, %v804
    %v806 = vpop.f32.mrb[0].mxu0
    %807 = vmatprep.mubr.f32.mxu0 0.0
    %808 = vmatmul.mubr.f32.gmra.mrb[0].mxu0 %v153
    %v809 = vpop.f32.mrb[0].mxu0
    %v810 = vadd.f32 %v435, %v809
    %v811 = vpop.f32.mrb[0].mxu0
    %812 = vmatprep.mubr.f32.mxu0 0.0
    %813 = vmatmul.mubr.f32.gmra.mrb[0].mxu0 %v156
    %v814 = vpop.f32.mrb[0].mxu0
    %v815 = vadd.f32 %v440, %v814
    %v816 = vpop.f32.mrb[0].mxu0
    %817 = vmatprep.mubr.f32.mxu0 0.0
    %818 = vmatmul.mubr.f32.gmra.mrb[0].mxu0 %v159
    %v819 = vpop.f32.mrb[0].mxu0
    %v820 = vadd.f32 %v445, %v819
    %v821 = vpop.f32.mrb[0].mxu0
    %822 = vmatprep.mubr.f32.mxu0 0.0
    %823 = vmatmul.mubr.f32.gmra.mrb[0].mxu0 %v162
    %v824 = vpop.f32.mrb[0].mxu0
    %v825 = vadd.f32 %v450, %v824
    %v826 = vpop.f32.mrb[0].mxu0
    %827 = vmatprep.mubr.f32.mxu0 0.0
    %828 = vmatmul.mubr.f32.gmra.mrb[0].mxu0 %v165
    %v829 = vpop.f32.mrb[0].mxu0
    %v830 = vadd.f32 %v455, %v829
    %v831 = vpop.f32.mrb[0].mxu0
    %832 = vmatprep.mubr.f32.mxu0 0.0
    %833 = vmatmul.mubr.f32.gmra.mrb[0].mxu0 %v168
    %v834 = vpop.f32.mrb[0].mxu0
    %v835 = vadd.f32 %v460, %v834
    %v836 = vpop.f32.mrb[0].mxu0
    %837 = vmatprep.mubr.f32.mxu0 0.0
    %838 = vmatmul.mubr.f32.gmra.mrb[0].mxu0 %v171
    %v839 = vpop.f32.mrb[0].mxu0
    %v840 = vadd.f32 %v465, %v839
    %v841 = vpop.f32.mrb[0].mxu0
    %842 = vmatprep.mubr.f32.mxu0 0.0
    %843 = vmatmul.mubr.f32.gmra.mrb[0].mxu0 %v174
    %v844 = vpop.f32.mrb[0].mxu0
    %v845 = vadd.f32 %v470, %v844
    %v846 = vpop.f32.mrb[0].mxu0
    %847 = vmatprep.mubr.f32.mxu0 0.0
    %848 = vmatmul.mubr.f32.gmra.mrb[0].mxu0 %v177
    %v849 = vpop.f32.mrb[0].mxu0
    %v850 = vadd.f32 %v475, %v849
    %v851 = vpop.f32.mrb[0].mxu0
    %852 = vmatprep.mubr.f32.mxu0 0.0
    %853 = vmatmul.mubr.f32.gmra.mrb[0].mxu0 %v180
    %v854 = vpop.f32.mrb[0].mxu0
    %v855 = vadd.f32 %v480, %v854
    %v856 = vpop.f32.mrb[0].mxu0
    %857 = vmatprep.mubr.f32.mxu0 0.0
    %858 = vmatmul.mubr.f32.gmra.mrb[0].mxu0 %v183
    %v859 = vpop.f32.mrb[0].mxu0
    %v860 = vadd.f32 %v485, %v859
    %v861 = vpop.f32.mrb[0].mxu0
    %862 = vmatprep.mubr.f32.mxu0 0.0
    %863 = vmatmul.mubr.f32.gmra.mrb[0].mxu0 %v186
    %v864 = vpop.f32.mrb[0].mxu0
    %v865 = vadd.f32 %v490, %v864
    %v866 = vpop.f32.mrb[0].mxu0
    %867 = vmatprep.mubr.f32.mxu0 0.0
    %868 = vmatmul.mubr.f32.gmra.mrb[0].mxu0 %v189
    %v869 = vpop.f32.mrb[0].mxu0
    %v870 = vadd.f32 %v495, %v869
    %v871 = vpop.f32.mrb[0].mxu0
    %872 = vmatprep.mubr.f32.mxu0 0.0
    %873 = vmatmul.mubr.f32.gmra.mrb[0].mxu0 %v192
    %v874 = vpop.f32.mrb[0].mxu0
    %v875 = vadd.f32 %v500, %v874
    %v876 = vpop.f32.mrb[0].mxu0
    %877 = vmatprep.mubr.f32.mxu0 0.0
    %878 = vmatmul.mubr.f32.gmra.mrb[0].mxu0 %v195
    %v879 = vpop.f32.mrb[0].mxu0
    %v880 = vadd.f32 %v505, %v879
    %v881 = vpop.f32.mrb[0].mxu0
    %882 = vmatprep.mubr.f32.mxu0 0.0
    %883 = vmatmul.mubr.f32.gmra.mrb[0].mxu0 %v198
    %v884 = vpop.f32.mrb[0].mxu0
    %v885 = vadd.f32 %v510, %v884
    %v886 = vpop.f32.mrb[0].mxu0
    %887 = vmatprep.mubr.f32.mxu0 0.0
    %888 = vmatmul.mubr.f32.gmra.mrb[0].mxu0 %v201
    %v889 = vpop.f32.mrb[0].mxu0
    %v890 = vadd.f32 %v515, %v889
    %v891 = vpop.f32.mrb[0].mxu0
    %892 = vmatprep.mubr.f32.mxu0 0.0
    %893 = vmatmul.mubr.f32.gmra.mrb[0].mxu0 %v204
    %v894 = vpop.f32.mrb[0].mxu0
    %v895 = vadd.f32 %v520, %v894
    %v896 = vpop.f32.mrb[0].mxu0
    %897 = vmatprep.mubr.f32.mxu0 0.0
    %898 = vmatmul.mubr.f32.gmra.mrb[0].mxu0 %v207
    %v899 = vpop.f32.mrb[0].mxu0
    %v900 = vadd.f32 %v525, %v899
    %v901 = vpop.f32.mrb[0].mxu0
    %902 = vmatprep.mubr.f32.mxu0 0.0
    %903 = vmatmul.mubr.f32.gmra.mrb[0].mxu0 %v210
    %v904 = vpop.f32.mrb[0].mxu0
    %v905 = vadd.f32 %v530, %v904
    %v906 = vpop.f32.mrb[0].mxu0
    %907 = vmatprep.mubr.f32.mxu0 0.0
    %908 = vmatmul.mubr.f32.gmra.mrb[0].mxu0 %v213
    %v909 = vpop.f32.mrb[0].mxu0
    %v910 = vadd.f32 %v535, %v909
    %v911 = vpop.f32.mrb[0].mxu0
    %912 = vmatprep.mubr.f32.mxu0 0.0
    %913 = vmatmul.mubr.f32.gmra.mrb[0].mxu0 %v216
    %v914 = vpop.f32.mrb[0].mxu0
    %v915 = vadd.f32 %v540, %v914
    %v916 = vpop.f32.mrb[0].mxu0
    %917 = vmatprep.mubr.f32.mxu0 0.0
    %918 = vmatmul.mubr.f32.gmra.mrb[0].mxu0 %v219
    %v919 = vpop.f32.mrb[0].mxu0
    %v920 = vadd.f32 %v545, %v919
    %v921 = vpop.f32.mrb[0].mxu0
    %922 = vmatprep.mubr.f32.mxu0 0.0
    %923 = vmatmul.mubr.f32.gmra.mrb[0].mxu0 %v222
    %v924 = vpop.f32.mrb[0].mxu0
    %v925 = vadd.f32 %v550, %v924
    %v926 = vpop.f32.mrb[0].mxu0
    %927 = vmatprep.mubr.f32.mxu0 0.0
    %928 = vmatmul.mubr.f32.gmra.mrb[0].mxu0 %v225
    %v929 = vpop.f32.mrb[0].mxu0
    %v930 = vadd.f32 %v555, %v929
    %v931 = vpop.f32.mrb[0].mxu0
    %932 = vmatprep.mubr.f32.mxu0 0.0
    %933 = vmatmul.mubr.f32.gmra.mrb[0].mxu0 %v228
    %v934 = vpop.f32.mrb[0].mxu0
    %v935 = vadd.f32 %v560, %v934
    %v936 = vpop.f32.mrb[0].mxu0
    %937 = vmatprep.mubr.f32.mxu0 0.0
    %938 = vmatmul.mubr.f32.gmra.mrb[0].mxu0 %v231
    %v939 = vpop.f32.mrb[0].mxu0
    %v940 = vadd.f32 %v565, %v939
    %v941 = vpop.f32.mrb[0].mxu0
    %942 = vmatprep.mubr.f32.mxu0 0.0
    %943 = vmatmul.mubr.f32.gmra.mrb[0].mxu0 %v234
    %v944 = vpop.f32.mrb[0].mxu0
    %v945 = vadd.f32 %v570, %v944
    %v946 = vpop.f32.mrb[0].mxu0
    %947 = vmatprep.mubr.f32.mxu0 0.0
    %948 = vmatmul.mubr.f32.gmra.mrb[0].mxu0 %v237
    %v949 = vpop.f32.mrb[0].mxu0
    %v950 = vadd.f32 %v575, %v949
    %v951 = vpop.f32.mrb[0].mxu0
    %952 = vmatprep.mubr.f32.mxu0 0.0
    %953 = vmatmul.mubr.f32.gmra.mrb[0].mxu0 %v240
    %v954 = vpop.f32.mrb[0].mxu0
    %v955 = vadd.f32 %v580, %v954
    %v956 = vpop.f32.mrb[0].mxu0
    %957 = vmatprep.mubr.f32.mxu0 0.0
    %958 = vmatmul.mubr.f32.gmra.mrb[0].mxu0 %v243
    %v959 = vpop.f32.mrb[0].mxu0
    %v960 = vadd.f32 %v585, %v959
    %v961 = vpop.f32.mrb[0].mxu0
    %962 = vmatprep.mubr.f32.mxu0 0.0
    %963 = vmatmul.mubr.f32.gmra.mrb[0].mxu0 %v246
    %v964 = vpop.f32.mrb[0].mxu0
    %v965 = vadd.f32 %v590, %v964
    %v966 = vpop.f32.mrb[0].mxu0
    %967 = vmatprep.mubr.f32.mxu0 0.0
    %968 = vmatmul.mubr.f32.gmra.mrb[0].mxu0 %v249
    %v969 = vpop.f32.mrb[0].mxu0
    %v970 = vadd.f32 %v595, %v969
    %v971 = vpop.f32.mrb[0].mxu0
    %972 = vmatprep.mubr.f32.mxu0 0.0
    %973 = vmatmul.mubr.f32.gmra.mrb[0].mxu0 %v252
    %v974 = vpop.f32.mrb[0].mxu0
    %v975 = vadd.f32 %v600, %v974
    %v976 = vpop.f32.mrb[0].mxu0
    %977 = vmatprep.mubr.f32.mxu0 0.0
    %978 = vmatmul.mubr.f32.gmra.mrb[0].mxu0 %v255
    %v979 = vpop.f32.mrb[0].mxu0
    %v980 = vadd.f32 %v605, %v979
    %v981 = vpop.f32.mrb[0].mxu0
    %982 = vmatprep.mubr.f32.mxu0 0.0
    %983 = vmatmul.mubr.f32.gmra.mrb[0].mxu0 %v258
    %v984 = vpop.f32.mrb[0].mxu0
    %v985 = vadd.f32 %v610, %v984
    %v986 = vpop.f32.mrb[0].mxu0
    %987 = vmatprep.mubr.f32.mxu0 0.0
    %988 = vmatmul.mubr.f32.gmra.mrb[0].mxu0 %v261
    %v989 = vpop.f32.mrb[0].mxu0
    %v990 = vadd.f32 %v615, %v989
    %v991 = vpop.f32.mrb[0].mxu0
    %992 = vmatprep.mubr.f32.mxu0 0.0
    %993 = vmatmul.mubr.f32.gmra.mrb[0].mxu0 %v264
    %v994 = vpop.f32.mrb[0].mxu0
    %v995 = vadd.f32 %v620, %v994
    %v996 = vpop.f32.mrb[0].mxu0
    %997 = vmatprep.mubr.f32.mxu0 0.0
    %998 = vmatmul.mubr.f32.gmra.mrb[0].mxu0 %v267
    %v999 = vpop.f32.mrb[0].mxu0
    %v1000 = vadd.f32 %v625, %v999
    %v1001 = vpop.f32.mrb[0].mxu0
    %1002 = vmatprep.mubr.f32.mxu0 0.0
    %1003 = vmatmul.mubr.f32.gmra.mrb[0].mxu0 %v270
    %v1004 = vpop.f32.mrb[0].mxu0
    %v1005 = vadd.f32 %v630, %v1004
    %v1006 = vpop.f32.mrb[0].mxu0
    %1007 = vmatprep.mubr.f32.mxu0 0.0
    %1008 = vmatmul.mubr.f32.gmra.mrb[0].mxu0 %v273
    %v1009 = vpop.f32.mrb[0].mxu0
    %v1010 = vadd.f32 %v635, %v1009
    %v1011 = vpop.f32.mrb[0].mxu0
    %1012 = vmatprep.mubr.f32.mxu0 0.0
    %1013 = vmatmul.mubr.f32.gmra.mrb[0].mxu0 %v276
    %v1014 = vpop.f32.mrb[0].mxu0
    %v1015 = vadd.f32 %v640, %v1014
    %v1016 = vpop.f32.mrb[0].mxu0
    %1017 = vmatprep.mubr.f32.mxu0 0.0
    %1018 = vmatmul.mubr.f32.gmra.mrb[0].mxu0 %v279
    %v1019 = vpop.f32.mrb[0].mxu0
    %v1020 = vadd.f32 %v645, %v1019
    %v1021 = vpop.f32.mrb[0].mxu0
    %1022 = vmatprep.mubr.f32.mxu0 0.0
    %1023 = vmatmul.mubr.f32.gmra.mrb[0].mxu0 %v282
    %v1024 = vpop.f32.mrb[0].mxu0
    %v1025 = vadd.f32 %v650, %v1024
    %v1026 = vpop.f32.mrb[0].mxu0
    %1027 = vmatprep.mubr.f32.mxu0 0.0
    %1028 = vmatmul.mubr.f32.gmra.mrb[0].mxu0 %v285
    %v1029 = vpop.f32.mrb[0].mxu0
    %v1030 = vadd.f32 %v655, %v1029
    %v1031 = vpop.f32.mrb[0].mxu0
    %1032 = vmatprep.mubr.f32.mxu0 0.0
    %1033 = vmatmul.mubr.f32.gmra.mrb[0].mxu0 %v288
    %v1034 = vpop.f32.mrb[0].mxu0
    %v1035 = vadd.f32 %v660, %v1034
    %v1036 = vpop.f32.mrb[0].mxu0
    %1037 = vmatprep.mubr.f32.mxu0 0.0
    %1038 = vmatmul.mubr.f32.gmra.mrb[0].mxu0 %v291
    %v1039 = vpop.f32.mrb[0].mxu0
    %v1040 = vadd.f32 %v665, %v1039
    %v1041 = vpop.f32.mrb[0].mxu0
    %1042 = vmatprep.mubr.f32.mxu0 0.0
    %1043 = vmatmul.mubr.f32.gmra.mrb[0].mxu0 %v294
    %v1044 = vpop.f32.mrb[0].mxu0
    %v1045 = vadd.f32 %v670, %v1044
    %v1046 = vpop.f32.mrb[0].mxu0
    %1047 = vmatprep.mubr.f32.mxu0 0.0
    %1048 = vmatmul.mubr.f32.gmra.mrb[0].mxu0 %v297
    %v1049 = vpop.f32.mrb[0].mxu0
    %v1050 = vadd.f32 %v675, %v1049
    %v1051 = vpop.f32.mrb[0].mxu0
    %1052 = vmatprep.mubr.f32.mxu0 0.0
    %1053 = vmatmul.mubr.f32.gmra.mrb[0].mxu0 %v300
    %v1054 = vpop.f32.mrb[0].mxu0
    %v1055 = vadd.f32 %v680, %v1054
    %v1056 = vpop.f32.mrb[0].mxu0
    %1057 = vmatprep.mubr.f32.mxu0 0.0
    %1058 = vmatmul.mubr.f32.gmra.mrb[0].mxu0 %v303
    %v1059 = vpop.f32.mrb[0].mxu0
    %v1060 = vadd.f32 %v685, %v1059
    %v1061 = vpop.f32.mrb[0].mxu0
    %1062 = vmatprep.mubr.f32.mxu0 0.0
    %1063 = vmatmul.mubr.f32.gmra.mrb[0].mxu0 %v306
    %v1064 = vpop.f32.mrb[0].mxu0
    %v1065 = vadd.f32 %v690, %v1064
    %v1066 = vpop.f32.mrb[0].mxu0
    %1067 = vmatprep.mubr.f32.mxu0 0.0
    %1068 = vmatmul.mubr.f32.gmra.mrb[0].mxu0 %v309
    %v1069 = vpop.f32.mrb[0].mxu0
    %v1070 = vadd.f32 %v695, %v1069
    %v1071 = vpop.f32.mrb[0].mxu0
    %1072 = vmatprep.mubr.f32.mxu0 0.0
    %1073 = vmatmul.mubr.f32.gmra.mrb[0].mxu0 %v312
    %v1074 = vpop.f32.mrb[0].mxu0
    %v1075 = vadd.f32 %v700, %v1074
    %v1076 = vpop.f32.mrb[0].mxu0
    %1077 = vmatprep.mubr.f32.mxu0 0.0
    %1078 = vmatmul.mubr.f32.gmra.mrb[0].mxu0 %v315
    %v1079 = vpop.f32.mrb[0].mxu0
    %v1080 = vadd.f32 0.0, %v1079
    %v1081 = vpop.f32.mrb[0].mxu0
    %1082 = vmatprep.mubr.f32.mxu0 0.0
    %1083 = vmatmul.mubr.f32.gmra.mrb[0].mxu0 %v318
    %v1084 = vpop.f32.mrb[0].mxu0
    %v1085 = vadd.f32 0.0, %v1084
    %v1086 = vpop.f32.mrb[0].mxu0
    %1087 = vdwg.mxu0
    %v1088 = vld [vmem:[%s1 + $0x10] sm:$0xff]
    %v1089 = vld [vmem:[%s1 + $0x38] sm:$0xff]
    %v1090 = vld [vmem:[%s1 + $0x60] sm:$0xff]
    %v1091 = vld [vmem:[%s1 + $0x88] sm:$0xff]
    %v1092 = vld [vmem:[%s1 + $0xb0] sm:$0xff]
    %v1093 = vld [vmem:[%s1 + $0xd8] sm:$0xff]
    %v1094 = vld [vmem:[%s1 + $0x100] sm:$0xff]
    %v1095 = vld [vmem:[%s1 + $0x128] sm:$0xff]
    %v1096 = vld [vmem:[%s1 + $0x150] sm:$0xff]
    %v1097 = vld [vmem:[%s1 + $0x178] sm:$0xff]
    %v1098 = vld [vmem:[%s1 + $0x1a0] sm:$0xff]
    %v1099 = vld [vmem:[%s1 + $0x1c8] sm:$0xff]
    %1100 = vmatprep.subr.mxu0 0.0
    %1101 = vmatpush1.msra.mxu0 %v1088
    %1102 = vmatprep.subr.mxu0 0.0
    %1103 = vmatpush1.msra.mxu0 %v1089
    %1104 = vmatprep.subr.mxu0 0.0
    %1105 = vmatpush1.msra.mxu0 %v1090
    %1106 = vmatprep.subr.mxu0 0.0
    %1107 = vmatpush1.msra.mxu0 %v1091
    %1108 = vmatprep.subr.mxu0 0.0
    %1109 = vmatpush1.msra.mxu0 %v1092
    %1110 = vmatprep.subr.mxu0 0.0
    %1111 = vmatpush1.msra.mxu0 %v1093
    %1112 = vmatprep.subr.mxu0 0.0
    %1113 = vmatpush1.msra.mxu0 %v1094
    %1114 = vmatprep.subr.mxu0 0.0
    %1115 = vmatpush1.msra.mxu0 %v1095
    %1116 = vmatprep.subr.mxu0 0.0
    %1117 = vmatpush1.msra.mxu0 %v1096
    %1118 = vmatprep.subr.mxu0 0.0
    %1119 = vmatpush1.msra.mxu0 %v1097
    %1120 = vmatprep.subr.mxu0 0.0
    %1121 = vmatpush1.msra.mxu0 %v1098
    %1122 = vmatprep.subr.mxu0 0.0
    %1123 = vmatpush1.msra.mxu0 %v1099
    %1124 = vmatprep.subr.mxu0 0.0
    %1125 = vmatpush1.msra.mxu0 0.0
    %1126 = vmatprep.subr.mxu0 0.0
    %1127 = vmatpush1.msra.mxu0 0.0
    %1128 = vmatprep.subr.mxu0 0.0
    %1129 = vmatpush1.msra.mxu0 0.0
    %1130 = vmatprep.subr.mxu0 0.0
    %1131 = vmatpush1.msra.mxu0 0.0
    %1132 = vmatprep.subr.mxu0 0.0
    %1133 = vmatpush1.msra.mxu0 0.0
    %1134 = vmatprep.subr.mxu0 0.0
    %1135 = vmatpush1.msra.mxu0 0.0
    %1136 = vmatprep.subr.mxu0 0.0
    %1137 = vmatpush1.msra.mxu0 0.0
    %1138 = vmatprep.subr.mxu0 0.0
    %1139 = vmatpush1.msra.mxu0 0.0
    %1140 = vmatprep.subr.mxu0 0.0
    %1141 = vmatpush1.msra.mxu0 0.0
    %1142 = vmatprep.subr.mxu0 0.0
    %1143 = vmatpush1.msra.mxu0 0.0
    %1144 = vmatprep.subr.mxu0 0.0
    %1145 = vmatpush1.msra.mxu0 0.0
    %1146 = vmatprep.subr.mxu0 0.0
    %1147 = vmatpush1.msra.mxu0 0.0
    %1148 = vmatprep.subr.mxu0 0.0
    %1149 = vmatpush1.msra.mxu0 0.0
    %1150 = vmatprep.subr.mxu0 0.0
    %1151 = vmatpush1.msra.mxu0 0.0
    %1152 = vmatprep.subr.mxu0 0.0
    %1153 = vmatpush1.msra.mxu0 0.0
    %1154 = vmatprep.subr.mxu0 0.0
    %1155 = vmatpush1.msra.mxu0 0.0
    %1156 = vmatprep.subr.mxu0 0.0
    %1157 = vmatpush1.msra.mxu0 0.0
    %1158 = vmatprep.subr.mxu0 0.0
    %1159 = vmatpush1.msra.mxu0 0.0
    %1160 = vmatprep.subr.mxu0 0.0
    %1161 = vmatpush1.msra.mxu0 0.0
    %1162 = vmatprep.subr.mxu0 0.0
    %1163 = vmatpush1.msra.mxu0 0.0
    %1164 = vmatprep.mubr.f32.mxu0 0.0
    %1165 = vmatmul.mubr.f32.gmra.mrb[0].mxu0 %v129
    %v1166 = vpop.f32.mrb[0].mxu0
    %v1167 = vpop.f32.mrb[0].mxu0
    %1168 = vmatprep.mubr.f32.mxu0 0.0
    %1169 = vmatmul.mubr.f32.gmra.mrb[0].mxu0 %v132
    %v1170 = vpop.f32.mrb[0].mxu0
    %v1171 = vpop.f32.mrb[0].mxu0
    %1172 = vmatprep.mubr.f32.mxu0 0.0
    %1173 = vmatmul.mubr.f32.gmra.mrb[0].mxu0 %v135
    %v1174 = vpop.f32.mrb[0].mxu0
    %v1175 = vpop.f32.mrb[0].mxu0
    %1176 = vmatprep.mubr.f32.mxu0 0.0
    %1177 = vmatmul.mubr.f32.gmra.mrb[0].mxu0 %v138
    %v1178 = vpop.f32.mrb[0].mxu0
    %v1179 = vpop.f32.mrb[0].mxu0
    %1180 = vmatprep.mubr.f32.mxu0 0.0
    %1181 = vmatmul.mubr.f32.gmra.mrb[0].mxu0 %v141
    %v1182 = vpop.f32.mrb[0].mxu0
    %v1183 = vadd.f32 0.0, %v1182
    %v1184 = vpop.f32.mrb[0].mxu0
    %1185 = vmatprep.mubr.f32.mxu0 0.0
    %1186 = vmatmul.mubr.f32.gmra.mrb[0].mxu0 %v144
    %v1187 = vpop.f32.mrb[0].mxu0
    %v1188 = vadd.f32 0.0, %v1187
    %v1189 = vpop.f32.mrb[0].mxu0
    %1190 = vmatprep.mubr.f32.mxu0 0.0
    %1191 = vmatmul.mubr.f32.gmra.mrb[0].mxu0 %v147
    %v1192 = vpop.f32.mrb[0].mxu0
    %v1193 = vadd.f32 0.0, %v1192
    %v1194 = vpop.f32.mrb[0].mxu0
    %1195 = vmatprep.mubr.f32.mxu0 0.0
    %1196 = vmatmul.mubr.f32.gmra.mrb[0].mxu0 %v150
    %v1197 = vpop.f32.mrb[0].mxu0
    %v1198 = vadd.f32 0.0, %v1197
    %v1199 = vpop.f32.mrb[0].mxu0
    %1200 = vmatprep.mubr.f32.mxu0 0.0
    %1201 = vmatmul.mubr.f32.gmra.mrb[0].mxu0 %v153
    %v1202 = vpop.f32.mrb[0].mxu0
    %v1203 = vadd.f32 0.0, %v1202
    %v1204 = vpop.f32.mrb[0].mxu0
    %1205 = vmatprep.mubr.f32.mxu0 0.0
    %1206 = vmatmul.mubr.f32.gmra.mrb[0].mxu0 %v156
    %v1207 = vpop.f32.mrb[0].mxu0
    %v1208 = vadd.f32 0.0, %v1207
    %v1209 = vpop.f32.mrb[0].mxu0
    %1210 = vmatprep.mubr.f32.mxu0 0.0
    %1211 = vmatmul.mubr.f32.gmra.mrb[0].mxu0 %v159
    %v1212 = vpop.f32.mrb[0].mxu0
    %v1213 = vadd.f32 0.0, %v1212
    %v1214 = vpop.f32.mrb[0].mxu0
    %1215 = vmatprep.mubr.f32.mxu0 0.0
    %1216 = vmatmul.mubr.f32.gmra.mrb[0].mxu0 %v162
    %v1217 = vpop.f32.mrb[0].mxu0
    %v1218 = vadd.f32 0.0, %v1217
    %v1219 = vpop.f32.mrb[0].mxu0
    %1220 = vmatprep.mubr.f32.mxu0 0.0
    %1221 = vmatmul.mubr.f32.gmra.mrb[0].mxu0 %v165
    %v1222 = vpop.f32.mrb[0].mxu0
    %v1223 = vadd.f32 0.0, %v1222
    %v1224 = vpop.f32.mrb[0].mxu0
    %1225 = vmatprep.mubr.f32.mxu0 0.0
    %1226 = vmatmul.mubr.f32.gmra.mrb[0].mxu0 %v168
    %v1227 = vpop.f32.mrb[0].mxu0
    %v1228 = vadd.f32 0.0, %v1227
    %v1229 = vpop.f32.mrb[0].mxu0
    %1230 = vmatprep.mubr.f32.mxu0 0.0
    %1231 = vmatmul.mubr.f32.gmra.mrb[0].mxu0 %v171
    %v1232 = vpop.f32.mrb[0].mxu0
    %v1233 = vadd.f32 0.0, %v1232
    %v1234 = vpop.f32.mrb[0].mxu0
    %1235 = vmatprep.mubr.f32.mxu0 0.0
    %1236 = vmatmul.mubr.f32.gmra.mrb[0].mxu0 %v174
    %v1237 = vpop.f32.mrb[0].mxu0
    %v1238 = vadd.f32 0.0, %v1237
    %v1239 = vpop.f32.mrb[0].mxu0
    %1240 = vmatprep.mubr.f32.mxu0 0.0
    %1241 = vmatmul.mubr.f32.gmra.mrb[0].mxu0 %v177
    %v1242 = vpop.f32.mrb[0].mxu0
    %v1243 = vadd.f32 0.0, %v1242
    %v1244 = vpop.f32.mrb[0].mxu0
    %1245 = vmatprep.mubr.f32.mxu0 0.0
    %1246 = vmatmul.mubr.f32.gmra.mrb[0].mxu0 %v180
    %v1247 = vpop.f32.mrb[0].mxu0
    %v1248 = vadd.f32 0.0, %v1247
    %v1249 = vpop.f32.mrb[0].mxu0
    %1250 = vmatprep.mubr.f32.mxu0 0.0
    %1251 = vmatmul.mubr.f32.gmra.mrb[0].mxu0 %v183
    %v1252 = vpop.f32.mrb[0].mxu0
    %v1253 = vadd.f32 0.0, %v1252
    %v1254 = vpop.f32.mrb[0].mxu0
    %1255 = vmatprep.mubr.f32.mxu0 0.0
    %1256 = vmatmul.mubr.f32.gmra.mrb[0].mxu0 %v186
    %v1257 = vpop.f32.mrb[0].mxu0
    %v1258 = vadd.f32 0.0, %v1257
    %v1259 = vpop.f32.mrb[0].mxu0
    %1260 = vmatprep.mubr.f32.mxu0 0.0
    %1261 = vmatmul.mubr.f32.gmra.mrb[0].mxu0 %v189
    %v1262 = vpop.f32.mrb[0].mxu0
    %v1263 = vadd.f32 0.0, %v1262
    %v1264 = vpop.f32.mrb[0].mxu0
    %1265 = vmatprep.mubr.f32.mxu0 0.0
    %1266 = vmatmul.mubr.f32.gmra.mrb[0].mxu0 %v192
    %v1267 = vpop.f32.mrb[0].mxu0
    %v1268 = vadd.f32 0.0, %v1267
    %v1269 = vpop.f32.mrb[0].mxu0
    %1270 = vmatprep.mubr.f32.mxu0 0.0
    %1271 = vmatmul.mubr.f32.gmra.mrb[0].mxu0 %v195
    %v1272 = vpop.f32.mrb[0].mxu0
    %v1273 = vadd.f32 0.0, %v1272
    %v1274 = vpop.f32.mrb[0].mxu0
    %1275 = vmatprep.mubr.f32.mxu0 0.0
    %1276 = vmatmul.mubr.f32.gmra.mrb[0].mxu0 %v198
    %v1277 = vpop.f32.mrb[0].mxu0
    %v1278 = vadd.f32 0.0, %v1277
    %v1279 = vpop.f32.mrb[0].mxu0
    %1280 = vmatprep.mubr.f32.mxu0 0.0
    %1281 = vmatmul.mubr.f32.gmra.mrb[0].mxu0 %v201
    %v1282 = vpop.f32.mrb[0].mxu0
    %v1283 = vadd.f32 0.0, %v1282
    %v1284 = vpop.f32.mrb[0].mxu0
    %1285 = vmatprep.mubr.f32.mxu0 0.0
    %1286 = vmatmul.mubr.f32.gmra.mrb[0].mxu0 %v204
    %v1287 = vpop.f32.mrb[0].mxu0
    %v1288 = vadd.f32 0.0, %v1287
    %v1289 = vpop.f32.mrb[0].mxu0
    %1290 = vmatprep.mubr.f32.mxu0 0.0
    %1291 = vmatmul.mubr.f32.gmra.mrb[0].mxu0 %v207
    %v1292 = vpop.f32.mrb[0].mxu0
    %v1293 = vadd.f32 0.0, %v1292
    %v1294 = vpop.f32.mrb[0].mxu0
    %1295 = vmatprep.mubr.f32.mxu0 0.0
    %1296 = vmatmul.mubr.f32.gmra.mrb[0].mxu0 %v210
    %v1297 = vpop.f32.mrb[0].mxu0
    %v1298 = vadd.f32 0.0, %v1297
    %v1299 = vpop.f32.mrb[0].mxu0
    %1300 = vmatprep.mubr.f32.mxu0 0.0
    %1301 = vmatmul.mubr.f32.gmra.mrb[0].mxu0 %v213
    %v1302 = vpop.f32.mrb[0].mxu0
    %v1303 = vadd.f32 0.0, %v1302
    %v1304 = vpop.f32.mrb[0].mxu0
    %1305 = vmatprep.mubr.f32.mxu0 0.0
    %1306 = vmatmul.mubr.f32.gmra.mrb[0].mxu0 %v216
    %v1307 = vpop.f32.mrb[0].mxu0
    %v1308 = vadd.f32 0.0, %v1307
    %v1309 = vpop.f32.mrb[0].mxu0
    %1310 = vmatprep.mubr.f32.mxu0 0.0
    %1311 = vmatmul.mubr.f32.gmra.mrb[0].mxu0 %v219
    %v1312 = vpop.f32.mrb[0].mxu0
    %v1313 = vadd.f32 0.0, %v1312
    %v1314 = vpop.f32.mrb[0].mxu0
    %1315 = vmatprep.mubr.f32.mxu0 0.0
    %1316 = vmatmul.mubr.f32.gmra.mrb[0].mxu0 %v222
    %v1317 = vpop.f32.mrb[0].mxu0
    %v1318 = vadd.f32 0.0, %v1317
    %v1319 = vpop.f32.mrb[0].mxu0
    %1320 = vmatprep.mubr.f32.mxu0 0.0
    %1321 = vmatmul.mubr.f32.gmra.mrb[0].mxu0 %v225
    %v1322 = vpop.f32.mrb[0].mxu0
    %v1323 = vadd.f32 0.0, %v1322
    %v1324 = vpop.f32.mrb[0].mxu0
    %1325 = vmatprep.mubr.f32.mxu0 0.0
    %1326 = vmatmul.mubr.f32.gmra.mrb[0].mxu0 %v228
    %v1327 = vpop.f32.mrb[0].mxu0
    %v1328 = vadd.f32 0.0, %v1327
    %v1329 = vpop.f32.mrb[0].mxu0
    %1330 = vmatprep.mubr.f32.mxu0 0.0
    %1331 = vmatmul.mubr.f32.gmra.mrb[0].mxu0 %v231
    %v1332 = vpop.f32.mrb[0].mxu0
    %v1333 = vadd.f32 0.0, %v1332
    %v1334 = vpop.f32.mrb[0].mxu0
    %1335 = vmatprep.mubr.f32.mxu0 0.0
    %1336 = vmatmul.mubr.f32.gmra.mrb[0].mxu0 %v234
    %v1337 = vpop.f32.mrb[0].mxu0
    %v1338 = vadd.f32 0.0, %v1337
    %v1339 = vpop.f32.mrb[0].mxu0
    %1340 = vmatprep.mubr.f32.mxu0 0.0
    %1341 = vmatmul.mubr.f32.gmra.mrb[0].mxu0 %v237
    %v1342 = vpop.f32.mrb[0].mxu0
    %v1343 = vadd.f32 0.0, %v1342
    %v1344 = vpop.f32.mrb[0].mxu0
    %1345 = vmatprep.mubr.f32.mxu0 0.0
    %1346 = vmatmul.mubr.f32.gmra.mrb[0].mxu0 %v240
    %v1347 = vpop.f32.mrb[0].mxu0
    %v1348 = vadd.f32 0.0, %v1347
    %v1349 = vpop.f32.mrb[0].mxu0
    %1350 = vmatprep.mubr.f32.mxu0 0.0
    %1351 = vmatmul.mubr.f32.gmra.mrb[0].mxu0 %v243
    %v1352 = vpop.f32.mrb[0].mxu0
    %v1353 = vadd.f32 0.0, %v1352
    %v1354 = vpop.f32.mrb[0].mxu0
    %1355 = vmatprep.mubr.f32.mxu0 0.0
    %1356 = vmatmul.mubr.f32.gmra.mrb[0].mxu0 %v246
    %v1357 = vpop.f32.mrb[0].mxu0
    %v1358 = vadd.f32 0.0, %v1357
    %v1359 = vpop.f32.mrb[0].mxu0
    %1360 = vmatprep.mubr.f32.mxu0 0.0
    %1361 = vmatmul.mubr.f32.gmra.mrb[0].mxu0 %v249
    %v1362 = vpop.f32.mrb[0].mxu0
    %v1363 = vadd.f32 0.0, %v1362
    %v1364 = vpop.f32.mrb[0].mxu0
    %1365 = vmatprep.mubr.f32.mxu0 0.0
    %1366 = vmatmul.mubr.f32.gmra.mrb[0].mxu0 %v252
    %v1367 = vpop.f32.mrb[0].mxu0
    %v1368 = vadd.f32 0.0, %v1367
    %v1369 = vpop.f32.mrb[0].mxu0
    %1370 = vmatprep.mubr.f32.mxu0 0.0
    %1371 = vmatmul.mubr.f32.gmra.mrb[0].mxu0 %v255
    %v1372 = vpop.f32.mrb[0].mxu0
    %v1373 = vadd.f32 0.0, %v1372
    %v1374 = vpop.f32.mrb[0].mxu0
    %1375 = vmatprep.mubr.f32.mxu0 0.0
    %1376 = vmatmul.mubr.f32.gmra.mrb[0].mxu0 %v258
    %v1377 = vpop.f32.mrb[0].mxu0
    %v1378 = vadd.f32 0.0, %v1377
    %v1379 = vpop.f32.mrb[0].mxu0
    %1380 = vmatprep.mubr.f32.mxu0 0.0
    %1381 = vmatmul.mubr.f32.gmra.mrb[0].mxu0 %v261
    %v1382 = vpop.f32.mrb[0].mxu0
    %v1383 = vadd.f32 0.0, %v1382
    %v1384 = vpop.f32.mrb[0].mxu0
    %1385 = vmatprep.mubr.f32.mxu0 0.0
    %1386 = vmatmul.mubr.f32.gmra.mrb[0].mxu0 %v264
    %v1387 = vpop.f32.mrb[0].mxu0
    %v1388 = vadd.f32 0.0, %v1387
    %v1389 = vpop.f32.mrb[0].mxu0
    %1390 = vmatprep.mubr.f32.mxu0 0.0
    %1391 = vmatmul.mubr.f32.gmra.mrb[0].mxu0 %v267
    %v1392 = vpop.f32.mrb[0].mxu0
    %v1393 = vadd.f32 0.0, %v1392
    %v1394 = vpop.f32.mrb[0].mxu0
    %1395 = vmatprep.mubr.f32.mxu0 0.0
    %1396 = vmatmul.mubr.f32.gmra.mrb[0].mxu0 %v270
    %v1397 = vpop.f32.mrb[0].mxu0
    %v1398 = vadd.f32 0.0, %v1397
    %v1399 = vpop.f32.mrb[0].mxu0
    %1400 = vmatprep.mubr.f32.mxu0 0.0
    %1401 = vmatmul.mubr.f32.gmra.mrb[0].mxu0 %v273
    %v1402 = vpop.f32.mrb[0].mxu0
    %v1403 = vadd.f32 0.0, %v1402
    %v1404 = vpop.f32.mrb[0].mxu0
    %1405 = vmatprep.mubr.f32.mxu0 0.0
    %1406 = vmatmul.mubr.f32.gmra.mrb[0].mxu0 %v276
    %v1407 = vpop.f32.mrb[0].mxu0
    %v1408 = vadd.f32 0.0, %v1407
    %v1409 = vpop.f32.mrb[0].mxu0
    %1410 = vmatprep.mubr.f32.mxu0 0.0
    %1411 = vmatmul.mubr.f32.gmra.mrb[0].mxu0 %v279
    %v1412 = vpop.f32.mrb[0].mxu0
    %v1413 = vadd.f32 0.0, %v1412
    %v1414 = vpop.f32.mrb[0].mxu0
    %1415 = vmatprep.mubr.f32.mxu0 0.0
    %1416 = vmatmul.mubr.f32.gmra.mrb[0].mxu0 %v282
    %v1417 = vpop.f32.mrb[0].mxu0
    %v1418 = vadd.f32 0.0, %v1417
    %v1419 = vpop.f32.mrb[0].mxu0
    %1420 = vmatprep.mubr.f32.mxu0 0.0
    %1421 = vmatmul.mubr.f32.gmra.mrb[0].mxu0 %v285
    %v1422 = vpop.f32.mrb[0].mxu0
    %v1423 = vadd.f32 0.0, %v1422
    %v1424 = vpop.f32.mrb[0].mxu0
    %1425 = vmatprep.mubr.f32.mxu0 0.0
    %1426 = vmatmul.mubr.f32.gmra.mrb[0].mxu0 %v288
    %v1427 = vpop.f32.mrb[0].mxu0
    %v1428 = vadd.f32 0.0, %v1427
    %v1429 = vpop.f32.mrb[0].mxu0
    %1430 = vmatprep.mubr.f32.mxu0 0.0
    %1431 = vmatmul.mubr.f32.gmra.mrb[0].mxu0 %v291
    %v1432 = vpop.f32.mrb[0].mxu0
    %v1433 = vadd.f32 0.0, %v1432
    %v1434 = vpop.f32.mrb[0].mxu0
    %1435 = vmatprep.mubr.f32.mxu0 0.0
    %1436 = vmatmul.mubr.f32.gmra.mrb[0].mxu0 %v294
    %v1437 = vpop.f32.mrb[0].mxu0
    %v1438 = vadd.f32 0.0, %v1437
    %v1439 = vpop.f32.mrb[0].mxu0
    %1440 = vmatprep.mubr.f32.mxu0 0.0
    %1441 = vmatmul.mubr.f32.gmra.mrb[0].mxu0 %v297
    %v1442 = vpop.f32.mrb[0].mxu0
    %v1443 = vadd.f32 0.0, %v1442
    %v1444 = vpop.f32.mrb[0].mxu0
    %1445 = vmatprep.mubr.f32.mxu0 0.0
    %1446 = vmatmul.mubr.f32.gmra.mrb[0].mxu0 %v300
    %v1447 = vpop.f32.mrb[0].mxu0
    %v1448 = vadd.f32 0.0, %v1447
    %v1449 = vpop.f32.mrb[0].mxu0
    %1450 = vmatprep.mubr.f32.mxu0 0.0
    %1451 = vmatmul.mubr.f32.gmra.mrb[0].mxu0 %v303
    %v1452 = vpop.f32.mrb[0].mxu0
    %v1453 = vadd.f32 0.0, %v1452
    %v1454 = vpop.f32.mrb[0].mxu0
    %1455 = vmatprep.mubr.f32.mxu0 0.0
    %1456 = vmatmul.mubr.f32.gmra.mrb[0].mxu0 %v306
    %v1457 = vpop.f32.mrb[0].mxu0
    %v1458 = vadd.f32 0.0, %v1457
    %v1459 = vpop.f32.mrb[0].mxu0
    %1460 = vmatprep.mubr.f32.mxu0 0.0
    %1461 = vmatmul.mubr.f32.gmra.mrb[0].mxu0 %v309
    %v1462 = vpop.f32.mrb[0].mxu0
    %v1463 = vadd.f32 0.0, %v1462
    %v1464 = vpop.f32.mrb[0].mxu0
    %1465 = vmatprep.mubr.f32.mxu0 0.0
    %1466 = vmatmul.mubr.f32.gmra.mrb[0].mxu0 %v312
    %v1467 = vpop.f32.mrb[0].mxu0
    %v1468 = vadd.f32 0.0, %v1467
    %v1469 = vpop.f32.mrb[0].mxu0
    %1470 = vmatprep.mubr.f32.mxu0 0.0
    %1471 = vmatmul.mubr.f32.gmra.mrb[0].mxu0 %v315
    %v1472 = vpop.f32.mrb[0].mxu0
    %v1473 = vadd.f32 0.0, %v1472
    %v1474 = vpop.f32.mrb[0].mxu0
    %1475 = vmatprep.mubr.f32.mxu0 0.0
    %1476 = vmatmul.mubr.f32.gmra.mrb[0].mxu0 %v318
    %v1477 = vpop.f32.mrb[0].mxu0
    %v1478 = vadd.f32 0.0, %v1477
    %v1479 = vpop.f32.mrb[0].mxu0
    %1480 = vdwg.mxu0
    %v1481 = vadd.f32 %v770, %v1183
    %v1482 = vadd.f32 %v775, %v1188
    %v1483 = vadd.f32 %v780, %v1193
    %v1484 = vadd.f32 %v785, %v1198
    %v1485 = vadd.f32 %v790, %v1203
    %v1486 = vadd.f32 %v795, %v1208
    %v1487 = vadd.f32 %v800, %v1213
    %v1488 = vadd.f32 %v805, %v1218
    %v1489 = vadd.f32 %v810, %v1223
    %v1490 = vadd.f32 %v815, %v1228
    %v1491 = vadd.f32 %v820, %v1233
    %v1492 = vadd.f32 %v825, %v1238
    %v1493 = vadd.f32 %v830, %v1243
    %v1494 = vadd.f32 %v835, %v1248
    %v1495 = vadd.f32 %v840, %v1253
    %v1496 = vadd.f32 %v845, %v1258
    %v1497 = vadd.f32 %v850, %v1263
    %v1498 = vadd.f32 %v855, %v1268
    %v1499 = vadd.f32 %v860, %v1273
    %v1500 = vadd.f32 %v865, %v1278
    %v1501 = vadd.f32 %v870, %v1283
    %v1502 = vadd.f32 %v875, %v1288
    %v1503 = vadd.f32 %v880, %v1293
    %v1504 = vadd.f32 %v885, %v1298
    %v1505 = vadd.f32 %v890, %v1303
    %v1506 = vadd.f32 %v895, %v1308
    %v1507 = vadd.f32 %v900, %v1313
    %v1508 = vadd.f32 %v905, %v1318
    %v1509 = vadd.f32 %v910, %v1323
    %v1510 = vadd.f32 %v915, %v1328
    %v1511 = vadd.f32 %v920, %v1333
    %v1512 = vadd.f32 %v925, %v1338
    %v1513 = vadd.f32 %v930, %v1343
    %v1514 = vadd.f32 %v935, %v1348
    %v1515 = vadd.f32 %v940, %v1353
    %v1516 = vadd.f32 %v945, %v1358
    %v1517 = vadd.f32 %v950, %v1363
    %v1518 = vadd.f32 %v955, %v1368
    %v1519 = vadd.f32 %v960, %v1373
    %v1520 = vadd.f32 %v965, %v1378
    %v1521 = vadd.f32 %v970, %v1383
    %v1522 = vadd.f32 %v975, %v1388
    %v1523 = vadd.f32 %v980, %v1393
    %v1524 = vadd.f32 %v985, %v1398
    %v1525 = vadd.f32 %v990, %v1403
    %v1526 = vadd.f32 %v995, %v1408
    %v1527 = vadd.f32 %v1000, %v1413
    %v1528 = vadd.f32 %v1005, %v1418
    %v1529 = vadd.f32 %v1010, %v1423
    %v1530 = vadd.f32 %v1015, %v1428
    %v1531 = vadd.f32 %v1020, %v1433
    %v1532 = vadd.f32 %v1025, %v1438
    %v1533 = vadd.f32 %v1030, %v1443
    %v1534 = vadd.f32 %v1035, %v1448
    %v1535 = vadd.f32 %v1040, %v1453
    %v1536 = vadd.f32 %v1045, %v1458
    %v1537 = vadd.f32 %v1050, %v1463
    %v1538 = vadd.f32 %v1055, %v1468
    %v1539 = vadd.f32 %v1060, %v1473
    %v1540 = vadd.f32 %v1065, %v1478
    %v1541 = vadd.f32 %v1070, 0.0
    %v1542 = vadd.f32 %v1075, 0.0
    %v1543 = vadd.f32 %v1080, 0.0
    %v1544 = vadd.f32 %v1085, 0.0
    %v1545 = vld [vmem:[%s1 + $0x18] sm:$0xff]
    %v1546 = vld [vmem:[%s1 + $0x40] sm:$0xff]
    %v1547 = vld [vmem:[%s1 + $0x68] sm:$0xff]
    %v1548 = vld [vmem:[%s1 + $0x90] sm:$0xff]
    %v1549 = vld [vmem:[%s1 + $0xb8] sm:$0xff]
    %v1550 = vld [vmem:[%s1 + $0xe0] sm:$0xff]
    %v1551 = vld [vmem:[%s1 + $0x108] sm:$0xff]
    %v1552 = vld [vmem:[%s1 + $0x130] sm:$0xff]
    %v1553 = vld [vmem:[%s1 + $0x158] sm:$0xff]
    %v1554 = vld [vmem:[%s1 + $0x180] sm:$0xff]
    %v1555 = vld [vmem:[%s1 + $0x1a8] sm:$0xff]
    %v1556 = vld [vmem:[%s1 + $0x1d0] sm:$0xff]
    %1557 = vmatprep.subr.mxu0 0.0
    %1558 = vmatpush1.msra.mxu0 %v1545
    %1559 = vmatprep.subr.mxu0 0.0
    %1560 = vmatpush1.msra.mxu0 %v1546
    %1561 = vmatprep.subr.mxu0 0.0
    %1562 = vmatpush1.msra.mxu0 %v1547
    %1563 = vmatprep.subr.mxu0 0.0
    %1564 = vmatpush1.msra.mxu0 %v1548
    %1565 = vmatprep.subr.mxu0 0.0
    %1566 = vmatpush1.msra.mxu0 %v1549
    %1567 = vmatprep.subr.mxu0 0.0
    %1568 = vmatpush1.msra.mxu0 %v1550
    %1569 = vmatprep.subr.mxu0 0.0
    %1570 = vmatpush1.msra.mxu0 %v1551
    %1571 = vmatprep.subr.mxu0 0.0
    %1572 = vmatpush1.msra.mxu0 %v1552
    %1573 = vmatprep.subr.mxu0 0.0
    %1574 = vmatpush1.msra.mxu0 %v1553
    %1575 = vmatprep.subr.mxu0 0.0
    %1576 = vmatpush1.msra.mxu0 %v1554
    %1577 = vmatprep.subr.mxu0 0.0
    %1578 = vmatpush1.msra.mxu0 %v1555
    %1579 = vmatprep.subr.mxu0 0.0
    %1580 = vmatpush1.msra.mxu0 %v1556
    %1581 = vmatprep.subr.mxu0 0.0
    %1582 = vmatpush1.msra.mxu0 0.0
    %1583 = vmatprep.subr.mxu0 0.0
    %1584 = vmatpush1.msra.mxu0 0.0
    %1585 = vmatprep.subr.mxu0 0.0
    %1586 = vmatpush1.msra.mxu0 0.0
    %1587 = vmatprep.subr.mxu0 0.0
    %1588 = vmatpush1.msra.mxu0 0.0
    %1589 = vmatprep.subr.mxu0 0.0
    %1590 = vmatpush1.msra.mxu0 0.0
    %1591 = vmatprep.subr.mxu0 0.0
    %1592 = vmatpush1.msra.mxu0 0.0
    %1593 = vmatprep.subr.mxu0 0.0
    %1594 = vmatpush1.msra.mxu0 0.0
    %1595 = vmatprep.subr.mxu0 0.0
    %1596 = vmatpush1.msra.mxu0 0.0
    %1597 = vmatprep.subr.mxu0 0.0
    %1598 = vmatpush1.msra.mxu0 0.0
    %1599 = vmatprep.subr.mxu0 0.0
    %1600 = vmatpush1.msra.mxu0 0.0
    %1601 = vmatprep.subr.mxu0 0.0
    %1602 = vmatpush1.msra.mxu0 0.0
    %1603 = vmatprep.subr.mxu0 0.0
    %1604 = vmatpush1.msra.mxu0 0.0
    %1605 = vmatprep.subr.mxu0 0.0
    %1606 = vmatpush1.msra.mxu0 0.0
    %1607 = vmatprep.subr.mxu0 0.0
    %1608 = vmatpush1.msra.mxu0 0.0
    %1609 = vmatprep.subr.mxu0 0.0
    %1610 = vmatpush1.msra.mxu0 0.0
    %1611 = vmatprep.subr.mxu0 0.0
    %1612 = vmatpush1.msra.mxu0 0.0
    %1613 = vmatprep.subr.mxu0 0.0
    %1614 = vmatpush1.msra.mxu0 0.0
    %1615 = vmatprep.subr.mxu0 0.0
    %1616 = vmatpush1.msra.mxu0 0.0
    %1617 = vmatprep.subr.mxu0 0.0
    %1618 = vmatpush1.msra.mxu0 0.0
    %1619 = vmatprep.subr.mxu0 0.0
    %1620 = vmatpush1.msra.mxu0 0.0
    %1621 = vmatprep.mubr.f32.mxu0 0.0
    %1622 = vmatmul.mubr.f32.gmra.mrb[0].mxu0 %v129
    %v1623 = vpop.f32.mrb[0].mxu0
    %v1624 = vpop.f32.mrb[0].mxu0
    %1625 = vmatprep.mubr.f32.mxu0 0.0
    %1626 = vmatmul.mubr.f32.gmra.mrb[0].mxu0 %v132
    %v1627 = vpop.f32.mrb[0].mxu0
    %v1628 = vpop.f32.mrb[0].mxu0
    %1629 = vmatprep.mubr.f32.mxu0 0.0
    %1630 = vmatmul.mubr.f32.gmra.mrb[0].mxu0 %v135
    %v1631 = vpop.f32.mrb[0].mxu0
    %v1632 = vpop.f32.mrb[0].mxu0
    %1633 = vmatprep.mubr.f32.mxu0 0.0
    %1634 = vmatmul.mubr.f32.gmra.mrb[0].mxu0 %v138
    %v1635 = vpop.f32.mrb[0].mxu0
    %v1636 = vpop.f32.mrb[0].mxu0
    %1637 = vmatprep.mubr.f32.mxu0 0.0
    %1638 = vmatmul.mubr.f32.gmra.mrb[0].mxu0 %v141
    %v1639 = vpop.f32.mrb[0].mxu0
    %v1640 = vpop.f32.mrb[0].mxu0
    %1641 = vmatprep.mubr.f32.mxu0 0.0
    %1642 = vmatmul.mubr.f32.gmra.mrb[0].mxu0 %v144
    %v1643 = vpop.f32.mrb[0].mxu0
    %v1644 = vpop.f32.mrb[0].mxu0
    %1645 = vmatprep.mubr.f32.mxu0 0.0
    %1646 = vmatmul.mubr.f32.gmra.mrb[0].mxu0 %v147
    %v1647 = vpop.f32.mrb[0].mxu0
    %v1648 = vadd.f32 0.0, %v1647
    %v1649 = vpop.f32.mrb[0].mxu0
    %1650 = vmatprep.mubr.f32.mxu0 0.0
    %1651 = vmatmul.mubr.f32.gmra.mrb[0].mxu0 %v150
    %v1652 = vpop.f32.mrb[0].mxu0
    %v1653 = vadd.f32 0.0, %v1652
    %v1654 = vpop.f32.mrb[0].mxu0
    %1655 = vmatprep.mubr.f32.mxu0 0.0
    %1656 = vmatmul.mubr.f32.gmra.mrb[0].mxu0 %v153
    %v1657 = vpop.f32.mrb[0].mxu0
    %v1658 = vadd.f32 0.0, %v1657
    %v1659 = vpop.f32.mrb[0].mxu0
    %1660 = vmatprep.mubr.f32.mxu0 0.0
    %1661 = vmatmul.mubr.f32.gmra.mrb[0].mxu0 %v156
    %v1662 = vpop.f32.mrb[0].mxu0
    %v1663 = vadd.f32 0.0, %v1662
    %v1664 = vpop.f32.mrb[0].mxu0
    %1665 = vmatprep.mubr.f32.mxu0 0.0
    %1666 = vmatmul.mubr.f32.gmra.mrb[0].mxu0 %v159
    %v1667 = vpop.f32.mrb[0].mxu0
    %v1668 = vadd.f32 0.0, %v1667
    %v1669 = vpop.f32.mrb[0].mxu0
    %1670 = vmatprep.mubr.f32.mxu0 0.0
    %1671 = vmatmul.mubr.f32.gmra.mrb[0].mxu0 %v162
    %v1672 = vpop.f32.mrb[0].mxu0
    %v1673 = vadd.f32 0.0, %v1672
    %v1674 = vpop.f32.mrb[0].mxu0
    %1675 = vmatprep.mubr.f32.mxu0 0.0
    %1676 = vmatmul.mubr.f32.gmra.mrb[0].mxu0 %v165
    %v1677 = vpop.f32.mrb[0].mxu0
    %v1678 = vadd.f32 0.0, %v1677
    %v1679 = vpop.f32.mrb[0].mxu0
    %1680 = vmatprep.mubr.f32.mxu0 0.0
    %1681 = vmatmul.mubr.f32.gmra.mrb[0].mxu0 %v168
    %v1682 = vpop.f32.mrb[0].mxu0
    %v1683 = vadd.f32 0.0, %v1682
    %v1684 = vpop.f32.mrb[0].mxu0
    %1685 = vmatprep.mubr.f32.mxu0 0.0
    %1686 = vmatmul.mubr.f32.gmra.mrb[0].mxu0 %v171
    %v1687 = vpop.f32.mrb[0].mxu0
    %v1688 = vadd.f32 0.0, %v1687
    %v1689 = vpop.f32.mrb[0].mxu0
    %1690 = vmatprep.mubr.f32.mxu0 0.0
    %1691 = vmatmul.mubr.f32.gmra.mrb[0].mxu0 %v174
    %v1692 = vpop.f32.mrb[0].mxu0
    %v1693 = vadd.f32 0.0, %v1692
    %v1694 = vpop.f32.mrb[0].mxu0
    %1695 = vmatprep.mubr.f32.mxu0 0.0
    %1696 = vmatmul.mubr.f32.gmra.mrb[0].mxu0 %v177
    %v1697 = vpop.f32.mrb[0].mxu0
    %v1698 = vadd.f32 0.0, %v1697
    %v1699 = vpop.f32.mrb[0].mxu0
    %1700 = vmatprep.mubr.f32.mxu0 0.0
    %1701 = vmatmul.mubr.f32.gmra.mrb[0].mxu0 %v180
    %v1702 = vpop.f32.mrb[0].mxu0
    %v1703 = vadd.f32 0.0, %v1702
    %v1704 = vpop.f32.mrb[0].mxu0
    %1705 = vmatprep.mubr.f32.mxu0 0.0
    %1706 = vmatmul.mubr.f32.gmra.mrb[0].mxu0 %v183
    %v1707 = vpop.f32.mrb[0].mxu0
    %v1708 = vadd.f32 0.0, %v1707
    %v1709 = vpop.f32.mrb[0].mxu0
    %1710 = vmatprep.mubr.f32.mxu0 0.0
    %1711 = vmatmul.mubr.f32.gmra.mrb[0].mxu0 %v186
    %v1712 = vpop.f32.mrb[0].mxu0
    %v1713 = vadd.f32 0.0, %v1712
    %v1714 = vpop.f32.mrb[0].mxu0
    %1715 = vmatprep.mubr.f32.mxu0 0.0
    %1716 = vmatmul.mubr.f32.gmra.mrb[0].mxu0 %v189
    %v1717 = vpop.f32.mrb[0].mxu0
    %v1718 = vadd.f32 0.0, %v1717
    %v1719 = vpop.f32.mrb[0].mxu0
    %1720 = vmatprep.mubr.f32.mxu0 0.0
    %1721 = vmatmul.mubr.f32.gmra.mrb[0].mxu0 %v192
    %v1722 = vpop.f32.mrb[0].mxu0
    %v1723 = vadd.f32 0.0, %v1722
    %v1724 = vpop.f32.mrb[0].mxu0
    %1725 = vmatprep.mubr.f32.mxu0 0.0
    %1726 = vmatmul.mubr.f32.gmra.mrb[0].mxu0 %v195
    %v1727 = vpop.f32.mrb[0].mxu0
    %v1728 = vadd.f32 0.0, %v1727
    %v1729 = vpop.f32.mrb[0].mxu0
    %1730 = vmatprep.mubr.f32.mxu0 0.0
    %1731 = vmatmul.mubr.f32.gmra.mrb[0].mxu0 %v198
    %v1732 = vpop.f32.mrb[0].mxu0
    %v1733 = vadd.f32 0.0, %v1732
    %v1734 = vpop.f32.mrb[0].mxu0
    %1735 = vmatprep.mubr.f32.mxu0 0.0
    %1736 = vmatmul.mubr.f32.gmra.mrb[0].mxu0 %v201
    %v1737 = vpop.f32.mrb[0].mxu0
    %v1738 = vadd.f32 0.0, %v1737
    %v1739 = vpop.f32.mrb[0].mxu0
    %1740 = vmatprep.mubr.f32.mxu0 0.0
    %1741 = vmatmul.mubr.f32.gmra.mrb[0].mxu0 %v204
    %v1742 = vpop.f32.mrb[0].mxu0
    %v1743 = vadd.f32 0.0, %v1742
    %v1744 = vpop.f32.mrb[0].mxu0
    %1745 = vmatprep.mubr.f32.mxu0 0.0
    %1746 = vmatmul.mubr.f32.gmra.mrb[0].mxu0 %v207
    %v1747 = vpop.f32.mrb[0].mxu0
    %v1748 = vadd.f32 0.0, %v1747
    %v1749 = vpop.f32.mrb[0].mxu0
    %1750 = vmatprep.mubr.f32.mxu0 0.0
    %1751 = vmatmul.mubr.f32.gmra.mrb[0].mxu0 %v210
    %v1752 = vpop.f32.mrb[0].mxu0
    %v1753 = vadd.f32 0.0, %v1752
    %v1754 = vpop.f32.mrb[0].mxu0
    %1755 = vmatprep.mubr.f32.mxu0 0.0
    %1756 = vmatmul.mubr.f32.gmra.mrb[0].mxu0 %v213
    %v1757 = vpop.f32.mrb[0].mxu0
    %v1758 = vadd.f32 0.0, %v1757
    %v1759 = vpop.f32.mrb[0].mxu0
    %1760 = vmatprep.mubr.f32.mxu0 0.0
    %1761 = vmatmul.mubr.f32.gmra.mrb[0].mxu0 %v216
    %v1762 = vpop.f32.mrb[0].mxu0
    %v1763 = vadd.f32 0.0, %v1762
    %v1764 = vpop.f32.mrb[0].mxu0
    %1765 = vmatprep.mubr.f32.mxu0 0.0
    %1766 = vmatmul.mubr.f32.gmra.mrb[0].mxu0 %v219
    %v1767 = vpop.f32.mrb[0].mxu0
    %v1768 = vadd.f32 0.0, %v1767
    %v1769 = vpop.f32.mrb[0].mxu0
    %1770 = vmatprep.mubr.f32.mxu0 0.0
    %1771 = vmatmul.mubr.f32.gmra.mrb[0].mxu0 %v222
    %v1772 = vpop.f32.mrb[0].mxu0
    %v1773 = vadd.f32 0.0, %v1772
    %v1774 = vpop.f32.mrb[0].mxu0
    %1775 = vmatprep.mubr.f32.mxu0 0.0
    %1776 = vmatmul.mubr.f32.gmra.mrb[0].mxu0 %v225
    %v1777 = vpop.f32.mrb[0].mxu0
    %v1778 = vadd.f32 0.0, %v1777
    %v1779 = vpop.f32.mrb[0].mxu0
    %1780 = vmatprep.mubr.f32.mxu0 0.0
    %1781 = vmatmul.mubr.f32.gmra.mrb[0].mxu0 %v228
    %v1782 = vpop.f32.mrb[0].mxu0
    %v1783 = vadd.f32 0.0, %v1782
    %v1784 = vpop.f32.mrb[0].mxu0
    %1785 = vmatprep.mubr.f32.mxu0 0.0
    %1786 = vmatmul.mubr.f32.gmra.mrb[0].mxu0 %v231
    %v1787 = vpop.f32.mrb[0].mxu0
    %v1788 = vadd.f32 0.0, %v1787
    %v1789 = vpop.f32.mrb[0].mxu0
    %1790 = vmatprep.mubr.f32.mxu0 0.0
    %1791 = vmatmul.mubr.f32.gmra.mrb[0].mxu0 %v234
    %v1792 = vpop.f32.mrb[0].mxu0
    %v1793 = vadd.f32 0.0, %v1792
    %v1794 = vpop.f32.mrb[0].mxu0
    %1795 = vmatprep.mubr.f32.mxu0 0.0
    %1796 = vmatmul.mubr.f32.gmra.mrb[0].mxu0 %v237
    %v1797 = vpop.f32.mrb[0].mxu0
    %v1798 = vadd.f32 0.0, %v1797
    %v1799 = vpop.f32.mrb[0].mxu0
    %1800 = vmatprep.mubr.f32.mxu0 0.0
    %1801 = vmatmul.mubr.f32.gmra.mrb[0].mxu0 %v240
    %v1802 = vpop.f32.mrb[0].mxu0
    %v1803 = vadd.f32 0.0, %v1802
    %v1804 = vpop.f32.mrb[0].mxu0
    %1805 = vmatprep.mubr.f32.mxu0 0.0
    %1806 = vmatmul.mubr.f32.gmra.mrb[0].mxu0 %v243
    %v1807 = vpop.f32.mrb[0].mxu0
    %v1808 = vadd.f32 0.0, %v1807
    %v1809 = vpop.f32.mrb[0].mxu0
    %1810 = vmatprep.mubr.f32.mxu0 0.0
    %1811 = vmatmul.mubr.f32.gmra.mrb[0].mxu0 %v246
    %v1812 = vpop.f32.mrb[0].mxu0
    %v1813 = vadd.f32 0.0, %v1812
    %v1814 = vpop.f32.mrb[0].mxu0
    %1815 = vmatprep.mubr.f32.mxu0 0.0
    %1816 = vmatmul.mubr.f32.gmra.mrb[0].mxu0 %v249
    %v1817 = vpop.f32.mrb[0].mxu0
    %v1818 = vadd.f32 0.0, %v1817
    %v1819 = vpop.f32.mrb[0].mxu0
    %1820 = vmatprep.mubr.f32.mxu0 0.0
    %1821 = vmatmul.mubr.f32.gmra.mrb[0].mxu0 %v252
    %v1822 = vpop.f32.mrb[0].mxu0
    %v1823 = vadd.f32 0.0, %v1822
    %v1824 = vpop.f32.mrb[0].mxu0
    %1825 = vmatprep.mubr.f32.mxu0 0.0
    %1826 = vmatmul.mubr.f32.gmra.mrb[0].mxu0 %v255
    %v1827 = vpop.f32.mrb[0].mxu0
    %v1828 = vadd.f32 0.0, %v1827
    %v1829 = vpop.f32.mrb[0].mxu0
    %1830 = vmatprep.mubr.f32.mxu0 0.0
    %1831 = vmatmul.mubr.f32.gmra.mrb[0].mxu0 %v258
    %v1832 = vpop.f32.mrb[0].mxu0
    %v1833 = vadd.f32 0.0, %v1832
    %v1834 = vpop.f32.mrb[0].mxu0
    %1835 = vmatprep.mubr.f32.mxu0 0.0
    %1836 = vmatmul.mubr.f32.gmra.mrb[0].mxu0 %v261
    %v1837 = vpop.f32.mrb[0].mxu0
    %v1838 = vadd.f32 0.0, %v1837
    %v1839 = vpop.f32.mrb[0].mxu0
    %1840 = vmatprep.mubr.f32.mxu0 0.0
    %1841 = vmatmul.mubr.f32.gmra.mrb[0].mxu0 %v264
    %v1842 = vpop.f32.mrb[0].mxu0
    %v1843 = vadd.f32 0.0, %v1842
    %v1844 = vpop.f32.mrb[0].mxu0
    %1845 = vmatprep.mubr.f32.mxu0 0.0
    %1846 = vmatmul.mubr.f32.gmra.mrb[0].mxu0 %v267
    %v1847 = vpop.f32.mrb[0].mxu0
    %v1848 = vadd.f32 0.0, %v1847
    %v1849 = vpop.f32.mrb[0].mxu0
    %1850 = vmatprep.mubr.f32.mxu0 0.0
    %1851 = vmatmul.mubr.f32.gmra.mrb[0].mxu0 %v270
    %v1852 = vpop.f32.mrb[0].mxu0
    %v1853 = vadd.f32 0.0, %v1852
    %v1854 = vpop.f32.mrb[0].mxu0
    %1855 = vmatprep.mubr.f32.mxu0 0.0
    %1856 = vmatmul.mubr.f32.gmra.mrb[0].mxu0 %v273
    %v1857 = vpop.f32.mrb[0].mxu0
    %v1858 = vadd.f32 0.0, %v1857
    %v1859 = vpop.f32.mrb[0].mxu0
    %1860 = vmatprep.mubr.f32.mxu0 0.0
    %1861 = vmatmul.mubr.f32.gmra.mrb[0].mxu0 %v276
    %v1862 = vpop.f32.mrb[0].mxu0
    %v1863 = vadd.f32 0.0, %v1862
    %v1864 = vpop.f32.mrb[0].mxu0
    %1865 = vmatprep.mubr.f32.mxu0 0.0
    %1866 = vmatmul.mubr.f32.gmra.mrb[0].mxu0 %v279
    %v1867 = vpop.f32.mrb[0].mxu0
    %v1868 = vadd.f32 0.0, %v1867
    %v1869 = vpop.f32.mrb[0].mxu0
    %1870 = vmatprep.mubr.f32.mxu0 0.0
    %1871 = vmatmul.mubr.f32.gmra.mrb[0].mxu0 %v282
    %v1872 = vpop.f32.mrb[0].mxu0
    %v1873 = vadd.f32 0.0, %v1872
    %v1874 = vpop.f32.mrb[0].mxu0
    %1875 = vmatprep.mubr.f32.mxu0 0.0
    %1876 = vmatmul.mubr.f32.gmra.mrb[0].mxu0 %v285
    %v1877 = vpop.f32.mrb[0].mxu0
    %v1878 = vadd.f32 0.0, %v1877
    %v1879 = vpop.f32.mrb[0].mxu0
    %1880 = vmatprep.mubr.f32.mxu0 0.0
    %1881 = vmatmul.mubr.f32.gmra.mrb[0].mxu0 %v288
    %v1882 = vpop.f32.mrb[0].mxu0
    %v1883 = vadd.f32 0.0, %v1882
    %v1884 = vpop.f32.mrb[0].mxu0
    %1885 = vmatprep.mubr.f32.mxu0 0.0
    %1886 = vmatmul.mubr.f32.gmra.mrb[0].mxu0 %v291
    %v1887 = vpop.f32.mrb[0].mxu0
    %v1888 = vadd.f32 0.0, %v1887
    %v1889 = vpop.f32.mrb[0].mxu0
    %1890 = vmatprep.mubr.f32.mxu0 0.0
    %1891 = vmatmul.mubr.f32.gmra.mrb[0].mxu0 %v294
    %v1892 = vpop.f32.mrb[0].mxu0
    %v1893 = vadd.f32 0.0, %v1892
    %v1894 = vpop.f32.mrb[0].mxu0
    %1895 = vmatprep.mubr.f32.mxu0 0.0
    %1896 = vmatmul.mubr.f32.gmra.mrb[0].mxu0 %v297
    %v1897 = vpop.f32.mrb[0].mxu0
    %v1898 = vadd.f32 0.0, %v1897
    %v1899 = vpop.f32.mrb[0].mxu0
    %1900 = vmatprep.mubr.f32.mxu0 0.0
    %1901 = vmatmul.mubr.f32.gmra.mrb[0].mxu0 %v300
    %v1902 = vpop.f32.mrb[0].mxu0
    %v1903 = vadd.f32 0.0, %v1902
    %v1904 = vpop.f32.mrb[0].mxu0
    %1905 = vmatprep.mubr.f32.mxu0 0.0
    %1906 = vmatmul.mubr.f32.gmra.mrb[0].mxu0 %v303
    %v1907 = vpop.f32.mrb[0].mxu0
    %v1908 = vadd.f32 0.0, %v1907
    %v1909 = vpop.f32.mrb[0].mxu0
    %1910 = vmatprep.mubr.f32.mxu0 0.0
    %1911 = vmatmul.mubr.f32.gmra.mrb[0].mxu0 %v306
    %v1912 = vpop.f32.mrb[0].mxu0
    %v1913 = vadd.f32 0.0, %v1912
    %v1914 = vpop.f32.mrb[0].mxu0
    %1915 = vmatprep.mubr.f32.mxu0 0.0
    %1916 = vmatmul.mubr.f32.gmra.mrb[0].mxu0 %v309
    %v1917 = vpop.f32.mrb[0].mxu0
    %v1918 = vadd.f32 0.0, %v1917
    %v1919 = vpop.f32.mrb[0].mxu0
    %1920 = vmatprep.mubr.f32.mxu0 0.0
    %1921 = vmatmul.mubr.f32.gmra.mrb[0].mxu0 %v312
    %v1922 = vpop.f32.mrb[0].mxu0
    %v1923 = vadd.f32 0.0, %v1922
    %v1924 = vpop.f32.mrb[0].mxu0
    %1925 = vmatprep.mubr.f32.mxu0 0.0
    %1926 = vmatmul.mubr.f32.gmra.mrb[0].mxu0 %v315
    %v1927 = vpop.f32.mrb[0].mxu0
    %v1928 = vadd.f32 0.0, %v1927
    %v1929 = vpop.f32.mrb[0].mxu0
    %1930 = vmatprep.mubr.f32.mxu0 0.0
    %1931 = vmatmul.mubr.f32.gmra.mrb[0].mxu0 %v318
    %v1932 = vpop.f32.mrb[0].mxu0
    %v1933 = vadd.f32 0.0, %v1932
    %v1934 = vpop.f32.mrb[0].mxu0
    %1935 = vdwg.mxu0
    %v1936 = vadd.f32 %v1481, %v1648
    %v1937 = vadd.f32 %v1482, %v1653
    %v1938 = vadd.f32 %v1483, %v1658
    %v1939 = vadd.f32 %v1484, %v1663
    %v1940 = vadd.f32 %v1485, %v1668
    %v1941 = vadd.f32 %v1486, %v1673
    %v1942 = vadd.f32 %v1487, %v1678
    %v1943 = vadd.f32 %v1488, %v1683
    %v1944 = vadd.f32 %v1489, %v1688
    %v1945 = vadd.f32 %v1490, %v1693
    %v1946 = vadd.f32 %v1491, %v1698
    %v1947 = vadd.f32 %v1492, %v1703
    %v1948 = vadd.f32 %v1493, %v1708
    %v1949 = vadd.f32 %v1494, %v1713
    %v1950 = vadd.f32 %v1495, %v1718
    %v1951 = vadd.f32 %v1496, %v1723
    %v1952 = vadd.f32 %v1497, %v1728
    %v1953 = vadd.f32 %v1498, %v1733
    %v1954 = vadd.f32 %v1499, %v1738
    %v1955 = vadd.f32 %v1500, %v1743
    %v1956 = vadd.f32 %v1501, %v1748
    %v1957 = vadd.f32 %v1502, %v1753
    %v1958 = vadd.f32 %v1503, %v1758
    %v1959 = vadd.f32 %v1504, %v1763
    %v1960 = vadd.f32 %v1505, %v1768
    %v1961 = vadd.f32 %v1506, %v1773
    %v1962 = vadd.f32 %v1507, %v1778
    %v1963 = vadd.f32 %v1508, %v1783
    %v1964 = vadd.f32 %v1509, %v1788
    %v1965 = vadd.f32 %v1510, %v1793
    %v1966 = vadd.f32 %v1511, %v1798
    %v1967 = vadd.f32 %v1512, %v1803
    %v1968 = vadd.f32 %v1513, %v1808
    %v1969 = vadd.f32 %v1514, %v1813
    %v1970 = vadd.f32 %v1515, %v1818
    %v1971 = vadd.f32 %v1516, %v1823
    %v1972 = vadd.f32 %v1517, %v1828
    %v1973 = vadd.f32 %v1518, %v1833
    %v1974 = vadd.f32 %v1519, %v1838
    %v1975 = vadd.f32 %v1520, %v1843
    %v1976 = vadd.f32 %v1521, %v1848
    %v1977 = vadd.f32 %v1522, %v1853
    %v1978 = vadd.f32 %v1523, %v1858
    %v1979 = vadd.f32 %v1524, %v1863
    %v1980 = vadd.f32 %v1525, %v1868
    %v1981 = vadd.f32 %v1526, %v1873
    %v1982 = vadd.f32 %v1527, %v1878
    %v1983 = vadd.f32 %v1528, %v1883
    %v1984 = vadd.f32 %v1529, %v1888
    %v1985 = vadd.f32 %v1530, %v1893
    %v1986 = vadd.f32 %v1531, %v1898
    %v1987 = vadd.f32 %v1532, %v1903
    %v1988 = vadd.f32 %v1533, %v1908
    %v1989 = vadd.f32 %v1534, %v1913
    %v1990 = vadd.f32 %v1535, %v1918
    %v1991 = vadd.f32 %v1536, %v1923
    %v1992 = vadd.f32 %v1537, %v1928
    %v1993 = vadd.f32 %v1538, %v1933
    %v1994 = vadd.f32 %v1539, 0.0
    %v1995 = vadd.f32 %v1540, 0.0
    %v1996 = vadd.f32 %v1541, 0.0
    %v1997 = vadd.f32 %v1542, 0.0
    %v1998 = vadd.f32 %v1543, 0.0
    %v1999 = vadd.f32 %v1544, 0.0
    %v2000 = vld [vmem:[%s1 + $0x20] sm:$0xff]
    %v2001 = vld [vmem:[%s1 + $0x48] sm:$0xff]
    %v2002 = vld [vmem:[%s1 + $0x70] sm:$0xff]
    %v2003 = vld [vmem:[%s1 + $0x98] sm:$0xff]
    %v2004 = vld [vmem:[%s1 + $0xc0] sm:$0xff]
    %v2005 = vld [vmem:[%s1 + $0xe8] sm:$0xff]
    %v2006 = vld [vmem:[%s1 + $0x110] sm:$0xff]
    %v2007 = vld [vmem:[%s1 + $0x138] sm:$0xff]
    %v2008 = vld [vmem:[%s1 + $0x160] sm:$0xff]
    %v2009 = vld [vmem:[%s1 + $0x188] sm:$0xff]
    %v2010 = vld [vmem:[%s1 + $0x1b0] sm:$0xff]
    %v2011 = vld [vmem:[%s1 + $0x1d8] sm:$0xff]
    %2012 = vmatprep.subr.mxu0 0.0
    %2013 = vmatpush1.msra.mxu0 %v2000
    %2014 = vmatprep.subr.mxu0 0.0
    %2015 = vmatpush1.msra.mxu0 %v2001
    %2016 = vmatprep.subr.mxu0 0.0
    %2017 = vmatpush1.msra.mxu0 %v2002
    %2018 = vmatprep.subr.mxu0 0.0
    %2019 = vmatpush1.msra.mxu0 %v2003
    %2020 = vmatprep.subr.mxu0 0.0
    %2021 = vmatpush1.msra.mxu0 %v2004
    %2022 = vmatprep.subr.mxu0 0.0
    %2023 = vmatpush1.msra.mxu0 %v2005
    %2024 = vmatprep.subr.mxu0 0.0
    %2025 = vmatpush1.msra.mxu0 %v2006
    %2026 = vmatprep.subr.mxu0 0.0
    %2027 = vmatpush1.msra.mxu0 %v2007
    %2028 = vmatprep.subr.mxu0 0.0
    %2029 = vmatpush1.msra.mxu0 %v2008
    %2030 = vmatprep.subr.mxu0 0.0
    %2031 = vmatpush1.msra.mxu0 %v2009
    %2032 = vmatprep.subr.mxu0 0.0
    %2033 = vmatpush1.msra.mxu0 %v2010
    %2034 = vmatprep.subr.mxu0 0.0
    %2035 = vmatpush1.msra.mxu0 %v2011
    %2036 = vmatprep.subr.mxu0 0.0
    %2037 = vmatpush1.msra.mxu0 0.0
    %2038 = vmatprep.subr.mxu0 0.0
    %2039 = vmatpush1.msra.mxu0 0.0
    %2040 = vmatprep.subr.mxu0 0.0
    %2041 = vmatpush1.msra.mxu0 0.0
    %2042 = vmatprep.subr.mxu0 0.0
    %2043 = vmatpush1.msra.mxu0 0.0
    %2044 = vmatprep.subr.mxu0 0.0
    %2045 = vmatpush1.msra.mxu0 0.0
    %2046 = vmatprep.subr.mxu0 0.0
    %2047 = vmatpush1.msra.mxu0 0.0
    %2048 = vmatprep.subr.mxu0 0.0
    %2049 = vmatpush1.msra.mxu0 0.0
    %2050 = vmatprep.subr.mxu0 0.0
    %2051 = vmatpush1.msra.mxu0 0.0
    %2052 = vmatprep.subr.mxu0 0.0
    %2053 = vmatpush1.msra.mxu0 0.0
    %2054 = vmatprep.subr.mxu0 0.0
    %2055 = vmatpush1.msra.mxu0 0.0
    %2056 = vmatprep.subr.mxu0 0.0
    %2057 = vmatpush1.msra.mxu0 0.0
    %2058 = vmatprep.subr.mxu0 0.0
    %2059 = vmatpush1.msra.mxu0 0.0
    %2060 = vmatprep.subr.mxu0 0.0
    %2061 = vmatpush1.msra.mxu0 0.0
    %2062 = vmatprep.subr.mxu0 0.0
    %2063 = vmatpush1.msra.mxu0 0.0
    %2064 = vmatprep.subr.mxu0 0.0
    %2065 = vmatpush1.msra.mxu0 0.0
    %2066 = vmatprep.subr.mxu0 0.0
    %2067 = vmatpush1.msra.mxu0 0.0
    %2068 = vmatprep.subr.mxu0 0.0
    %2069 = vmatpush1.msra.mxu0 0.0
    %2070 = vmatprep.subr.mxu0 0.0
    %2071 = vmatpush1.msra.mxu0 0.0
    %2072 = vmatprep.subr.mxu0 0.0
    %2073 = vmatpush1.msra.mxu0 0.0
    %2074 = vmatprep.subr.mxu0 0.0
    %2075 = vmatpush1.msra.mxu0 0.0
    %2076 = vmatprep.mubr.f32.mxu0 0.0
    %2077 = vmatmul.mubr.f32.gmra.mrb[0].mxu0 %v129
    %v2078 = vpop.f32.mrb[0].mxu0
    %v2079 = vpop.f32.mrb[0].mxu0
    %2080 = vmatprep.mubr.f32.mxu0 0.0
    %2081 = vmatmul.mubr.f32.gmra.mrb[0].mxu0 %v132
    %v2082 = vpop.f32.mrb[0].mxu0
    %v2083 = vpop.f32.mrb[0].mxu0
    %2084 = vmatprep.mubr.f32.mxu0 0.0
    %2085 = vmatmul.mubr.f32.gmra.mrb[0].mxu0 %v135
    %v2086 = vpop.f32.mrb[0].mxu0
    %v2087 = vpop.f32.mrb[0].mxu0
    %2088 = vmatprep.mubr.f32.mxu0 0.0
    %2089 = vmatmul.mubr.f32.gmra.mrb[0].mxu0 %v138
    %v2090 = vpop.f32.mrb[0].mxu0
    %v2091 = vpop.f32.mrb[0].mxu0
    %2092 = vmatprep.mubr.f32.mxu0 0.0
    %2093 = vmatmul.mubr.f32.gmra.mrb[0].mxu0 %v141
    %v2094 = vpop.f32.mrb[0].mxu0
    %v2095 = vpop.f32.mrb[0].mxu0
    %2096 = vmatprep.mubr.f32.mxu0 0.0
    %2097 = vmatmul.mubr.f32.gmra.mrb[0].mxu0 %v144
    %v2098 = vpop.f32.mrb[0].mxu0
    %v2099 = vpop.f32.mrb[0].mxu0
    %2100 = vmatprep.mubr.f32.mxu0 0.0
    %2101 = vmatmul.mubr.f32.gmra.mrb[0].mxu0 %v147
    %v2102 = vpop.f32.mrb[0].mxu0
    %v2103 = vpop.f32.mrb[0].mxu0
    %2104 = vmatprep.mubr.f32.mxu0 0.0
    %2105 = vmatmul.mubr.f32.gmra.mrb[0].mxu0 %v150
    %v2106 = vpop.f32.mrb[0].mxu0
    %v2107 = vpop.f32.mrb[0].mxu0
    %2108 = vmatprep.mubr.f32.mxu0 0.0
    %2109 = vmatmul.mubr.f32.gmra.mrb[0].mxu0 %v153
    %v2110 = vpop.f32.mrb[0].mxu0
    %v2111 = vadd.f32 0.0, %v2110
    %v2112 = vpop.f32.mrb[0].mxu0
    %2113 = vmatprep.mubr.f32.mxu0 0.0
    %2114 = vmatmul.mubr.f32.gmra.mrb[0].mxu0 %v156
    %v2115 = vpop.f32.mrb[0].mxu0
    %v2116 = vadd.f32 0.0, %v2115
    %v2117 = vpop.f32.mrb[0].mxu0
    %2118 = vmatprep.mubr.f32.mxu0 0.0
    %2119 = vmatmul.mubr.f32.gmra.mrb[0].mxu0 %v159
    %v2120 = vpop.f32.mrb[0].mxu0
    %v2121 = vadd.f32 0.0, %v2120
    %v2122 = vpop.f32.mrb[0].mxu0
    %2123 = vmatprep.mubr.f32.mxu0 0.0
    %2124 = vmatmul.mubr.f32.gmra.mrb[0].mxu0 %v162
    %v2125 = vpop.f32.mrb[0].mxu0
    %v2126 = vadd.f32 0.0, %v2125
    %v2127 = vpop.f32.mrb[0].mxu0
    %2128 = vmatprep.mubr.f32.mxu0 0.0
    %2129 = vmatmul.mubr.f32.gmra.mrb[0].mxu0 %v165
    %v2130 = vpop.f32.mrb[0].mxu0
    %v2131 = vadd.f32 0.0, %v2130
    %v2132 = vpop.f32.mrb[0].mxu0
    %2133 = vmatprep.mubr.f32.mxu0 0.0
    %2134 = vmatmul.mubr.f32.gmra.mrb[0].mxu0 %v168
    %v2135 = vpop.f32.mrb[0].mxu0
    %v2136 = vadd.f32 0.0, %v2135
    %v2137 = vpop.f32.mrb[0].mxu0
    %2138 = vmatprep.mubr.f32.mxu0 0.0
    %2139 = vmatmul.mubr.f32.gmra.mrb[0].mxu0 %v171
    %v2140 = vpop.f32.mrb[0].mxu0
    %v2141 = vadd.f32 0.0, %v2140
    %v2142 = vpop.f32.mrb[0].mxu0
    %2143 = vmatprep.mubr.f32.mxu0 0.0
    %2144 = vmatmul.mubr.f32.gmra.mrb[0].mxu0 %v174
    %v2145 = vpop.f32.mrb[0].mxu0
    %v2146 = vadd.f32 0.0, %v2145
    %v2147 = vpop.f32.mrb[0].mxu0
    %2148 = vmatprep.mubr.f32.mxu0 0.0
    %2149 = vmatmul.mubr.f32.gmra.mrb[0].mxu0 %v177
    %v2150 = vpop.f32.mrb[0].mxu0
    %v2151 = vadd.f32 0.0, %v2150
    %v2152 = vpop.f32.mrb[0].mxu0
    %2153 = vmatprep.mubr.f32.mxu0 0.0
    %2154 = vmatmul.mubr.f32.gmra.mrb[0].mxu0 %v180
    %v2155 = vpop.f32.mrb[0].mxu0
    %v2156 = vadd.f32 0.0, %v2155
    %v2157 = vpop.f32.mrb[0].mxu0
    %2158 = vmatprep.mubr.f32.mxu0 0.0
    %2159 = vmatmul.mubr.f32.gmra.mrb[0].mxu0 %v183
    %v2160 = vpop.f32.mrb[0].mxu0
    %v2161 = vadd.f32 0.0, %v2160
    %v2162 = vpop.f32.mrb[0].mxu0
    %2163 = vmatprep.mubr.f32.mxu0 0.0
    %2164 = vmatmul.mubr.f32.gmra.mrb[0].mxu0 %v186
    %v2165 = vpop.f32.mrb[0].mxu0
    %v2166 = vadd.f32 0.0, %v2165
    %v2167 = vpop.f32.mrb[0].mxu0
    %2168 = vmatprep.mubr.f32.mxu0 0.0
    %2169 = vmatmul.mubr.f32.gmra.mrb[0].mxu0 %v189
    %v2170 = vpop.f32.mrb[0].mxu0
    %v2171 = vadd.f32 0.0, %v2170
    %v2172 = vpop.f32.mrb[0].mxu0
    %2173 = vmatprep.mubr.f32.mxu0 0.0
    %2174 = vmatmul.mubr.f32.gmra.mrb[0].mxu0 %v192
    %v2175 = vpop.f32.mrb[0].mxu0
    %v2176 = vadd.f32 0.0, %v2175
    %v2177 = vpop.f32.mrb[0].mxu0
    %2178 = vmatprep.mubr.f32.mxu0 0.0
    %2179 = vmatmul.mubr.f32.gmra.mrb[0].mxu0 %v195
    %v2180 = vpop.f32.mrb[0].mxu0
    %v2181 = vadd.f32 0.0, %v2180
    %v2182 = vpop.f32.mrb[0].mxu0
    %2183 = vmatprep.mubr.f32.mxu0 0.0
    %2184 = vmatmul.mubr.f32.gmra.mrb[0].mxu0 %v198
    %v2185 = vpop.f32.mrb[0].mxu0
    %v2186 = vadd.f32 0.0, %v2185
    %v2187 = vpop.f32.mrb[0].mxu0
    %2188 = vmatprep.mubr.f32.mxu0 0.0
    %2189 = vmatmul.mubr.f32.gmra.mrb[0].mxu0 %v201
    %v2190 = vpop.f32.mrb[0].mxu0
    %v2191 = vadd.f32 0.0, %v2190
    %v2192 = vpop.f32.mrb[0].mxu0
    %2193 = vmatprep.mubr.f32.mxu0 0.0
    %2194 = vmatmul.mubr.f32.gmra.mrb[0].mxu0 %v204
    %v2195 = vpop.f32.mrb[0].mxu0
    %v2196 = vadd.f32 0.0, %v2195
    %v2197 = vpop.f32.mrb[0].mxu0
    %2198 = vmatprep.mubr.f32.mxu0 0.0
    %2199 = vmatmul.mubr.f32.gmra.mrb[0].mxu0 %v207
    %v2200 = vpop.f32.mrb[0].mxu0
    %v2201 = vadd.f32 0.0, %v2200
    %v2202 = vpop.f32.mrb[0].mxu0
    %2203 = vmatprep.mubr.f32.mxu0 0.0
    %2204 = vmatmul.mubr.f32.gmra.mrb[0].mxu0 %v210
    %v2205 = vpop.f32.mrb[0].mxu0
    %v2206 = vadd.f32 0.0, %v2205
    %v2207 = vpop.f32.mrb[0].mxu0
    %2208 = vmatprep.mubr.f32.mxu0 0.0
    %2209 = vmatmul.mubr.f32.gmra.mrb[0].mxu0 %v213
    %v2210 = vpop.f32.mrb[0].mxu0
    %v2211 = vadd.f32 0.0, %v2210
    %v2212 = vpop.f32.mrb[0].mxu0
    %2213 = vmatprep.mubr.f32.mxu0 0.0
    %2214 = vmatmul.mubr.f32.gmra.mrb[0].mxu0 %v216
    %v2215 = vpop.f32.mrb[0].mxu0
    %v2216 = vadd.f32 0.0, %v2215
    %v2217 = vpop.f32.mrb[0].mxu0
    %2218 = vmatprep.mubr.f32.mxu0 0.0
    %2219 = vmatmul.mubr.f32.gmra.mrb[0].mxu0 %v219
    %v2220 = vpop.f32.mrb[0].mxu0
    %v2221 = vadd.f32 0.0, %v2220
    %v2222 = vpop.f32.mrb[0].mxu0
    %2223 = vmatprep.mubr.f32.mxu0 0.0
    %2224 = vmatmul.mubr.f32.gmra.mrb[0].mxu0 %v222
    %v2225 = vpop.f32.mrb[0].mxu0
    %v2226 = vadd.f32 0.0, %v2225
    %v2227 = vpop.f32.mrb[0].mxu0
    %2228 = vmatprep.mubr.f32.mxu0 0.0
    %2229 = vmatmul.mubr.f32.gmra.mrb[0].mxu0 %v225
    %v2230 = vpop.f32.mrb[0].mxu0
    %v2231 = vadd.f32 0.0, %v2230
    %v2232 = vpop.f32.mrb[0].mxu0
    %2233 = vmatprep.mubr.f32.mxu0 0.0
    %2234 = vmatmul.mubr.f32.gmra.mrb[0].mxu0 %v228
    %v2235 = vpop.f32.mrb[0].mxu0
    %v2236 = vadd.f32 0.0, %v2235
    %v2237 = vpop.f32.mrb[0].mxu0
    %2238 = vmatprep.mubr.f32.mxu0 0.0
    %2239 = vmatmul.mubr.f32.gmra.mrb[0].mxu0 %v231
    %v2240 = vpop.f32.mrb[0].mxu0
    %v2241 = vadd.f32 0.0, %v2240
    %v2242 = vpop.f32.mrb[0].mxu0
    %2243 = vmatprep.mubr.f32.mxu0 0.0
    %2244 = vmatmul.mubr.f32.gmra.mrb[0].mxu0 %v234
    %v2245 = vpop.f32.mrb[0].mxu0
    %v2246 = vadd.f32 0.0, %v2245
    %v2247 = vpop.f32.mrb[0].mxu0
    %2248 = vmatprep.mubr.f32.mxu0 0.0
    %2249 = vmatmul.mubr.f32.gmra.mrb[0].mxu0 %v237
    %v2250 = vpop.f32.mrb[0].mxu0
    %v2251 = vadd.f32 0.0, %v2250
    %v2252 = vpop.f32.mrb[0].mxu0
    %2253 = vmatprep.mubr.f32.mxu0 0.0
    %2254 = vmatmul.mubr.f32.gmra.mrb[0].mxu0 %v240
    %v2255 = vpop.f32.mrb[0].mxu0
    %v2256 = vadd.f32 0.0, %v2255
    %v2257 = vpop.f32.mrb[0].mxu0
    %2258 = vmatprep.mubr.f32.mxu0 0.0
    %2259 = vmatmul.mubr.f32.gmra.mrb[0].mxu0 %v243
    %v2260 = vpop.f32.mrb[0].mxu0
    %v2261 = vadd.f32 0.0, %v2260
    %v2262 = vpop.f32.mrb[0].mxu0
    %2263 = vmatprep.mubr.f32.mxu0 0.0
    %2264 = vmatmul.mubr.f32.gmra.mrb[0].mxu0 %v246
    %v2265 = vpop.f32.mrb[0].mxu0
    %v2266 = vadd.f32 0.0, %v2265
    %v2267 = vpop.f32.mrb[0].mxu0
    %2268 = vmatprep.mubr.f32.mxu0 0.0
    %2269 = vmatmul.mubr.f32.gmra.mrb[0].mxu0 %v249
    %v2270 = vpop.f32.mrb[0].mxu0
    %v2271 = vadd.f32 0.0, %v2270
    %v2272 = vpop.f32.mrb[0].mxu0
    %2273 = vmatprep.mubr.f32.mxu0 0.0
    %2274 = vmatmul.mubr.f32.gmra.mrb[0].mxu0 %v252
    %v2275 = vpop.f32.mrb[0].mxu0
    %v2276 = vadd.f32 0.0, %v2275
    %v2277 = vpop.f32.mrb[0].mxu0
    %2278 = vmatprep.mubr.f32.mxu0 0.0
    %2279 = vmatmul.mubr.f32.gmra.mrb[0].mxu0 %v255
    %v2280 = vpop.f32.mrb[0].mxu0
    %v2281 = vadd.f32 0.0, %v2280
    %v2282 = vpop.f32.mrb[0].mxu0
    %2283 = vmatprep.mubr.f32.mxu0 0.0
    %2284 = vmatmul.mubr.f32.gmra.mrb[0].mxu0 %v258
    %v2285 = vpop.f32.mrb[0].mxu0
    %v2286 = vadd.f32 0.0, %v2285
    %v2287 = vpop.f32.mrb[0].mxu0
    %2288 = vmatprep.mubr.f32.mxu0 0.0
    %2289 = vmatmul.mubr.f32.gmra.mrb[0].mxu0 %v261
    %v2290 = vpop.f32.mrb[0].mxu0
    %v2291 = vadd.f32 0.0, %v2290
    %v2292 = vpop.f32.mrb[0].mxu0
    %2293 = vmatprep.mubr.f32.mxu0 0.0
    %2294 = vmatmul.mubr.f32.gmra.mrb[0].mxu0 %v264
    %v2295 = vpop.f32.mrb[0].mxu0
    %v2296 = vadd.f32 0.0, %v2295
    %v2297 = vpop.f32.mrb[0].mxu0
    %2298 = vmatprep.mubr.f32.mxu0 0.0
    %2299 = vmatmul.mubr.f32.gmra.mrb[0].mxu0 %v267
    %v2300 = vpop.f32.mrb[0].mxu0
    %v2301 = vadd.f32 0.0, %v2300
    %v2302 = vpop.f32.mrb[0].mxu0
    %2303 = vmatprep.mubr.f32.mxu0 0.0
    %2304 = vmatmul.mubr.f32.gmra.mrb[0].mxu0 %v270
    %v2305 = vpop.f32.mrb[0].mxu0
    %v2306 = vadd.f32 0.0, %v2305
    %v2307 = vpop.f32.mrb[0].mxu0
    %2308 = vmatprep.mubr.f32.mxu0 0.0
    %2309 = vmatmul.mubr.f32.gmra.mrb[0].mxu0 %v273
    %v2310 = vpop.f32.mrb[0].mxu0
    %v2311 = vadd.f32 0.0, %v2310
    %v2312 = vpop.f32.mrb[0].mxu0
    %2313 = vmatprep.mubr.f32.mxu0 0.0
    %2314 = vmatmul.mubr.f32.gmra.mrb[0].mxu0 %v276
    %v2315 = vpop.f32.mrb[0].mxu0
    %v2316 = vadd.f32 0.0, %v2315
    %v2317 = vpop.f32.mrb[0].mxu0
    %2318 = vmatprep.mubr.f32.mxu0 0.0
    %2319 = vmatmul.mubr.f32.gmra.mrb[0].mxu0 %v279
    %v2320 = vpop.f32.mrb[0].mxu0
    %v2321 = vadd.f32 0.0, %v2320
    %v2322 = vpop.f32.mrb[0].mxu0
    %2323 = vmatprep.mubr.f32.mxu0 0.0
    %2324 = vmatmul.mubr.f32.gmra.mrb[0].mxu0 %v282
    %v2325 = vpop.f32.mrb[0].mxu0
    %v2326 = vadd.f32 0.0, %v2325
    %v2327 = vpop.f32.mrb[0].mxu0
    %2328 = vmatprep.mubr.f32.mxu0 0.0
    %2329 = vmatmul.mubr.f32.gmra.mrb[0].mxu0 %v285
    %v2330 = vpop.f32.mrb[0].mxu0
    %v2331 = vadd.f32 0.0, %v2330
    %v2332 = vpop.f32.mrb[0].mxu0
    %2333 = vmatprep.mubr.f32.mxu0 0.0
    %2334 = vmatmul.mubr.f32.gmra.mrb[0].mxu0 %v288
    %v2335 = vpop.f32.mrb[0].mxu0
    %v2336 = vadd.f32 0.0, %v2335
    %v2337 = vpop.f32.mrb[0].mxu0
    %2338 = vmatprep.mubr.f32.mxu0 0.0
    %2339 = vmatmul.mubr.f32.gmra.mrb[0].mxu0 %v291
    %v2340 = vpop.f32.mrb[0].mxu0
    %v2341 = vadd.f32 0.0, %v2340
    %v2342 = vpop.f32.mrb[0].mxu0
    %2343 = vmatprep.mubr.f32.mxu0 0.0
    %2344 = vmatmul.mubr.f32.gmra.mrb[0].mxu0 %v294
    %v2345 = vpop.f32.mrb[0].mxu0
    %v2346 = vadd.f32 0.0, %v2345
    %v2347 = vpop.f32.mrb[0].mxu0
    %2348 = vmatprep.mubr.f32.mxu0 0.0
    %2349 = vmatmul.mubr.f32.gmra.mrb[0].mxu0 %v297
    %v2350 = vpop.f32.mrb[0].mxu0
    %v2351 = vadd.f32 0.0, %v2350
    %v2352 = vpop.f32.mrb[0].mxu0
    %2353 = vmatprep.mubr.f32.mxu0 0.0
    %2354 = vmatmul.mubr.f32.gmra.mrb[0].mxu0 %v300
    %v2355 = vpop.f32.mrb[0].mxu0
    %v2356 = vadd.f32 0.0, %v2355
    %v2357 = vpop.f32.mrb[0].mxu0
    %2358 = vmatprep.mubr.f32.mxu0 0.0
    %2359 = vmatmul.mubr.f32.gmra.mrb[0].mxu0 %v303
    %v2360 = vpop.f32.mrb[0].mxu0
    %v2361 = vadd.f32 0.0, %v2360
    %v2362 = vpop.f32.mrb[0].mxu0
    %2363 = vmatprep.mubr.f32.mxu0 0.0
    %2364 = vmatmul.mubr.f32.gmra.mrb[0].mxu0 %v306
    %v2365 = vpop.f32.mrb[0].mxu0
    %v2366 = vadd.f32 0.0, %v2365
    %v2367 = vpop.f32.mrb[0].mxu0
    %2368 = vmatprep.mubr.f32.mxu0 0.0
    %2369 = vmatmul.mubr.f32.gmra.mrb[0].mxu0 %v309
    %v2370 = vpop.f32.mrb[0].mxu0
    %v2371 = vadd.f32 0.0, %v2370
    %v2372 = vpop.f32.mrb[0].mxu0
    %2373 = vmatprep.mubr.f32.mxu0 0.0
    %2374 = vmatmul.mubr.f32.gmra.mrb[0].mxu0 %v312
    %v2375 = vpop.f32.mrb[0].mxu0
    %v2376 = vadd.f32 0.0, %v2375
    %v2377 = vpop.f32.mrb[0].mxu0
    %2378 = vmatprep.mubr.f32.mxu0 0.0
    %2379 = vmatmul.mubr.f32.gmra.mrb[0].mxu0 %v315
    %v2380 = vpop.f32.mrb[0].mxu0
    %v2381 = vadd.f32 0.0, %v2380
    %v2382 = vpop.f32.mrb[0].mxu0
    %2383 = vmatprep.mubr.f32.mxu0 0.0
    %2384 = vmatmul.mubr.f32.gmra.mrb[0].mxu0 %v318
    %v2385 = vpop.f32.mrb[0].mxu0
    %v2386 = vadd.f32 0.0, %v2385
    %v2387 = vpop.f32.mrb[0].mxu0
    %2388 = vdwg.mxu0
    %v2389 = vadd.f32 %v1936, %v2111
    %v2390 = vadd.f32 %v1937, %v2116
    %v2391 = vadd.f32 %v1938, %v2121
    %v2392 = vadd.f32 %v1939, %v2126
    %v2393 = vadd.f32 %v1940, %v2131
    %v2394 = vadd.f32 %v1941, %v2136
    %v2395 = vadd.f32 %v1942, %v2141
    %v2396 = vadd.f32 %v1943, %v2146
    %v2397 = vadd.f32 %v1944, %v2151
    %v2398 = vadd.f32 %v1945, %v2156
    %v2399 = vadd.f32 %v1946, %v2161
    %v2400 = vadd.f32 %v1947, %v2166
    %v2401 = vadd.f32 %v1948, %v2171
    %v2402 = vadd.f32 %v1949, %v2176
    %v2403 = vadd.f32 %v1950, %v2181
    %v2404 = vadd.f32 %v1951, %v2186
    %v2405 = vadd.f32 %v1952, %v2191
    %v2406 = vadd.f32 %v1953, %v2196
    %v2407 = vadd.f32 %v1954, %v2201
    %v2408 = vadd.f32 %v1955, %v2206
    %v2409 = vadd.f32 %v1956, %v2211
    %v2410 = vadd.f32 %v1957, %v2216
    %v2411 = vadd.f32 %v1958, %v2221
    %v2412 = vadd.f32 %v1959, %v2226
    %v2413 = vadd.f32 %v1960, %v2231
    %v2414 = vadd.f32 %v1961, %v2236
    %v2415 = vadd.f32 %v1962, %v2241
    %v2416 = vadd.f32 %v1963, %v2246
    %v2417 = vadd.f32 %v1964, %v2251
    %v2418 = vadd.f32 %v1965, %v2256
    %v2419 = vadd.f32 %v1966, %v2261
    %v2420 = vadd.f32 %v1967, %v2266
    %v2421 = vadd.f32 %v1968, %v2271
    %v2422 = vadd.f32 %v1969, %v2276
    %v2423 = vadd.f32 %v1970, %v2281
    %v2424 = vadd.f32 %v1971, %v2286
    %v2425 = vadd.f32 %v1972, %v2291
    %v2426 = vadd.f32 %v1973, %v2296
    %v2427 = vadd.f32 %v1974, %v2301
    %v2428 = vadd.f32 %v1975, %v2306
    %v2429 = vadd.f32 %v1976, %v2311
    %v2430 = vadd.f32 %v1977, %v2316
    %v2431 = vadd.f32 %v1978, %v2321
    %v2432 = vadd.f32 %v1979, %v2326
    %v2433 = vadd.f32 %v1980, %v2331
    %v2434 = vadd.f32 %v1981, %v2336
    %v2435 = vadd.f32 %v1982, %v2341
    %v2436 = vadd.f32 %v1983, %v2346
    %v2437 = vadd.f32 %v1984, %v2351
    %v2438 = vadd.f32 %v1985, %v2356
    %v2439 = vadd.f32 %v1986, %v2361
    %v2440 = vadd.f32 %v1987, %v2366
    %v2441 = vadd.f32 %v1988, %v2371
    %v2442 = vadd.f32 %v1989, %v2376
    %v2443 = vadd.f32 %v1990, %v2381
    %v2444 = vadd.f32 %v1991, %v2386
    %v2445 = vadd.f32 %v1992, 0.0
    %v2446 = vadd.f32 %v1993, 0.0
    %v2447 = vadd.f32 %v1994, 0.0
    %v2448 = vadd.f32 %v1995, 0.0
    %v2449 = vadd.f32 %v1996, 0.0
    %v2450 = vadd.f32 %v1997, 0.0
    %v2451 = vadd.f32 %v1998, 0.0
    %v2452 = vadd.f32 %v1999, 0.0
    %v2453 = vld [vmem:[%s2] sm:$0x1]
    %v2455 = vlaneseq
    %v2456 = vshrl.u32 %v2455, 7
    %v2457 = vsub.s32 0, %v2456
    %v2458 = vrot.slane %v2453, %v2457
    %v2460 = vadd.f32 %v2389, %v2458
    %v2461 = vadd.f32 %v2390, %v2458
    %v2462 = vadd.f32 %v2391, %v2458
    %v2463 = vadd.f32 %v2392, %v2458
    %v2464 = vadd.f32 %v2393, %v2458
    %v2465 = vadd.f32 %v2394, %v2458
    %v2466 = vadd.f32 %v2395, %v2458
    %v2467 = vadd.f32 %v2396, %v2458
    %v2468 = vadd.f32 %v2397, %v2458
    %v2469 = vadd.f32 %v2398, %v2458
    %v2470 = vadd.f32 %v2399, %v2458
    %v2471 = vadd.f32 %v2400, %v2458
    %v2472 = vadd.f32 %v2401, %v2458
    %v2473 = vadd.f32 %v2402, %v2458
    %v2474 = vadd.f32 %v2403, %v2458
    %v2475 = vadd.f32 %v2404, %v2458
    %v2476 = vadd.f32 %v2405, %v2458
    %v2477 = vadd.f32 %v2406, %v2458
    %v2478 = vadd.f32 %v2407, %v2458
    %v2479 = vadd.f32 %v2408, %v2458
    %v2480 = vadd.f32 %v2409, %v2458
    %v2481 = vadd.f32 %v2410, %v2458
    %v2482 = vadd.f32 %v2411, %v2458
    %v2483 = vadd.f32 %v2412, %v2458
    %v2484 = vadd.f32 %v2413, %v2458
    %v2485 = vadd.f32 %v2414, %v2458
    %v2486 = vadd.f32 %v2415, %v2458
    %v2487 = vadd.f32 %v2416, %v2458
    %v2488 = vadd.f32 %v2417, %v2458
    %v2489 = vadd.f32 %v2418, %v2458
    %v2490 = vadd.f32 %v2419, %v2458
    %v2491 = vadd.f32 %v2420, %v2458
    %v2492 = vadd.f32 %v2421, %v2458
    %v2493 = vadd.f32 %v2422, %v2458
    %v2494 = vadd.f32 %v2423, %v2458
    %v2495 = vadd.f32 %v2424, %v2458
    %v2496 = vadd.f32 %v2425, %v2458
    %v2497 = vadd.f32 %v2426, %v2458
    %v2498 = vadd.f32 %v2427, %v2458
    %v2499 = vadd.f32 %v2428, %v2458
    %v2500 = vadd.f32 %v2429, %v2458
    %v2501 = vadd.f32 %v2430, %v2458
    %v2502 = vadd.f32 %v2431, %v2458
    %v2503 = vadd.f32 %v2432, %v2458
    %v2504 = vadd.f32 %v2433, %v2458
    %v2505 = vadd.f32 %v2434, %v2458
    %v2506 = vadd.f32 %v2435, %v2458
    %v2507 = vadd.f32 %v2436, %v2458
    %v2508 = vadd.f32 %v2437, %v2458
    %v2509 = vadd.f32 %v2438, %v2458
    %v2510 = vadd.f32 %v2439, %v2458
    %v2511 = vadd.f32 %v2440, %v2458
    %v2512 = vadd.f32 %v2441, %v2458
    %v2513 = vadd.f32 %v2442, %v2458
    %v2514 = vadd.f32 %v2443, %v2458
    %v2515 = vadd.f32 %v2444, %v2458
    %v2516 = vadd.f32 %v2445, %v2458
    %v2517 = vadd.f32 %v2446, %v2458
    %v2518 = vadd.f32 %v2447, %v2458
    %v2519 = vadd.f32 %v2448, %v2458
    %v2520 = vadd.f32 %v2449, %v2458
    %v2521 = vadd.f32 %v2450, %v2458
    %v2522 = vadd.f32 %v2451, %v2458
    %v2523 = vadd.f32 %v2452, %v2458
    %v2524 = vmax.f32 %v2460, 0.0
    %v2525 = vmax.f32 %v2461, 0.0
    %v2526 = vmax.f32 %v2462, 0.0
    %v2527 = vmax.f32 %v2463, 0.0
    %v2528 = vmax.f32 %v2464, 0.0
    %v2529 = vmax.f32 %v2465, 0.0
    %v2530 = vmax.f32 %v2466, 0.0
    %v2531 = vmax.f32 %v2467, 0.0
    %v2532 = vmax.f32 %v2468, 0.0
    %v2533 = vmax.f32 %v2469, 0.0
    %v2534 = vmax.f32 %v2470, 0.0
    %v2535 = vmax.f32 %v2471, 0.0
    %v2536 = vmax.f32 %v2472, 0.0
    %v2537 = vmax.f32 %v2473, 0.0
    %v2538 = vmax.f32 %v2474, 0.0
    %v2539 = vmax.f32 %v2475, 0.0
    %v2540 = vmax.f32 %v2476, 0.0
    %v2541 = vmax.f32 %v2477, 0.0
    %v2542 = vmax.f32 %v2478, 0.0
    %v2543 = vmax.f32 %v2479, 0.0
    %v2544 = vmax.f32 %v2480, 0.0
    %v2545 = vmax.f32 %v2481, 0.0
    %v2546 = vmax.f32 %v2482, 0.0
    %v2547 = vmax.f32 %v2483, 0.0
    %v2548 = vmax.f32 %v2484, 0.0
    %v2549 = vmax.f32 %v2485, 0.0
    %v2550 = vmax.f32 %v2486, 0.0
    %v2551 = vmax.f32 %v2487, 0.0
    %v2552 = vmax.f32 %v2488, 0.0
    %v2553 = vmax.f32 %v2489, 0.0
    %v2554 = vmax.f32 %v2490, 0.0
    %v2555 = vmax.f32 %v2491, 0.0
    %v2556 = vmax.f32 %v2492, 0.0
    %v2557 = vmax.f32 %v2493, 0.0
    %v2558 = vmax.f32 %v2494, 0.0
    %v2559 = vmax.f32 %v2495, 0.0
    %v2560 = vmax.f32 %v2496, 0.0
    %v2561 = vmax.f32 %v2497, 0.0
    %v2562 = vmax.f32 %v2498, 0.0
    %v2563 = vmax.f32 %v2499, 0.0
    %v2564 = vmax.f32 %v2500, 0.0
    %v2565 = vmax.f32 %v2501, 0.0
    %v2566 = vmax.f32 %v2502, 0.0
    %v2567 = vmax.f32 %v2503, 0.0
    %v2568 = vmax.f32 %v2504, 0.0
    %v2569 = vmax.f32 %v2505, 0.0
    %v2570 = vmax.f32 %v2506, 0.0
    %v2571 = vmax.f32 %v2507, 0.0
    %v2572 = vmax.f32 %v2508, 0.0
    %v2573 = vmax.f32 %v2509, 0.0
    %v2574 = vmax.f32 %v2510, 0.0
    %v2575 = vmax.f32 %v2511, 0.0
    %v2576 = vmax.f32 %v2512, 0.0
    %v2577 = vmax.f32 %v2513, 0.0
    %v2578 = vmax.f32 %v2514, 0.0
    %v2579 = vmax.f32 %v2515, 0.0
    %v2580 = vmax.f32 %v2516, 0.0
    %v2581 = vmax.f32 %v2517, 0.0
    %v2582 = vmax.f32 %v2518, 0.0
    %v2583 = vmax.f32 %v2519, 0.0
    %v2584 = vmax.f32 %v2520, 0.0
    %v2585 = vmax.f32 %v2521, 0.0
    %v2586 = vmax.f32 %v2522, 0.0
    %v2587 = vmax.f32 %v2523, 0.0
    %v2588 = vmax.f32 %v2524, %v2526
    %v2589 = vmax.f32 %v2525, %v2527
    %v2590 = vmax.f32 %v2526, %v2528
    %v2591 = vmax.f32 %v2527, %v2529
    %v2592 = vmax.f32 %v2528, %v2530
    %v2593 = vmax.f32 %v2529, %v2531
    %v2594 = vmax.f32 %v2530, %v2532
    %v2595 = vmax.f32 %v2531, %v2533
    %v2596 = vmax.f32 %v2532, %v2534
    %v2597 = vmax.f32 %v2533, %v2535
    %v2598 = vmax.f32 %v2534, %v2536
    %v2599 = vmax.f32 %v2535, %v2537
    %v2600 = vmax.f32 %v2536, %v2538
    %v2601 = vmax.f32 %v2537, %v2539
    %v2602 = vmax.f32 %v2538, %v2540
    %v2603 = vmax.f32 %v2539, %v2541
    %v2604 = vmax.f32 %v2540, %v2542
    %v2605 = vmax.f32 %v2541, %v2543
    %v2606 = vmax.f32 %v2542, %v2544
    %v2607 = vmax.f32 %v2543, %v2545
    %v2608 = vmax.f32 %v2544, %v2546
    %v2609 = vmax.f32 %v2545, %v2547
    %v2610 = vmax.f32 %v2546, %v2548
    %v2611 = vmax.f32 %v2547, %v2549
    %v2612 = vmax.f32 %v2548, %v2550
    %v2613 = vmax.f32 %v2549, %v2551
    %v2614 = vmax.f32 %v2550, %v2552
    %v2615 = vmax.f32 %v2551, %v2553
    %v2616 = vmax.f32 %v2552, %v2554
    %v2617 = vmax.f32 %v2553, %v2555
    %v2618 = vmax.f32 %v2554, %v2556
    %v2619 = vmax.f32 %v2555, %v2557
    %v2620 = vmax.f32 %v2556, %v2558
    %v2621 = vmax.f32 %v2557, %v2559
    %v2622 = vmax.f32 %v2558, %v2560
    %v2623 = vmax.f32 %v2559, %v2561
    %v2624 = vmax.f32 %v2560, %v2562
    %v2625 = vmax.f32 %v2561, %v2563
    %v2626 = vmax.f32 %v2562, %v2564
    %v2627 = vmax.f32 %v2563, %v2565
    %v2628 = vmax.f32 %v2564, %v2566
    %v2629 = vmax.f32 %v2565, %v2567
    %v2630 = vmax.f32 %v2566, %v2568
    %v2631 = vmax.f32 %v2567, %v2569
    %v2632 = vmax.f32 %v2568, %v2570
    %v2633 = vmax.f32 %v2569, %v2571
    %v2634 = vmax.f32 %v2570, %v2572
    %v2635 = vmax.f32 %v2571, %v2573
    %v2636 = vmax.f32 %v2572, %v2574
    %v2637 = vmax.f32 %v2573, %v2575
    %v2638 = vmax.f32 %v2574, %v2576
    %v2639 = vmax.f32 %v2575, %v2577
    %v2640 = vmax.f32 %v2576, %v2578
    %v2641 = vmax.f32 %v2577, %v2579
    %v2642 = vmax.f32 %v2578, %v2580
    %v2643 = vmax.f32 %v2579, %v2581
    %v2644 = vmax.f32 %v2580, %v2582
    %v2645 = vmax.f32 %v2581, %v2583
    %v2646 = vmax.f32 %v2582, %v2584
    %v2647 = vmax.f32 %v2583, %v2585
    %v2648 = vmax.f32 %v2584, %v2586
    %v2649 = vmax.f32 %v2585, %v2587
    %v2650 = vmax.f32 %v2586, 0.0
    %v2651 = vmax.f32 %v2587, 0.0
    %2716 = vrot.lane.b32.xlu0 %v2588, 127
    %v2717 = vpop.permute.xlu0 %2716
    %2718 = vrot.lane.b32.xlu0 %v2589, 127
    %v2719 = vpop.permute.xlu0 %2718
    %2720 = vrot.lane.b32.xlu0 %v2590, 127
    %v2721 = vpop.permute.xlu0 %2720
    %2722 = vrot.lane.b32.xlu0 %v2591, 127
    %v2723 = vpop.permute.xlu0 %2722
    %2724 = vrot.lane.b32.xlu0 %v2592, 127
    %v2725 = vpop.permute.xlu0 %2724
    %2726 = vrot.lane.b32.xlu0 %v2593, 127
    %v2727 = vpop.permute.xlu0 %2726
    %2728 = vrot.lane.b32.xlu0 %v2594, 127
    %v2729 = vpop.permute.xlu0 %2728
    %2730 = vrot.lane.b32.xlu0 %v2595, 127
    %v2731 = vpop.permute.xlu0 %2730
    %2732 = vrot.lane.b32.xlu0 %v2596, 127
    %v2733 = vpop.permute.xlu0 %2732
    %2734 = vrot.lane.b32.xlu0 %v2597, 127
    %v2735 = vpop.permute.xlu0 %2734
    %2736 = vrot.lane.b32.xlu0 %v2598, 127
    %v2737 = vpop.permute.xlu0 %2736
    %2738 = vrot.lane.b32.xlu0 %v2599, 127
    %v2739 = vpop.permute.xlu0 %2738
    %2740 = vrot.lane.b32.xlu0 %v2600, 127
    %v2741 = vpop.permute.xlu0 %2740
    %2742 = vrot.lane.b32.xlu0 %v2601, 127
    %v2743 = vpop.permute.xlu0 %2742
    %2744 = vrot.lane.b32.xlu0 %v2602, 127
    %v2745 = vpop.permute.xlu0 %2744
    %2746 = vrot.lane.b32.xlu0 %v2603, 127
    %v2747 = vpop.permute.xlu0 %2746
    %2748 = vrot.lane.b32.xlu0 %v2604, 127
    %v2749 = vpop.permute.xlu0 %2748
    %2750 = vrot.lane.b32.xlu0 %v2605, 127
    %v2751 = vpop.permute.xlu0 %2750
    %2752 = vrot.lane.b32.xlu0 %v2606, 127
    %v2753 = vpop.permute.xlu0 %2752
    %2754 = vrot.lane.b32.xlu0 %v2607, 127
    %v2755 = vpop.permute.xlu0 %2754
    %2756 = vrot.lane.b32.xlu0 %v2608, 127
    %v2757 = vpop.permute.xlu0 %2756
    %2758 = vrot.lane.b32.xlu0 %v2609, 127
    %v2759 = vpop.permute.xlu0 %2758
    %2760 = vrot.lane.b32.xlu0 %v2610, 127
    %v2761 = vpop.permute.xlu0 %2760
    %2762 = vrot.lane.b32.xlu0 %v2611, 127
    %v2763 = vpop.permute.xlu0 %2762
    %2764 = vrot.lane.b32.xlu0 %v2612, 127
    %v2765 = vpop.permute.xlu0 %2764
    %2766 = vrot.lane.b32.xlu0 %v2613, 127
    %v2767 = vpop.permute.xlu0 %2766
    %2768 = vrot.lane.b32.xlu0 %v2614, 127
    %v2769 = vpop.permute.xlu0 %2768
    %2770 = vrot.lane.b32.xlu0 %v2615, 127
    %v2771 = vpop.permute.xlu0 %2770
    %2772 = vrot.lane.b32.xlu0 %v2616, 127
    %v2773 = vpop.permute.xlu0 %2772
    %2774 = vrot.lane.b32.xlu0 %v2617, 127
    %v2775 = vpop.permute.xlu0 %2774
    %2776 = vrot.lane.b32.xlu0 %v2618, 127
    %v2777 = vpop.permute.xlu0 %2776
    %2778 = vrot.lane.b32.xlu0 %v2619, 127
    %v2779 = vpop.permute.xlu0 %2778
    %2780 = vrot.lane.b32.xlu0 %v2620, 127
    %v2781 = vpop.permute.xlu0 %2780
    %2782 = vrot.lane.b32.xlu0 %v2621, 127
    %v2783 = vpop.permute.xlu0 %2782
    %2784 = vrot.lane.b32.xlu0 %v2622, 127
    %v2785 = vpop.permute.xlu0 %2784
    %2786 = vrot.lane.b32.xlu0 %v2623, 127
    %v2787 = vpop.permute.xlu0 %2786
    %2788 = vrot.lane.b32.xlu0 %v2624, 127
    %v2789 = vpop.permute.xlu0 %2788
    %2790 = vrot.lane.b32.xlu0 %v2625, 127
    %v2791 = vpop.permute.xlu0 %2790
    %2792 = vrot.lane.b32.xlu0 %v2626, 127
    %v2793 = vpop.permute.xlu0 %2792
    %2794 = vrot.lane.b32.xlu0 %v2627, 127
    %v2795 = vpop.permute.xlu0 %2794
    %2796 = vrot.lane.b32.xlu0 %v2628, 127
    %v2797 = vpop.permute.xlu0 %2796
    %2798 = vrot.lane.b32.xlu0 %v2629, 127
    %v2799 = vpop.permute.xlu0 %2798
    %2800 = vrot.lane.b32.xlu0 %v2630, 127
    %v2801 = vpop.permute.xlu0 %2800
    %2802 = vrot.lane.b32.xlu0 %v2631, 127
    %v2803 = vpop.permute.xlu0 %2802
    %2804 = vrot.lane.b32.xlu0 %v2632, 127
    %v2805 = vpop.permute.xlu0 %2804
    %2806 = vrot.lane.b32.xlu0 %v2633, 127
    %v2807 = vpop.permute.xlu0 %2806
    %2808 = vrot.lane.b32.xlu0 %v2634, 127
    %v2809 = vpop.permute.xlu0 %2808
    %2810 = vrot.lane.b32.xlu0 %v2635, 127
    %v2811 = vpop.permute.xlu0 %2810
    %2812 = vrot.lane.b32.xlu0 %v2636, 127
    %v2813 = vpop.permute.xlu0 %2812
    %2814 = vrot.lane.b32.xlu0 %v2637, 127
    %v2815 = vpop.permute.xlu0 %2814
    %2816 = vrot.lane.b32.xlu0 %v2638, 127
    %v2817 = vpop.permute.xlu0 %2816
    %2818 = vrot.lane.b32.xlu0 %v2639, 127
    %v2819 = vpop.permute.xlu0 %2818
    %2820 = vrot.lane.b32.xlu0 %v2640, 127
    %v2821 = vpop.permute.xlu0 %2820
    %2822 = vrot.lane.b32.xlu0 %v2641, 127
    %v2823 = vpop.permute.xlu0 %2822
    %2824 = vrot.lane.b32.xlu0 %v2642, 127
    %v2825 = vpop.permute.xlu0 %2824
    %2826 = vrot.lane.b32.xlu0 %v2643, 127
    %v2827 = vpop.permute.xlu0 %2826
    %2828 = vrot.lane.b32.xlu0 %v2644, 127
    %v2829 = vpop.permute.xlu0 %2828
    %2830 = vrot.lane.b32.xlu0 %v2645, 127
    %v2831 = vpop.permute.xlu0 %2830
    %2832 = vrot.lane.b32.xlu0 %v2646, 127
    %v2833 = vpop.permute.xlu0 %2832
    %2834 = vrot.lane.b32.xlu0 %v2647, 127
    %v2835 = vpop.permute.xlu0 %2834
    %2836 = vrot.lane.b32.xlu0 %v2648, 127
    %v2837 = vpop.permute.xlu0 %2836
    %2838 = vrot.lane.b32.xlu0 %v2649, 127
    %v2839 = vpop.permute.xlu0 %2838
    %2840 = vrot.lane.b32.xlu0 %v2650, 127
    %v2841 = vpop.permute.xlu0 %2840
    %2842 = vrot.lane.b32.xlu0 %v2651, 127
    %v2843 = vpop.permute.xlu0 %2842
    %v2908 = vmax.f32 %v2588, %v2717
    %v2909 = vmax.f32 %v2589, %v2719
    %v2910 = vmax.f32 %v2590, %v2721
    %v2911 = vmax.f32 %v2591, %v2723
    %v2912 = vmax.f32 %v2592, %v2725
    %v2913 = vmax.f32 %v2593, %v2727
    %v2914 = vmax.f32 %v2594, %v2729
    %v2915 = vmax.f32 %v2595, %v2731
    %v2916 = vmax.f32 %v2596, %v2733
    %v2917 = vmax.f32 %v2597, %v2735
    %v2918 = vmax.f32 %v2598, %v2737
    %v2919 = vmax.f32 %v2599, %v2739
    %v2920 = vmax.f32 %v2600, %v2741
    %v2921 = vmax.f32 %v2601, %v2743
    %v2922 = vmax.f32 %v2602, %v2745
    %v2923 = vmax.f32 %v2603, %v2747
    %v2924 = vmax.f32 %v2604, %v2749
    %v2925 = vmax.f32 %v2605, %v2751
    %v2926 = vmax.f32 %v2606, %v2753
    %v2927 = vmax.f32 %v2607, %v2755
    %v2928 = vmax.f32 %v2608, %v2757
    %v2929 = vmax.f32 %v2609, %v2759
    %v2930 = vmax.f32 %v2610, %v2761
    %v2931 = vmax.f32 %v2611, %v2763
    %v2932 = vmax.f32 %v2612, %v2765
    %v2933 = vmax.f32 %v2613, %v2767
    %v2934 = vmax.f32 %v2614, %v2769
    %v2935 = vmax.f32 %v2615, %v2771
    %v2936 = vmax.f32 %v2616, %v2773
    %v2937 = vmax.f32 %v2617, %v2775
    %v2938 = vmax.f32 %v2618, %v2777
    %v2939 = vmax.f32 %v2619, %v2779
    %v2940 = vmax.f32 %v2620, %v2781
    %v2941 = vmax.f32 %v2621, %v2783
    %v2942 = vmax.f32 %v2622, %v2785
    %v2943 = vmax.f32 %v2623, %v2787
    %v2944 = vmax.f32 %v2624, %v2789
    %v2945 = vmax.f32 %v2625, %v2791
    %v2946 = vmax.f32 %v2626, %v2793
    %v2947 = vmax.f32 %v2627, %v2795
    %v2948 = vmax.f32 %v2628, %v2797
    %v2949 = vmax.f32 %v2629, %v2799
    %v2950 = vmax.f32 %v2630, %v2801
    %v2951 = vmax.f32 %v2631, %v2803
    %v2952 = vmax.f32 %v2632, %v2805
    %v2953 = vmax.f32 %v2633, %v2807
    %v2954 = vmax.f32 %v2634, %v2809
    %v2955 = vmax.f32 %v2635, %v2811
    %v2956 = vmax.f32 %v2636, %v2813
    %v2957 = vmax.f32 %v2637, %v2815
    %v2958 = vmax.f32 %v2638, %v2817
    %v2959 = vmax.f32 %v2639, %v2819
    %v2960 = vmax.f32 %v2640, %v2821
    %v2961 = vmax.f32 %v2641, %v2823
    %v2962 = vmax.f32 %v2642, %v2825
    %v2963 = vmax.f32 %v2643, %v2827
    %v2964 = vmax.f32 %v2644, %v2829
    %v2965 = vmax.f32 %v2645, %v2831
    %v2966 = vmax.f32 %v2646, %v2833
    %v2967 = vmax.f32 %v2647, %v2835
    %v2968 = vmax.f32 %v2648, %v2837
    %v2969 = vmax.f32 %v2649, %v2839
    %v2970 = vmax.f32 %v2650, %v2841
    %v2971 = vmax.f32 %v2651, %v2843
    %v2972 = vld [vmem:[%s3] sm:$0xff]
    %v2973 = vld [vmem:[%s3 + $0x28] sm:$0xff]
    %v2974 = vld [vmem:[%s3 + $0x50] sm:$0xff]
    %v2975 = vld [vmem:[%s3 + $0x78] sm:$0xff]
    %v2976 = vld [vmem:[%s3 + $0xa0] sm:$0xff]
    %v2977 = vld [vmem:[%s3 + $0xc8] sm:$0xff]
    %v2978 = vld [vmem:[%s3 + $0xf0] sm:$0xff]
    %v2979 = vld [vmem:[%s3 + $0x118] sm:$0xff]
    %v2980 = vld [vmem:[%s3 + $0x140] sm:$0xff]
    %v2981 = vld [vmem:[%s3 + $0x168] sm:$0xff]
    %v2982 = vld [vmem:[%s3 + $0x190] sm:$0xff]
    %v2983 = vld [vmem:[%s3 + $0x1b8] sm:$0xff]
    %v2984 = vld [vmem:[%s3 + $0x1e0] sm:$0xff]
    %v2985 = vld [vmem:[%s3 + $0x208] sm:$0xff]
    %v2986 = vld [vmem:[%s3 + $0x230] sm:$0xff]
    %v2987 = vld [vmem:[%s3 + $0x258] sm:$0xff]
    %v2988 = vld [vmem:[%s3 + $0x8] sm:$0xff]
    %v2989 = vld [vmem:[%s3 + $0x30] sm:$0xff]
    %v2990 = vld [vmem:[%s3 + $0x58] sm:$0xff]
    %v2991 = vld [vmem:[%s3 + $0x80] sm:$0xff]
    %v2992 = vld [vmem:[%s3 + $0xa8] sm:$0xff]
    %v2993 = vld [vmem:[%s3 + $0xd0] sm:$0xff]
    %v2994 = vld [vmem:[%s3 + $0xf8] sm:$0xff]
    %v2995 = vld [vmem:[%s3 + $0x120] sm:$0xff]
    %v2996 = vld [vmem:[%s3 + $0x148] sm:$0xff]
    %v2997 = vld [vmem:[%s3 + $0x170] sm:$0xff]
    %v2998 = vld [vmem:[%s3 + $0x198] sm:$0xff]
    %v2999 = vld [vmem:[%s3 + $0x1c0] sm:$0xff]
    %v3000 = vld [vmem:[%s3 + $0x1e8] sm:$0xff]
    %v3001 = vld [vmem:[%s3 + $0x210] sm:$0xff]
    %v3002 = vld [vmem:[%s3 + $0x238] sm:$0xff]
    %v3003 = vld [vmem:[%s3 + $0x260] sm:$0xff]
    %3004 = vmatprep.subr.mxu0 0.0
    %3005 = vmatpush1.msra.mxu0 %v2988
    %3006 = vmatprep.subr.mxu0 0.0
    %3007 = vmatpush1.msra.mxu0 %v2989
    %3008 = vmatprep.subr.mxu0 0.0
    %3009 = vmatpush1.msra.mxu0 %v2990
    %3010 = vmatprep.subr.mxu0 0.0
    %3011 = vmatpush1.msra.mxu0 %v2991
    %3012 = vmatprep.subr.mxu0 0.0
    %3013 = vmatpush1.msra.mxu0 %v2992
    %3014 = vmatprep.subr.mxu0 0.0
    %3015 = vmatpush1.msra.mxu0 %v2993
    %3016 = vmatprep.subr.mxu0 0.0
    %3017 = vmatpush1.msra.mxu0 %v2994
    %3018 = vmatprep.subr.mxu0 0.0
    %3019 = vmatpush1.msra.mxu0 %v2995
    %3020 = vmatprep.subr.mxu0 0.0
    %3021 = vmatpush1.msra.mxu0 %v2996
    %3022 = vmatprep.subr.mxu0 0.0
    %3023 = vmatpush1.msra.mxu0 %v2997
    %3024 = vmatprep.subr.mxu0 0.0
    %3025 = vmatpush1.msra.mxu0 %v2998
    %3026 = vmatprep.subr.mxu0 0.0
    %3027 = vmatpush1.msra.mxu0 %v2999
    %3028 = vmatprep.subr.mxu0 0.0
    %3029 = vmatpush1.msra.mxu0 %v3000
    %3030 = vmatprep.subr.mxu0 0.0
    %3031 = vmatpush1.msra.mxu0 %v3001
    %3032 = vmatprep.subr.mxu0 0.0
    %3033 = vmatpush1.msra.mxu0 %v3002
    %3034 = vmatprep.subr.mxu0 0.0
    %3035 = vmatpush1.msra.mxu0 %v3003
    %3036 = vmatprep.subr.mxu0 0.0
    %3037 = vmatpush1.msra.mxu0 0.0
    %3038 = vmatprep.subr.mxu0 0.0
    %3039 = vmatpush1.msra.mxu0 0.0
    %3040 = vmatprep.subr.mxu0 0.0
    %3041 = vmatpush1.msra.mxu0 0.0
    %3042 = vmatprep.subr.mxu0 0.0
    %3043 = vmatpush1.msra.mxu0 0.0
    %3044 = vmatprep.subr.mxu0 0.0
    %3045 = vmatpush1.msra.mxu0 0.0
    %3046 = vmatprep.subr.mxu0 0.0
    %3047 = vmatpush1.msra.mxu0 0.0
    %3048 = vmatprep.subr.mxu0 0.0
    %3049 = vmatpush1.msra.mxu0 0.0
    %3050 = vmatprep.subr.mxu0 0.0
    %3051 = vmatpush1.msra.mxu0 0.0
    %3052 = vmatprep.subr.mxu0 0.0
    %3053 = vmatpush1.msra.mxu0 0.0
    %3054 = vmatprep.subr.mxu0 0.0
    %3055 = vmatpush1.msra.mxu0 0.0
    %3056 = vmatprep.subr.mxu0 0.0
    %3057 = vmatpush1.msra.mxu0 0.0
    %3058 = vmatprep.subr.mxu0 0.0
    %3059 = vmatpush1.msra.mxu0 0.0
    %3060 = vmatprep.subr.mxu0 0.0
    %3061 = vmatpush1.msra.mxu0 0.0
    %3062 = vmatprep.subr.mxu0 0.0
    %3063 = vmatpush1.msra.mxu0 0.0
    %3064 = vmatprep.subr.mxu0 0.0
    %3065 = vmatpush1.msra.mxu0 0.0
    %3066 = vmatprep.subr.mxu0 0.0
    %3067 = vmatpush1.msra.mxu0 0.0
    %3068 = vmatprep.mubr.f32.mxu0 0.0
    %3069 = vmatmul.mubr.f32.gmra.mrb[0].mxu0 %v2908
    %v3070 = vpop.f32.mrb[0].mxu0
    %v3071 = vpop.f32.mrb[0].mxu0
    %3072 = vmatprep.mubr.f32.mxu0 0.0
    %3073 = vmatmul.mubr.f32.gmra.mrb[0].mxu0 %v2909
    %v3074 = vpop.f32.mrb[0].mxu0
    %v3075 = vpop.f32.mrb[0].mxu0
    %3076 = vmatprep.mubr.f32.mxu0 0.0
    %3077 = vmatmul.mubr.f32.gmra.mrb[0].mxu0 %v2910
    %v3078 = vpop.f32.mrb[0].mxu0
    %v3079 = vpop.f32.mrb[0].mxu0
    %3080 = vmatprep.mubr.f32.mxu0 0.0
    %3081 = vmatmul.mubr.f32.gmra.mrb[0].mxu0 %v2911
    %v3082 = vpop.f32.mrb[0].mxu0
    %v3083 = vpop.f32.mrb[0].mxu0
    %3084 = vmatprep.mubr.f32.mxu0 0.0
    %3085 = vmatmul.mubr.f32.gmra.mrb[0].mxu0 %v2912
    %v3086 = vpop.f32.mrb[0].mxu0
    %v3087 = vadd.f32 0.0, %v3086
    %v3088 = vpop.f32.mrb[0].mxu0
    %3089 = vmatprep.mubr.f32.mxu0 0.0
    %3090 = vmatmul.mubr.f32.gmra.mrb[0].mxu0 %v2913
    %v3091 = vpop.f32.mrb[0].mxu0
    %v3092 = vadd.f32 0.0, %v3091
    %v3093 = vpop.f32.mrb[0].mxu0
    %3094 = vmatprep.mubr.f32.mxu0 0.0
    %3095 = vmatmul.mubr.f32.gmra.mrb[0].mxu0 %v2914
    %v3096 = vpop.f32.mrb[0].mxu0
    %v3097 = vpop.f32.mrb[0].mxu0
    %3098 = vmatprep.mubr.f32.mxu0 0.0
    %3099 = vmatmul.mubr.f32.gmra.mrb[0].mxu0 %v2915
    %v3100 = vpop.f32.mrb[0].mxu0
    %v3101 = vpop.f32.mrb[0].mxu0
    %3102 = vmatprep.mubr.f32.mxu0 0.0
    %3103 = vmatmul.mubr.f32.gmra.mrb[0].mxu0 %v2916
    %v3104 = vpop.f32.mrb[0].mxu0
    %v3105 = vadd.f32 0.0, %v3104
    %v3106 = vpop.f32.mrb[0].mxu0
    %3107 = vmatprep.mubr.f32.mxu0 0.0
    %3108 = vmatmul.mubr.f32.gmra.mrb[0].mxu0 %v2917
    %v3109 = vpop.f32.mrb[0].mxu0
    %v3110 = vadd.f32 0.0, %v3109
    %v3111 = vpop.f32.mrb[0].mxu0
    %3112 = vmatprep.mubr.f32.mxu0 0.0
    %3113 = vmatmul.mubr.f32.gmra.mrb[0].mxu0 %v2918
    %v3114 = vpop.f32.mrb[0].mxu0
    %v3115 = vpop.f32.mrb[0].mxu0
    %3116 = vmatprep.mubr.f32.mxu0 0.0
    %3117 = vmatmul.mubr.f32.gmra.mrb[0].mxu0 %v2919
    %v3118 = vpop.f32.mrb[0].mxu0
    %v3119 = vpop.f32.mrb[0].mxu0
    %3120 = vmatprep.mubr.f32.mxu0 0.0
    %3121 = vmatmul.mubr.f32.gmra.mrb[0].mxu0 %v2920
    %v3122 = vpop.f32.mrb[0].mxu0
    %v3123 = vadd.f32 0.0, %v3122
    %v3124 = vpop.f32.mrb[0].mxu0
    %3125 = vmatprep.mubr.f32.mxu0 0.0
    %3126 = vmatmul.mubr.f32.gmra.mrb[0].mxu0 %v2921
    %v3127 = vpop.f32.mrb[0].mxu0
    %v3128 = vadd.f32 0.0, %v3127
    %v3129 = vpop.f32.mrb[0].mxu0
    %3130 = vmatprep.mubr.f32.mxu0 0.0
    %3131 = vmatmul.mubr.f32.gmra.mrb[0].mxu0 %v2922
    %v3132 = vpop.f32.mrb[0].mxu0
    %v3133 = vpop.f32.mrb[0].mxu0
    %3134 = vmatprep.mubr.f32.mxu0 0.0
    %3135 = vmatmul.mubr.f32.gmra.mrb[0].mxu0 %v2923
    %v3136 = vpop.f32.mrb[0].mxu0
    %v3137 = vpop.f32.mrb[0].mxu0
    %3138 = vmatprep.mubr.f32.mxu0 0.0
    %3139 = vmatmul.mubr.f32.gmra.mrb[0].mxu0 %v2924
    %v3140 = vpop.f32.mrb[0].mxu0
    %v3141 = vadd.f32 0.0, %v3140
    %v3142 = vpop.f32.mrb[0].mxu0
    %3143 = vmatprep.mubr.f32.mxu0 0.0
    %3144 = vmatmul.mubr.f32.gmra.mrb[0].mxu0 %v2925
    %v3145 = vpop.f32.mrb[0].mxu0
    %v3146 = vadd.f32 0.0, %v3145
    %v3147 = vpop.f32.mrb[0].mxu0
    %3148 = vmatprep.mubr.f32.mxu0 0.0
    %3149 = vmatmul.mubr.f32.gmra.mrb[0].mxu0 %v2926
    %v3150 = vpop.f32.mrb[0].mxu0
    %v3151 = vpop.f32.mrb[0].mxu0
    %3152 = vmatprep.mubr.f32.mxu0 0.0
    %3153 = vmatmul.mubr.f32.gmra.mrb[0].mxu0 %v2927
    %v3154 = vpop.f32.mrb[0].mxu0
    %v3155 = vpop.f32.mrb[0].mxu0
    %3156 = vmatprep.mubr.f32.mxu0 0.0
    %3157 = vmatmul.mubr.f32.gmra.mrb[0].mxu0 %v2928
    %v3158 = vpop.f32.mrb[0].mxu0
    %v3159 = vadd.f32 0.0, %v3158
    %v3160 = vpop.f32.mrb[0].mxu0
    %3161 = vmatprep.mubr.f32.mxu0 0.0
    %3162 = vmatmul.mubr.f32.gmra.mrb[0].mxu0 %v2929
    %v3163 = vpop.f32.mrb[0].mxu0
    %v3164 = vadd.f32 0.0, %v3163
    %v3165 = vpop.f32.mrb[0].mxu0
    %3166 = vmatprep.mubr.f32.mxu0 0.0
    %3167 = vmatmul.mubr.f32.gmra.mrb[0].mxu0 %v2930
    %v3168 = vpop.f32.mrb[0].mxu0
    %v3169 = vpop.f32.mrb[0].mxu0
    %3170 = vmatprep.mubr.f32.mxu0 0.0
    %3171 = vmatmul.mubr.f32.gmra.mrb[0].mxu0 %v2931
    %v3172 = vpop.f32.mrb[0].mxu0
    %v3173 = vpop.f32.mrb[0].mxu0
    %3174 = vmatprep.mubr.f32.mxu0 0.0
    %3175 = vmatmul.mubr.f32.gmra.mrb[0].mxu0 %v2932
    %v3176 = vpop.f32.mrb[0].mxu0
    %v3177 = vadd.f32 0.0, %v3176
    %v3178 = vpop.f32.mrb[0].mxu0
    %3179 = vmatprep.mubr.f32.mxu0 0.0
    %3180 = vmatmul.mubr.f32.gmra.mrb[0].mxu0 %v2933
    %v3181 = vpop.f32.mrb[0].mxu0
    %v3182 = vadd.f32 0.0, %v3181
    %v3183 = vpop.f32.mrb[0].mxu0
    %3184 = vmatprep.mubr.f32.mxu0 0.0
    %3185 = vmatmul.mubr.f32.gmra.mrb[0].mxu0 %v2934
    %v3186 = vpop.f32.mrb[0].mxu0
    %v3187 = vpop.f32.mrb[0].mxu0
    %3188 = vmatprep.mubr.f32.mxu0 0.0
    %3189 = vmatmul.mubr.f32.gmra.mrb[0].mxu0 %v2935
    %v3190 = vpop.f32.mrb[0].mxu0
    %v3191 = vpop.f32.mrb[0].mxu0
    %3192 = vmatprep.mubr.f32.mxu0 0.0
    %3193 = vmatmul.mubr.f32.gmra.mrb[0].mxu0 %v2936
    %v3194 = vpop.f32.mrb[0].mxu0
    %v3195 = vadd.f32 0.0, %v3194
    %v3196 = vpop.f32.mrb[0].mxu0
    %3197 = vmatprep.mubr.f32.mxu0 0.0
    %3198 = vmatmul.mubr.f32.gmra.mrb[0].mxu0 %v2937
    %v3199 = vpop.f32.mrb[0].mxu0
    %v3200 = vadd.f32 0.0, %v3199
    %v3201 = vpop.f32.mrb[0].mxu0
    %3202 = vmatprep.mubr.f32.mxu0 0.0
    %3203 = vmatmul.mubr.f32.gmra.mrb[0].mxu0 %v2938
    %v3204 = vpop.f32.mrb[0].mxu0
    %v3205 = vpop.f32.mrb[0].mxu0
    %3206 = vmatprep.mubr.f32.mxu0 0.0
    %3207 = vmatmul.mubr.f32.gmra.mrb[0].mxu0 %v2939
    %v3208 = vpop.f32.mrb[0].mxu0
    %v3209 = vpop.f32.mrb[0].mxu0
    %3210 = vmatprep.mubr.f32.mxu0 0.0
    %3211 = vmatmul.mubr.f32.gmra.mrb[0].mxu0 %v2940
    %v3212 = vpop.f32.mrb[0].mxu0
    %v3213 = vadd.f32 0.0, %v3212
    %v3214 = vpop.f32.mrb[0].mxu0
    %3215 = vmatprep.mubr.f32.mxu0 0.0
    %3216 = vmatmul.mubr.f32.gmra.mrb[0].mxu0 %v2941
    %v3217 = vpop.f32.mrb[0].mxu0
    %v3218 = vadd.f32 0.0, %v3217
    %v3219 = vpop.f32.mrb[0].mxu0
    %3220 = vmatprep.mubr.f32.mxu0 0.0
    %3221 = vmatmul.mubr.f32.gmra.mrb[0].mxu0 %v2942
    %v3222 = vpop.f32.mrb[0].mxu0
    %v3223 = vpop.f32.mrb[0].mxu0
    %3224 = vmatprep.mubr.f32.mxu0 0.0
    %3225 = vmatmul.mubr.f32.gmra.mrb[0].mxu0 %v2943
    %v3226 = vpop.f32.mrb[0].mxu0
    %v3227 = vpop.f32.mrb[0].mxu0
    %3228 = vmatprep.mubr.f32.mxu0 0.0
    %3229 = vmatmul.mubr.f32.gmra.mrb[0].mxu0 %v2944
    %v3230 = vpop.f32.mrb[0].mxu0
    %v3231 = vadd.f32 0.0, %v3230
    %v3232 = vpop.f32.mrb[0].mxu0
    %3233 = vmatprep.mubr.f32.mxu0 0.0
    %3234 = vmatmul.mubr.f32.gmra.mrb[0].mxu0 %v2945
    %v3235 = vpop.f32.mrb[0].mxu0
    %v3236 = vadd.f32 0.0, %v3235
    %v3237 = vpop.f32.mrb[0].mxu0
    %3238 = vmatprep.mubr.f32.mxu0 0.0
    %3239 = vmatmul.mubr.f32.gmra.mrb[0].mxu0 %v2946
    %v3240 = vpop.f32.mrb[0].mxu0
    %v3241 = vpop.f32.mrb[0].mxu0
    %3242 = vmatprep.mubr.f32.mxu0 0.0
    %3243 = vmatmul.mubr.f32.gmra.mrb[0].mxu0 %v2947
    %v3244 = vpop.f32.mrb[0].mxu0
    %v3245 = vpop.f32.mrb[0].mxu0
    %3246 = vmatprep.mubr.f32.mxu0 0.0
    %3247 = vmatmul.mubr.f32.gmra.mrb[0].mxu0 %v2948
    %v3248 = vpop.f32.mrb[0].mxu0
    %v3249 = vadd.f32 0.0, %v3248
    %v3250 = vpop.f32.mrb[0].mxu0
    %3251 = vmatprep.mubr.f32.mxu0 0.0
    %3252 = vmatmul.mubr.f32.gmra.mrb[0].mxu0 %v2949
    %v3253 = vpop.f32.mrb[0].mxu0
    %v3254 = vadd.f32 0.0, %v3253
    %v3255 = vpop.f32.mrb[0].mxu0
    %3256 = vmatprep.mubr.f32.mxu0 0.0
    %3257 = vmatmul.mubr.f32.gmra.mrb[0].mxu0 %v2950
    %v3258 = vpop.f32.mrb[0].mxu0
    %v3259 = vpop.f32.mrb[0].mxu0
    %3260 = vmatprep.mubr.f32.mxu0 0.0
    %3261 = vmatmul.mubr.f32.gmra.mrb[0].mxu0 %v2951
    %v3262 = vpop.f32.mrb[0].mxu0
    %v3263 = vpop.f32.mrb[0].mxu0
    %3264 = vmatprep.mubr.f32.mxu0 0.0
    %3265 = vmatmul.mubr.f32.gmra.mrb[0].mxu0 %v2952
    %v3266 = vpop.f32.mrb[0].mxu0
    %v3267 = vpop.f32.mrb[0].mxu0
    %3268 = vmatprep.mubr.f32.mxu0 0.0
    %3269 = vmatmul.mubr.f32.gmra.mrb[0].mxu0 %v2953
    %v3270 = vpop.f32.mrb[0].mxu0
    %v3271 = vpop.f32.mrb[0].mxu0
    %3272 = vmatprep.mubr.f32.mxu0 0.0
    %3273 = vmatmul.mubr.f32.gmra.mrb[0].mxu0 %v2954
    %v3274 = vpop.f32.mrb[0].mxu0
    %v3275 = vpop.f32.mrb[0].mxu0
    %3276 = vmatprep.mubr.f32.mxu0 0.0
    %3277 = vmatmul.mubr.f32.gmra.mrb[0].mxu0 %v2955
    %v3278 = vpop.f32.mrb[0].mxu0
    %v3279 = vpop.f32.mrb[0].mxu0
    %3280 = vmatprep.mubr.f32.mxu0 0.0
    %3281 = vmatmul.mubr.f32.gmra.mrb[0].mxu0 %v2956
    %v3282 = vpop.f32.mrb[0].mxu0
    %v3283 = vpop.f32.mrb[0].mxu0
    %3284 = vmatprep.mubr.f32.mxu0 0.0
    %3285 = vmatmul.mubr.f32.gmra.mrb[0].mxu0 %v2957
    %v3286 = vpop.f32.mrb[0].mxu0
    %v3287 = vpop.f32.mrb[0].mxu0
    %3288 = vmatprep.mubr.f32.mxu0 0.0
    %3289 = vmatmul.mubr.f32.gmra.mrb[0].mxu0 %v2958
    %v3290 = vpop.f32.mrb[0].mxu0
    %v3291 = vpop.f32.mrb[0].mxu0
    %3292 = vmatprep.mubr.f32.mxu0 0.0
    %3293 = vmatmul.mubr.f32.gmra.mrb[0].mxu0 %v2959
    %v3294 = vpop.f32.mrb[0].mxu0
    %v3295 = vpop.f32.mrb[0].mxu0
    %3296 = vmatprep.mubr.f32.mxu0 0.0
    %3297 = vmatmul.mubr.f32.gmra.mrb[0].mxu0 %v2960
    %v3298 = vpop.f32.mrb[0].mxu0
    %v3299 = vpop.f32.mrb[0].mxu0
    %3300 = vmatprep.mubr.f32.mxu0 0.0
    %3301 = vmatmul.mubr.f32.gmra.mrb[0].mxu0 %v2961
    %v3302 = vpop.f32.mrb[0].mxu0
    %v3303 = vpop.f32.mrb[0].mxu0
    %3304 = vmatprep.mubr.f32.mxu0 0.0
    %3305 = vmatmul.mubr.f32.gmra.mrb[0].mxu0 %v2962
    %v3306 = vpop.f32.mrb[0].mxu0
    %v3307 = vpop.f32.mrb[0].mxu0
    %3308 = vmatprep.mubr.f32.mxu0 0.0
    %3309 = vmatmul.mubr.f32.gmra.mrb[0].mxu0 %v2963
    %v3310 = vpop.f32.mrb[0].mxu0
    %v3311 = vpop.f32.mrb[0].mxu0
    %3312 = vmatprep.mubr.f32.mxu0 0.0
    %3313 = vmatmul.mubr.f32.gmra.mrb[0].mxu0 %v2964
    %v3314 = vpop.f32.mrb[0].mxu0
    %v3315 = vpop.f32.mrb[0].mxu0
    %3316 = vmatprep.mubr.f32.mxu0 0.0
    %3317 = vmatmul.mubr.f32.gmra.mrb[0].mxu0 %v2965
    %v3318 = vpop.f32.mrb[0].mxu0
    %v3319 = vpop.f32.mrb[0].mxu0
    %3320 = vmatprep.mubr.f32.mxu0 0.0
    %3321 = vmatmul.mubr.f32.gmra.mrb[0].mxu0 %v2966
    %v3322 = vpop.f32.mrb[0].mxu0
    %v3323 = vpop.f32.mrb[0].mxu0
    %3324 = vmatprep.mubr.f32.mxu0 0.0
    %3325 = vmatmul.mubr.f32.gmra.mrb[0].mxu0 %v2967
    %v3326 = vpop.f32.mrb[0].mxu0
    %v3327 = vpop.f32.mrb[0].mxu0
    %3328 = vmatprep.mubr.f32.mxu0 0.0
    %3329 = vmatmul.mubr.f32.gmra.mrb[0].mxu0 %v2968
    %v3330 = vpop.f32.mrb[0].mxu0
    %v3331 = vpop.f32.mrb[0].mxu0
    %3332 = vmatprep.mubr.f32.mxu0 0.0
    %3333 = vmatmul.mubr.f32.gmra.mrb[0].mxu0 %v2969
    %v3334 = vpop.f32.mrb[0].mxu0
    %v3335 = vpop.f32.mrb[0].mxu0
    %3336 = vmatprep.mubr.f32.mxu0 0.0
    %3337 = vmatmul.mubr.f32.gmra.mrb[0].mxu0 %v2970
    %v3338 = vpop.f32.mrb[0].mxu0
    %v3339 = vpop.f32.mrb[0].mxu0
    %3340 = vmatprep.mubr.f32.mxu0 0.0
    %3341 = vmatmul.mubr.f32.gmra.mrb[0].mxu0 %v2971
    %v3342 = vpop.f32.mrb[0].mxu0
    %v3343 = vpop.f32.mrb[0].mxu0
    %3344 = vdwg.mxu0
    %3345 = vmatprep.subr.mxu0 0.0
    %3346 = vmatpush1.msra.mxu0 %v2972
    %3347 = vmatprep.subr.mxu0 0.0
    %3348 = vmatpush1.msra.mxu0 %v2973
    %3349 = vmatprep.subr.mxu0 0.0
    %3350 = vmatpush1.msra.mxu0 %v2974
    %3351 = vmatprep.subr.mxu0 0.0
    %3352 = vmatpush1.msra.mxu0 %v2975
    %3353 = vmatprep.subr.mxu0 0.0
    %3354 = vmatpush1.msra.mxu0 %v2976
    %3355 = vmatprep.subr.mxu0 0.0
    %3356 = vmatpush1.msra.mxu0 %v2977
    %3357 = vmatprep.subr.mxu0 0.0
    %3358 = vmatpush1.msra.mxu0 %v2978
    %3359 = vmatprep.subr.mxu0 0.0
    %3360 = vmatpush1.msra.mxu0 %v2979
    %3361 = vmatprep.subr.mxu0 0.0
    %3362 = vmatpush1.msra.mxu0 %v2980
    %3363 = vmatprep.subr.mxu0 0.0
    %3364 = vmatpush1.msra.mxu0 %v2981
    %3365 = vmatprep.subr.mxu0 0.0
    %3366 = vmatpush1.msra.mxu0 %v2982
    %3367 = vmatprep.subr.mxu0 0.0
    %3368 = vmatpush1.msra.mxu0 %v2983
    %3369 = vmatprep.subr.mxu0 0.0
    %3370 = vmatpush1.msra.mxu0 %v2984
    %3371 = vmatprep.subr.mxu0 0.0
    %3372 = vmatpush1.msra.mxu0 %v2985
    %3373 = vmatprep.subr.mxu0 0.0
    %3374 = vmatpush1.msra.mxu0 %v2986
    %3375 = vmatprep.subr.mxu0 0.0
    %3376 = vmatpush1.msra.mxu0 %v2987
    %3377 = vmatprep.subr.mxu0 0.0
    %3378 = vmatpush1.msra.mxu0 0.0
    %3379 = vmatprep.subr.mxu0 0.0
    %3380 = vmatpush1.msra.mxu0 0.0
    %3381 = vmatprep.subr.mxu0 0.0
    %3382 = vmatpush1.msra.mxu0 0.0
    %3383 = vmatprep.subr.mxu0 0.0
    %3384 = vmatpush1.msra.mxu0 0.0
    %3385 = vmatprep.subr.mxu0 0.0
    %3386 = vmatpush1.msra.mxu0 0.0
    %3387 = vmatprep.subr.mxu0 0.0
    %3388 = vmatpush1.msra.mxu0 0.0
    %3389 = vmatprep.subr.mxu0 0.0
    %3390 = vmatpush1.msra.mxu0 0.0
    %3391 = vmatprep.subr.mxu0 0.0
    %3392 = vmatpush1.msra.mxu0 0.0
    %3393 = vmatprep.subr.mxu0 0.0
    %3394 = vmatpush1.msra.mxu0 0.0
    %3395 = vmatprep.subr.mxu0 0.0
    %3396 = vmatpush1.msra.mxu0 0.0
    %3397 = vmatprep.subr.mxu0 0.0
    %3398 = vmatpush1.msra.mxu0 0.0
    %3399 = vmatprep.subr.mxu0 0.0
    %3400 = vmatpush1.msra.mxu0 0.0
    %3401 = vmatprep.subr.mxu0 0.0
    %3402 = vmatpush1.msra.mxu0 0.0
    %3403 = vmatprep.subr.mxu0 0.0
    %3404 = vmatpush1.msra.mxu0 0.0
    %3405 = vmatprep.subr.mxu0 0.0
    %3406 = vmatpush1.msra.mxu0 0.0
    %3407 = vmatprep.subr.mxu0 0.0
    %3408 = vmatpush1.msra.mxu0 0.0
    %3409 = vmatprep.mubr.f32.mxu0 0.0
    %3410 = vmatmul.mubr.f32.gmra.mrb[0].mxu0 %v2908
    %v3411 = vpop.f32.mrb[0].mxu0
    %v3412 = vadd.f32 %v3087, %v3411
    %v3413 = vpop.f32.mrb[0].mxu0
    %3414 = vmatprep.mubr.f32.mxu0 0.0
    %3415 = vmatmul.mubr.f32.gmra.mrb[0].mxu0 %v2909
    %v3416 = vpop.f32.mrb[0].mxu0
    %v3417 = vadd.f32 %v3092, %v3416
    %v3418 = vpop.f32.mrb[0].mxu0
    %3419 = vmatprep.mubr.f32.mxu0 0.0
    %3420 = vmatmul.mubr.f32.gmra.mrb[0].mxu0 %v2910
    %v3421 = vpop.f32.mrb[0].mxu0
    %v3422 = vpop.f32.mrb[0].mxu0
    %3423 = vmatprep.mubr.f32.mxu0 0.0
    %3424 = vmatmul.mubr.f32.gmra.mrb[0].mxu0 %v2911
    %v3425 = vpop.f32.mrb[0].mxu0
    %v3426 = vpop.f32.mrb[0].mxu0
    %3427 = vmatprep.mubr.f32.mxu0 0.0
    %3428 = vmatmul.mubr.f32.gmra.mrb[0].mxu0 %v2912
    %v3429 = vpop.f32.mrb[0].mxu0
    %v3430 = vadd.f32 %v3105, %v3429
    %v3431 = vpop.f32.mrb[0].mxu0
    %3432 = vmatprep.mubr.f32.mxu0 0.0
    %3433 = vmatmul.mubr.f32.gmra.mrb[0].mxu0 %v2913
    %v3434 = vpop.f32.mrb[0].mxu0
    %v3435 = vadd.f32 %v3110, %v3434
    %v3436 = vpop.f32.mrb[0].mxu0
    %3437 = vmatprep.mubr.f32.mxu0 0.0
    %3438 = vmatmul.mubr.f32.gmra.mrb[0].mxu0 %v2914
    %v3439 = vpop.f32.mrb[0].mxu0
    %v3440 = vpop.f32.mrb[0].mxu0
    %3441 = vmatprep.mubr.f32.mxu0 0.0
    %3442 = vmatmul.mubr.f32.gmra.mrb[0].mxu0 %v2915
    %v3443 = vpop.f32.mrb[0].mxu0
    %v3444 = vpop.f32.mrb[0].mxu0
    %3445 = vmatprep.mubr.f32.mxu0 0.0
    %3446 = vmatmul.mubr.f32.gmra.mrb[0].mxu0 %v2916
    %v3447 = vpop.f32.mrb[0].mxu0
    %v3448 = vadd.f32 %v3123, %v3447
    %v3449 = vpop.f32.mrb[0].mxu0
    %3450 = vmatprep.mubr.f32.mxu0 0.0
    %3451 = vmatmul.mubr.f32.gmra.mrb[0].mxu0 %v2917
    %v3452 = vpop.f32.mrb[0].mxu0
    %v3453 = vadd.f32 %v3128, %v3452
    %v3454 = vpop.f32.mrb[0].mxu0
    %3455 = vmatprep.mubr.f32.mxu0 0.0
    %3456 = vmatmul.mubr.f32.gmra.mrb[0].mxu0 %v2918
    %v3457 = vpop.f32.mrb[0].mxu0
    %v3458 = vpop.f32.mrb[0].mxu0
    %3459 = vmatprep.mubr.f32.mxu0 0.0
    %3460 = vmatmul.mubr.f32.gmra.mrb[0].mxu0 %v2919
    %v3461 = vpop.f32.mrb[0].mxu0
    %v3462 = vpop.f32.mrb[0].mxu0
    %3463 = vmatprep.mubr.f32.mxu0 0.0
    %3464 = vmatmul.mubr.f32.gmra.mrb[0].mxu0 %v2920
    %v3465 = vpop.f32.mrb[0].mxu0
    %v3466 = vadd.f32 %v3141, %v3465
    %v3467 = vpop.f32.mrb[0].mxu0
    %3468 = vmatprep.mubr.f32.mxu0 0.0
    %3469 = vmatmul.mubr.f32.gmra.mrb[0].mxu0 %v2921
    %v3470 = vpop.f32.mrb[0].mxu0
    %v3471 = vadd.f32 %v3146, %v3470
    %v3472 = vpop.f32.mrb[0].mxu0
    %3473 = vmatprep.mubr.f32.mxu0 0.0
    %3474 = vmatmul.mubr.f32.gmra.mrb[0].mxu0 %v2922
    %v3475 = vpop.f32.mrb[0].mxu0
    %v3476 = vpop.f32.mrb[0].mxu0
    %3477 = vmatprep.mubr.f32.mxu0 0.0
    %3478 = vmatmul.mubr.f32.gmra.mrb[0].mxu0 %v2923
    %v3479 = vpop.f32.mrb[0].mxu0
    %v3480 = vpop.f32.mrb[0].mxu0
    %3481 = vmatprep.mubr.f32.mxu0 0.0
    %3482 = vmatmul.mubr.f32.gmra.mrb[0].mxu0 %v2924
    %v3483 = vpop.f32.mrb[0].mxu0
    %v3484 = vadd.f32 %v3159, %v3483
    %v3485 = vpop.f32.mrb[0].mxu0
    %3486 = vmatprep.mubr.f32.mxu0 0.0
    %3487 = vmatmul.mubr.f32.gmra.mrb[0].mxu0 %v2925
    %v3488 = vpop.f32.mrb[0].mxu0
    %v3489 = vadd.f32 %v3164, %v3488
    %v3490 = vpop.f32.mrb[0].mxu0
    %3491 = vmatprep.mubr.f32.mxu0 0.0
    %3492 = vmatmul.mubr.f32.gmra.mrb[0].mxu0 %v2926
    %v3493 = vpop.f32.mrb[0].mxu0
    %v3494 = vpop.f32.mrb[0].mxu0
    %3495 = vmatprep.mubr.f32.mxu0 0.0
    %3496 = vmatmul.mubr.f32.gmra.mrb[0].mxu0 %v2927
    %v3497 = vpop.f32.mrb[0].mxu0
    %v3498 = vpop.f32.mrb[0].mxu0
    %3499 = vmatprep.mubr.f32.mxu0 0.0
    %3500 = vmatmul.mubr.f32.gmra.mrb[0].mxu0 %v2928
    %v3501 = vpop.f32.mrb[0].mxu0
    %v3502 = vadd.f32 %v3177, %v3501
    %v3503 = vpop.f32.mrb[0].mxu0
    %3504 = vmatprep.mubr.f32.mxu0 0.0
    %3505 = vmatmul.mubr.f32.gmra.mrb[0].mxu0 %v2929
    %v3506 = vpop.f32.mrb[0].mxu0
    %v3507 = vadd.f32 %v3182, %v3506
    %v3508 = vpop.f32.mrb[0].mxu0
    %3509 = vmatprep.mubr.f32.mxu0 0.0
    %3510 = vmatmul.mubr.f32.gmra.mrb[0].mxu0 %v2930
    %v3511 = vpop.f32.mrb[0].mxu0
    %v3512 = vpop.f32.mrb[0].mxu0
    %3513 = vmatprep.mubr.f32.mxu0 0.0
    %3514 = vmatmul.mubr.f32.gmra.mrb[0].mxu0 %v2931
    %v3515 = vpop.f32.mrb[0].mxu0
    %v3516 = vpop.f32.mrb[0].mxu0
    %3517 = vmatprep.mubr.f32.mxu0 0.0
    %3518 = vmatmul.mubr.f32.gmra.mrb[0].mxu0 %v2932
    %v3519 = vpop.f32.mrb[0].mxu0
    %v3520 = vadd.f32 %v3195, %v3519
    %v3521 = vpop.f32.mrb[0].mxu0
    %3522 = vmatprep.mubr.f32.mxu0 0.0
    %3523 = vmatmul.mubr.f32.gmra.mrb[0].mxu0 %v2933
    %v3524 = vpop.f32.mrb[0].mxu0
    %v3525 = vadd.f32 %v3200, %v3524
    %v3526 = vpop.f32.mrb[0].mxu0
    %3527 = vmatprep.mubr.f32.mxu0 0.0
    %3528 = vmatmul.mubr.f32.gmra.mrb[0].mxu0 %v2934
    %v3529 = vpop.f32.mrb[0].mxu0
    %v3530 = vpop.f32.mrb[0].mxu0
    %3531 = vmatprep.mubr.f32.mxu0 0.0
    %3532 = vmatmul.mubr.f32.gmra.mrb[0].mxu0 %v2935
    %v3533 = vpop.f32.mrb[0].mxu0
    %v3534 = vpop.f32.mrb[0].mxu0
    %3535 = vmatprep.mubr.f32.mxu0 0.0
    %3536 = vmatmul.mubr.f32.gmra.mrb[0].mxu0 %v2936
    %v3537 = vpop.f32.mrb[0].mxu0
    %v3538 = vadd.f32 %v3213, %v3537
    %v3539 = vpop.f32.mrb[0].mxu0
    %3540 = vmatprep.mubr.f32.mxu0 0.0
    %3541 = vmatmul.mubr.f32.gmra.mrb[0].mxu0 %v2937
    %v3542 = vpop.f32.mrb[0].mxu0
    %v3543 = vadd.f32 %v3218, %v3542
    %v3544 = vpop.f32.mrb[0].mxu0
    %3545 = vmatprep.mubr.f32.mxu0 0.0
    %3546 = vmatmul.mubr.f32.gmra.mrb[0].mxu0 %v2938
    %v3547 = vpop.f32.mrb[0].mxu0
    %v3548 = vpop.f32.mrb[0].mxu0
    %3549 = vmatprep.mubr.f32.mxu0 0.0
    %3550 = vmatmul.mubr.f32.gmra.mrb[0].mxu0 %v2939
    %v3551 = vpop.f32.mrb[0].mxu0
    %v3552 = vpop.f32.mrb[0].mxu0
    %3553 = vmatprep.mubr.f32.mxu0 0.0
    %3554 = vmatmul.mubr.f32.gmra.mrb[0].mxu0 %v2940
    %v3555 = vpop.f32.mrb[0].mxu0
    %v3556 = vadd.f32 %v3231, %v3555
    %v3557 = vpop.f32.mrb[0].mxu0
    %3558 = vmatprep.mubr.f32.mxu0 0.0
    %3559 = vmatmul.mubr.f32.gmra.mrb[0].mxu0 %v2941
    %v3560 = vpop.f32.mrb[0].mxu0
    %v3561 = vadd.f32 %v3236, %v3560
    %v3562 = vpop.f32.mrb[0].mxu0
    %3563 = vmatprep.mubr.f32.mxu0 0.0
    %3564 = vmatmul.mubr.f32.gmra.mrb[0].mxu0 %v2942
    %v3565 = vpop.f32.mrb[0].mxu0
    %v3566 = vpop.f32.mrb[0].mxu0
    %3567 = vmatprep.mubr.f32.mxu0 0.0
    %3568 = vmatmul.mubr.f32.gmra.mrb[0].mxu0 %v2943
    %v3569 = vpop.f32.mrb[0].mxu0
    %v3570 = vpop.f32.mrb[0].mxu0
    %3571 = vmatprep.mubr.f32.mxu0 0.0
    %3572 = vmatmul.mubr.f32.gmra.mrb[0].mxu0 %v2944
    %v3573 = vpop.f32.mrb[0].mxu0
    %v3574 = vadd.f32 %v3249, %v3573
    %v3575 = vpop.f32.mrb[0].mxu0
    %3576 = vmatprep.mubr.f32.mxu0 0.0
    %3577 = vmatmul.mubr.f32.gmra.mrb[0].mxu0 %v2945
    %v3578 = vpop.f32.mrb[0].mxu0
    %v3579 = vadd.f32 %v3254, %v3578
    %v3580 = vpop.f32.mrb[0].mxu0
    %3581 = vmatprep.mubr.f32.mxu0 0.0
    %3582 = vmatmul.mubr.f32.gmra.mrb[0].mxu0 %v2946
    %v3583 = vpop.f32.mrb[0].mxu0
    %v3584 = vpop.f32.mrb[0].mxu0
    %3585 = vmatprep.mubr.f32.mxu0 0.0
    %3586 = vmatmul.mubr.f32.gmra.mrb[0].mxu0 %v2947
    %v3587 = vpop.f32.mrb[0].mxu0
    %v3588 = vpop.f32.mrb[0].mxu0
    %3589 = vmatprep.mubr.f32.mxu0 0.0
    %3590 = vmatmul.mubr.f32.gmra.mrb[0].mxu0 %v2948
    %v3591 = vpop.f32.mrb[0].mxu0
    %v3592 = vpop.f32.mrb[0].mxu0
    %3593 = vmatprep.mubr.f32.mxu0 0.0
    %3594 = vmatmul.mubr.f32.gmra.mrb[0].mxu0 %v2949
    %v3595 = vpop.f32.mrb[0].mxu0
    %v3596 = vpop.f32.mrb[0].mxu0
    %3597 = vmatprep.mubr.f32.mxu0 0.0
    %3598 = vmatmul.mubr.f32.gmra.mrb[0].mxu0 %v2950
    %v3599 = vpop.f32.mrb[0].mxu0
    %v3600 = vpop.f32.mrb[0].mxu0
    %3601 = vmatprep.mubr.f32.mxu0 0.0
    %3602 = vmatmul.mubr.f32.gmra.mrb[0].mxu0 %v2951
    %v3603 = vpop.f32.mrb[0].mxu0
    %v3604 = vpop.f32.mrb[0].mxu0
    %3605 = vmatprep.mubr.f32.mxu0 0.0
    %3606 = vmatmul.mubr.f32.gmra.mrb[0].mxu0 %v2952
    %v3607 = vpop.f32.mrb[0].mxu0
    %v3608 = vpop.f32.mrb[0].mxu0
    %3609 = vmatprep.mubr.f32.mxu0 0.0
    %3610 = vmatmul.mubr.f32.gmra.mrb[0].mxu0 %v2953
    %v3611 = vpop.f32.mrb[0].mxu0
    %v3612 = vpop.f32.mrb[0].mxu0
    %3613 = vmatprep.mubr.f32.mxu0 0.0
    %3614 = vmatmul.mubr.f32.gmra.mrb[0].mxu0 %v2954
    %v3615 = vpop.f32.mrb[0].mxu0
    %v3616 = vpop.f32.mrb[0].mxu0
    %3617 = vmatprep.mubr.f32.mxu0 0.0
    %3618 = vmatmul.mubr.f32.gmra.mrb[0].mxu0 %v2955
    %v3619 = vpop.f32.mrb[0].mxu0
    %v3620 = vpop.f32.mrb[0].mxu0
    %3621 = vmatprep.mubr.f32.mxu0 0.0
    %3622 = vmatmul.mubr.f32.gmra.mrb[0].mxu0 %v2956
    %v3623 = vpop.f32.mrb[0].mxu0
    %v3624 = vpop.f32.mrb[0].mxu0
    %3625 = vmatprep.mubr.f32.mxu0 0.0
    %3626 = vmatmul.mubr.f32.gmra.mrb[0].mxu0 %v2957
    %v3627 = vpop.f32.mrb[0].mxu0
    %v3628 = vpop.f32.mrb[0].mxu0
    %3629 = vmatprep.mubr.f32.mxu0 0.0
    %3630 = vmatmul.mubr.f32.gmra.mrb[0].mxu0 %v2958
    %v3631 = vpop.f32.mrb[0].mxu0
    %v3632 = vpop.f32.mrb[0].mxu0
    %3633 = vmatprep.mubr.f32.mxu0 0.0
    %3634 = vmatmul.mubr.f32.gmra.mrb[0].mxu0 %v2959
    %v3635 = vpop.f32.mrb[0].mxu0
    %v3636 = vpop.f32.mrb[0].mxu0
    %3637 = vmatprep.mubr.f32.mxu0 0.0
    %3638 = vmatmul.mubr.f32.gmra.mrb[0].mxu0 %v2960
    %v3639 = vpop.f32.mrb[0].mxu0
    %v3640 = vpop.f32.mrb[0].mxu0
    %3641 = vmatprep.mubr.f32.mxu0 0.0
    %3642 = vmatmul.mubr.f32.gmra.mrb[0].mxu0 %v2961
    %v3643 = vpop.f32.mrb[0].mxu0
    %v3644 = vpop.f32.mrb[0].mxu0
    %3645 = vmatprep.mubr.f32.mxu0 0.0
    %3646 = vmatmul.mubr.f32.gmra.mrb[0].mxu0 %v2962
    %v3647 = vpop.f32.mrb[0].mxu0
    %v3648 = vpop.f32.mrb[0].mxu0
    %3649 = vmatprep.mubr.f32.mxu0 0.0
    %3650 = vmatmul.mubr.f32.gmra.mrb[0].mxu0 %v2963
    %v3651 = vpop.f32.mrb[0].mxu0
    %v3652 = vpop.f32.mrb[0].mxu0
    %3653 = vmatprep.mubr.f32.mxu0 0.0
    %3654 = vmatmul.mubr.f32.gmra.mrb[0].mxu0 %v2964
    %v3655 = vpop.f32.mrb[0].mxu0
    %v3656 = vpop.f32.mrb[0].mxu0
    %3657 = vmatprep.mubr.f32.mxu0 0.0
    %3658 = vmatmul.mubr.f32.gmra.mrb[0].mxu0 %v2965
    %v3659 = vpop.f32.mrb[0].mxu0
    %v3660 = vpop.f32.mrb[0].mxu0
    %3661 = vmatprep.mubr.f32.mxu0 0.0
    %3662 = vmatmul.mubr.f32.gmra.mrb[0].mxu0 %v2966
    %v3663 = vpop.f32.mrb[0].mxu0
    %v3664 = vpop.f32.mrb[0].mxu0
    %3665 = vmatprep.mubr.f32.mxu0 0.0
    %3666 = vmatmul.mubr.f32.gmra.mrb[0].mxu0 %v2967
    %v3667 = vpop.f32.mrb[0].mxu0
    %v3668 = vpop.f32.mrb[0].mxu0
    %3669 = vmatprep.mubr.f32.mxu0 0.0
    %3670 = vmatmul.mubr.f32.gmra.mrb[0].mxu0 %v2968
    %v3671 = vpop.f32.mrb[0].mxu0
    %v3672 = vpop.f32.mrb[0].mxu0
    %3673 = vmatprep.mubr.f32.mxu0 0.0
    %3674 = vmatmul.mubr.f32.gmra.mrb[0].mxu0 %v2969
    %v3675 = vpop.f32.mrb[0].mxu0
    %v3676 = vpop.f32.mrb[0].mxu0
    %3677 = vmatprep.mubr.f32.mxu0 0.0
    %3678 = vmatmul.mubr.f32.gmra.mrb[0].mxu0 %v2970
    %v3679 = vpop.f32.mrb[0].mxu0
    %v3680 = vpop.f32.mrb[0].mxu0
    %3681 = vmatprep.mubr.f32.mxu0 0.0
    %3682 = vmatmul.mubr.f32.gmra.mrb[0].mxu0 %v2971
    %v3683 = vpop.f32.mrb[0].mxu0
    %v3684 = vpop.f32.mrb[0].mxu0
    %3685 = vdwg.mxu0
    %v3686 = vld [vmem:[%s3 + $0x10] sm:$0xff]
    %v3687 = vld [vmem:[%s3 + $0x38] sm:$0xff]
    %v3688 = vld [vmem:[%s3 + $0x60] sm:$0xff]
    %v3689 = vld [vmem:[%s3 + $0x88] sm:$0xff]
    %v3690 = vld [vmem:[%s3 + $0xb0] sm:$0xff]
    %v3691 = vld [vmem:[%s3 + $0xd8] sm:$0xff]
    %v3692 = vld [vmem:[%s3 + $0x100] sm:$0xff]
    %v3693 = vld [vmem:[%s3 + $0x128] sm:$0xff]
    %v3694 = vld [vmem:[%s3 + $0x150] sm:$0xff]
    %v3695 = vld [vmem:[%s3 + $0x178] sm:$0xff]
    %v3696 = vld [vmem:[%s3 + $0x1a0] sm:$0xff]
    %v3697 = vld [vmem:[%s3 + $0x1c8] sm:$0xff]
    %v3698 = vld [vmem:[%s3 + $0x1f0] sm:$0xff]
    %v3699 = vld [vmem:[%s3 + $0x218] sm:$0xff]
    %v3700 = vld [vmem:[%s3 + $0x240] sm:$0xff]
    %v3701 = vld [vmem:[%s3 + $0x268] sm:$0xff]
    %3702 = vmatprep.subr.mxu0 0.0
    %3703 = vmatpush1.msra.mxu0 %v3686
    %3704 = vmatprep.subr.mxu0 0.0
    %3705 = vmatpush1.msra.mxu0 %v3687
    %3706 = vmatprep.subr.mxu0 0.0
    %3707 = vmatpush1.msra.mxu0 %v3688
    %3708 = vmatprep.subr.mxu0 0.0
    %3709 = vmatpush1.msra.mxu0 %v3689
    %3710 = vmatprep.subr.mxu0 0.0
    %3711 = vmatpush1.msra.mxu0 %v3690
    %3712 = vmatprep.subr.mxu0 0.0
    %3713 = vmatpush1.msra.mxu0 %v3691
    %3714 = vmatprep.subr.mxu0 0.0
    %3715 = vmatpush1.msra.mxu0 %v3692
    %3716 = vmatprep.subr.mxu0 0.0
    %3717 = vmatpush1.msra.mxu0 %v3693
    %3718 = vmatprep.subr.mxu0 0.0
    %3719 = vmatpush1.msra.mxu0 %v3694
    %3720 = vmatprep.subr.mxu0 0.0
    %3721 = vmatpush1.msra.mxu0 %v3695
    %3722 = vmatprep.subr.mxu0 0.0
    %3723 = vmatpush1.msra.mxu0 %v3696
    %3724 = vmatprep.subr.mxu0 0.0
    %3725 = vmatpush1.msra.mxu0 %v3697
    %3726 = vmatprep.subr.mxu0 0.0
    %3727 = vmatpush1.msra.mxu0 %v3698
    %3728 = vmatprep.subr.mxu0 0.0
    %3729 = vmatpush1.msra.mxu0 %v3699
    %3730 = vmatprep.subr.mxu0 0.0
    %3731 = vmatpush1.msra.mxu0 %v3700
    %3732 = vmatprep.subr.mxu0 0.0
    %3733 = vmatpush1.msra.mxu0 %v3701
    %3734 = vmatprep.subr.mxu0 0.0
    %3735 = vmatpush1.msra.mxu0 0.0
    %3736 = vmatprep.subr.mxu0 0.0
    %3737 = vmatpush1.msra.mxu0 0.0
    %3738 = vmatprep.subr.mxu0 0.0
    %3739 = vmatpush1.msra.mxu0 0.0
    %3740 = vmatprep.subr.mxu0 0.0
    %3741 = vmatpush1.msra.mxu0 0.0
    %3742 = vmatprep.subr.mxu0 0.0
    %3743 = vmatpush1.msra.mxu0 0.0
    %3744 = vmatprep.subr.mxu0 0.0
    %3745 = vmatpush1.msra.mxu0 0.0
    %3746 = vmatprep.subr.mxu0 0.0
    %3747 = vmatpush1.msra.mxu0 0.0
    %3748 = vmatprep.subr.mxu0 0.0
    %3749 = vmatpush1.msra.mxu0 0.0
    %3750 = vmatprep.subr.mxu0 0.0
    %3751 = vmatpush1.msra.mxu0 0.0
    %3752 = vmatprep.subr.mxu0 0.0
    %3753 = vmatpush1.msra.mxu0 0.0
    %3754 = vmatprep.subr.mxu0 0.0
    %3755 = vmatpush1.msra.mxu0 0.0
    %3756 = vmatprep.subr.mxu0 0.0
    %3757 = vmatpush1.msra.mxu0 0.0
    %3758 = vmatprep.subr.mxu0 0.0
    %3759 = vmatpush1.msra.mxu0 0.0
    %3760 = vmatprep.subr.mxu0 0.0
    %3761 = vmatpush1.msra.mxu0 0.0
    %3762 = vmatprep.subr.mxu0 0.0
    %3763 = vmatpush1.msra.mxu0 0.0
    %3764 = vmatprep.subr.mxu0 0.0
    %3765 = vmatpush1.msra.mxu0 0.0
    %3766 = vmatprep.mubr.f32.mxu0 0.0
    %3767 = vmatmul.mubr.f32.gmra.mrb[0].mxu0 %v2908
    %v3768 = vpop.f32.mrb[0].mxu0
    %v3769 = vpop.f32.mrb[0].mxu0
    %3770 = vmatprep.mubr.f32.mxu0 0.0
    %3771 = vmatmul.mubr.f32.gmra.mrb[0].mxu0 %v2909
    %v3772 = vpop.f32.mrb[0].mxu0
    %v3773 = vpop.f32.mrb[0].mxu0
    %3774 = vmatprep.mubr.f32.mxu0 0.0
    %3775 = vmatmul.mubr.f32.gmra.mrb[0].mxu0 %v2910
    %v3776 = vpop.f32.mrb[0].mxu0
    %v3777 = vpop.f32.mrb[0].mxu0
    %3778 = vmatprep.mubr.f32.mxu0 0.0
    %3779 = vmatmul.mubr.f32.gmra.mrb[0].mxu0 %v2911
    %v3780 = vpop.f32.mrb[0].mxu0
    %v3781 = vpop.f32.mrb[0].mxu0
    %3782 = vmatprep.mubr.f32.mxu0 0.0
    %3783 = vmatmul.mubr.f32.gmra.mrb[0].mxu0 %v2912
    %v3784 = vpop.f32.mrb[0].mxu0
    %v3785 = vpop.f32.mrb[0].mxu0
    %3786 = vmatprep.mubr.f32.mxu0 0.0
    %3787 = vmatmul.mubr.f32.gmra.mrb[0].mxu0 %v2913
    %v3788 = vpop.f32.mrb[0].mxu0
    %v3789 = vpop.f32.mrb[0].mxu0
    %3790 = vmatprep.mubr.f32.mxu0 0.0
    %3791 = vmatmul.mubr.f32.gmra.mrb[0].mxu0 %v2914
    %v3792 = vpop.f32.mrb[0].mxu0
    %v3793 = vpop.f32.mrb[0].mxu0
    %3794 = vmatprep.mubr.f32.mxu0 0.0
    %3795 = vmatmul.mubr.f32.gmra.mrb[0].mxu0 %v2915
    %v3796 = vpop.f32.mrb[0].mxu0
    %v3797 = vpop.f32.mrb[0].mxu0
    %3798 = vmatprep.mubr.f32.mxu0 0.0
    %3799 = vmatmul.mubr.f32.gmra.mrb[0].mxu0 %v2916
    %v3800 = vpop.f32.mrb[0].mxu0
    %v3801 = vadd.f32 0.0, %v3800
    %v3802 = vpop.f32.mrb[0].mxu0
    %3803 = vmatprep.mubr.f32.mxu0 0.0
    %3804 = vmatmul.mubr.f32.gmra.mrb[0].mxu0 %v2917
    %v3805 = vpop.f32.mrb[0].mxu0
    %v3806 = vadd.f32 0.0, %v3805
    %v3807 = vpop.f32.mrb[0].mxu0
    %3808 = vmatprep.mubr.f32.mxu0 0.0
    %3809 = vmatmul.mubr.f32.gmra.mrb[0].mxu0 %v2918
    %v3810 = vpop.f32.mrb[0].mxu0
    %v3811 = vpop.f32.mrb[0].mxu0
    %3812 = vmatprep.mubr.f32.mxu0 0.0
    %3813 = vmatmul.mubr.f32.gmra.mrb[0].mxu0 %v2919
    %v3814 = vpop.f32.mrb[0].mxu0
    %v3815 = vpop.f32.mrb[0].mxu0
    %3816 = vmatprep.mubr.f32.mxu0 0.0
    %3817 = vmatmul.mubr.f32.gmra.mrb[0].mxu0 %v2920
    %v3818 = vpop.f32.mrb[0].mxu0
    %v3819 = vadd.f32 0.0, %v3818
    %v3820 = vpop.f32.mrb[0].mxu0
    %3821 = vmatprep.mubr.f32.mxu0 0.0
    %3822 = vmatmul.mubr.f32.gmra.mrb[0].mxu0 %v2921
    %v3823 = vpop.f32.mrb[0].mxu0
    %v3824 = vadd.f32 0.0, %v3823
    %v3825 = vpop.f32.mrb[0].mxu0
    %3826 = vmatprep.mubr.f32.mxu0 0.0
    %3827 = vmatmul.mubr.f32.gmra.mrb[0].mxu0 %v2922
    %v3828 = vpop.f32.mrb[0].mxu0
    %v3829 = vpop.f32.mrb[0].mxu0
    %3830 = vmatprep.mubr.f32.mxu0 0.0
    %3831 = vmatmul.mubr.f32.gmra.mrb[0].mxu0 %v2923
    %v3832 = vpop.f32.mrb[0].mxu0
    %v3833 = vpop.f32.mrb[0].mxu0
    %3834 = vmatprep.mubr.f32.mxu0 0.0
    %3835 = vmatmul.mubr.f32.gmra.mrb[0].mxu0 %v2924
    %v3836 = vpop.f32.mrb[0].mxu0
    %v3837 = vadd.f32 0.0, %v3836
    %v3838 = vpop.f32.mrb[0].mxu0
    %3839 = vmatprep.mubr.f32.mxu0 0.0
    %3840 = vmatmul.mubr.f32.gmra.mrb[0].mxu0 %v2925
    %v3841 = vpop.f32.mrb[0].mxu0
    %v3842 = vadd.f32 0.0, %v3841
    %v3843 = vpop.f32.mrb[0].mxu0
    %3844 = vmatprep.mubr.f32.mxu0 0.0
    %3845 = vmatmul.mubr.f32.gmra.mrb[0].mxu0 %v2926
    %v3846 = vpop.f32.mrb[0].mxu0
    %v3847 = vpop.f32.mrb[0].mxu0
    %3848 = vmatprep.mubr.f32.mxu0 0.0
    %3849 = vmatmul.mubr.f32.gmra.mrb[0].mxu0 %v2927
    %v3850 = vpop.f32.mrb[0].mxu0
    %v3851 = vpop.f32.mrb[0].mxu0
    %3852 = vmatprep.mubr.f32.mxu0 0.0
    %3853 = vmatmul.mubr.f32.gmra.mrb[0].mxu0 %v2928
    %v3854 = vpop.f32.mrb[0].mxu0
    %v3855 = vadd.f32 0.0, %v3854
    %v3856 = vpop.f32.mrb[0].mxu0
    %3857 = vmatprep.mubr.f32.mxu0 0.0
    %3858 = vmatmul.mubr.f32.gmra.mrb[0].mxu0 %v2929
    %v3859 = vpop.f32.mrb[0].mxu0
    %v3860 = vadd.f32 0.0, %v3859
    %v3861 = vpop.f32.mrb[0].mxu0
    %3862 = vmatprep.mubr.f32.mxu0 0.0
    %3863 = vmatmul.mubr.f32.gmra.mrb[0].mxu0 %v2930
    %v3864 = vpop.f32.mrb[0].mxu0
    %v3865 = vpop.f32.mrb[0].mxu0
    %3866 = vmatprep.mubr.f32.mxu0 0.0
    %3867 = vmatmul.mubr.f32.gmra.mrb[0].mxu0 %v2931
    %v3868 = vpop.f32.mrb[0].mxu0
    %v3869 = vpop.f32.mrb[0].mxu0
    %3870 = vmatprep.mubr.f32.mxu0 0.0
    %3871 = vmatmul.mubr.f32.gmra.mrb[0].mxu0 %v2932
    %v3872 = vpop.f32.mrb[0].mxu0
    %v3873 = vadd.f32 0.0, %v3872
    %v3874 = vpop.f32.mrb[0].mxu0
    %3875 = vmatprep.mubr.f32.mxu0 0.0
    %3876 = vmatmul.mubr.f32.gmra.mrb[0].mxu0 %v2933
    %v3877 = vpop.f32.mrb[0].mxu0
    %v3878 = vadd.f32 0.0, %v3877
    %v3879 = vpop.f32.mrb[0].mxu0
    %3880 = vmatprep.mubr.f32.mxu0 0.0
    %3881 = vmatmul.mubr.f32.gmra.mrb[0].mxu0 %v2934
    %v3882 = vpop.f32.mrb[0].mxu0
    %v3883 = vpop.f32.mrb[0].mxu0
    %3884 = vmatprep.mubr.f32.mxu0 0.0
    %3885 = vmatmul.mubr.f32.gmra.mrb[0].mxu0 %v2935
    %v3886 = vpop.f32.mrb[0].mxu0
    %v3887 = vpop.f32.mrb[0].mxu0
    %3888 = vmatprep.mubr.f32.mxu0 0.0
    %3889 = vmatmul.mubr.f32.gmra.mrb[0].mxu0 %v2936
    %v3890 = vpop.f32.mrb[0].mxu0
    %v3891 = vadd.f32 0.0, %v3890
    %v3892 = vpop.f32.mrb[0].mxu0
    %3893 = vmatprep.mubr.f32.mxu0 0.0
    %3894 = vmatmul.mubr.f32.gmra.mrb[0].mxu0 %v2937
    %v3895 = vpop.f32.mrb[0].mxu0
    %v3896 = vadd.f32 0.0, %v3895
    %v3897 = vpop.f32.mrb[0].mxu0
    %3898 = vmatprep.mubr.f32.mxu0 0.0
    %3899 = vmatmul.mubr.f32.gmra.mrb[0].mxu0 %v2938
    %v3900 = vpop.f32.mrb[0].mxu0
    %v3901 = vpop.f32.mrb[0].mxu0
    %3902 = vmatprep.mubr.f32.mxu0 0.0
    %3903 = vmatmul.mubr.f32.gmra.mrb[0].mxu0 %v2939
    %v3904 = vpop.f32.mrb[0].mxu0
    %v3905 = vpop.f32.mrb[0].mxu0
    %3906 = vmatprep.mubr.f32.mxu0 0.0
    %3907 = vmatmul.mubr.f32.gmra.mrb[0].mxu0 %v2940
    %v3908 = vpop.f32.mrb[0].mxu0
    %v3909 = vadd.f32 0.0, %v3908
    %v3910 = vpop.f32.mrb[0].mxu0
    %3911 = vmatprep.mubr.f32.mxu0 0.0
    %3912 = vmatmul.mubr.f32.gmra.mrb[0].mxu0 %v2941
    %v3913 = vpop.f32.mrb[0].mxu0
    %v3914 = vadd.f32 0.0, %v3913
    %v3915 = vpop.f32.mrb[0].mxu0
    %3916 = vmatprep.mubr.f32.mxu0 0.0
    %3917 = vmatmul.mubr.f32.gmra.mrb[0].mxu0 %v2942
    %v3918 = vpop.f32.mrb[0].mxu0
    %v3919 = vpop.f32.mrb[0].mxu0
    %3920 = vmatprep.mubr.f32.mxu0 0.0
    %3921 = vmatmul.mubr.f32.gmra.mrb[0].mxu0 %v2943
    %v3922 = vpop.f32.mrb[0].mxu0
    %v3923 = vpop.f32.mrb[0].mxu0
    %3924 = vmatprep.mubr.f32.mxu0 0.0
    %3925 = vmatmul.mubr.f32.gmra.mrb[0].mxu0 %v2944
    %v3926 = vpop.f32.mrb[0].mxu0
    %v3927 = vadd.f32 0.0, %v3926
    %v3928 = vpop.f32.mrb[0].mxu0
    %3929 = vmatprep.mubr.f32.mxu0 0.0
    %3930 = vmatmul.mubr.f32.gmra.mrb[0].mxu0 %v2945
    %v3931 = vpop.f32.mrb[0].mxu0
    %v3932 = vadd.f32 0.0, %v3931
    %v3933 = vpop.f32.mrb[0].mxu0
    %3934 = vmatprep.mubr.f32.mxu0 0.0
    %3935 = vmatmul.mubr.f32.gmra.mrb[0].mxu0 %v2946
    %v3936 = vpop.f32.mrb[0].mxu0
    %v3937 = vpop.f32.mrb[0].mxu0
    %3938 = vmatprep.mubr.f32.mxu0 0.0
    %3939 = vmatmul.mubr.f32.gmra.mrb[0].mxu0 %v2947
    %v3940 = vpop.f32.mrb[0].mxu0
    %v3941 = vpop.f32.mrb[0].mxu0
    %3942 = vmatprep.mubr.f32.mxu0 0.0
    %3943 = vmatmul.mubr.f32.gmra.mrb[0].mxu0 %v2948
    %v3944 = vpop.f32.mrb[0].mxu0
    %v3945 = vadd.f32 0.0, %v3944
    %v3946 = vpop.f32.mrb[0].mxu0
    %3947 = vmatprep.mubr.f32.mxu0 0.0
    %3948 = vmatmul.mubr.f32.gmra.mrb[0].mxu0 %v2949
    %v3949 = vpop.f32.mrb[0].mxu0
    %v3950 = vadd.f32 0.0, %v3949
    %v3951 = vpop.f32.mrb[0].mxu0
    %3952 = vmatprep.mubr.f32.mxu0 0.0
    %3953 = vmatmul.mubr.f32.gmra.mrb[0].mxu0 %v2950
    %v3954 = vpop.f32.mrb[0].mxu0
    %v3955 = vpop.f32.mrb[0].mxu0
    %3956 = vmatprep.mubr.f32.mxu0 0.0
    %3957 = vmatmul.mubr.f32.gmra.mrb[0].mxu0 %v2951
    %v3958 = vpop.f32.mrb[0].mxu0
    %v3959 = vpop.f32.mrb[0].mxu0
    %3960 = vmatprep.mubr.f32.mxu0 0.0
    %3961 = vmatmul.mubr.f32.gmra.mrb[0].mxu0 %v2952
    %v3962 = vpop.f32.mrb[0].mxu0
    %v3963 = vadd.f32 0.0, %v3962
    %v3964 = vpop.f32.mrb[0].mxu0
    %3965 = vmatprep.mubr.f32.mxu0 0.0
    %3966 = vmatmul.mubr.f32.gmra.mrb[0].mxu0 %v2953
    %v3967 = vpop.f32.mrb[0].mxu0
    %v3968 = vadd.f32 0.0, %v3967
    %v3969 = vpop.f32.mrb[0].mxu0
    %3970 = vmatprep.mubr.f32.mxu0 0.0
    %3971 = vmatmul.mubr.f32.gmra.mrb[0].mxu0 %v2954
    %v3972 = vpop.f32.mrb[0].mxu0
    %v3973 = vpop.f32.mrb[0].mxu0
    %3974 = vmatprep.mubr.f32.mxu0 0.0
    %3975 = vmatmul.mubr.f32.gmra.mrb[0].mxu0 %v2955
    %v3976 = vpop.f32.mrb[0].mxu0
    %v3977 = vpop.f32.mrb[0].mxu0
    %3978 = vmatprep.mubr.f32.mxu0 0.0
    %3979 = vmatmul.mubr.f32.gmra.mrb[0].mxu0 %v2956
    %v3980 = vpop.f32.mrb[0].mxu0
    %v3981 = vpop.f32.mrb[0].mxu0
    %3982 = vmatprep.mubr.f32.mxu0 0.0
    %3983 = vmatmul.mubr.f32.gmra.mrb[0].mxu0 %v2957
    %v3984 = vpop.f32.mrb[0].mxu0
    %v3985 = vpop.f32.mrb[0].mxu0
    %3986 = vmatprep.mubr.f32.mxu0 0.0
    %3987 = vmatmul.mubr.f32.gmra.mrb[0].mxu0 %v2958
    %v3988 = vpop.f32.mrb[0].mxu0
    %v3989 = vpop.f32.mrb[0].mxu0
    %3990 = vmatprep.mubr.f32.mxu0 0.0
    %3991 = vmatmul.mubr.f32.gmra.mrb[0].mxu0 %v2959
    %v3992 = vpop.f32.mrb[0].mxu0
    %v3993 = vpop.f32.mrb[0].mxu0
    %3994 = vmatprep.mubr.f32.mxu0 0.0
    %3995 = vmatmul.mubr.f32.gmra.mrb[0].mxu0 %v2960
    %v3996 = vpop.f32.mrb[0].mxu0
    %v3997 = vpop.f32.mrb[0].mxu0
    %3998 = vmatprep.mubr.f32.mxu0 0.0
    %3999 = vmatmul.mubr.f32.gmra.mrb[0].mxu0 %v2961
    %v4000 = vpop.f32.mrb[0].mxu0
    %v4001 = vpop.f32.mrb[0].mxu0
    %4002 = vmatprep.mubr.f32.mxu0 0.0
    %4003 = vmatmul.mubr.f32.gmra.mrb[0].mxu0 %v2962
    %v4004 = vpop.f32.mrb[0].mxu0
    %v4005 = vpop.f32.mrb[0].mxu0
    %4006 = vmatprep.mubr.f32.mxu0 0.0
    %4007 = vmatmul.mubr.f32.gmra.mrb[0].mxu0 %v2963
    %v4008 = vpop.f32.mrb[0].mxu0
    %v4009 = vpop.f32.mrb[0].mxu0
    %4010 = vmatprep.mubr.f32.mxu0 0.0
    %4011 = vmatmul.mubr.f32.gmra.mrb[0].mxu0 %v2964
    %v4012 = vpop.f32.mrb[0].mxu0
    %v4013 = vpop.f32.mrb[0].mxu0
    %4014 = vmatprep.mubr.f32.mxu0 0.0
    %4015 = vmatmul.mubr.f32.gmra.mrb[0].mxu0 %v2965
    %v4016 = vpop.f32.mrb[0].mxu0
    %v4017 = vpop.f32.mrb[0].mxu0
    %4018 = vmatprep.mubr.f32.mxu0 0.0
    %4019 = vmatmul.mubr.f32.gmra.mrb[0].mxu0 %v2966
    %v4020 = vpop.f32.mrb[0].mxu0
    %v4021 = vpop.f32.mrb[0].mxu0
    %4022 = vmatprep.mubr.f32.mxu0 0.0
    %4023 = vmatmul.mubr.f32.gmra.mrb[0].mxu0 %v2967
    %v4024 = vpop.f32.mrb[0].mxu0
    %v4025 = vpop.f32.mrb[0].mxu0
    %4026 = vmatprep.mubr.f32.mxu0 0.0
    %4027 = vmatmul.mubr.f32.gmra.mrb[0].mxu0 %v2968
    %v4028 = vpop.f32.mrb[0].mxu0
    %v4029 = vpop.f32.mrb[0].mxu0
    %4030 = vmatprep.mubr.f32.mxu0 0.0
    %4031 = vmatmul.mubr.f32.gmra.mrb[0].mxu0 %v2969
    %v4032 = vpop.f32.mrb[0].mxu0
    %v4033 = vpop.f32.mrb[0].mxu0
    %4034 = vmatprep.mubr.f32.mxu0 0.0
    %4035 = vmatmul.mubr.f32.gmra.mrb[0].mxu0 %v2970
    %v4036 = vpop.f32.mrb[0].mxu0
    %v4037 = vpop.f32.mrb[0].mxu0
    %4038 = vmatprep.mubr.f32.mxu0 0.0
    %4039 = vmatmul.mubr.f32.gmra.mrb[0].mxu0 %v2971
    %v4040 = vpop.f32.mrb[0].mxu0
    %v4041 = vpop.f32.mrb[0].mxu0
    %4042 = vdwg.mxu0
    %v4043 = vadd.f32 %v3412, %v3801
    %v4044 = vadd.f32 %v3417, %v3806
    %v4045 = vadd.f32 %v3430, %v3819
    %v4046 = vadd.f32 %v3435, %v3824
    %v4047 = vadd.f32 %v3448, %v3837
    %v4048 = vadd.f32 %v3453, %v3842
    %v4049 = vadd.f32 %v3466, %v3855
    %v4050 = vadd.f32 %v3471, %v3860
    %v4051 = vadd.f32 %v3484, %v3873
    %v4052 = vadd.f32 %v3489, %v3878
    %v4053 = vadd.f32 %v3502, %v3891
    %v4054 = vadd.f32 %v3507, %v3896
    %v4055 = vadd.f32 %v3520, %v3909
    %v4056 = vadd.f32 %v3525, %v3914
    %v4057 = vadd.f32 %v3538, %v3927
    %v4058 = vadd.f32 %v3543, %v3932
    %v4059 = vadd.f32 %v3556, %v3945
    %v4060 = vadd.f32 %v3561, %v3950
    %v4061 = vadd.f32 %v3574, %v3963
    %v4062 = vadd.f32 %v3579, %v3968
    %v4063 = vld [vmem:[%s3 + $0x18] sm:$0xff]
    %v4064 = vld [vmem:[%s3 + $0x40] sm:$0xff]
    %v4065 = vld [vmem:[%s3 + $0x68] sm:$0xff]
    %v4066 = vld [vmem:[%s3 + $0x90] sm:$0xff]
    %v4067 = vld [vmem:[%s3 + $0xb8] sm:$0xff]
    %v4068 = vld [vmem:[%s3 + $0xe0] sm:$0xff]
    %v4069 = vld [vmem:[%s3 + $0x108] sm:$0xff]
    %v4070 = vld [vmem:[%s3 + $0x130] sm:$0xff]
    %v4071 = vld [vmem:[%s3 + $0x158] sm:$0xff]
    %v4072 = vld [vmem:[%s3 + $0x180] sm:$0xff]
    %v4073 = vld [vmem:[%s3 + $0x1a8] sm:$0xff]
    %v4074 = vld [vmem:[%s3 + $0x1d0] sm:$0xff]
    %v4075 = vld [vmem:[%s3 + $0x1f8] sm:$0xff]
    %v4076 = vld [vmem:[%s3 + $0x220] sm:$0xff]
    %v4077 = vld [vmem:[%s3 + $0x248] sm:$0xff]
    %v4078 = vld [vmem:[%s3 + $0x270] sm:$0xff]
    %4079 = vmatprep.subr.mxu0 0.0
    %4080 = vmatpush1.msra.mxu0 %v4063
    %4081 = vmatprep.subr.mxu0 0.0
    %4082 = vmatpush1.msra.mxu0 %v4064
    %4083 = vmatprep.subr.mxu0 0.0
    %4084 = vmatpush1.msra.mxu0 %v4065
    %4085 = vmatprep.subr.mxu0 0.0
    %4086 = vmatpush1.msra.mxu0 %v4066
    %4087 = vmatprep.subr.mxu0 0.0
    %4088 = vmatpush1.msra.mxu0 %v4067
    %4089 = vmatprep.subr.mxu0 0.0
    %4090 = vmatpush1.msra.mxu0 %v4068
    %4091 = vmatprep.subr.mxu0 0.0
    %4092 = vmatpush1.msra.mxu0 %v4069
    %4093 = vmatprep.subr.mxu0 0.0
    %4094 = vmatpush1.msra.mxu0 %v4070
    %4095 = vmatprep.subr.mxu0 0.0
    %4096 = vmatpush1.msra.mxu0 %v4071
    %4097 = vmatprep.subr.mxu0 0.0
    %4098 = vmatpush1.msra.mxu0 %v4072
    %4099 = vmatprep.subr.mxu0 0.0
    %4100 = vmatpush1.msra.mxu0 %v4073
    %4101 = vmatprep.subr.mxu0 0.0
    %4102 = vmatpush1.msra.mxu0 %v4074
    %4103 = vmatprep.subr.mxu0 0.0
    %4104 = vmatpush1.msra.mxu0 %v4075
    %4105 = vmatprep.subr.mxu0 0.0
    %4106 = vmatpush1.msra.mxu0 %v4076
    %4107 = vmatprep.subr.mxu0 0.0
    %4108 = vmatpush1.msra.mxu0 %v4077
    %4109 = vmatprep.subr.mxu0 0.0
    %4110 = vmatpush1.msra.mxu0 %v4078
    %4111 = vmatprep.subr.mxu0 0.0
    %4112 = vmatpush1.msra.mxu0 0.0
    %4113 = vmatprep.subr.mxu0 0.0
    %4114 = vmatpush1.msra.mxu0 0.0
    %4115 = vmatprep.subr.mxu0 0.0
    %4116 = vmatpush1.msra.mxu0 0.0
    %4117 = vmatprep.subr.mxu0 0.0
    %4118 = vmatpush1.msra.mxu0 0.0
    %4119 = vmatprep.subr.mxu0 0.0
    %4120 = vmatpush1.msra.mxu0 0.0
    %4121 = vmatprep.subr.mxu0 0.0
    %4122 = vmatpush1.msra.mxu0 0.0
    %4123 = vmatprep.subr.mxu0 0.0
    %4124 = vmatpush1.msra.mxu0 0.0
    %4125 = vmatprep.subr.mxu0 0.0
    %4126 = vmatpush1.msra.mxu0 0.0
    %4127 = vmatprep.subr.mxu0 0.0
    %4128 = vmatpush1.msra.mxu0 0.0
    %4129 = vmatprep.subr.mxu0 0.0
    %4130 = vmatpush1.msra.mxu0 0.0
    %4131 = vmatprep.subr.mxu0 0.0
    %4132 = vmatpush1.msra.mxu0 0.0
    %4133 = vmatprep.subr.mxu0 0.0
    %4134 = vmatpush1.msra.mxu0 0.0
    %4135 = vmatprep.subr.mxu0 0.0
    %4136 = vmatpush1.msra.mxu0 0.0
    %4137 = vmatprep.subr.mxu0 0.0
    %4138 = vmatpush1.msra.mxu0 0.0
    %4139 = vmatprep.subr.mxu0 0.0
    %4140 = vmatpush1.msra.mxu0 0.0
    %4141 = vmatprep.subr.mxu0 0.0
    %4142 = vmatpush1.msra.mxu0 0.0
    %4143 = vmatprep.mubr.f32.mxu0 0.0
    %4144 = vmatmul.mubr.f32.gmra.mrb[0].mxu0 %v2908
    %v4145 = vpop.f32.mrb[0].mxu0
    %v4146 = vpop.f32.mrb[0].mxu0
    %4147 = vmatprep.mubr.f32.mxu0 0.0
    %4148 = vmatmul.mubr.f32.gmra.mrb[0].mxu0 %v2909
    %v4149 = vpop.f32.mrb[0].mxu0
    %v4150 = vpop.f32.mrb[0].mxu0
    %4151 = vmatprep.mubr.f32.mxu0 0.0
    %4152 = vmatmul.mubr.f32.gmra.mrb[0].mxu0 %v2910
    %v4153 = vpop.f32.mrb[0].mxu0
    %v4154 = vpop.f32.mrb[0].mxu0
    %4155 = vmatprep.mubr.f32.mxu0 0.0
    %4156 = vmatmul.mubr.f32.gmra.mrb[0].mxu0 %v2911
    %v4157 = vpop.f32.mrb[0].mxu0
    %v4158 = vpop.f32.mrb[0].mxu0
    %4159 = vmatprep.mubr.f32.mxu0 0.0
    %4160 = vmatmul.mubr.f32.gmra.mrb[0].mxu0 %v2912
    %v4161 = vpop.f32.mrb[0].mxu0
    %v4162 = vpop.f32.mrb[0].mxu0
    %4163 = vmatprep.mubr.f32.mxu0 0.0
    %4164 = vmatmul.mubr.f32.gmra.mrb[0].mxu0 %v2913
    %v4165 = vpop.f32.mrb[0].mxu0
    %v4166 = vpop.f32.mrb[0].mxu0
    %4167 = vmatprep.mubr.f32.mxu0 0.0
    %4168 = vmatmul.mubr.f32.gmra.mrb[0].mxu0 %v2914
    %v4169 = vpop.f32.mrb[0].mxu0
    %v4170 = vpop.f32.mrb[0].mxu0
    %4171 = vmatprep.mubr.f32.mxu0 0.0
    %4172 = vmatmul.mubr.f32.gmra.mrb[0].mxu0 %v2915
    %v4173 = vpop.f32.mrb[0].mxu0
    %v4174 = vpop.f32.mrb[0].mxu0
    %4175 = vmatprep.mubr.f32.mxu0 0.0
    %4176 = vmatmul.mubr.f32.gmra.mrb[0].mxu0 %v2916
    %v4177 = vpop.f32.mrb[0].mxu0
    %v4178 = vpop.f32.mrb[0].mxu0
    %4179 = vmatprep.mubr.f32.mxu0 0.0
    %4180 = vmatmul.mubr.f32.gmra.mrb[0].mxu0 %v2917
    %v4181 = vpop.f32.mrb[0].mxu0
    %v4182 = vpop.f32.mrb[0].mxu0
    %4183 = vmatprep.mubr.f32.mxu0 0.0
    %4184 = vmatmul.mubr.f32.gmra.mrb[0].mxu0 %v2918
    %v4185 = vpop.f32.mrb[0].mxu0
    %v4186 = vpop.f32.mrb[0].mxu0
    %4187 = vmatprep.mubr.f32.mxu0 0.0
    %4188 = vmatmul.mubr.f32.gmra.mrb[0].mxu0 %v2919
    %v4189 = vpop.f32.mrb[0].mxu0
    %v4190 = vpop.f32.mrb[0].mxu0
    %4191 = vmatprep.mubr.f32.mxu0 0.0
    %4192 = vmatmul.mubr.f32.gmra.mrb[0].mxu0 %v2920
    %v4193 = vpop.f32.mrb[0].mxu0
    %v4194 = vadd.f32 0.0, %v4193
    %v4195 = vpop.f32.mrb[0].mxu0
    %4196 = vmatprep.mubr.f32.mxu0 0.0
    %4197 = vmatmul.mubr.f32.gmra.mrb[0].mxu0 %v2921
    %v4198 = vpop.f32.mrb[0].mxu0
    %v4199 = vadd.f32 0.0, %v4198
    %v4200 = vpop.f32.mrb[0].mxu0
    %4201 = vmatprep.mubr.f32.mxu0 0.0
    %4202 = vmatmul.mubr.f32.gmra.mrb[0].mxu0 %v2922
    %v4203 = vpop.f32.mrb[0].mxu0
    %v4204 = vpop.f32.mrb[0].mxu0
    %4205 = vmatprep.mubr.f32.mxu0 0.0
    %4206 = vmatmul.mubr.f32.gmra.mrb[0].mxu0 %v2923
    %v4207 = vpop.f32.mrb[0].mxu0
    %v4208 = vpop.f32.mrb[0].mxu0
    %4209 = vmatprep.mubr.f32.mxu0 0.0
    %4210 = vmatmul.mubr.f32.gmra.mrb[0].mxu0 %v2924
    %v4211 = vpop.f32.mrb[0].mxu0
    %v4212 = vadd.f32 0.0, %v4211
    %v4213 = vpop.f32.mrb[0].mxu0
    %4214 = vmatprep.mubr.f32.mxu0 0.0
    %4215 = vmatmul.mubr.f32.gmra.mrb[0].mxu0 %v2925
    %v4216 = vpop.f32.mrb[0].mxu0
    %v4217 = vadd.f32 0.0, %v4216
    %v4218 = vpop.f32.mrb[0].mxu0
    %4219 = vmatprep.mubr.f32.mxu0 0.0
    %4220 = vmatmul.mubr.f32.gmra.mrb[0].mxu0 %v2926
    %v4221 = vpop.f32.mrb[0].mxu0
    %v4222 = vpop.f32.mrb[0].mxu0
    %4223 = vmatprep.mubr.f32.mxu0 0.0
    %4224 = vmatmul.mubr.f32.gmra.mrb[0].mxu0 %v2927
    %v4225 = vpop.f32.mrb[0].mxu0
    %v4226 = vpop.f32.mrb[0].mxu0
    %4227 = vmatprep.mubr.f32.mxu0 0.0
    %4228 = vmatmul.mubr.f32.gmra.mrb[0].mxu0 %v2928
    %v4229 = vpop.f32.mrb[0].mxu0
    %v4230 = vadd.f32 0.0, %v4229
    %v4231 = vpop.f32.mrb[0].mxu0
    %4232 = vmatprep.mubr.f32.mxu0 0.0
    %4233 = vmatmul.mubr.f32.gmra.mrb[0].mxu0 %v2929
    %v4234 = vpop.f32.mrb[0].mxu0
    %v4235 = vadd.f32 0.0, %v4234
    %v4236 = vpop.f32.mrb[0].mxu0
    %4237 = vmatprep.mubr.f32.mxu0 0.0
    %4238 = vmatmul.mubr.f32.gmra.mrb[0].mxu0 %v2930
    %v4239 = vpop.f32.mrb[0].mxu0
    %v4240 = vpop.f32.mrb[0].mxu0
    %4241 = vmatprep.mubr.f32.mxu0 0.0
    %4242 = vmatmul.mubr.f32.gmra.mrb[0].mxu0 %v2931
    %v4243 = vpop.f32.mrb[0].mxu0
    %v4244 = vpop.f32.mrb[0].mxu0
    %4245 = vmatprep.mubr.f32.mxu0 0.0
    %4246 = vmatmul.mubr.f32.gmra.mrb[0].mxu0 %v2932
    %v4247 = vpop.f32.mrb[0].mxu0
    %v4248 = vadd.f32 0.0, %v4247
    %v4249 = vpop.f32.mrb[0].mxu0
    %4250 = vmatprep.mubr.f32.mxu0 0.0
    %4251 = vmatmul.mubr.f32.gmra.mrb[0].mxu0 %v2933
    %v4252 = vpop.f32.mrb[0].mxu0
    %v4253 = vadd.f32 0.0, %v4252
    %v4254 = vpop.f32.mrb[0].mxu0
    %4255 = vmatprep.mubr.f32.mxu0 0.0
    %4256 = vmatmul.mubr.f32.gmra.mrb[0].mxu0 %v2934
    %v4257 = vpop.f32.mrb[0].mxu0
    %v4258 = vpop.f32.mrb[0].mxu0
    %4259 = vmatprep.mubr.f32.mxu0 0.0
    %4260 = vmatmul.mubr.f32.gmra.mrb[0].mxu0 %v2935
    %v4261 = vpop.f32.mrb[0].mxu0
    %v4262 = vpop.f32.mrb[0].mxu0
    %4263 = vmatprep.mubr.f32.mxu0 0.0
    %4264 = vmatmul.mubr.f32.gmra.mrb[0].mxu0 %v2936
    %v4265 = vpop.f32.mrb[0].mxu0
    %v4266 = vadd.f32 0.0, %v4265
    %v4267 = vpop.f32.mrb[0].mxu0
    %4268 = vmatprep.mubr.f32.mxu0 0.0
    %4269 = vmatmul.mubr.f32.gmra.mrb[0].mxu0 %v2937
    %v4270 = vpop.f32.mrb[0].mxu0
    %v4271 = vadd.f32 0.0, %v4270
    %v4272 = vpop.f32.mrb[0].mxu0
    %4273 = vmatprep.mubr.f32.mxu0 0.0
    %4274 = vmatmul.mubr.f32.gmra.mrb[0].mxu0 %v2938
    %v4275 = vpop.f32.mrb[0].mxu0
    %v4276 = vpop.f32.mrb[0].mxu0
    %4277 = vmatprep.mubr.f32.mxu0 0.0
    %4278 = vmatmul.mubr.f32.gmra.mrb[0].mxu0 %v2939
    %v4279 = vpop.f32.mrb[0].mxu0
    %v4280 = vpop.f32.mrb[0].mxu0
    %4281 = vmatprep.mubr.f32.mxu0 0.0
    %4282 = vmatmul.mubr.f32.gmra.mrb[0].mxu0 %v2940
    %v4283 = vpop.f32.mrb[0].mxu0
    %v4284 = vadd.f32 0.0, %v4283
    %v4285 = vpop.f32.mrb[0].mxu0
    %4286 = vmatprep.mubr.f32.mxu0 0.0
    %4287 = vmatmul.mubr.f32.gmra.mrb[0].mxu0 %v2941
    %v4288 = vpop.f32.mrb[0].mxu0
    %v4289 = vadd.f32 0.0, %v4288
    %v4290 = vpop.f32.mrb[0].mxu0
    %4291 = vmatprep.mubr.f32.mxu0 0.0
    %4292 = vmatmul.mubr.f32.gmra.mrb[0].mxu0 %v2942
    %v4293 = vpop.f32.mrb[0].mxu0
    %v4294 = vpop.f32.mrb[0].mxu0
    %4295 = vmatprep.mubr.f32.mxu0 0.0
    %4296 = vmatmul.mubr.f32.gmra.mrb[0].mxu0 %v2943
    %v4297 = vpop.f32.mrb[0].mxu0
    %v4298 = vpop.f32.mrb[0].mxu0
    %4299 = vmatprep.mubr.f32.mxu0 0.0
    %4300 = vmatmul.mubr.f32.gmra.mrb[0].mxu0 %v2944
    %v4301 = vpop.f32.mrb[0].mxu0
    %v4302 = vadd.f32 0.0, %v4301
    %v4303 = vpop.f32.mrb[0].mxu0
    %4304 = vmatprep.mubr.f32.mxu0 0.0
    %4305 = vmatmul.mubr.f32.gmra.mrb[0].mxu0 %v2945
    %v4306 = vpop.f32.mrb[0].mxu0
    %v4307 = vadd.f32 0.0, %v4306
    %v4308 = vpop.f32.mrb[0].mxu0
    %4309 = vmatprep.mubr.f32.mxu0 0.0
    %4310 = vmatmul.mubr.f32.gmra.mrb[0].mxu0 %v2946
    %v4311 = vpop.f32.mrb[0].mxu0
    %v4312 = vpop.f32.mrb[0].mxu0
    %4313 = vmatprep.mubr.f32.mxu0 0.0
    %4314 = vmatmul.mubr.f32.gmra.mrb[0].mxu0 %v2947
    %v4315 = vpop.f32.mrb[0].mxu0
    %v4316 = vpop.f32.mrb[0].mxu0
    %4317 = vmatprep.mubr.f32.mxu0 0.0
    %4318 = vmatmul.mubr.f32.gmra.mrb[0].mxu0 %v2948
    %v4319 = vpop.f32.mrb[0].mxu0
    %v4320 = vadd.f32 0.0, %v4319
    %v4321 = vpop.f32.mrb[0].mxu0
    %4322 = vmatprep.mubr.f32.mxu0 0.0
    %4323 = vmatmul.mubr.f32.gmra.mrb[0].mxu0 %v2949
    %v4324 = vpop.f32.mrb[0].mxu0
    %v4325 = vadd.f32 0.0, %v4324
    %v4326 = vpop.f32.mrb[0].mxu0
    %4327 = vmatprep.mubr.f32.mxu0 0.0
    %4328 = vmatmul.mubr.f32.gmra.mrb[0].mxu0 %v2950
    %v4329 = vpop.f32.mrb[0].mxu0
    %v4330 = vpop.f32.mrb[0].mxu0
    %4331 = vmatprep.mubr.f32.mxu0 0.0
    %4332 = vmatmul.mubr.f32.gmra.mrb[0].mxu0 %v2951
    %v4333 = vpop.f32.mrb[0].mxu0
    %v4334 = vpop.f32.mrb[0].mxu0
    %4335 = vmatprep.mubr.f32.mxu0 0.0
    %4336 = vmatmul.mubr.f32.gmra.mrb[0].mxu0 %v2952
    %v4337 = vpop.f32.mrb[0].mxu0
    %v4338 = vadd.f32 0.0, %v4337
    %v4339 = vpop.f32.mrb[0].mxu0
    %4340 = vmatprep.mubr.f32.mxu0 0.0
    %4341 = vmatmul.mubr.f32.gmra.mrb[0].mxu0 %v2953
    %v4342 = vpop.f32.mrb[0].mxu0
    %v4343 = vadd.f32 0.0, %v4342
    %v4344 = vpop.f32.mrb[0].mxu0
    %4345 = vmatprep.mubr.f32.mxu0 0.0
    %4346 = vmatmul.mubr.f32.gmra.mrb[0].mxu0 %v2954
    %v4347 = vpop.f32.mrb[0].mxu0
    %v4348 = vpop.f32.mrb[0].mxu0
    %4349 = vmatprep.mubr.f32.mxu0 0.0
    %4350 = vmatmul.mubr.f32.gmra.mrb[0].mxu0 %v2955
    %v4351 = vpop.f32.mrb[0].mxu0
    %v4352 = vpop.f32.mrb[0].mxu0
    %4353 = vmatprep.mubr.f32.mxu0 0.0
    %4354 = vmatmul.mubr.f32.gmra.mrb[0].mxu0 %v2956
    %v4355 = vpop.f32.mrb[0].mxu0
    %v4356 = vadd.f32 0.0, %v4355
    %v4357 = vpop.f32.mrb[0].mxu0
    %4358 = vmatprep.mubr.f32.mxu0 0.0
    %4359 = vmatmul.mubr.f32.gmra.mrb[0].mxu0 %v2957
    %v4360 = vpop.f32.mrb[0].mxu0
    %v4361 = vadd.f32 0.0, %v4360
    %v4362 = vpop.f32.mrb[0].mxu0
    %4363 = vmatprep.mubr.f32.mxu0 0.0
    %4364 = vmatmul.mubr.f32.gmra.mrb[0].mxu0 %v2958
    %v4365 = vpop.f32.mrb[0].mxu0
    %v4366 = vpop.f32.mrb[0].mxu0
    %4367 = vmatprep.mubr.f32.mxu0 0.0
    %4368 = vmatmul.mubr.f32.gmra.mrb[0].mxu0 %v2959
    %v4369 = vpop.f32.mrb[0].mxu0
    %v4370 = vpop.f32.mrb[0].mxu0
    %4371 = vmatprep.mubr.f32.mxu0 0.0
    %4372 = vmatmul.mubr.f32.gmra.mrb[0].mxu0 %v2960
    %v4373 = vpop.f32.mrb[0].mxu0
    %v4374 = vpop.f32.mrb[0].mxu0
    %4375 = vmatprep.mubr.f32.mxu0 0.0
    %4376 = vmatmul.mubr.f32.gmra.mrb[0].mxu0 %v2961
    %v4377 = vpop.f32.mrb[0].mxu0
    %v4378 = vpop.f32.mrb[0].mxu0
    %4379 = vmatprep.mubr.f32.mxu0 0.0
    %4380 = vmatmul.mubr.f32.gmra.mrb[0].mxu0 %v2962
    %v4381 = vpop.f32.mrb[0].mxu0
    %v4382 = vpop.f32.mrb[0].mxu0
    %4383 = vmatprep.mubr.f32.mxu0 0.0
    %4384 = vmatmul.mubr.f32.gmra.mrb[0].mxu0 %v2963
    %v4385 = vpop.f32.mrb[0].mxu0
    %v4386 = vpop.f32.mrb[0].mxu0
    %4387 = vmatprep.mubr.f32.mxu0 0.0
    %4388 = vmatmul.mubr.f32.gmra.mrb[0].mxu0 %v2964
    %v4389 = vpop.f32.mrb[0].mxu0
    %v4390 = vpop.f32.mrb[0].mxu0
    %4391 = vmatprep.mubr.f32.mxu0 0.0
    %4392 = vmatmul.mubr.f32.gmra.mrb[0].mxu0 %v2965
    %v4393 = vpop.f32.mrb[0].mxu0
    %v4394 = vpop.f32.mrb[0].mxu0
    %4395 = vmatprep.mubr.f32.mxu0 0.0
    %4396 = vmatmul.mubr.f32.gmra.mrb[0].mxu0 %v2966
    %v4397 = vpop.f32.mrb[0].mxu0
    %v4398 = vpop.f32.mrb[0].mxu0
    %4399 = vmatprep.mubr.f32.mxu0 0.0
    %4400 = vmatmul.mubr.f32.gmra.mrb[0].mxu0 %v2967
    %v4401 = vpop.f32.mrb[0].mxu0
    %v4402 = vpop.f32.mrb[0].mxu0
    %4403 = vmatprep.mubr.f32.mxu0 0.0
    %4404 = vmatmul.mubr.f32.gmra.mrb[0].mxu0 %v2968
    %v4405 = vpop.f32.mrb[0].mxu0
    %v4406 = vpop.f32.mrb[0].mxu0
    %4407 = vmatprep.mubr.f32.mxu0 0.0
    %4408 = vmatmul.mubr.f32.gmra.mrb[0].mxu0 %v2969
    %v4409 = vpop.f32.mrb[0].mxu0
    %v4410 = vpop.f32.mrb[0].mxu0
    %4411 = vmatprep.mubr.f32.mxu0 0.0
    %4412 = vmatmul.mubr.f32.gmra.mrb[0].mxu0 %v2970
    %v4413 = vpop.f32.mrb[0].mxu0
    %v4414 = vpop.f32.mrb[0].mxu0
    %4415 = vmatprep.mubr.f32.mxu0 0.0
    %4416 = vmatmul.mubr.f32.gmra.mrb[0].mxu0 %v2971
    %v4417 = vpop.f32.mrb[0].mxu0
    %v4418 = vpop.f32.mrb[0].mxu0
    %4419 = vdwg.mxu0
    %v4420 = vadd.f32 %v4043, %v4194
    %v4421 = vadd.f32 %v4044, %v4199
    %v4422 = vadd.f32 %v4045, %v4212
    %v4423 = vadd.f32 %v4046, %v4217
    %v4424 = vadd.f32 %v4047, %v4230
    %v4425 = vadd.f32 %v4048, %v4235
    %v4426 = vadd.f32 %v4049, %v4248
    %v4427 = vadd.f32 %v4050, %v4253
    %v4428 = vadd.f32 %v4051, %v4266
    %v4429 = vadd.f32 %v4052, %v4271
    %v4430 = vadd.f32 %v4053, %v4284
    %v4431 = vadd.f32 %v4054, %v4289
    %v4432 = vadd.f32 %v4055, %v4302
    %v4433 = vadd.f32 %v4056, %v4307
    %v4434 = vadd.f32 %v4057, %v4320
    %v4435 = vadd.f32 %v4058, %v4325
    %v4436 = vadd.f32 %v4059, %v4338
    %v4437 = vadd.f32 %v4060, %v4343
    %v4438 = vadd.f32 %v4061, %v4356
    %v4439 = vadd.f32 %v4062, %v4361
    %v4440 = vld [vmem:[%s3 + $0x20] sm:$0xff]
    %v4441 = vld [vmem:[%s3 + $0x48] sm:$0xff]
    %v4442 = vld [vmem:[%s3 + $0x70] sm:$0xff]
    %v4443 = vld [vmem:[%s3 + $0x98] sm:$0xff]
    %v4444 = vld [vmem:[%s3 + $0xc0] sm:$0xff]
    %v4445 = vld [vmem:[%s3 + $0xe8] sm:$0xff]
    %v4446 = vld [vmem:[%s3 + $0x110] sm:$0xff]
    %v4447 = vld [vmem:[%s3 + $0x138] sm:$0xff]
    %v4448 = vld [vmem:[%s3 + $0x160] sm:$0xff]
    %v4449 = vld [vmem:[%s3 + $0x188] sm:$0xff]
    %v4450 = vld [vmem:[%s3 + $0x1b0] sm:$0xff]
    %v4451 = vld [vmem:[%s3 + $0x1d8] sm:$0xff]
    %v4452 = vld [vmem:[%s3 + $0x200] sm:$0xff]
    %v4453 = vld [vmem:[%s3 + $0x228] sm:$0xff]
    %v4454 = vld [vmem:[%s3 + $0x250] sm:$0xff]
    %v4455 = vld [vmem:[%s3 + $0x278] sm:$0xff]
    %4456 = vmatprep.subr.mxu0 0.0
    %4457 = vmatpush1.msra.mxu0 %v4440
    %4458 = vmatprep.subr.mxu0 0.0
    %4459 = vmatpush1.msra.mxu0 %v4441
    %4460 = vmatprep.subr.mxu0 0.0
    %4461 = vmatpush1.msra.mxu0 %v4442
    %4462 = vmatprep.subr.mxu0 0.0
    %4463 = vmatpush1.msra.mxu0 %v4443
    %4464 = vmatprep.subr.mxu0 0.0
    %4465 = vmatpush1.msra.mxu0 %v4444
    %4466 = vmatprep.subr.mxu0 0.0
    %4467 = vmatpush1.msra.mxu0 %v4445
    %4468 = vmatprep.subr.mxu0 0.0
    %4469 = vmatpush1.msra.mxu0 %v4446
    %4470 = vmatprep.subr.mxu0 0.0
    %4471 = vmatpush1.msra.mxu0 %v4447
    %4472 = vmatprep.subr.mxu0 0.0
    %4473 = vmatpush1.msra.mxu0 %v4448
    %4474 = vmatprep.subr.mxu0 0.0
    %4475 = vmatpush1.msra.mxu0 %v4449
    %4476 = vmatprep.subr.mxu0 0.0
    %4477 = vmatpush1.msra.mxu0 %v4450
    %4478 = vmatprep.subr.mxu0 0.0
    %4479 = vmatpush1.msra.mxu0 %v4451
    %4480 = vmatprep.subr.mxu0 0.0
    %4481 = vmatpush1.msra.mxu0 %v4452
    %4482 = vmatprep.subr.mxu0 0.0
    %4483 = vmatpush1.msra.mxu0 %v4453
    %4484 = vmatprep.subr.mxu0 0.0
    %4485 = vmatpush1.msra.mxu0 %v4454
    %4486 = vmatprep.subr.mxu0 0.0
    %4487 = vmatpush1.msra.mxu0 %v4455
    %4488 = vmatprep.subr.mxu0 0.0
    %4489 = vmatpush1.msra.mxu0 0.0
    %4490 = vmatprep.subr.mxu0 0.0
    %4491 = vmatpush1.msra.mxu0 0.0
    %4492 = vmatprep.subr.mxu0 0.0
    %4493 = vmatpush1.msra.mxu0 0.0
    %4494 = vmatprep.subr.mxu0 0.0
    %4495 = vmatpush1.msra.mxu0 0.0
    %4496 = vmatprep.subr.mxu0 0.0
    %4497 = vmatpush1.msra.mxu0 0.0
    %4498 = vmatprep.subr.mxu0 0.0
    %4499 = vmatpush1.msra.mxu0 0.0
    %4500 = vmatprep.subr.mxu0 0.0
    %4501 = vmatpush1.msra.mxu0 0.0
    %4502 = vmatprep.subr.mxu0 0.0
    %4503 = vmatpush1.msra.mxu0 0.0
    %4504 = vmatprep.subr.mxu0 0.0
    %4505 = vmatpush1.msra.mxu0 0.0
    %4506 = vmatprep.subr.mxu0 0.0
    %4507 = vmatpush1.msra.mxu0 0.0
    %4508 = vmatprep.subr.mxu0 0.0
    %4509 = vmatpush1.msra.mxu0 0.0
    %4510 = vmatprep.subr.mxu0 0.0
    %4511 = vmatpush1.msra.mxu0 0.0
    %4512 = vmatprep.subr.mxu0 0.0
    %4513 = vmatpush1.msra.mxu0 0.0
    %4514 = vmatprep.subr.mxu0 0.0
    %4515 = vmatpush1.msra.mxu0 0.0
    %4516 = vmatprep.subr.mxu0 0.0
    %4517 = vmatpush1.msra.mxu0 0.0
    %4518 = vmatprep.subr.mxu0 0.0
    %4519 = vmatpush1.msra.mxu0 0.0
    %4520 = vmatprep.mubr.f32.mxu0 0.0
    %4521 = vmatmul.mubr.f32.gmra.mrb[0].mxu0 %v2908
    %v4522 = vpop.f32.mrb[0].mxu0
    %v4523 = vpop.f32.mrb[0].mxu0
    %4524 = vmatprep.mubr.f32.mxu0 0.0
    %4525 = vmatmul.mubr.f32.gmra.mrb[0].mxu0 %v2909
    %v4526 = vpop.f32.mrb[0].mxu0
    %v4527 = vpop.f32.mrb[0].mxu0
    %4528 = vmatprep.mubr.f32.mxu0 0.0
    %4529 = vmatmul.mubr.f32.gmra.mrb[0].mxu0 %v2910
    %v4530 = vpop.f32.mrb[0].mxu0
    %v4531 = vpop.f32.mrb[0].mxu0
    %4532 = vmatprep.mubr.f32.mxu0 0.0
    %4533 = vmatmul.mubr.f32.gmra.mrb[0].mxu0 %v2911
    %v4534 = vpop.f32.mrb[0].mxu0
    %v4535 = vpop.f32.mrb[0].mxu0
    %4536 = vmatprep.mubr.f32.mxu0 0.0
    %4537 = vmatmul.mubr.f32.gmra.mrb[0].mxu0 %v2912
    %v4538 = vpop.f32.mrb[0].mxu0
    %v4539 = vpop.f32.mrb[0].mxu0
    %4540 = vmatprep.mubr.f32.mxu0 0.0
    %4541 = vmatmul.mubr.f32.gmra.mrb[0].mxu0 %v2913
    %v4542 = vpop.f32.mrb[0].mxu0
    %v4543 = vpop.f32.mrb[0].mxu0
    %4544 = vmatprep.mubr.f32.mxu0 0.0
    %4545 = vmatmul.mubr.f32.gmra.mrb[0].mxu0 %v2914
    %v4546 = vpop.f32.mrb[0].mxu0
    %v4547 = vpop.f32.mrb[0].mxu0
    %4548 = vmatprep.mubr.f32.mxu0 0.0
    %4549 = vmatmul.mubr.f32.gmra.mrb[0].mxu0 %v2915
    %v4550 = vpop.f32.mrb[0].mxu0
    %v4551 = vpop.f32.mrb[0].mxu0
    %4552 = vmatprep.mubr.f32.mxu0 0.0
    %4553 = vmatmul.mubr.f32.gmra.mrb[0].mxu0 %v2916
    %v4554 = vpop.f32.mrb[0].mxu0
    %v4555 = vpop.f32.mrb[0].mxu0
    %4556 = vmatprep.mubr.f32.mxu0 0.0
    %4557 = vmatmul.mubr.f32.gmra.mrb[0].mxu0 %v2917
    %v4558 = vpop.f32.mrb[0].mxu0
    %v4559 = vpop.f32.mrb[0].mxu0
    %4560 = vmatprep.mubr.f32.mxu0 0.0
    %4561 = vmatmul.mubr.f32.gmra.mrb[0].mxu0 %v2918
    %v4562 = vpop.f32.mrb[0].mxu0
    %v4563 = vpop.f32.mrb[0].mxu0
    %4564 = vmatprep.mubr.f32.mxu0 0.0
    %4565 = vmatmul.mubr.f32.gmra.mrb[0].mxu0 %v2919
    %v4566 = vpop.f32.mrb[0].mxu0
    %v4567 = vpop.f32.mrb[0].mxu0
    %4568 = vmatprep.mubr.f32.mxu0 0.0
    %4569 = vmatmul.mubr.f32.gmra.mrb[0].mxu0 %v2920
    %v4570 = vpop.f32.mrb[0].mxu0
    %v4571 = vpop.f32.mrb[0].mxu0
    %4572 = vmatprep.mubr.f32.mxu0 0.0
    %4573 = vmatmul.mubr.f32.gmra.mrb[0].mxu0 %v2921
    %v4574 = vpop.f32.mrb[0].mxu0
    %v4575 = vpop.f32.mrb[0].mxu0
    %4576 = vmatprep.mubr.f32.mxu0 0.0
    %4577 = vmatmul.mubr.f32.gmra.mrb[0].mxu0 %v2922
    %v4578 = vpop.f32.mrb[0].mxu0
    %v4579 = vpop.f32.mrb[0].mxu0
    %4580 = vmatprep.mubr.f32.mxu0 0.0
    %4581 = vmatmul.mubr.f32.gmra.mrb[0].mxu0 %v2923
    %v4582 = vpop.f32.mrb[0].mxu0
    %v4583 = vpop.f32.mrb[0].mxu0
    %4584 = vmatprep.mubr.f32.mxu0 0.0
    %4585 = vmatmul.mubr.f32.gmra.mrb[0].mxu0 %v2924
    %v4586 = vpop.f32.mrb[0].mxu0
    %v4587 = vadd.f32 0.0, %v4586
    %v4588 = vpop.f32.mrb[0].mxu0
    %4589 = vmatprep.mubr.f32.mxu0 0.0
    %4590 = vmatmul.mubr.f32.gmra.mrb[0].mxu0 %v2925
    %v4591 = vpop.f32.mrb[0].mxu0
    %v4592 = vadd.f32 0.0, %v4591
    %v4593 = vpop.f32.mrb[0].mxu0
    %4594 = vmatprep.mubr.f32.mxu0 0.0
    %4595 = vmatmul.mubr.f32.gmra.mrb[0].mxu0 %v2926
    %v4596 = vpop.f32.mrb[0].mxu0
    %v4597 = vpop.f32.mrb[0].mxu0
    %4598 = vmatprep.mubr.f32.mxu0 0.0
    %4599 = vmatmul.mubr.f32.gmra.mrb[0].mxu0 %v2927
    %v4600 = vpop.f32.mrb[0].mxu0
    %v4601 = vpop.f32.mrb[0].mxu0
    %4602 = vmatprep.mubr.f32.mxu0 0.0
    %4603 = vmatmul.mubr.f32.gmra.mrb[0].mxu0 %v2928
    %v4604 = vpop.f32.mrb[0].mxu0
    %v4605 = vadd.f32 0.0, %v4604
    %v4606 = vpop.f32.mrb[0].mxu0
    %4607 = vmatprep.mubr.f32.mxu0 0.0
    %4608 = vmatmul.mubr.f32.gmra.mrb[0].mxu0 %v2929
    %v4609 = vpop.f32.mrb[0].mxu0
    %v4610 = vadd.f32 0.0, %v4609
    %v4611 = vpop.f32.mrb[0].mxu0
    %4612 = vmatprep.mubr.f32.mxu0 0.0
    %4613 = vmatmul.mubr.f32.gmra.mrb[0].mxu0 %v2930
    %v4614 = vpop.f32.mrb[0].mxu0
    %v4615 = vpop.f32.mrb[0].mxu0
    %4616 = vmatprep.mubr.f32.mxu0 0.0
    %4617 = vmatmul.mubr.f32.gmra.mrb[0].mxu0 %v2931
    %v4618 = vpop.f32.mrb[0].mxu0
    %v4619 = vpop.f32.mrb[0].mxu0
    %4620 = vmatprep.mubr.f32.mxu0 0.0
    %4621 = vmatmul.mubr.f32.gmra.mrb[0].mxu0 %v2932
    %v4622 = vpop.f32.mrb[0].mxu0
    %v4623 = vadd.f32 0.0, %v4622
    %v4624 = vpop.f32.mrb[0].mxu0
    %4625 = vmatprep.mubr.f32.mxu0 0.0
    %4626 = vmatmul.mubr.f32.gmra.mrb[0].mxu0 %v2933
    %v4627 = vpop.f32.mrb[0].mxu0
    %v4628 = vadd.f32 0.0, %v4627
    %v4629 = vpop.f32.mrb[0].mxu0
    %4630 = vmatprep.mubr.f32.mxu0 0.0
    %4631 = vmatmul.mubr.f32.gmra.mrb[0].mxu0 %v2934
    %v4632 = vpop.f32.mrb[0].mxu0
    %v4633 = vpop.f32.mrb[0].mxu0
    %4634 = vmatprep.mubr.f32.mxu0 0.0
    %4635 = vmatmul.mubr.f32.gmra.mrb[0].mxu0 %v2935
    %v4636 = vpop.f32.mrb[0].mxu0
    %v4637 = vpop.f32.mrb[0].mxu0
    %4638 = vmatprep.mubr.f32.mxu0 0.0
    %4639 = vmatmul.mubr.f32.gmra.mrb[0].mxu0 %v2936
    %v4640 = vpop.f32.mrb[0].mxu0
    %v4641 = vadd.f32 0.0, %v4640
    %v4642 = vpop.f32.mrb[0].mxu0
    %4643 = vmatprep.mubr.f32.mxu0 0.0
    %4644 = vmatmul.mubr.f32.gmra.mrb[0].mxu0 %v2937
    %v4645 = vpop.f32.mrb[0].mxu0
    %v4646 = vadd.f32 0.0, %v4645
    %v4647 = vpop.f32.mrb[0].mxu0
    %4648 = vmatprep.mubr.f32.mxu0 0.0
    %4649 = vmatmul.mubr.f32.gmra.mrb[0].mxu0 %v2938
    %v4650 = vpop.f32.mrb[0].mxu0
    %v4651 = vpop.f32.mrb[0].mxu0
    %4652 = vmatprep.mubr.f32.mxu0 0.0
    %4653 = vmatmul.mubr.f32.gmra.mrb[0].mxu0 %v2939
    %v4654 = vpop.f32.mrb[0].mxu0
    %v4655 = vpop.f32.mrb[0].mxu0
    %4656 = vmatprep.mubr.f32.mxu0 0.0
    %4657 = vmatmul.mubr.f32.gmra.mrb[0].mxu0 %v2940
    %v4658 = vpop.f32.mrb[0].mxu0
    %v4659 = vadd.f32 0.0, %v4658
    %v4660 = vpop.f32.mrb[0].mxu0
    %4661 = vmatprep.mubr.f32.mxu0 0.0
    %4662 = vmatmul.mubr.f32.gmra.mrb[0].mxu0 %v2941
    %v4663 = vpop.f32.mrb[0].mxu0
    %v4664 = vadd.f32 0.0, %v4663
    %v4665 = vpop.f32.mrb[0].mxu0
    %4666 = vmatprep.mubr.f32.mxu0 0.0
    %4667 = vmatmul.mubr.f32.gmra.mrb[0].mxu0 %v2942
    %v4668 = vpop.f32.mrb[0].mxu0
    %v4669 = vpop.f32.mrb[0].mxu0
    %4670 = vmatprep.mubr.f32.mxu0 0.0
    %4671 = vmatmul.mubr.f32.gmra.mrb[0].mxu0 %v2943
    %v4672 = vpop.f32.mrb[0].mxu0
    %v4673 = vpop.f32.mrb[0].mxu0
    %4674 = vmatprep.mubr.f32.mxu0 0.0
    %4675 = vmatmul.mubr.f32.gmra.mrb[0].mxu0 %v2944
    %v4676 = vpop.f32.mrb[0].mxu0
    %v4677 = vadd.f32 0.0, %v4676
    %v4678 = vpop.f32.mrb[0].mxu0
    %4679 = vmatprep.mubr.f32.mxu0 0.0
    %4680 = vmatmul.mubr.f32.gmra.mrb[0].mxu0 %v2945
    %v4681 = vpop.f32.mrb[0].mxu0
    %v4682 = vadd.f32 0.0, %v4681
    %v4683 = vpop.f32.mrb[0].mxu0
    %4684 = vmatprep.mubr.f32.mxu0 0.0
    %4685 = vmatmul.mubr.f32.gmra.mrb[0].mxu0 %v2946
    %v4686 = vpop.f32.mrb[0].mxu0
    %v4687 = vpop.f32.mrb[0].mxu0
    %4688 = vmatprep.mubr.f32.mxu0 0.0
    %4689 = vmatmul.mubr.f32.gmra.mrb[0].mxu0 %v2947
    %v4690 = vpop.f32.mrb[0].mxu0
    %v4691 = vpop.f32.mrb[0].mxu0
    %4692 = vmatprep.mubr.f32.mxu0 0.0
    %4693 = vmatmul.mubr.f32.gmra.mrb[0].mxu0 %v2948
    %v4694 = vpop.f32.mrb[0].mxu0
    %v4695 = vadd.f32 0.0, %v4694
    %v4696 = vpop.f32.mrb[0].mxu0
    %4697 = vmatprep.mubr.f32.mxu0 0.0
    %4698 = vmatmul.mubr.f32.gmra.mrb[0].mxu0 %v2949
    %v4699 = vpop.f32.mrb[0].mxu0
    %v4700 = vadd.f32 0.0, %v4699
    %v4701 = vpop.f32.mrb[0].mxu0
    %4702 = vmatprep.mubr.f32.mxu0 0.0
    %4703 = vmatmul.mubr.f32.gmra.mrb[0].mxu0 %v2950
    %v4704 = vpop.f32.mrb[0].mxu0
    %v4705 = vpop.f32.mrb[0].mxu0
    %4706 = vmatprep.mubr.f32.mxu0 0.0
    %4707 = vmatmul.mubr.f32.gmra.mrb[0].mxu0 %v2951
    %v4708 = vpop.f32.mrb[0].mxu0
    %v4709 = vpop.f32.mrb[0].mxu0
    %4710 = vmatprep.mubr.f32.mxu0 0.0
    %4711 = vmatmul.mubr.f32.gmra.mrb[0].mxu0 %v2952
    %v4712 = vpop.f32.mrb[0].mxu0
    %v4713 = vadd.f32 0.0, %v4712
    %v4714 = vpop.f32.mrb[0].mxu0
    %4715 = vmatprep.mubr.f32.mxu0 0.0
    %4716 = vmatmul.mubr.f32.gmra.mrb[0].mxu0 %v2953
    %v4717 = vpop.f32.mrb[0].mxu0
    %v4718 = vadd.f32 0.0, %v4717
    %v4719 = vpop.f32.mrb[0].mxu0
    %4720 = vmatprep.mubr.f32.mxu0 0.0
    %4721 = vmatmul.mubr.f32.gmra.mrb[0].mxu0 %v2954
    %v4722 = vpop.f32.mrb[0].mxu0
    %v4723 = vpop.f32.mrb[0].mxu0
    %4724 = vmatprep.mubr.f32.mxu0 0.0
    %4725 = vmatmul.mubr.f32.gmra.mrb[0].mxu0 %v2955
    %v4726 = vpop.f32.mrb[0].mxu0
    %v4727 = vpop.f32.mrb[0].mxu0
    %4728 = vmatprep.mubr.f32.mxu0 0.0
    %4729 = vmatmul.mubr.f32.gmra.mrb[0].mxu0 %v2956
    %v4730 = vpop.f32.mrb[0].mxu0
    %v4731 = vadd.f32 0.0, %v4730
    %v4732 = vpop.f32.mrb[0].mxu0
    %4733 = vmatprep.mubr.f32.mxu0 0.0
    %4734 = vmatmul.mubr.f32.gmra.mrb[0].mxu0 %v2957
    %v4735 = vpop.f32.mrb[0].mxu0
    %v4736 = vadd.f32 0.0, %v4735
    %v4737 = vpop.f32.mrb[0].mxu0
    %4738 = vmatprep.mubr.f32.mxu0 0.0
    %4739 = vmatmul.mubr.f32.gmra.mrb[0].mxu0 %v2958
    %v4740 = vpop.f32.mrb[0].mxu0
    %v4741 = vpop.f32.mrb[0].mxu0
    %4742 = vmatprep.mubr.f32.mxu0 0.0
    %4743 = vmatmul.mubr.f32.gmra.mrb[0].mxu0 %v2959
    %v4744 = vpop.f32.mrb[0].mxu0
    %v4745 = vpop.f32.mrb[0].mxu0
    %4746 = vmatprep.mubr.f32.mxu0 0.0
    %4747 = vmatmul.mubr.f32.gmra.mrb[0].mxu0 %v2960
    %v4748 = vpop.f32.mrb[0].mxu0
    %v4749 = vadd.f32 0.0, %v4748
    %v4750 = vpop.f32.mrb[0].mxu0
    %4751 = vmatprep.mubr.f32.mxu0 0.0
    %4752 = vmatmul.mubr.f32.gmra.mrb[0].mxu0 %v2961
    %v4753 = vpop.f32.mrb[0].mxu0
    %v4754 = vadd.f32 0.0, %v4753
    %v4755 = vpop.f32.mrb[0].mxu0
    %4756 = vmatprep.mubr.f32.mxu0 0.0
    %4757 = vmatmul.mubr.f32.gmra.mrb[0].mxu0 %v2962
    %v4758 = vpop.f32.mrb[0].mxu0
    %v4759 = vpop.f32.mrb[0].mxu0
    %4760 = vmatprep.mubr.f32.mxu0 0.0
    %4761 = vmatmul.mubr.f32.gmra.mrb[0].mxu0 %v2963
    %v4762 = vpop.f32.mrb[0].mxu0
    %v4763 = vpop.f32.mrb[0].mxu0
    %4764 = vmatprep.mubr.f32.mxu0 0.0
    %4765 = vmatmul.mubr.f32.gmra.mrb[0].mxu0 %v2964
    %v4766 = vpop.f32.mrb[0].mxu0
    %v4767 = vpop.f32.mrb[0].mxu0
    %4768 = vmatprep.mubr.f32.mxu0 0.0
    %4769 = vmatmul.mubr.f32.gmra.mrb[0].mxu0 %v2965
    %v4770 = vpop.f32.mrb[0].mxu0
    %v4771 = vpop.f32.mrb[0].mxu0
    %4772 = vmatprep.mubr.f32.mxu0 0.0
    %4773 = vmatmul.mubr.f32.gmra.mrb[0].mxu0 %v2966
    %v4774 = vpop.f32.mrb[0].mxu0
    %v4775 = vpop.f32.mrb[0].mxu0
    %4776 = vmatprep.mubr.f32.mxu0 0.0
    %4777 = vmatmul.mubr.f32.gmra.mrb[0].mxu0 %v2967
    %v4778 = vpop.f32.mrb[0].mxu0
    %v4779 = vpop.f32.mrb[0].mxu0
    %4780 = vmatprep.mubr.f32.mxu0 0.0
    %4781 = vmatmul.mubr.f32.gmra.mrb[0].mxu0 %v2968
    %v4782 = vpop.f32.mrb[0].mxu0
    %v4783 = vpop.f32.mrb[0].mxu0
    %4784 = vmatprep.mubr.f32.mxu0 0.0
    %4785 = vmatmul.mubr.f32.gmra.mrb[0].mxu0 %v2969
    %v4786 = vpop.f32.mrb[0].mxu0
    %v4787 = vpop.f32.mrb[0].mxu0
    %4788 = vmatprep.mubr.f32.mxu0 0.0
    %4789 = vmatmul.mubr.f32.gmra.mrb[0].mxu0 %v2970
    %v4790 = vpop.f32.mrb[0].mxu0
    %v4791 = vpop.f32.mrb[0].mxu0
    %4792 = vmatprep.mubr.f32.mxu0 0.0
    %4793 = vmatmul.mubr.f32.gmra.mrb[0].mxu0 %v2971
    %v4794 = vpop.f32.mrb[0].mxu0
    %v4795 = vpop.f32.mrb[0].mxu0
    %4796 = vdwg.mxu0
    %v4797 = vadd.f32 %v4420, %v4587
    %v4798 = vadd.f32 %v4421, %v4592
    %v4799 = vadd.f32 %v4422, %v4605
    %v4800 = vadd.f32 %v4423, %v4610
    %v4801 = vadd.f32 %v4424, %v4623
    %v4802 = vadd.f32 %v4425, %v4628
    %v4803 = vadd.f32 %v4426, %v4641
    %v4804 = vadd.f32 %v4427, %v4646
    %v4805 = vadd.f32 %v4428, %v4659
    %v4806 = vadd.f32 %v4429, %v4664
    %v4807 = vadd.f32 %v4430, %v4677
    %v4808 = vadd.f32 %v4431, %v4682
    %v4809 = vadd.f32 %v4432, %v4695
    %v4810 = vadd.f32 %v4433, %v4700
    %v4811 = vadd.f32 %v4434, %v4713
    %v4812 = vadd.f32 %v4435, %v4718
    %v4813 = vadd.f32 %v4436, %v4731
    %v4814 = vadd.f32 %v4437, %v4736
    %v4815 = vadd.f32 %v4438, %v4749
    %v4816 = vadd.f32 %v4439, %v4754
    %v4817 = vld [vmem:[%s4] sm:$0x1]
    %v4819 = vlaneseq
    %v4820 = vshrl.u32 %v4819, 7
    %v4821 = vsub.s32 0, %v4820
    %v4822 = vrot.slane %v4817, %v4821
    %v4824 = vadd.f32 %v4797, %v4822
    %v4825 = vadd.f32 %v4798, %v4822
    %v4826 = vadd.f32 %v4799, %v4822
    %v4827 = vadd.f32 %v4800, %v4822
    %v4828 = vadd.f32 %v4801, %v4822
    %v4829 = vadd.f32 %v4802, %v4822
    %v4830 = vadd.f32 %v4803, %v4822
    %v4831 = vadd.f32 %v4804, %v4822
    %v4832 = vadd.f32 %v4805, %v4822
    %v4833 = vadd.f32 %v4806, %v4822
    %v4834 = vadd.f32 %v4807, %v4822
    %v4835 = vadd.f32 %v4808, %v4822
    %v4836 = vadd.f32 %v4809, %v4822
    %v4837 = vadd.f32 %v4810, %v4822
    %v4838 = vadd.f32 %v4811, %v4822
    %v4839 = vadd.f32 %v4812, %v4822
    %v4840 = vadd.f32 %v4813, %v4822
    %v4841 = vadd.f32 %v4814, %v4822
    %v4842 = vadd.f32 %v4815, %v4822
    %v4843 = vadd.f32 %v4816, %v4822
    %v4844 = vmax.f32 %v4824, 0.0
    %v4845 = vmax.f32 %v4825, 0.0
    %v4846 = vmax.f32 %v4826, 0.0
    %v4847 = vmax.f32 %v4827, 0.0
    %v4848 = vmax.f32 %v4828, 0.0
    %v4849 = vmax.f32 %v4829, 0.0
    %v4850 = vmax.f32 %v4830, 0.0
    %v4851 = vmax.f32 %v4831, 0.0
    %v4852 = vmax.f32 %v4832, 0.0
    %v4853 = vmax.f32 %v4833, 0.0
    %v4854 = vmax.f32 %v4834, 0.0
    %v4855 = vmax.f32 %v4835, 0.0
    %v4856 = vmax.f32 %v4836, 0.0
    %v4857 = vmax.f32 %v4837, 0.0
    %v4858 = vmax.f32 %v4838, 0.0
    %v4859 = vmax.f32 %v4839, 0.0
    %v4860 = vmax.f32 %v4840, 0.0
    %v4861 = vmax.f32 %v4841, 0.0
    %v4862 = vmax.f32 %v4842, 0.0
    %v4863 = vmax.f32 %v4843, 0.0
    %v4864 = vmax.f32 %v4844, %v4846
    %v4865 = vmax.f32 %v4845, %v4847
    %v4866 = vmax.f32 %v4848, %v4850
    %v4867 = vmax.f32 %v4849, %v4851
    %v4868 = vmax.f32 %v4852, %v4854
    %v4869 = vmax.f32 %v4853, %v4855
    %v4870 = vmax.f32 %v4856, %v4858
    %v4871 = vmax.f32 %v4857, %v4859
    %v4872 = vmax.f32 %v4860, %v4862
    %v4873 = vmax.f32 %v4861, %v4863
    %4884 = vrot.lane.b32.xlu0 %v4864, 127
    %v4885 = vpop.permute.xlu0 %4884
    %4886 = vrot.lane.b32.xlu0 %v4865, 127
    %v4887 = vpop.permute.xlu0 %4886
    %4888 = vrot.lane.b32.xlu0 %v4866, 127
    %v4889 = vpop.permute.xlu0 %4888
    %4890 = vrot.lane.b32.xlu0 %v4867, 127
    %v4891 = vpop.permute.xlu0 %4890
    %4892 = vrot.lane.b32.xlu0 %v4868, 127
    %v4893 = vpop.permute.xlu0 %4892
    %4894 = vrot.lane.b32.xlu0 %v4869, 127
    %v4895 = vpop.permute.xlu0 %4894
    %4896 = vrot.lane.b32.xlu0 %v4870, 127
    %v4897 = vpop.permute.xlu0 %4896
    %4898 = vrot.lane.b32.xlu0 %v4871, 127
    %v4899 = vpop.permute.xlu0 %4898
    %4900 = vrot.lane.b32.xlu0 %v4872, 127
    %v4901 = vpop.permute.xlu0 %4900
    %4902 = vrot.lane.b32.xlu0 %v4873, 127
    %v4903 = vpop.permute.xlu0 %4902
    %v4914 = vmax.f32 %v4864, %v4885
    %v4915 = vmax.f32 %v4865, %v4887
    %v4916 = vmax.f32 %v4866, %v4889
    %v4917 = vmax.f32 %v4867, %v4891
    %v4918 = vmax.f32 %v4868, %v4893
    %v4919 = vmax.f32 %v4869, %v4895
    %v4920 = vmax.f32 %v4870, %v4897
    %v4921 = vmax.f32 %v4871, %v4899
    %v4922 = vmax.f32 %v4872, %v4901
    %v4923 = vmax.f32 %v4873, %v4903
    %v4924 = vld [vmem:[%s5] sm:$0xff]
    %v4925 = vld [vmem:[%s5 + $0x8] sm:$0xff]
    %v4926 = vld [vmem:[%s5 + $0x10] sm:$0xff]
    %v4927 = vld [vmem:[%s5 + $0x18] sm:$0xff]
    %v4928 = vld [vmem:[%s5 + $0x20] sm:$0xff]
    %v4929 = vld [vmem:[%s5 + $0x28] sm:$0xff]
    %v4930 = vld [vmem:[%s5 + $0x30] sm:$0xff]
    %v4931 = vld [vmem:[%s5 + $0x38] sm:$0xff]
    %v4932 = vld [vmem:[%s5 + $0x40] sm:$0xff]
    %v4933 = vld [vmem:[%s5 + $0x48] sm:$0xff]
    %v4934 = vld [vmem:[%s5 + $0x50] sm:$0xff]
    %v4935 = vld [vmem:[%s5 + $0x58] sm:$0xff]
    %v4936 = vld [vmem:[%s5 + $0x60] sm:$0xff]
    %v4937 = vld [vmem:[%s5 + $0x68] sm:$0xff]
    %v4938 = vld [vmem:[%s5 + $0x70] sm:$0xff]
    %v4939 = vld [vmem:[%s5 + $0x78] sm:$0xff]
    %v4940 = vld [vmem:[%s5 + $0x80] sm:$0xff]
    %v4941 = vld [vmem:[%s5 + $0x88] sm:$0xff]
    %v4942 = vld [vmem:[%s5 + $0x90] sm:$0xff]
    %v4943 = vld [vmem:[%s5 + $0x98] sm:$0xff]
    %v4944 = vld [vmem:[%s5 + $0xa0] sm:$0xff]
    %v4945 = vld [vmem:[%s5 + $0xa8] sm:$0xff]
    %v4946 = vld [vmem:[%s5 + $0xb0] sm:$0xff]
    %v4947 = vld [vmem:[%s5 + $0xb8] sm:$0xff]
    %v4948 = vld [vmem:[%s5 + $0xc0] sm:$0xff]
    %v4949 = vld [vmem:[%s5 + $0xc8] sm:$0xff]
    %v4950 = vld [vmem:[%s5 + $0xd0] sm:$0xff]
    %v4951 = vld [vmem:[%s5 + $0xd8] sm:$0xff]
    %v4952 = vld [vmem:[%s5 + $0xe0] sm:$0xff]
    %v4953 = vld [vmem:[%s5 + $0xe8] sm:$0xff]
    %v4954 = vld [vmem:[%s5 + $0xf0] sm:$0xff]
    %v4955 = vld [vmem:[%s5 + $0xf8] sm:$0xff]
    %v4956 = vld [vmem:[%s5 + $0x100] sm:$0xff]
    %v4957 = vld [vmem:[%s5 + $0x108] sm:$0xff]
    %v4958 = vld [vmem:[%s5 + $0x110] sm:$0xff]
    %v4959 = vld [vmem:[%s5 + $0x118] sm:$0xff]
    %v4960 = vld [vmem:[%s5 + $0x120] sm:$0xff]
    %v4961 = vld [vmem:[%s5 + $0x128] sm:$0xff]
    %v4962 = vld [vmem:[%s5 + $0x130] sm:$0xff]
    %v4963 = vld [vmem:[%s5 + $0x138] sm:$0xff]
    %v4964 = vld [vmem:[%s5 + $0x140] sm:$0xff]
    %v4965 = vld [vmem:[%s5 + $0x148] sm:$0xff]
    %v4966 = vld [vmem:[%s5 + $0x150] sm:$0xff]
    %v4967 = vld [vmem:[%s5 + $0x158] sm:$0xff]
    %v4968 = vld [vmem:[%s5 + $0x160] sm:$0xff]
    %v4969 = vld [vmem:[%s5 + $0x168] sm:$0xff]
    %v4970 = vld [vmem:[%s5 + $0x170] sm:$0xff]
    %v4971 = vld [vmem:[%s5 + $0x178] sm:$0xff]
    %v4972 = vld [vmem:[%s5 + $0x180] sm:$0xff]
    %v4973 = vld [vmem:[%s5 + $0x188] sm:$0xff]
    %v4974 = vld [vmem:[%s5 + $0x190] sm:$0xff]
    %v4975 = vld [vmem:[%s5 + $0x198] sm:$0xff]
    %v4976 = vld [vmem:[%s5 + $0x1a0] sm:$0xff]
    %v4977 = vld [vmem:[%s5 + $0x1a8] sm:$0xff]
    %v4978 = vld [vmem:[%s5 + $0x1b0] sm:$0xff]
    %v4979 = vld [vmem:[%s5 + $0x1b8] sm:$0xff]
    %v4980 = vld [vmem:[%s5 + $0x1c0] sm:$0xff]
    %v4981 = vld [vmem:[%s5 + $0x1c8] sm:$0xff]
    %v4982 = vld [vmem:[%s5 + $0x1d0] sm:$0xff]
    %v4983 = vld [vmem:[%s5 + $0x1d8] sm:$0xff]
    %v4984 = vld [vmem:[%s5 + $0x1e0] sm:$0xff]
    %v4985 = vld [vmem:[%s5 + $0x1e8] sm:$0xff]
    %v4986 = vld [vmem:[%s5 + $0x1f0] sm:$0xff]
    %v4987 = vld [vmem:[%s5 + $0x1f8] sm:$0xff]
    %v4988 = vld [vmem:[%s5 + $0x200] sm:$0xff]
    %v4989 = vld [vmem:[%s5 + $0x208] sm:$0xff]
    %v4990 = vld [vmem:[%s5 + $0x210] sm:$0xff]
    %v4991 = vld [vmem:[%s5 + $0x218] sm:$0xff]
    %v4992 = vld [vmem:[%s5 + $0x220] sm:$0xff]
    %v4993 = vld [vmem:[%s5 + $0x228] sm:$0xff]
    %v4994 = vld [vmem:[%s5 + $0x230] sm:$0xff]
    %v4995 = vld [vmem:[%s5 + $0x238] sm:$0xff]
    %v4996 = vld [vmem:[%s5 + $0x240] sm:$0xff]
    %v4997 = vld [vmem:[%s5 + $0x248] sm:$0xff]
    %v4998 = vld [vmem:[%s5 + $0x250] sm:$0xff]
    %v4999 = vld [vmem:[%s5 + $0x258] sm:$0xff]
    %v5000 = vld [vmem:[%s5 + $0x260] sm:$0xff]
    %v5001 = vld [vmem:[%s5 + $0x268] sm:$0xff]
    %v5002 = vld [vmem:[%s5 + $0x270] sm:$0xff]
    %v5003 = vld [vmem:[%s5 + $0x278] sm:$0xff]
    %v5004 = vld [vmem:[%s6] sm:$0x1]
    %v5006 = vlaneseq
    %v5007 = vshrl.u32 %v5006, 7
    %v5008 = vsub.s32 0, %v5007
    %v5009 = vrot.slane %v5004, %v5008
    %5011 = vmatprep.subr.mxu0 0.0
    %5012 = vmatpush1.msra.mxu0 %v4924
    %5013 = vmatprep.subr.mxu0 0.0
    %5014 = vmatpush1.msra.mxu0 %v4925
    %5015 = vmatprep.subr.mxu0 0.0
    %5016 = vmatpush1.msra.mxu0 %v4926
    %5017 = vmatprep.subr.mxu0 0.0
    %5018 = vmatpush1.msra.mxu0 %v4927
    %5019 = vmatprep.subr.mxu0 0.0
    %5020 = vmatpush1.msra.mxu0 %v4928
    %5021 = vmatprep.subr.mxu0 0.0
    %5022 = vmatpush1.msra.mxu0 %v4929
    %5023 = vmatprep.subr.mxu0 0.0
    %5024 = vmatpush1.msra.mxu0 %v4930
    %5025 = vmatprep.subr.mxu0 0.0
    %5026 = vmatpush1.msra.mxu0 %v4931
    %5027 = vmatprep.subr.mxu0 0.0
    %5028 = vmatpush1.msra.mxu0 %v4932
    %5029 = vmatprep.subr.mxu0 0.0
    %5030 = vmatpush1.msra.mxu0 %v4933
    %5031 = vmatprep.subr.mxu0 0.0
    %5032 = vmatpush1.msra.mxu0 %v4934
    %5033 = vmatprep.subr.mxu0 0.0
    %5034 = vmatpush1.msra.mxu0 %v4935
    %5035 = vmatprep.subr.mxu0 0.0
    %5036 = vmatpush1.msra.mxu0 %v4936
    %5037 = vmatprep.subr.mxu0 0.0
    %5038 = vmatpush1.msra.mxu0 %v4937
    %5039 = vmatprep.subr.mxu0 0.0
    %5040 = vmatpush1.msra.mxu0 %v4938
    %5041 = vmatprep.subr.mxu0 0.0
    %5042 = vmatpush1.msra.mxu0 %v4939
    %5043 = vmatprep.subr.mxu0 0.0
    %5044 = vmatpush1.msra.mxu0 %v4940
    %5045 = vmatprep.subr.mxu0 0.0
    %5046 = vmatpush1.msra.mxu0 %v4941
    %5047 = vmatprep.subr.mxu0 0.0
    %5048 = vmatpush1.msra.mxu0 %v4942
    %5049 = vmatprep.subr.mxu0 0.0
    %5050 = vmatpush1.msra.mxu0 %v4943
    %5051 = vmatprep.subr.mxu0 0.0
    %5052 = vmatpush1.msra.mxu0 %v4944
    %5053 = vmatprep.subr.mxu0 0.0
    %5054 = vmatpush1.msra.mxu0 %v4945
    %5055 = vmatprep.subr.mxu0 0.0
    %5056 = vmatpush1.msra.mxu0 %v4946
    %5057 = vmatprep.subr.mxu0 0.0
    %5058 = vmatpush1.msra.mxu0 %v4947
    %5059 = vmatprep.subr.mxu0 0.0
    %5060 = vmatpush1.msra.mxu0 %v4948
    %5061 = vmatprep.subr.mxu0 0.0
    %5062 = vmatpush1.msra.mxu0 %v4949
    %5063 = vmatprep.subr.mxu0 0.0
    %5064 = vmatpush1.msra.mxu0 %v4950
    %5065 = vmatprep.subr.mxu0 0.0
    %5066 = vmatpush1.msra.mxu0 %v4951
    %5067 = vmatprep.subr.mxu0 0.0
    %5068 = vmatpush1.msra.mxu0 %v4952
    %5069 = vmatprep.subr.mxu0 0.0
    %5070 = vmatpush1.msra.mxu0 %v4953
    %5071 = vmatprep.subr.mxu0 0.0
    %5072 = vmatpush1.msra.mxu0 %v4954
    %5073 = vmatprep.subr.mxu0 0.0
    %5074 = vmatpush1.msra.mxu0 %v4955
    %5075 = vmatprep.mubr.f32.mxu0 %v4916
    %5076 = vmatmul.mubr.f32.gmra.mrb[0].mxu0 %v4914
    %v5077 = vpop.f32.mrb[0].mxu0
    %v5078 = vadd.f32 %v5009, %v5077
    %v5079 = vpop.f32.mrb[0].mxu0
    %5080 = vmatprep.mubr.f32.mxu0 %v4917
    %5081 = vmatmul.mubr.f32.gmra.mrb[0].mxu0 %v4915
    %v5082 = vpop.f32.mrb[0].mxu0
    %v5083 = vadd.f32 %v5009, %v5082
    %v5084 = vpop.f32.mrb[0].mxu0
    %5085 = vdwg.mxu0
    %5086 = vmatprep.subr.mxu0 0.0
    %5087 = vmatpush1.msra.mxu0 %v4956
    %5088 = vmatprep.subr.mxu0 0.0
    %5089 = vmatpush1.msra.mxu0 %v4957
    %5090 = vmatprep.subr.mxu0 0.0
    %5091 = vmatpush1.msra.mxu0 %v4958
    %5092 = vmatprep.subr.mxu0 0.0
    %5093 = vmatpush1.msra.mxu0 %v4959
    %5094 = vmatprep.subr.mxu0 0.0
    %5095 = vmatpush1.msra.mxu0 %v4960
    %5096 = vmatprep.subr.mxu0 0.0
    %5097 = vmatpush1.msra.mxu0 %v4961
    %5098 = vmatprep.subr.mxu0 0.0
    %5099 = vmatpush1.msra.mxu0 %v4962
    %5100 = vmatprep.subr.mxu0 0.0
    %5101 = vmatpush1.msra.mxu0 %v4963
    %5102 = vmatprep.subr.mxu0 0.0
    %5103 = vmatpush1.msra.mxu0 %v4964
    %5104 = vmatprep.subr.mxu0 0.0
    %5105 = vmatpush1.msra.mxu0 %v4965
    %5106 = vmatprep.subr.mxu0 0.0
    %5107 = vmatpush1.msra.mxu0 %v4966
    %5108 = vmatprep.subr.mxu0 0.0
    %5109 = vmatpush1.msra.mxu0 %v4967
    %5110 = vmatprep.subr.mxu0 0.0
    %5111 = vmatpush1.msra.mxu0 %v4968
    %5112 = vmatprep.subr.mxu0 0.0
    %5113 = vmatpush1.msra.mxu0 %v4969
    %5114 = vmatprep.subr.mxu0 0.0
    %5115 = vmatpush1.msra.mxu0 %v4970
    %5116 = vmatprep.subr.mxu0 0.0
    %5117 = vmatpush1.msra.mxu0 %v4971
    %5118 = vmatprep.subr.mxu0 0.0
    %5119 = vmatpush1.msra.mxu0 %v4972
    %5120 = vmatprep.subr.mxu0 0.0
    %5121 = vmatpush1.msra.mxu0 %v4973
    %5122 = vmatprep.subr.mxu0 0.0
    %5123 = vmatpush1.msra.mxu0 %v4974
    %5124 = vmatprep.subr.mxu0 0.0
    %5125 = vmatpush1.msra.mxu0 %v4975
    %5126 = vmatprep.subr.mxu0 0.0
    %5127 = vmatpush1.msra.mxu0 %v4976
    %5128 = vmatprep.subr.mxu0 0.0
    %5129 = vmatpush1.msra.mxu0 %v4977
    %5130 = vmatprep.subr.mxu0 0.0
    %5131 = vmatpush1.msra.mxu0 %v4978
    %5132 = vmatprep.subr.mxu0 0.0
    %5133 = vmatpush1.msra.mxu0 %v4979
    %5134 = vmatprep.subr.mxu0 0.0
    %5135 = vmatpush1.msra.mxu0 %v4980
    %5136 = vmatprep.subr.mxu0 0.0
    %5137 = vmatpush1.msra.mxu0 %v4981
    %5138 = vmatprep.subr.mxu0 0.0
    %5139 = vmatpush1.msra.mxu0 %v4982
    %5140 = vmatprep.subr.mxu0 0.0
    %5141 = vmatpush1.msra.mxu0 %v4983
    %5142 = vmatprep.subr.mxu0 0.0
    %5143 = vmatpush1.msra.mxu0 %v4984
    %5144 = vmatprep.subr.mxu0 0.0
    %5145 = vmatpush1.msra.mxu0 %v4985
    %5146 = vmatprep.subr.mxu0 0.0
    %5147 = vmatpush1.msra.mxu0 %v4986
    %5148 = vmatprep.subr.mxu0 0.0
    %5149 = vmatpush1.msra.mxu0 %v4987
    %5150 = vmatprep.mubr.f32.mxu0 %v4920
    %5151 = vmatmul.mubr.f32.gmra.mrb[0].mxu0 %v4918
    %v5152 = vpop.f32.mrb[0].mxu0
    %v5153 = vadd.f32 %v5078, %v5152
    %v5154 = vpop.f32.mrb[0].mxu0
    %5155 = vmatprep.mubr.f32.mxu0 %v4921
    %5156 = vmatmul.mubr.f32.gmra.mrb[0].mxu0 %v4919
    %v5157 = vpop.f32.mrb[0].mxu0
    %v5158 = vadd.f32 %v5083, %v5157
    %v5159 = vpop.f32.mrb[0].mxu0
    %5160 = vdwg.mxu0
    %5161 = vmatprep.subr.mxu0 0.0
    %5162 = vmatpush1.msra.mxu0 %v4988
    %5163 = vmatprep.subr.mxu0 0.0
    %5164 = vmatpush1.msra.mxu0 %v4989
    %5165 = vmatprep.subr.mxu0 0.0
    %5166 = vmatpush1.msra.mxu0 %v4990
    %5167 = vmatprep.subr.mxu0 0.0
    %5168 = vmatpush1.msra.mxu0 %v4991
    %5169 = vmatprep.subr.mxu0 0.0
    %5170 = vmatpush1.msra.mxu0 %v4992
    %5171 = vmatprep.subr.mxu0 0.0
    %5172 = vmatpush1.msra.mxu0 %v4993
    %5173 = vmatprep.subr.mxu0 0.0
    %5174 = vmatpush1.msra.mxu0 %v4994
    %5175 = vmatprep.subr.mxu0 0.0
    %5176 = vmatpush1.msra.mxu0 %v4995
    %5177 = vmatprep.subr.mxu0 0.0
    %5178 = vmatpush1.msra.mxu0 %v4996
    %5179 = vmatprep.subr.mxu0 0.0
    %5180 = vmatpush1.msra.mxu0 %v4997
    %5181 = vmatprep.subr.mxu0 0.0
    %5182 = vmatpush1.msra.mxu0 %v4998
    %5183 = vmatprep.subr.mxu0 0.0
    %5184 = vmatpush1.msra.mxu0 %v4999
    %5185 = vmatprep.subr.mxu0 0.0
    %5186 = vmatpush1.msra.mxu0 %v5000
    %5187 = vmatprep.subr.mxu0 0.0
    %5188 = vmatpush1.msra.mxu0 %v5001
    %5189 = vmatprep.subr.mxu0 0.0
    %5190 = vmatpush1.msra.mxu0 %v5002
    %5191 = vmatprep.subr.mxu0 0.0
    %5192 = vmatpush1.msra.mxu0 %v5003
    %5193 = vmatprep.subr.mxu0 0.0
    %5194 = vmatpush1.msra.mxu0 0.0
    %5195 = vmatprep.subr.mxu0 0.0
    %5196 = vmatpush1.msra.mxu0 0.0
    %5197 = vmatprep.subr.mxu0 0.0
    %5198 = vmatpush1.msra.mxu0 0.0
    %5199 = vmatprep.subr.mxu0 0.0
    %5200 = vmatpush1.msra.mxu0 0.0
    %5201 = vmatprep.subr.mxu0 0.0
    %5202 = vmatpush1.msra.mxu0 0.0
    %5203 = vmatprep.subr.mxu0 0.0
    %5204 = vmatpush1.msra.mxu0 0.0
    %5205 = vmatprep.subr.mxu0 0.0
    %5206 = vmatpush1.msra.mxu0 0.0
    %5207 = vmatprep.subr.mxu0 0.0
    %5208 = vmatpush1.msra.mxu0 0.0
    %5209 = vmatprep.subr.mxu0 0.0
    %5210 = vmatpush1.msra.mxu0 0.0
    %5211 = vmatprep.subr.mxu0 0.0
    %5212 = vmatpush1.msra.mxu0 0.0
    %5213 = vmatprep.subr.mxu0 0.0
    %5214 = vmatpush1.msra.mxu0 0.0
    %5215 = vmatprep.subr.mxu0 0.0
    %5216 = vmatpush1.msra.mxu0 0.0
    %5217 = vmatprep.subr.mxu0 0.0
    %5218 = vmatpush1.msra.mxu0 0.0
    %5219 = vmatprep.subr.mxu0 0.0
    %5220 = vmatpush1.msra.mxu0 0.0
    %5221 = vmatprep.subr.mxu0 0.0
    %5222 = vmatpush1.msra.mxu0 0.0
    %5223 = vmatprep.subr.mxu0 0.0
    %5224 = vmatpush1.msra.mxu0 0.0
    %5225 = vmatprep.mubr.f32.mxu0 0.0
    %5226 = vmatmul.mubr.f32.gmra.mrb[0].mxu0 %v4922
    %v5227 = vpop.f32.mrb[0].mxu0
    %v5228 = vadd.f32 %v5153, %v5227
    %v5229 = vpop.f32.mrb[0].mxu0
    %5230 = vmatprep.mubr.f32.mxu0 0.0
    %5231 = vmatmul.mubr.f32.gmra.mrb[0].mxu0 %v4923
    %v5232 = vpop.f32.mrb[0].mxu0
    %v5233 = vadd.f32 %v5158, %v5232
    %v5234 = vpop.f32.mrb[0].mxu0
    %5235 = vdwg.mxu0
    %v5236 = vmax.f32 %v5228, 0.0
    %v5237 = vmax.f32 %v5233, 0.0
    %v5238 = vld [vmem:[%s9] sm:$0xff]
    %v5239 = vld [vmem:[%s10] sm:$0xff]
    %v5240 = vld [vmem:[%s7] sm:$0x1f]
    %v5241 = vld [vmem:[%s8] sm:$0x1]
    %v5243 = vlaneseq
    %v5244 = vshrl.u32 %v5243, 7
    %v5245 = vsub.s32 0, %v5244
    %v5246 = vrot.slane %v5241, %v5245
    %vm5248 = vcmask 523264
    %v5250 = vsel %vm5248, %v5236, 0
    %v5253 = vsel %vm5248, %v5240, 0
    %5255 = vmatprep.subr.mxu0 0.0
    %5256 = vmatpush1.xpose.msra.mxu0 %v5253
    %5257 = vmatprep.subr.mxu0 0.0
    %5258 = vmatpush1.xpose.msra.mxu0 0.0
    %5259 = vmatprep.subr.mxu0 0.0
    %5260 = vmatpush1.xpose.msra.mxu0 0.0
    %5261 = vmatprep.subr.mxu0 0.0
    %5262 = vmatpush1.xpose.msra.mxu0 0.0
    %5263 = vmatprep.subr.mxu0 0.0
    %5264 = vmatpush1.xpose.msra.mxu0 0.0
    %5265 = vmatprep.subr.mxu0 0.0
    %5266 = vmatpush1.xpose.msra.mxu0 0.0
    %5267 = vmatprep.subr.mxu0 0.0
    %5268 = vmatpush1.xpose.msra.mxu0 0.0
    %5269 = vmatprep.subr.mxu0 0.0
    %5270 = vmatpush1.xpose.msra.mxu0 0.0
    %5271 = vmatprep.subr.mxu0 0.0
    %5272 = vmatpush1.xpose.msra.mxu0 0.0
    %5273 = vmatprep.subr.mxu0 0.0
    %5274 = vmatpush1.xpose.msra.mxu0 0.0
    %5275 = vmatprep.subr.mxu0 0.0
    %5276 = vmatpush1.xpose.msra.mxu0 0.0
    %5277 = vmatprep.subr.mxu0 0.0
    %5278 = vmatpush1.xpose.msra.mxu0 0.0
    %5279 = vmatprep.subr.mxu0 0.0
    %5280 = vmatpush1.xpose.msra.mxu0 0.0
    %5281 = vmatprep.subr.mxu0 0.0
    %5282 = vmatpush1.xpose.msra.mxu0 0.0
    %5283 = vmatprep.subr.mxu0 0.0
    %5284 = vmatpush1.xpose.msra.mxu0 0.0
    %5285 = vmatprep.subr.mxu0 0.0
    %5286 = vmatpush1.xpose.msra.mxu0 0.0
    %5287 = vmatprep.subr.mxu0 0.0
    %5288 = vmatpush1.xpose.msra.mxu0 0.0
    %5289 = vmatprep.subr.mxu0 0.0
    %5290 = vmatpush1.xpose.msra.mxu0 0.0
    %5291 = vmatprep.subr.mxu0 0.0
    %5292 = vmatpush1.xpose.msra.mxu0 0.0
    %5293 = vmatprep.subr.mxu0 0.0
    %5294 = vmatpush1.xpose.msra.mxu0 0.0
    %5295 = vmatprep.subr.mxu0 0.0
    %5296 = vmatpush1.xpose.msra.mxu0 0.0
    %5297 = vmatprep.subr.mxu0 0.0
    %5298 = vmatpush1.xpose.msra.mxu0 0.0
    %5299 = vmatprep.subr.mxu0 0.0
    %5300 = vmatpush1.xpose.msra.mxu0 0.0
    %5301 = vmatprep.subr.mxu0 0.0
    %5302 = vmatpush1.xpose.msra.mxu0 0.0
    %5303 = vmatprep.subr.mxu0 0.0
    %5304 = vmatpush1.xpose.msra.mxu0 0.0
    %5305 = vmatprep.subr.mxu0 0.0
    %5306 = vmatpush1.xpose.msra.mxu0 0.0
    %5307 = vmatprep.subr.mxu0 0.0
    %5308 = vmatpush1.xpose.msra.mxu0 0.0
    %5309 = vmatprep.subr.mxu0 0.0
    %5310 = vmatpush1.xpose.msra.mxu0 0.0
    %5311 = vmatprep.subr.mxu0 0.0
    %5312 = vmatpush1.xpose.msra.mxu0 0.0
    %5313 = vmatprep.subr.mxu0 0.0
    %5314 = vmatpush1.xpose.msra.mxu0 0.0
    %5315 = vmatprep.subr.mxu0 0.0
    %5316 = vmatpush1.xpose.msra.mxu0 0.0
    %5317 = vmatprep.subr.mxu0 0.0
    %5318 = vmatpush1.xpose.msra.mxu0 0.0
    %5319 = vmatprep.mubr.f32.mxu0 0.0
    %5320 = vmatmul.mubr.f32.gmra.mrb[0].mxu0 %v5250
    %v5321 = vpop.f32.mrb[0].mxu0
    %v5322 = vadd.f32 %v5246, %v5321
    %v5323 = vpop.f32.mrb[0].mxu0
    %5324 = vdwg.mxu0
    %vm5325 = vcmask 39936
    %v5326 = vsel %vm5325, %v5322, -inf
    %5327 = vmax.xlane.f32.xlu0 %v5326
    %v5328 = vpop.xlane.xlu0 %5327
    %v5329 = vsub.f32 %v5322, %v5328
    %v5330 = vmul.f32 %v5329, 1.442695
    %v5331 = vpow.pop %v5330
    %v5332 = vsel %vm5325, %v5331, 0.0
    %5333 = vadd.xlane.f32.xlu0 %v5332
    %v5334 = vpop.xlane.xlu0 %5333
    %v5335 = vrcp.pop %v5334
    %v5336 = vmul.f32 %v5331, %v5335
    %v5337 = vsub.f32 %v5336, %v5238
    %5339 = vset.pattern.permute.xlu0 0
    %5340 = vperm.xlu0 %5339, %v5239
    %v5341 = vpop.permute.xlu0 %5340
    %v5343 = vmul.f32 %v5337, %v5341
    %5344 = vxpose.xlu0.b32.start [1/16] %v5343, 128
    %5345 = vxpose.xlu0.b32.cont [2/16] 0.0, 128
    %5346 = vxpose.xlu0.b32.cont [3/16] 0.0, 128
    %5347 = vxpose.xlu0.b32.cont [4/16] 0.0, 128
    %5348 = vxpose.xlu0.b32.cont [5/16] 0.0, 128
    %5349 = vxpose.xlu0.b32.cont [6/16] 0.0, 128
    %5350 = vxpose.xlu0.b32.cont [7/16] 0.0, 128
    %5351 = vxpose.xlu0.b32.cont [8/16] 0.0, 128
    %5352 = vxpose.xlu0.b32.cont [9/16] 0.0, 128
    %5353 = vxpose.xlu0.b32.cont [10/16] 0.0, 128
    %5354 = vxpose.xlu0.b32.cont [11/16] 0.0, 128
    %5355 = vxpose.xlu0.b32.cont [12/16] 0.0, 128
    %5356 = vxpose.xlu0.b32.cont [13/16] 0.0, 128
    %5357 = vxpose.xlu0.b32.cont [14/16] 0.0, 128
    %5358 = vxpose.xlu0.b32.cont [15/16] 0.0, 128
    %5359 = vxpose.xlu0.b32.end [16/16] 0.0, 128
    %v5360 = vpop.trf.xlu0
    %v5361 = vpop.trf.xlu0
    %v5362 = vpop.trf.xlu0
    %v5363 = vpop.trf.xlu0
    %v5364 = vpop.trf.xlu0
    %v5365 = vpop.trf.xlu0
    %v5366 = vpop.trf.xlu0
    %v5367 = vpop.trf.xlu0
    %v5368 = vpop.trf.xlu0
    %v5369 = vpop.trf.xlu0
    %v5370 = vpop.trf.xlu0
    %v5371 = vpop.trf.xlu0
    %v5372 = vpop.trf.xlu0
    %v5373 = vpop.trf.xlu0
    %v5374 = vpop.trf.xlu0
    %v5375 = vpop.trf.xlu0
    %vm5376 = vcmask 64512
    %v5378 = vsel %vm5376, %v5360, 0
    %5380 = vmatprep.subr.mxu0 0.0
    %5381 = vmatpush1.msra.mxu0 %v5236
    %5382 = vmatprep.subr.mxu0 0.0
    %5383 = vmatpush1.msra.mxu0 0.0
    %5384 = vmatprep.subr.mxu0 0.0
    %5385 = vmatpush1.msra.mxu0 0.0
    %5386 = vmatprep.subr.mxu0 0.0
    %5387 = vmatpush1.msra.mxu0 0.0
    %5388 = vmatprep.subr.mxu0 0.0
    %5389 = vmatpush1.msra.mxu0 0.0
    %5390 = vmatprep.subr.mxu0 0.0
    %5391 = vmatpush1.msra.mxu0 0.0
    %5392 = vmatprep.subr.mxu0 0.0
    %5393 = vmatpush1.msra.mxu0 0.0
    %5394 = vmatprep.subr.mxu0 0.0
    %5395 = vmatpush1.msra.mxu0 0.0
    %5396 = vmatprep.subr.mxu0 0.0
    %5397 = vmatpush1.msra.mxu0 0.0
    %5398 = vmatprep.subr.mxu0 0.0
    %5399 = vmatpush1.msra.mxu0 0.0
    %5400 = vmatprep.subr.mxu0 0.0
    %5401 = vmatpush1.msra.mxu0 0.0
    %5402 = vmatprep.subr.mxu0 0.0
    %5403 = vmatpush1.msra.mxu0 0.0
    %5404 = vmatprep.subr.mxu0 0.0
    %5405 = vmatpush1.msra.mxu0 0.0
    %5406 = vmatprep.subr.mxu0 0.0
    %5407 = vmatpush1.msra.mxu0 0.0
    %5408 = vmatprep.subr.mxu0 0.0
    %5409 = vmatpush1.msra.mxu0 0.0
    %5410 = vmatprep.subr.mxu0 0.0
    %5411 = vmatpush1.msra.mxu0 0.0
    %5412 = vmatprep.subr.mxu0 0.0
    %5413 = vmatpush1.msra.mxu0 0.0
    %5414 = vmatprep.subr.mxu0 0.0
    %5415 = vmatpush1.msra.mxu0 0.0
    %5416 = vmatprep.subr.mxu0 0.0
    %5417 = vmatpush1.msra.mxu0 0.0
    %5418 = vmatprep.subr.mxu0 0.0
    %5419 = vmatpush1.msra.mxu0 0.0
    %5420 = vmatprep.subr.mxu0 0.0
    %5421 = vmatpush1.msra.mxu0 0.0
    %5422 = vmatprep.subr.mxu0 0.0
    %5423 = vmatpush1.msra.mxu0 0.0
    %5424 = vmatprep.subr.mxu0 0.0
    %5425 = vmatpush1.msra.mxu0 0.0
    %5426 = vmatprep.subr.mxu0 0.0
    %5427 = vmatpush1.msra.mxu0 0.0
    %5428 = vmatprep.subr.mxu0 0.0
    %5429 = vmatpush1.msra.mxu0 0.0
    %5430 = vmatprep.subr.mxu0 0.0
    %5431 = vmatpush1.msra.mxu0 0.0
    %5432 = vmatprep.subr.mxu0 0.0
    %5433 = vmatpush1.msra.mxu0 0.0
    %5434 = vmatprep.subr.mxu0 0.0
    %5435 = vmatpush1.msra.mxu0 0.0
    %5436 = vmatprep.subr.mxu0 0.0
    %5437 = vmatpush1.msra.mxu0 0.0
    %5438 = vmatprep.subr.mxu0 0.0
    %5439 = vmatpush1.msra.mxu0 0.0
    %5440 = vmatprep.subr.mxu0 0.0
    %5441 = vmatpush1.msra.mxu0 0.0
    %5442 = vmatprep.subr.mxu0 0.0
    %5443 = vmatpush1.msra.mxu0 0.0
    %5444 = vmatprep.mubr.f32.mxu0 0.0
    %5445 = vmatmul.mubr.f32.gmra.mrb[0].mxu0 %v5378
    %v5446 = vpop.f32.mrb[0].mxu0
    %v5447 = vadd.f32 0.0, %v5446
    %v5448 = vpop.f32.mrb[0].mxu0
    %5449 = vdwg.mxu0
    %v5450 = vsel %vm5325, %v5343, 0.0
    %v5451 = vrot.slane %v5450, 4
    %v5452 = vadd.f32 %v5450, %v5451
    %v5453 = vrot.slane %v5452, 2
    %v5454 = vadd.f32 %v5452, %v5453
    %v5455 = vrot.slane %v5454, 1
    %v5456 = vadd.f32 %v5454, %v5455
    %v5457 = vmul.f32 %v5447, 0.01
    %v5458 = vsub.f32 %v5240, %v5457
    %v5459 = vmul.f32 %v5456, 0.01
    %v5460 = vsub.f32 %v5241, %v5459
    %v5462 = vlaneseq
    %v5463 = vshrl.u32 %v5462, 7
    %v5464 = vsub.s32 0, %v5463
    %v5465 = vrot.slane %v5460, %v5464
    %v5468 = vsel %vm5248, %v5458, 0
    %5470 = vmatprep.subr.mxu0 0.0
    %5471 = vmatpush1.xpose.msra.mxu0 %v5468
    %5472 = vmatprep.subr.mxu0 0.0
    %5473 = vmatpush1.xpose.msra.mxu0 0.0
    %5474 = vmatprep.subr.mxu0 0.0
    %5475 = vmatpush1.xpose.msra.mxu0 0.0
    %5476 = vmatprep.subr.mxu0 0.0
    %5477 = vmatpush1.xpose.msra.mxu0 0.0
    %5478 = vmatprep.subr.mxu0 0.0
    %5479 = vmatpush1.xpose.msra.mxu0 0.0
    %5480 = vmatprep.subr.mxu0 0.0
    %5481 = vmatpush1.xpose.msra.mxu0 0.0
    %5482 = vmatprep.subr.mxu0 0.0
    %5483 = vmatpush1.xpose.msra.mxu0 0.0
    %5484 = vmatprep.subr.mxu0 0.0
    %5485 = vmatpush1.xpose.msra.mxu0 0.0
    %5486 = vmatprep.subr.mxu0 0.0
    %5487 = vmatpush1.xpose.msra.mxu0 0.0
    %5488 = vmatprep.subr.mxu0 0.0
    %5489 = vmatpush1.xpose.msra.mxu0 0.0
    %5490 = vmatprep.subr.mxu0 0.0
    %5491 = vmatpush1.xpose.msra.mxu0 0.0
    %5492 = vmatprep.subr.mxu0 0.0
    %5493 = vmatpush1.xpose.msra.mxu0 0.0
    %5494 = vmatprep.subr.mxu0 0.0
    %5495 = vmatpush1.xpose.msra.mxu0 0.0
    %5496 = vmatprep.subr.mxu0 0.0
    %5497 = vmatpush1.xpose.msra.mxu0 0.0
    %5498 = vmatprep.subr.mxu0 0.0
    %5499 = vmatpush1.xpose.msra.mxu0 0.0
    %5500 = vmatprep.subr.mxu0 0.0
    %5501 = vmatpush1.xpose.msra.mxu0 0.0
    %5502 = vmatprep.subr.mxu0 0.0
    %5503 = vmatpush1.xpose.msra.mxu0 0.0
    %5504 = vmatprep.subr.mxu0 0.0
    %5505 = vmatpush1.xpose.msra.mxu0 0.0
    %5506 = vmatprep.subr.mxu0 0.0
    %5507 = vmatpush1.xpose.msra.mxu0 0.0
    %5508 = vmatprep.subr.mxu0 0.0
    %5509 = vmatpush1.xpose.msra.mxu0 0.0
    %5510 = vmatprep.subr.mxu0 0.0
    %5511 = vmatpush1.xpose.msra.mxu0 0.0
    %5512 = vmatprep.subr.mxu0 0.0
    %5513 = vmatpush1.xpose.msra.mxu0 0.0
    %5514 = vmatprep.subr.mxu0 0.0
    %5515 = vmatpush1.xpose.msra.mxu0 0.0
    %5516 = vmatprep.subr.mxu0 0.0
    %5517 = vmatpush1.xpose.msra.mxu0 0.0
    %5518 = vmatprep.subr.mxu0 0.0
    %5519 = vmatpush1.xpose.msra.mxu0 0.0
    %5520 = vmatprep.subr.mxu0 0.0
    %5521 = vmatpush1.xpose.msra.mxu0 0.0
    %5522 = vmatprep.subr.mxu0 0.0
    %5523 = vmatpush1.xpose.msra.mxu0 0.0
    %5524 = vmatprep.subr.mxu0 0.0
    %5525 = vmatpush1.xpose.msra.mxu0 0.0
    %5526 = vmatprep.subr.mxu0 0.0
    %5527 = vmatpush1.xpose.msra.mxu0 0.0
    %5528 = vmatprep.subr.mxu0 0.0
    %5529 = vmatpush1.xpose.msra.mxu0 0.0
    %5530 = vmatprep.subr.mxu0 0.0
    %5531 = vmatpush1.xpose.msra.mxu0 0.0
    %5532 = vmatprep.subr.mxu0 0.0
    %5533 = vmatpush1.xpose.msra.mxu0 0.0
    %5534 = vmatprep.mubr.f32.mxu0 0.0
    %5535 = vmatmul.mubr.f32.gmra.mrb[0].mxu0 %v5250
    %v5536 = vpop.f32.mrb[0].mxu0
    %v5537 = vadd.f32 %v5465, %v5536
    %v5538 = vpop.f32.mrb[0].mxu0
    %5539 = vdwg.mxu0
    %v5540 = vsel %vm5325, %v5537, -inf
    %5541 = vmax.xlane.f32.xlu0 %v5540
    %v5542 = vpop.xlane.xlu0 %5541
    %v5543 = vsub.f32 %v5537, %v5542
    %v5544 = vmul.f32 %v5543, 1.442695
    %v5545 = vpow.pop %v5544
    %v5546 = vsel %vm5325, %v5545, 0.0
    %5547 = vadd.xlane.f32.xlu0 %v5546
    %v5548 = vpop.xlane.xlu0 %5547
    %v5549 = vrcp.pop %v5548
    %v5550 = vmul.f32 %v5545, %v5549
    %v5551 = vsub.f32 %v5550, %v5238
    %v5552 = vmul.f32 %v5551, %v5341
    %5553 = vxpose.xlu0.b32.start [1/16] %v5552, 128
    %5554 = vxpose.xlu0.b32.cont [2/16] 0.0, 128
    %5555 = vxpose.xlu0.b32.cont [3/16] 0.0, 128
    %5556 = vxpose.xlu0.b32.cont [4/16] 0.0, 128
    %5557 = vxpose.xlu0.b32.cont [5/16] 0.0, 128
    %5558 = vxpose.xlu0.b32.cont [6/16] 0.0, 128
    %5559 = vxpose.xlu0.b32.cont [7/16] 0.0, 128
    %5560 = vxpose.xlu0.b32.cont [8/16] 0.0, 128
    %5561 = vxpose.xlu0.b32.cont [9/16] 0.0, 128
    %5562 = vxpose.xlu0.b32.cont [10/16] 0.0, 128
    %5563 = vxpose.xlu0.b32.cont [11/16] 0.0, 128
    %5564 = vxpose.xlu0.b32.cont [12/16] 0.0, 128
    %5565 = vxpose.xlu0.b32.cont [13/16] 0.0, 128
    %5566 = vxpose.xlu0.b32.cont [14/16] 0.0, 128
    %5567 = vxpose.xlu0.b32.cont [15/16] 0.0, 128
    %5568 = vxpose.xlu0.b32.end [16/16] 0.0, 128
    %v5569 = vpop.trf.xlu0
    %v5570 = vpop.trf.xlu0
    %v5571 = vpop.trf.xlu0
    %v5572 = vpop.trf.xlu0
    %v5573 = vpop.trf.xlu0
    %v5574 = vpop.trf.xlu0
    %v5575 = vpop.trf.xlu0
    %v5576 = vpop.trf.xlu0
    %v5577 = vpop.trf.xlu0
    %v5578 = vpop.trf.xlu0
    %v5579 = vpop.trf.xlu0
    %v5580 = vpop.trf.xlu0
    %v5581 = vpop.trf.xlu0
    %v5582 = vpop.trf.xlu0
    %v5583 = vpop.trf.xlu0
    %v5584 = vpop.trf.xlu0
    %v5586 = vsel %vm5376, %v5569, 0
    %5588 = vmatprep.subr.mxu0 0.0
    %5589 = vmatpush1.msra.mxu0 %v5236
    %5590 = vmatprep.subr.mxu0 0.0
    %5591 = vmatpush1.msra.mxu0 0.0
    %5592 = vmatprep.subr.mxu0 0.0
    %5593 = vmatpush1.msra.mxu0 0.0
    %5594 = vmatprep.subr.mxu0 0.0
    %5595 = vmatpush1.msra.mxu0 0.0
    %5596 = vmatprep.subr.mxu0 0.0
    %5597 = vmatpush1.msra.mxu0 0.0
    %5598 = vmatprep.subr.mxu0 0.0
    %5599 = vmatpush1.msra.mxu0 0.0
    %5600 = vmatprep.subr.mxu0 0.0
    %5601 = vmatpush1.msra.mxu0 0.0
    %5602 = vmatprep.subr.mxu0 0.0
    %5603 = vmatpush1.msra.mxu0 0.0
    %5604 = vmatprep.subr.mxu0 0.0
    %5605 = vmatpush1.msra.mxu0 0.0
    %5606 = vmatprep.subr.mxu0 0.0
    %5607 = vmatpush1.msra.mxu0 0.0
    %5608 = vmatprep.subr.mxu0 0.0
    %5609 = vmatpush1.msra.mxu0 0.0
    %5610 = vmatprep.subr.mxu0 0.0
    %5611 = vmatpush1.msra.mxu0 0.0
    %5612 = vmatprep.subr.mxu0 0.0
    %5613 = vmatpush1.msra.mxu0 0.0
    %5614 = vmatprep.subr.mxu0 0.0
    %5615 = vmatpush1.msra.mxu0 0.0
    %5616 = vmatprep.subr.mxu0 0.0
    %5617 = vmatpush1.msra.mxu0 0.0
    %5618 = vmatprep.subr.mxu0 0.0
    %5619 = vmatpush1.msra.mxu0 0.0
    %5620 = vmatprep.subr.mxu0 0.0
    %5621 = vmatpush1.msra.mxu0 0.0
    %5622 = vmatprep.subr.mxu0 0.0
    %5623 = vmatpush1.msra.mxu0 0.0
    %5624 = vmatprep.subr.mxu0 0.0
    %5625 = vmatpush1.msra.mxu0 0.0
    %5626 = vmatprep.subr.mxu0 0.0
    %5627 = vmatpush1.msra.mxu0 0.0
    %5628 = vmatprep.subr.mxu0 0.0
    %5629 = vmatpush1.msra.mxu0 0.0
    %5630 = vmatprep.subr.mxu0 0.0
    %5631 = vmatpush1.msra.mxu0 0.0
    %5632 = vmatprep.subr.mxu0 0.0
    %5633 = vmatpush1.msra.mxu0 0.0
    %5634 = vmatprep.subr.mxu0 0.0
    %5635 = vmatpush1.msra.mxu0 0.0
    %5636 = vmatprep.subr.mxu0 0.0
    %5637 = vmatpush1.msra.mxu0 0.0
    %5638 = vmatprep.subr.mxu0 0.0
    %5639 = vmatpush1.msra.mxu0 0.0
    %5640 = vmatprep.subr.mxu0 0.0
    %5641 = vmatpush1.msra.mxu0 0.0
    %5642 = vmatprep.subr.mxu0 0.0
    %5643 = vmatpush1.msra.mxu0 0.0
    %5644 = vmatprep.subr.mxu0 0.0
    %5645 = vmatpush1.msra.mxu0 0.0
    %5646 = vmatprep.subr.mxu0 0.0
    %5647 = vmatpush1.msra.mxu0 0.0
    %5648 = vmatprep.subr.mxu0 0.0
    %5649 = vmatpush1.msra.mxu0 0.0
    %5650 = vmatprep.subr.mxu0 0.0
    %5651 = vmatpush1.msra.mxu0 0.0
    %5652 = vmatprep.mubr.f32.mxu0 0.0
    %5653 = vmatmul.mubr.f32.gmra.mrb[0].mxu0 %v5586
    %v5654 = vpop.f32.mrb[0].mxu0
    %v5655 = vadd.f32 0.0, %v5654
    %v5656 = vpop.f32.mrb[0].mxu0
    %5657 = vdwg.mxu0
    %v5658 = vsel %vm5325, %v5552, 0.0
    %v5659 = vrot.slane %v5658, 4
    %v5660 = vadd.f32 %v5658, %v5659
    %v5661 = vrot.slane %v5660, 2
    %v5662 = vadd.f32 %v5660, %v5661
    %v5663 = vrot.slane %v5662, 1
    %v5664 = vadd.f32 %v5662, %v5663
    %v5665 = vmul.f32 %v5655, 0.01
    %v5666 = vsub.f32 %v5458, %v5665
    %v5667 = vmul.f32 %v5664, 0.01
    %v5668 = vsub.f32 %v5460, %v5667
    %v5670 = vlaneseq
    %v5671 = vshrl.u32 %v5670, 7
    %v5672 = vsub.s32 0, %v5671
    %v5673 = vrot.slane %v5668, %v5672
    %v5676 = vsel %vm5248, %v5666, 0
    %5678 = vmatprep.subr.mxu0 0.0
    %5679 = vmatpush1.xpose.msra.mxu0 %v5676
    %5680 = vmatprep.subr.mxu0 0.0
    %5681 = vmatpush1.xpose.msra.mxu0 0.0
    %5682 = vmatprep.subr.mxu0 0.0
    %5683 = vmatpush1.xpose.msra.mxu0 0.0
    %5684 = vmatprep.subr.mxu0 0.0
    %5685 = vmatpush1.xpose.msra.mxu0 0.0
    %5686 = vmatprep.subr.mxu0 0.0
    %5687 = vmatpush1.xpose.msra.mxu0 0.0
    %5688 = vmatprep.subr.mxu0 0.0
    %5689 = vmatpush1.xpose.msra.mxu0 0.0
    %5690 = vmatprep.subr.mxu0 0.0
    %5691 = vmatpush1.xpose.msra.mxu0 0.0
    %5692 = vmatprep.subr.mxu0 0.0
    %5693 = vmatpush1.xpose.msra.mxu0 0.0
    %5694 = vmatprep.subr.mxu0 0.0
    %5695 = vmatpush1.xpose.msra.mxu0 0.0
    %5696 = vmatprep.subr.mxu0 0.0
    %5697 = vmatpush1.xpose.msra.mxu0 0.0
    %5698 = vmatprep.subr.mxu0 0.0
    %5699 = vmatpush1.xpose.msra.mxu0 0.0
    %5700 = vmatprep.subr.mxu0 0.0
    %5701 = vmatpush1.xpose.msra.mxu0 0.0
    %5702 = vmatprep.subr.mxu0 0.0
    %5703 = vmatpush1.xpose.msra.mxu0 0.0
    %5704 = vmatprep.subr.mxu0 0.0
    %5705 = vmatpush1.xpose.msra.mxu0 0.0
    %5706 = vmatprep.subr.mxu0 0.0
    %5707 = vmatpush1.xpose.msra.mxu0 0.0
    %5708 = vmatprep.subr.mxu0 0.0
    %5709 = vmatpush1.xpose.msra.mxu0 0.0
    %5710 = vmatprep.subr.mxu0 0.0
    %5711 = vmatpush1.xpose.msra.mxu0 0.0
    %5712 = vmatprep.subr.mxu0 0.0
    %5713 = vmatpush1.xpose.msra.mxu0 0.0
    %5714 = vmatprep.subr.mxu0 0.0
    %5715 = vmatpush1.xpose.msra.mxu0 0.0
    %5716 = vmatprep.subr.mxu0 0.0
    %5717 = vmatpush1.xpose.msra.mxu0 0.0
    %5718 = vmatprep.subr.mxu0 0.0
    %5719 = vmatpush1.xpose.msra.mxu0 0.0
    %5720 = vmatprep.subr.mxu0 0.0
    %5721 = vmatpush1.xpose.msra.mxu0 0.0
    %5722 = vmatprep.subr.mxu0 0.0
    %5723 = vmatpush1.xpose.msra.mxu0 0.0
    %5724 = vmatprep.subr.mxu0 0.0
    %5725 = vmatpush1.xpose.msra.mxu0 0.0
    %5726 = vmatprep.subr.mxu0 0.0
    %5727 = vmatpush1.xpose.msra.mxu0 0.0
    %5728 = vmatprep.subr.mxu0 0.0
    %5729 = vmatpush1.xpose.msra.mxu0 0.0
    %5730 = vmatprep.subr.mxu0 0.0
    %5731 = vmatpush1.xpose.msra.mxu0 0.0
    %5732 = vmatprep.subr.mxu0 0.0
    %5733 = vmatpush1.xpose.msra.mxu0 0.0
    %5734 = vmatprep.subr.mxu0 0.0
    %5735 = vmatpush1.xpose.msra.mxu0 0.0
    %5736 = vmatprep.subr.mxu0 0.0
    %5737 = vmatpush1.xpose.msra.mxu0 0.0
    %5738 = vmatprep.subr.mxu0 0.0
    %5739 = vmatpush1.xpose.msra.mxu0 0.0
    %5740 = vmatprep.subr.mxu0 0.0
    %5741 = vmatpush1.xpose.msra.mxu0 0.0
    %5742 = vmatprep.mubr.f32.mxu0 0.0
    %5743 = vmatmul.mubr.f32.gmra.mrb[0].mxu0 %v5250
    %v5744 = vpop.f32.mrb[0].mxu0
    %v5745 = vadd.f32 %v5673, %v5744
    %v5746 = vpop.f32.mrb[0].mxu0
    %5747 = vdwg.mxu0
    %v5748 = vsel %vm5325, %v5745, -inf
    %5749 = vmax.xlane.f32.xlu0 %v5748
    %v5750 = vpop.xlane.xlu0 %5749
    %v5751 = vsub.f32 %v5745, %v5750
    %v5752 = vmul.f32 %v5751, 1.442695
    %v5753 = vpow.pop %v5752
    %v5754 = vsel %vm5325, %v5753, 0.0
    %5755 = vadd.xlane.f32.xlu0 %v5754
    %v5756 = vpop.xlane.xlu0 %5755
    %v5757 = vrcp.pop %v5756
    %v5758 = vmul.f32 %v5753, %v5757
    %v5759 = vsub.f32 %v5758, %v5238
    %v5760 = vmul.f32 %v5759, %v5341
    %5761 = vxpose.xlu0.b32.start [1/16] %v5760, 128
    %5762 = vxpose.xlu0.b32.cont [2/16] 0.0, 128
    %5763 = vxpose.xlu0.b32.cont [3/16] 0.0, 128
    %5764 = vxpose.xlu0.b32.cont [4/16] 0.0, 128
    %5765 = vxpose.xlu0.b32.cont [5/16] 0.0, 128
    %5766 = vxpose.xlu0.b32.cont [6/16] 0.0, 128
    %5767 = vxpose.xlu0.b32.cont [7/16] 0.0, 128
    %5768 = vxpose.xlu0.b32.cont [8/16] 0.0, 128
    %5769 = vxpose.xlu0.b32.cont [9/16] 0.0, 128
    %5770 = vxpose.xlu0.b32.cont [10/16] 0.0, 128
    %5771 = vxpose.xlu0.b32.cont [11/16] 0.0, 128
    %5772 = vxpose.xlu0.b32.cont [12/16] 0.0, 128
    %5773 = vxpose.xlu0.b32.cont [13/16] 0.0, 128
    %5774 = vxpose.xlu0.b32.cont [14/16] 0.0, 128
    %5775 = vxpose.xlu0.b32.cont [15/16] 0.0, 128
    %5776 = vxpose.xlu0.b32.end [16/16] 0.0, 128
    %v5777 = vpop.trf.xlu0
    %v5778 = vpop.trf.xlu0
    %v5779 = vpop.trf.xlu0
    %v5780 = vpop.trf.xlu0
    %v5781 = vpop.trf.xlu0
    %v5782 = vpop.trf.xlu0
    %v5783 = vpop.trf.xlu0
    %v5784 = vpop.trf.xlu0
    %v5785 = vpop.trf.xlu0
    %v5786 = vpop.trf.xlu0
    %v5787 = vpop.trf.xlu0
    %v5788 = vpop.trf.xlu0
    %v5789 = vpop.trf.xlu0
    %v5790 = vpop.trf.xlu0
    %v5791 = vpop.trf.xlu0
    %v5792 = vpop.trf.xlu0
    %v5794 = vsel %vm5376, %v5777, 0
    %5796 = vmatprep.subr.mxu0 0.0
    %5797 = vmatpush1.msra.mxu0 %v5236
    %5798 = vmatprep.subr.mxu0 0.0
    %5799 = vmatpush1.msra.mxu0 0.0
    %5800 = vmatprep.subr.mxu0 0.0
    %5801 = vmatpush1.msra.mxu0 0.0
    %5802 = vmatprep.subr.mxu0 0.0
    %5803 = vmatpush1.msra.mxu0 0.0
    %5804 = vmatprep.subr.mxu0 0.0
    %5805 = vmatpush1.msra.mxu0 0.0
    %5806 = vmatprep.subr.mxu0 0.0
    %5807 = vmatpush1.msra.mxu0 0.0
    %5808 = vmatprep.subr.mxu0 0.0
    %5809 = vmatpush1.msra.mxu0 0.0
    %5810 = vmatprep.subr.mxu0 0.0
    %5811 = vmatpush1.msra.mxu0 0.0
    %5812 = vmatprep.subr.mxu0 0.0
    %5813 = vmatpush1.msra.mxu0 0.0
    %5814 = vmatprep.subr.mxu0 0.0
    %5815 = vmatpush1.msra.mxu0 0.0
    %5816 = vmatprep.subr.mxu0 0.0
    %5817 = vmatpush1.msra.mxu0 0.0
    %5818 = vmatprep.subr.mxu0 0.0
    %5819 = vmatpush1.msra.mxu0 0.0
    %5820 = vmatprep.subr.mxu0 0.0
    %5821 = vmatpush1.msra.mxu0 0.0
    %5822 = vmatprep.subr.mxu0 0.0
    %5823 = vmatpush1.msra.mxu0 0.0
    %5824 = vmatprep.subr.mxu0 0.0
    %5825 = vmatpush1.msra.mxu0 0.0
    %5826 = vmatprep.subr.mxu0 0.0
    %5827 = vmatpush1.msra.mxu0 0.0
    %5828 = vmatprep.subr.mxu0 0.0
    %5829 = vmatpush1.msra.mxu0 0.0
    %5830 = vmatprep.subr.mxu0 0.0
    %5831 = vmatpush1.msra.mxu0 0.0
    %5832 = vmatprep.subr.mxu0 0.0
    %5833 = vmatpush1.msra.mxu0 0.0
    %5834 = vmatprep.subr.mxu0 0.0
    %5835 = vmatpush1.msra.mxu0 0.0
    %5836 = vmatprep.subr.mxu0 0.0
    %5837 = vmatpush1.msra.mxu0 0.0
    %5838 = vmatprep.subr.mxu0 0.0
    %5839 = vmatpush1.msra.mxu0 0.0
    %5840 = vmatprep.subr.mxu0 0.0
    %5841 = vmatpush1.msra.mxu0 0.0
    %5842 = vmatprep.subr.mxu0 0.0
    %5843 = vmatpush1.msra.mxu0 0.0
    %5844 = vmatprep.subr.mxu0 0.0
    %5845 = vmatpush1.msra.mxu0 0.0
    %5846 = vmatprep.subr.mxu0 0.0
    %5847 = vmatpush1.msra.mxu0 0.0
    %5848 = vmatprep.subr.mxu0 0.0
    %5849 = vmatpush1.msra.mxu0 0.0
    %5850 = vmatprep.subr.mxu0 0.0
    %5851 = vmatpush1.msra.mxu0 0.0
    %5852 = vmatprep.subr.mxu0 0.0
    %5853 = vmatpush1.msra.mxu0 0.0
    %5854 = vmatprep.subr.mxu0 0.0
    %5855 = vmatpush1.msra.mxu0 0.0
    %5856 = vmatprep.subr.mxu0 0.0
    %5857 = vmatpush1.msra.mxu0 0.0
    %5858 = vmatprep.subr.mxu0 0.0
    %5859 = vmatpush1.msra.mxu0 0.0
    %5860 = vmatprep.mubr.f32.mxu0 0.0
    %5861 = vmatmul.mubr.f32.gmra.mrb[0].mxu0 %v5794
    %v5862 = vpop.f32.mrb[0].mxu0
    %v5863 = vadd.f32 0.0, %v5862
    %v5864 = vpop.f32.mrb[0].mxu0
    %5865 = vdwg.mxu0
    %v5866 = vsel %vm5325, %v5760, 0.0
    %v5867 = vrot.slane %v5866, 4
    %v5868 = vadd.f32 %v5866, %v5867
    %v5869 = vrot.slane %v5868, 2
    %v5870 = vadd.f32 %v5868, %v5869
    %v5871 = vrot.slane %v5870, 1
    %v5872 = vadd.f32 %v5870, %v5871
    %v5873 = vmul.f32 %v5863, 0.01
    %v5874 = vsub.f32 %v5666, %v5873
    %v5875 = vmul.f32 %v5872, 0.01
    %v5876 = vsub.f32 %v5668, %v5875
    %v5878 = vlaneseq
    %v5879 = vshrl.u32 %v5878, 7
    %v5880 = vsub.s32 0, %v5879
    %v5881 = vrot.slane %v5876, %v5880
    %v5884 = vsel %vm5248, %v5874, 0
    %5886 = vmatprep.subr.mxu0 0.0
    %5887 = vmatpush1.xpose.msra.mxu0 %v5884
    %5888 = vmatprep.subr.mxu0 0.0
    %5889 = vmatpush1.xpose.msra.mxu0 0.0
    %5890 = vmatprep.subr.mxu0 0.0
    %5891 = vmatpush1.xpose.msra.mxu0 0.0
    %5892 = vmatprep.subr.mxu0 0.0
    %5893 = vmatpush1.xpose.msra.mxu0 0.0
    %5894 = vmatprep.subr.mxu0 0.0
    %5895 = vmatpush1.xpose.msra.mxu0 0.0
    %5896 = vmatprep.subr.mxu0 0.0
    %5897 = vmatpush1.xpose.msra.mxu0 0.0
    %5898 = vmatprep.subr.mxu0 0.0
    %5899 = vmatpush1.xpose.msra.mxu0 0.0
    %5900 = vmatprep.subr.mxu0 0.0
    %5901 = vmatpush1.xpose.msra.mxu0 0.0
    %5902 = vmatprep.subr.mxu0 0.0
    %5903 = vmatpush1.xpose.msra.mxu0 0.0
    %5904 = vmatprep.subr.mxu0 0.0
    %5905 = vmatpush1.xpose.msra.mxu0 0.0
    %5906 = vmatprep.subr.mxu0 0.0
    %5907 = vmatpush1.xpose.msra.mxu0 0.0
    %5908 = vmatprep.subr.mxu0 0.0
    %5909 = vmatpush1.xpose.msra.mxu0 0.0
    %5910 = vmatprep.subr.mxu0 0.0
    %5911 = vmatpush1.xpose.msra.mxu0 0.0
    %5912 = vmatprep.subr.mxu0 0.0
    %5913 = vmatpush1.xpose.msra.mxu0 0.0
    %5914 = vmatprep.subr.mxu0 0.0
    %5915 = vmatpush1.xpose.msra.mxu0 0.0
    %5916 = vmatprep.subr.mxu0 0.0
    %5917 = vmatpush1.xpose.msra.mxu0 0.0
    %5918 = vmatprep.subr.mxu0 0.0
    %5919 = vmatpush1.xpose.msra.mxu0 0.0
    %5920 = vmatprep.subr.mxu0 0.0
    %5921 = vmatpush1.xpose.msra.mxu0 0.0
    %5922 = vmatprep.subr.mxu0 0.0
    %5923 = vmatpush1.xpose.msra.mxu0 0.0
    %5924 = vmatprep.subr.mxu0 0.0
    %5925 = vmatpush1.xpose.msra.mxu0 0.0
    %5926 = vmatprep.subr.mxu0 0.0
    %5927 = vmatpush1.xpose.msra.mxu0 0.0
    %5928 = vmatprep.subr.mxu0 0.0
    %5929 = vmatpush1.xpose.msra.mxu0 0.0
    %5930 = vmatprep.subr.mxu0 0.0
    %5931 = vmatpush1.xpose.msra.mxu0 0.0
    %5932 = vmatprep.subr.mxu0 0.0
    %5933 = vmatpush1.xpose.msra.mxu0 0.0
    %5934 = vmatprep.subr.mxu0 0.0
    %5935 = vmatpush1.xpose.msra.mxu0 0.0
    %5936 = vmatprep.subr.mxu0 0.0
    %5937 = vmatpush1.xpose.msra.mxu0 0.0
    %5938 = vmatprep.subr.mxu0 0.0
    %5939 = vmatpush1.xpose.msra.mxu0 0.0
    %5940 = vmatprep.subr.mxu0 0.0
    %5941 = vmatpush1.xpose.msra.mxu0 0.0
    %5942 = vmatprep.subr.mxu0 0.0
    %5943 = vmatpush1.xpose.msra.mxu0 0.0
    %5944 = vmatprep.subr.mxu0 0.0
    %5945 = vmatpush1.xpose.msra.mxu0 0.0
    %5946 = vmatprep.subr.mxu0 0.0
    %5947 = vmatpush1.xpose.msra.mxu0 0.0
    %5948 = vmatprep.subr.mxu0 0.0
    %5949 = vmatpush1.xpose.msra.mxu0 0.0
    %5950 = vmatprep.mubr.f32.mxu0 0.0
    %5951 = vmatmul.mubr.f32.gmra.mrb[0].mxu0 %v5250
    %v5952 = vpop.f32.mrb[0].mxu0
    %v5953 = vadd.f32 %v5881, %v5952
    %v5954 = vpop.f32.mrb[0].mxu0
    %5955 = vdwg.mxu0
    %v5956 = vsel %vm5325, %v5953, -inf
    %5957 = vmax.xlane.f32.xlu0 %v5956
    %v5958 = vpop.xlane.xlu0 %5957
    %v5959 = vsub.f32 %v5953, %v5958
    %v5960 = vmul.f32 %v5959, 1.442695
    %v5961 = vpow.pop %v5960
    %v5962 = vsel %vm5325, %v5961, 0.0
    %5963 = vadd.xlane.f32.xlu0 %v5962
    %v5964 = vpop.xlane.xlu0 %5963
    %v5965 = vrcp.pop %v5964
    %v5966 = vmul.f32 %v5961, %v5965
    %v5967 = vsub.f32 %v5966, %v5238
    %v5968 = vmul.f32 %v5967, %v5341
    %5969 = vxpose.xlu0.b32.start [1/16] %v5968, 128
    %5970 = vxpose.xlu0.b32.cont [2/16] 0.0, 128
    %5971 = vxpose.xlu0.b32.cont [3/16] 0.0, 128
    %5972 = vxpose.xlu0.b32.cont [4/16] 0.0, 128
    %5973 = vxpose.xlu0.b32.cont [5/16] 0.0, 128
    %5974 = vxpose.xlu0.b32.cont [6/16] 0.0, 128
    %5975 = vxpose.xlu0.b32.cont [7/16] 0.0, 128
    %5976 = vxpose.xlu0.b32.cont [8/16] 0.0, 128
    %5977 = vxpose.xlu0.b32.cont [9/16] 0.0, 128
    %5978 = vxpose.xlu0.b32.cont [10/16] 0.0, 128
    %5979 = vxpose.xlu0.b32.cont [11/16] 0.0, 128
    %5980 = vxpose.xlu0.b32.cont [12/16] 0.0, 128
    %5981 = vxpose.xlu0.b32.cont [13/16] 0.0, 128
    %5982 = vxpose.xlu0.b32.cont [14/16] 0.0, 128
    %5983 = vxpose.xlu0.b32.cont [15/16] 0.0, 128
    %5984 = vxpose.xlu0.b32.end [16/16] 0.0, 128
    %v5985 = vpop.trf.xlu0
    %v5986 = vpop.trf.xlu0
    %v5987 = vpop.trf.xlu0
    %v5988 = vpop.trf.xlu0
    %v5989 = vpop.trf.xlu0
    %v5990 = vpop.trf.xlu0
    %v5991 = vpop.trf.xlu0
    %v5992 = vpop.trf.xlu0
    %v5993 = vpop.trf.xlu0
    %v5994 = vpop.trf.xlu0
    %v5995 = vpop.trf.xlu0
    %v5996 = vpop.trf.xlu0
    %v5997 = vpop.trf.xlu0
    %v5998 = vpop.trf.xlu0
    %v5999 = vpop.trf.xlu0
    %v6000 = vpop.trf.xlu0
    %v6002 = vsel %vm5376, %v5985, 0
    %6004 = vmatprep.subr.mxu0 0.0
    %6005 = vmatpush1.msra.mxu0 %v5236
    %6006 = vmatprep.subr.mxu0 0.0
    %6007 = vmatpush1.msra.mxu0 0.0
    %6008 = vmatprep.subr.mxu0 0.0
    %6009 = vmatpush1.msra.mxu0 0.0
    %6010 = vmatprep.subr.mxu0 0.0
    %6011 = vmatpush1.msra.mxu0 0.0
    %6012 = vmatprep.subr.mxu0 0.0
    %6013 = vmatpush1.msra.mxu0 0.0
    %6014 = vmatprep.subr.mxu0 0.0
    %6015 = vmatpush1.msra.mxu0 0.0
    %6016 = vmatprep.subr.mxu0 0.0
    %6017 = vmatpush1.msra.mxu0 0.0
    %6018 = vmatprep.subr.mxu0 0.0
    %6019 = vmatpush1.msra.mxu0 0.0
    %6020 = vmatprep.subr.mxu0 0.0
    %6021 = vmatpush1.msra.mxu0 0.0
    %6022 = vmatprep.subr.mxu0 0.0
    %6023 = vmatpush1.msra.mxu0 0.0
    %6024 = vmatprep.subr.mxu0 0.0
    %6025 = vmatpush1.msra.mxu0 0.0
    %6026 = vmatprep.subr.mxu0 0.0
    %6027 = vmatpush1.msra.mxu0 0.0
    %6028 = vmatprep.subr.mxu0 0.0
    %6029 = vmatpush1.msra.mxu0 0.0
    %6030 = vmatprep.subr.mxu0 0.0
    %6031 = vmatpush1.msra.mxu0 0.0
    %6032 = vmatprep.subr.mxu0 0.0
    %6033 = vmatpush1.msra.mxu0 0.0
    %6034 = vmatprep.subr.mxu0 0.0
    %6035 = vmatpush1.msra.mxu0 0.0
    %6036 = vmatprep.subr.mxu0 0.0
    %6037 = vmatpush1.msra.mxu0 0.0
    %6038 = vmatprep.subr.mxu0 0.0
    %6039 = vmatpush1.msra.mxu0 0.0
    %6040 = vmatprep.subr.mxu0 0.0
    %6041 = vmatpush1.msra.mxu0 0.0
    %6042 = vmatprep.subr.mxu0 0.0
    %6043 = vmatpush1.msra.mxu0 0.0
    %6044 = vmatprep.subr.mxu0 0.0
    %6045 = vmatpush1.msra.mxu0 0.0
    %6046 = vmatprep.subr.mxu0 0.0
    %6047 = vmatpush1.msra.mxu0 0.0
    %6048 = vmatprep.subr.mxu0 0.0
    %6049 = vmatpush1.msra.mxu0 0.0
    %6050 = vmatprep.subr.mxu0 0.0
    %6051 = vmatpush1.msra.mxu0 0.0
    %6052 = vmatprep.subr.mxu0 0.0
    %6053 = vmatpush1.msra.mxu0 0.0
    %6054 = vmatprep.subr.mxu0 0.0
    %6055 = vmatpush1.msra.mxu0 0.0
    %6056 = vmatprep.subr.mxu0 0.0
    %6057 = vmatpush1.msra.mxu0 0.0
    %6058 = vmatprep.subr.mxu0 0.0
    %6059 = vmatpush1.msra.mxu0 0.0
    %6060 = vmatprep.subr.mxu0 0.0
    %6061 = vmatpush1.msra.mxu0 0.0
    %6062 = vmatprep.subr.mxu0 0.0
    %6063 = vmatpush1.msra.mxu0 0.0
    %6064 = vmatprep.subr.mxu0 0.0
    %6065 = vmatpush1.msra.mxu0 0.0
    %6066 = vmatprep.subr.mxu0 0.0
    %6067 = vmatpush1.msra.mxu0 0.0
    %6068 = vmatprep.mubr.f32.mxu0 0.0
    %6069 = vmatmul.mubr.f32.gmra.mrb[0].mxu0 %v6002
    %v6070 = vpop.f32.mrb[0].mxu0
    %v6071 = vadd.f32 0.0, %v6070
    %v6072 = vpop.f32.mrb[0].mxu0
    %6073 = vdwg.mxu0
    %v6074 = vsel %vm5325, %v5968, 0.0
    %v6075 = vrot.slane %v6074, 4
    %v6076 = vadd.f32 %v6074, %v6075
    %v6077 = vrot.slane %v6076, 2
    %v6078 = vadd.f32 %v6076, %v6077
    %v6079 = vrot.slane %v6078, 1
    %v6080 = vadd.f32 %v6078, %v6079
    %v6081 = vmul.f32 %v6071, 0.01
    %v6082 = vsub.f32 %v5874, %v6081
    %v6083 = vmul.f32 %v6080, 0.01
    %v6084 = vsub.f32 %v5876, %v6083
    %v6086 = vlaneseq
    %v6087 = vshrl.u32 %v6086, 7
    %v6088 = vsub.s32 0, %v6087
    %v6089 = vrot.slane %v6084, %v6088
    %v6092 = vsel %vm5248, %v6082, 0
    %6094 = vmatprep.subr.mxu0 0.0
    %6095 = vmatpush1.xpose.msra.mxu0 %v6092
    %6096 = vmatprep.subr.mxu0 0.0
    %6097 = vmatpush1.xpose.msra.mxu0 0.0
    %6098 = vmatprep.subr.mxu0 0.0
    %6099 = vmatpush1.xpose.msra.mxu0 0.0
    %6100 = vmatprep.subr.mxu0 0.0
    %6101 = vmatpush1.xpose.msra.mxu0 0.0
    %6102 = vmatprep.subr.mxu0 0.0
    %6103 = vmatpush1.xpose.msra.mxu0 0.0
    %6104 = vmatprep.subr.mxu0 0.0
    %6105 = vmatpush1.xpose.msra.mxu0 0.0
    %6106 = vmatprep.subr.mxu0 0.0
    %6107 = vmatpush1.xpose.msra.mxu0 0.0
    %6108 = vmatprep.subr.mxu0 0.0
    %6109 = vmatpush1.xpose.msra.mxu0 0.0
    %6110 = vmatprep.subr.mxu0 0.0
    %6111 = vmatpush1.xpose.msra.mxu0 0.0
    %6112 = vmatprep.subr.mxu0 0.0
    %6113 = vmatpush1.xpose.msra.mxu0 0.0
    %6114 = vmatprep.subr.mxu0 0.0
    %6115 = vmatpush1.xpose.msra.mxu0 0.0
    %6116 = vmatprep.subr.mxu0 0.0
    %6117 = vmatpush1.xpose.msra.mxu0 0.0
    %6118 = vmatprep.subr.mxu0 0.0
    %6119 = vmatpush1.xpose.msra.mxu0 0.0
    %6120 = vmatprep.subr.mxu0 0.0
    %6121 = vmatpush1.xpose.msra.mxu0 0.0
    %6122 = vmatprep.subr.mxu0 0.0
    %6123 = vmatpush1.xpose.msra.mxu0 0.0
    %6124 = vmatprep.subr.mxu0 0.0
    %6125 = vmatpush1.xpose.msra.mxu0 0.0
    %6126 = vmatprep.subr.mxu0 0.0
    %6127 = vmatpush1.xpose.msra.mxu0 0.0
    %6128 = vmatprep.subr.mxu0 0.0
    %6129 = vmatpush1.xpose.msra.mxu0 0.0
    %6130 = vmatprep.subr.mxu0 0.0
    %6131 = vmatpush1.xpose.msra.mxu0 0.0
    %6132 = vmatprep.subr.mxu0 0.0
    %6133 = vmatpush1.xpose.msra.mxu0 0.0
    %6134 = vmatprep.subr.mxu0 0.0
    %6135 = vmatpush1.xpose.msra.mxu0 0.0
    %6136 = vmatprep.subr.mxu0 0.0
    %6137 = vmatpush1.xpose.msra.mxu0 0.0
    %6138 = vmatprep.subr.mxu0 0.0
    %6139 = vmatpush1.xpose.msra.mxu0 0.0
    %6140 = vmatprep.subr.mxu0 0.0
    %6141 = vmatpush1.xpose.msra.mxu0 0.0
    %6142 = vmatprep.subr.mxu0 0.0
    %6143 = vmatpush1.xpose.msra.mxu0 0.0
    %6144 = vmatprep.subr.mxu0 0.0
    %6145 = vmatpush1.xpose.msra.mxu0 0.0
    %6146 = vmatprep.subr.mxu0 0.0
    %6147 = vmatpush1.xpose.msra.mxu0 0.0
    %6148 = vmatprep.subr.mxu0 0.0
    %6149 = vmatpush1.xpose.msra.mxu0 0.0
    %6150 = vmatprep.subr.mxu0 0.0
    %6151 = vmatpush1.xpose.msra.mxu0 0.0
    %6152 = vmatprep.subr.mxu0 0.0
    %6153 = vmatpush1.xpose.msra.mxu0 0.0
    %6154 = vmatprep.subr.mxu0 0.0
    %6155 = vmatpush1.xpose.msra.mxu0 0.0
    %6156 = vmatprep.subr.mxu0 0.0
    %6157 = vmatpush1.xpose.msra.mxu0 0.0
    %6158 = vmatprep.mubr.f32.mxu0 0.0
    %6159 = vmatmul.mubr.f32.gmra.mrb[0].mxu0 %v5250
    %v6160 = vpop.f32.mrb[0].mxu0
    %v6161 = vadd.f32 %v6089, %v6160
    %v6162 = vpop.f32.mrb[0].mxu0
    %6163 = vdwg.mxu0
    %v6164 = vsel %vm5325, %v6161, -inf
    %6165 = vmax.xlane.f32.xlu0 %v6164
    %v6166 = vpop.xlane.xlu0 %6165
    %v6167 = vsub.f32 %v6161, %v6166
    %v6168 = vmul.f32 %v6167, 1.442695
    %v6169 = vpow.pop %v6168
    %v6170 = vsel %vm5325, %v6169, 0.0
    %6171 = vadd.xlane.f32.xlu0 %v6170
    %v6172 = vpop.xlane.xlu0 %6171
    %v6173 = vrcp.pop %v6172
    %v6174 = vmul.f32 %v6169, %v6173
    %v6175 = vsub.f32 %v6174, %v5238
    %v6176 = vmul.f32 %v6175, %v5341
    %6177 = vxpose.xlu0.b32.start [1/16] %v6176, 128
    %6178 = vxpose.xlu0.b32.cont [2/16] 0.0, 128
    %6179 = vxpose.xlu0.b32.cont [3/16] 0.0, 128
    %6180 = vxpose.xlu0.b32.cont [4/16] 0.0, 128
    %6181 = vxpose.xlu0.b32.cont [5/16] 0.0, 128
    %6182 = vxpose.xlu0.b32.cont [6/16] 0.0, 128
    %6183 = vxpose.xlu0.b32.cont [7/16] 0.0, 128
    %6184 = vxpose.xlu0.b32.cont [8/16] 0.0, 128
    %6185 = vxpose.xlu0.b32.cont [9/16] 0.0, 128
    %6186 = vxpose.xlu0.b32.cont [10/16] 0.0, 128
    %6187 = vxpose.xlu0.b32.cont [11/16] 0.0, 128
    %6188 = vxpose.xlu0.b32.cont [12/16] 0.0, 128
    %6189 = vxpose.xlu0.b32.cont [13/16] 0.0, 128
    %6190 = vxpose.xlu0.b32.cont [14/16] 0.0, 128
    %6191 = vxpose.xlu0.b32.cont [15/16] 0.0, 128
    %6192 = vxpose.xlu0.b32.end [16/16] 0.0, 128
    %v6193 = vpop.trf.xlu0
    %v6194 = vpop.trf.xlu0
    %v6195 = vpop.trf.xlu0
    %v6196 = vpop.trf.xlu0
    %v6197 = vpop.trf.xlu0
    %v6198 = vpop.trf.xlu0
    %v6199 = vpop.trf.xlu0
    %v6200 = vpop.trf.xlu0
    %v6201 = vpop.trf.xlu0
    %v6202 = vpop.trf.xlu0
    %v6203 = vpop.trf.xlu0
    %v6204 = vpop.trf.xlu0
    %v6205 = vpop.trf.xlu0
    %v6206 = vpop.trf.xlu0
    %v6207 = vpop.trf.xlu0
    %v6208 = vpop.trf.xlu0
    %v6210 = vsel %vm5376, %v6193, 0
    %6212 = vmatprep.subr.mxu0 0.0
    %6213 = vmatpush1.msra.mxu0 %v5236
    %6214 = vmatprep.subr.mxu0 0.0
    %6215 = vmatpush1.msra.mxu0 0.0
    %6216 = vmatprep.subr.mxu0 0.0
    %6217 = vmatpush1.msra.mxu0 0.0
    %6218 = vmatprep.subr.mxu0 0.0
    %6219 = vmatpush1.msra.mxu0 0.0
    %6220 = vmatprep.subr.mxu0 0.0
    %6221 = vmatpush1.msra.mxu0 0.0
    %6222 = vmatprep.subr.mxu0 0.0
    %6223 = vmatpush1.msra.mxu0 0.0
    %6224 = vmatprep.subr.mxu0 0.0
    %6225 = vmatpush1.msra.mxu0 0.0
    %6226 = vmatprep.subr.mxu0 0.0
    %6227 = vmatpush1.msra.mxu0 0.0
    %6228 = vmatprep.subr.mxu0 0.0
    %6229 = vmatpush1.msra.mxu0 0.0
    %6230 = vmatprep.subr.mxu0 0.0
    %6231 = vmatpush1.msra.mxu0 0.0
    %6232 = vmatprep.subr.mxu0 0.0
    %6233 = vmatpush1.msra.mxu0 0.0
    %6234 = vmatprep.subr.mxu0 0.0
    %6235 = vmatpush1.msra.mxu0 0.0
    %6236 = vmatprep.subr.mxu0 0.0
    %6237 = vmatpush1.msra.mxu0 0.0
    %6238 = vmatprep.subr.mxu0 0.0
    %6239 = vmatpush1.msra.mxu0 0.0
    %6240 = vmatprep.subr.mxu0 0.0
    %6241 = vmatpush1.msra.mxu0 0.0
    %6242 = vmatprep.subr.mxu0 0.0
    %6243 = vmatpush1.msra.mxu0 0.0
    %6244 = vmatprep.subr.mxu0 0.0
    %6245 = vmatpush1.msra.mxu0 0.0
    %6246 = vmatprep.subr.mxu0 0.0
    %6247 = vmatpush1.msra.mxu0 0.0
    %6248 = vmatprep.subr.mxu0 0.0
    %6249 = vmatpush1.msra.mxu0 0.0
    %6250 = vmatprep.subr.mxu0 0.0
    %6251 = vmatpush1.msra.mxu0 0.0
    %6252 = vmatprep.subr.mxu0 0.0
    %6253 = vmatpush1.msra.mxu0 0.0
    %6254 = vmatprep.subr.mxu0 0.0
    %6255 = vmatpush1.msra.mxu0 0.0
    %6256 = vmatprep.subr.mxu0 0.0
    %6257 = vmatpush1.msra.mxu0 0.0
    %6258 = vmatprep.subr.mxu0 0.0
    %6259 = vmatpush1.msra.mxu0 0.0
    %6260 = vmatprep.subr.mxu0 0.0
    %6261 = vmatpush1.msra.mxu0 0.0
    %6262 = vmatprep.subr.mxu0 0.0
    %6263 = vmatpush1.msra.mxu0 0.0
    %6264 = vmatprep.subr.mxu0 0.0
    %6265 = vmatpush1.msra.mxu0 0.0
    %6266 = vmatprep.subr.mxu0 0.0
    %6267 = vmatpush1.msra.mxu0 0.0
    %6268 = vmatprep.subr.mxu0 0.0
    %6269 = vmatpush1.msra.mxu0 0.0
    %6270 = vmatprep.subr.mxu0 0.0
    %6271 = vmatpush1.msra.mxu0 0.0
    %6272 = vmatprep.subr.mxu0 0.0
    %6273 = vmatpush1.msra.mxu0 0.0
    %6274 = vmatprep.subr.mxu0 0.0
    %6275 = vmatpush1.msra.mxu0 0.0
    %6276 = vmatprep.mubr.f32.mxu0 0.0
    %6277 = vmatmul.mubr.f32.gmra.mrb[0].mxu0 %v6210
    %v6278 = vpop.f32.mrb[0].mxu0
    %v6279 = vadd.f32 0.0, %v6278
    %v6280 = vpop.f32.mrb[0].mxu0
    %6281 = vdwg.mxu0
    %v6282 = vsel %vm5325, %v6176, 0.0
    %v6283 = vrot.slane %v6282, 4
    %v6284 = vadd.f32 %v6282, %v6283
    %v6285 = vrot.slane %v6284, 2
    %v6286 = vadd.f32 %v6284, %v6285
    %v6287 = vrot.slane %v6286, 1
    %v6288 = vadd.f32 %v6286, %v6287
    %v6289 = vmul.f32 %v6279, 0.01
    %v6290 = vsub.f32 %v6082, %v6289
    %v6291 = vmul.f32 %v6288, 0.01
    %v6292 = vsub.f32 %v6084, %v6291
    %v6294 = vlaneseq
    %v6295 = vshrl.u32 %v6294, 7
    %v6296 = vsub.s32 0, %v6295
    %v6297 = vrot.slane %v6292, %v6296
    %v6300 = vsel %vm5248, %v5237, 0
    %v6303 = vsel %vm5248, %v6290, 0
    %6305 = vmatprep.subr.mxu0 0.0
    %6306 = vmatpush1.xpose.msra.mxu0 %v6303
    %6307 = vmatprep.subr.mxu0 0.0
    %6308 = vmatpush1.xpose.msra.mxu0 0.0
    %6309 = vmatprep.subr.mxu0 0.0
    %6310 = vmatpush1.xpose.msra.mxu0 0.0
    %6311 = vmatprep.subr.mxu0 0.0
    %6312 = vmatpush1.xpose.msra.mxu0 0.0
    %6313 = vmatprep.subr.mxu0 0.0
    %6314 = vmatpush1.xpose.msra.mxu0 0.0
    %6315 = vmatprep.subr.mxu0 0.0
    %6316 = vmatpush1.xpose.msra.mxu0 0.0
    %6317 = vmatprep.subr.mxu0 0.0
    %6318 = vmatpush1.xpose.msra.mxu0 0.0
    %6319 = vmatprep.subr.mxu0 0.0
    %6320 = vmatpush1.xpose.msra.mxu0 0.0
    %6321 = vmatprep.subr.mxu0 0.0
    %6322 = vmatpush1.xpose.msra.mxu0 0.0
    %6323 = vmatprep.subr.mxu0 0.0
    %6324 = vmatpush1.xpose.msra.mxu0 0.0
    %6325 = vmatprep.subr.mxu0 0.0
    %6326 = vmatpush1.xpose.msra.mxu0 0.0
    %6327 = vmatprep.subr.mxu0 0.0
    %6328 = vmatpush1.xpose.msra.mxu0 0.0
    %6329 = vmatprep.subr.mxu0 0.0
    %6330 = vmatpush1.xpose.msra.mxu0 0.0
    %6331 = vmatprep.subr.mxu0 0.0
    %6332 = vmatpush1.xpose.msra.mxu0 0.0
    %6333 = vmatprep.subr.mxu0 0.0
    %6334 = vmatpush1.xpose.msra.mxu0 0.0
    %6335 = vmatprep.subr.mxu0 0.0
    %6336 = vmatpush1.xpose.msra.mxu0 0.0
    %6337 = vmatprep.subr.mxu0 0.0
    %6338 = vmatpush1.xpose.msra.mxu0 0.0
    %6339 = vmatprep.subr.mxu0 0.0
    %6340 = vmatpush1.xpose.msra.mxu0 0.0
    %6341 = vmatprep.subr.mxu0 0.0
    %6342 = vmatpush1.xpose.msra.mxu0 0.0
    %6343 = vmatprep.subr.mxu0 0.0
    %6344 = vmatpush1.xpose.msra.mxu0 0.0
    %6345 = vmatprep.subr.mxu0 0.0
    %6346 = vmatpush1.xpose.msra.mxu0 0.0
    %6347 = vmatprep.subr.mxu0 0.0
    %6348 = vmatpush1.xpose.msra.mxu0 0.0
    %6349 = vmatprep.subr.mxu0 0.0
    %6350 = vmatpush1.xpose.msra.mxu0 0.0
    %6351 = vmatprep.subr.mxu0 0.0
    %6352 = vmatpush1.xpose.msra.mxu0 0.0
    %6353 = vmatprep.subr.mxu0 0.0
    %6354 = vmatpush1.xpose.msra.mxu0 0.0
    %6355 = vmatprep.subr.mxu0 0.0
    %6356 = vmatpush1.xpose.msra.mxu0 0.0
    %6357 = vmatprep.subr.mxu0 0.0
    %6358 = vmatpush1.xpose.msra.mxu0 0.0
    %6359 = vmatprep.subr.mxu0 0.0
    %6360 = vmatpush1.xpose.msra.mxu0 0.0
    %6361 = vmatprep.subr.mxu0 0.0
    %6362 = vmatpush1.xpose.msra.mxu0 0.0
    %6363 = vmatprep.subr.mxu0 0.0
    %6364 = vmatpush1.xpose.msra.mxu0 0.0
    %6365 = vmatprep.subr.mxu0 0.0
    %6366 = vmatpush1.xpose.msra.mxu0 0.0
    %6367 = vmatprep.subr.mxu0 0.0
    %6368 = vmatpush1.xpose.msra.mxu0 0.0
    %6369 = vmatprep.mubr.f32.mxu0 0.0
    %6370 = vmatmul.mubr.f32.gmra.mrb[0].mxu0 %v6300
    %v6371 = vpop.f32.mrb[0].mxu0
    %v6372 = vadd.f32 %v6297, %v6371
    %v6373 = vpop.f32.mrb[0].mxu0
    %6374 = vdwg.mxu0
    %6375 = vst.msk [vmem:[#allocation2] sm:$0xff] %vm5325, %v6372
    // Predicated region
    $region46: #{meta_lenet_forward.1} parent=1 // pred_check
      _
    $region47: #{meta_lenet_forward.1} parent=1 // pred_check_branch
      %6377 = sbr.rel (0) target = $region49
    $region48: #{meta_lenet_forward.1} parent=1 // pred_region
      %s6379 = ssub.s32 128, 128
      %6380 = vsyncadd [#allocation3], %s6379
      %s6382 = sshll.u32 [#allocation2], 4
      %s6383 = int_to_ptr.vmem [resolvable:$true] %s6382
      %6385 = dma.vmem_to_hbm [thread:$0]  %s6383, 128, %s11, [#allocation3]
    $region49: #{meta_lenet_forward.1} parent=1 // pred_fallthru
      _
    // Predicated region
    $region50: #{meta_lenet_forward.1} parent=1 // pred_check
      _
    $region51: #{meta_lenet_forward.1} parent=1 // pred_check_branch
      %6387 = sbr.rel (0) target = $region53
    $region52: #{meta_lenet_forward.1} parent=1 // pred_region
      %6388 = dma.done [#allocation3], 128
    $region53: #{meta_lenet_forward.1} parent=1 // pred_fallthru
      _
    %6389 = vsyncpa [#allocation3], 1

</llo_original>
